<compile_context>
chip_gen: v7x
topology: tpu7x:2x2x1
jax: 0.10.0
libtpu: 0.0.40
codegen_flags: <defaults>
</compile_context>

<pallas_src>
import functools

import jax
import jax.numpy as jnp
from jax import lax
from jax.experimental import pallas as pl
from jax.experimental.pallas import tpu as pltpu

EPS = 1e-5  # torch.nn.InstanceNorm2d default eps


# ---------------- in-kernel helpers ----------------

def _build_vpad(buf_ref, src, H, W):
    """Write the vertically reflection-padded, row-flattened image into buf_ref.

    src: (C, H*W) f32 value (rows of length W flattened on the lane axis).
    buf_ref layout (C, (H+4)*W):
        [ guard | reflect(row 1) | rows 0..H-1 | reflect(row H-2) | guard ]
    Guard rows are only ever read at lane positions that the horizontal
    reflection select overwrites; zeroed so the scratch is fully initialised."""
    HW = H * W
    zeros = jnp.zeros_like(src[:, 0:W])
    buf_ref[:, 2 * W:2 * W + HW] = src                              # interior rows
    buf_ref[:, W:2 * W] = src[:, W:2 * W]                           # top reflect = row 1
    buf_ref[:, 2 * W + HW:3 * W + HW] = src[:, HW - 2 * W:HW - W]   # bottom = row H-2
    buf_ref[:, 0:W] = zeros
    buf_ref[:, 3 * W + HW:4 * W + HW] = zeros


def _conv3x3(buf_ref, w_ref, mask_l, mask_r, H, W):
    """3x3 'valid' conv over the reflection-padded image held in buf_ref.

    w_ref: (3, 3, Cout, Cin). Taps come straight from lane-shifted ref slices
    (zero copies); output is (Cout, H*W) f32, lane-dense."""
    HW = H * W
    c_out = w_ref.shape[2]
    acc = jnp.zeros((c_out, HW), jnp.float32)
    for kh in range(3):
        base = (kh + 1) * W
        s_m = buf_ref[:, base - 1:base - 1 + HW]    # value at flat index p-1
        s_c = buf_ref[:, base:base + HW]            # value at flat index p
        s_p = buf_ref[:, base + 1:base + 1 + HW]    # value at flat index p+1
        taps = (jnp.where(mask_l, s_p, s_m),        # kw=0 (reflect at w == 0)
                s_c,                                # kw=1
                jnp.where(mask_r, s_m, s_p))        # kw=2 (reflect at w == W-1)
        for kw in range(3):
            acc = acc + jnp.dot(w_ref[kh, kw], taps[kw],
                                preferred_element_type=jnp.float32,
                                precision=lax.Precision.HIGHEST)
    return acc


def _instance_norm(y, g_ref, b_ref):
    """y: (C, H*W) f32; per-channel (sublane-row) biased mean/var over lanes."""
    mean = jnp.mean(y, axis=1, keepdims=True)
    var = jnp.mean(jnp.square(y - mean), axis=1, keepdims=True)
    return (y - mean) * lax.rsqrt(var + EPS) * g_ref[...] + b_ref[...]


# ---------------- fused Pallas kernel (one image per grid step) ----------------

def _residual_block_kernel(x_ref, w1_ref, g1_ref, be1_ref, w2_ref, g2_ref, be2_ref,
                           o_ref, buf_ref, *, H, W):
    HW = H * W
    # Lane-position masks for the horizontal reflection fix-ups (hoisted once,
    # reused by both convs; broadcast along sublanes inside the selects).
    col = lax.broadcasted_iota(jnp.int32, (1, HW), 1) % W
    mask_l = col == 0
    mask_r = col == W - 1

    # conv1 -> InstanceNorm -> ReLU   (intermediate never leaves VMEM)
    _build_vpad(buf_ref, x_ref[0], H, W)
    y = _conv3x3(buf_ref, w1_ref, mask_l, mask_r, H, W)
    y = jnp.maximum(_instance_norm(y, g1_ref, be1_ref), 0.0)

    # conv2 -> InstanceNorm -> + residual (re-read from the resident input ref)
    _build_vpad(buf_ref, y, H, W)
    y = _conv3x3(buf_ref, w2_ref, mask_l, mask_r, H, W)
    y = _instance_norm(y, g2_ref, be2_ref)

    o_ref[0] = (y + x_ref[0]).astype(o_ref.dtype)


# ---------------- pallas_call wrapper ----------------

def _vmem_limit_bytes(C, H, W):
    f32 = 4
    img = C * H * W * f32                       # one (C, H*W) activation block
    buf = C * (H + 4) * W * f32                 # padded-row scratch
    wts = 2 * (9 * C * C + 2 * C) * f32         # both convs + IN affine params
    # double-buffered in/out blocks + scratch + params + headroom for in-kernel
    # temporaries (tap slabs, conv accumulator, norm stats).
    est = 4 * img + buf + 2 * wts + 10 * img + (4 << 20)
    try:
        phys = int(getattr(pltpu.get_tpu_info(), "vmem_capacity_bytes", 128 << 20))
    except Exception:
        phys = 128 << 20
    return int(min(max(est, 16 << 20), int(phys * 0.85)))


def residual_block(x_nchw, params):
    """ResidualBlock.forward. x_nchw: (N, C, H, W) f32 -> (N, C, H, W) f32."""
    N, C, H, W = x_nchw.shape
    assert H >= 2 and W >= 2, "ReflectionPad2d(1) needs H, W >= 2"
    HW = H * W

    # Free row-major reshape (no HBM traffic, no transposes): NCHW as (N,C,H*W).
    x = x_nchw.reshape(N, C, HW)

    # HWIO (3,3,Cin,Cout) -> (3,3,Cout,Cin) so each tap dot is (Cout,Cin)x(Cin,HW).
    w1 = jnp.transpose(params["w1"], (0, 1, 3, 2))
    w2 = jnp.transpose(params["w2"], (0, 1, 3, 2))
    col = lambda p: p.reshape(C, 1)
    # Conv biases b1/b2 intentionally NOT passed: a per-channel constant added
    # before InstanceNorm is exactly cancelled by the mean subtraction.

    full = lambda shape: pl.BlockSpec(shape, lambda n: (0,) * len(shape))
    kernel = functools.partial(_residual_block_kernel, H=H, W=W)

    out = pl.pallas_call(
        kernel,
        out_shape=jax.ShapeDtypeStruct((N, C, HW), jnp.float32),
        grid=(N,),  # one image per step; N>=2 keeps both v7x TensorCores busy
        in_specs=[
            pl.BlockSpec((1, C, HW), lambda n: (n, 0, 0)),
            full((3, 3, C, C)), full((C, 1)), full((C, 1)),
            full((3, 3, C, C)), full((C, 1)), full((C, 1)),
        ],
        out_specs=pl.BlockSpec((1, C, HW), lambda n: (n, 0, 0)),
        scratch_shapes=[pltpu.VMEM((C, (H + 4) * W), jnp.float32)],
        compiler_params=pltpu.CompilerParams(
            dimension_semantics=("parallel",),
            vmem_limit_bytes=_vmem_limit_bytes(C, H, W)),
    )(x, w1, col(params["g1"]), col(params["beta1"]),
      w2, col(params["g2"]), col(params["beta2"]))

    return out.reshape(N, C, H, W)


# ---------------- pure-JAX reference (for correctness check) ----------------

def _ref_block(x_nchw, p):
    x = jnp.transpose(x_nchw, (0, 2, 3, 1))
    pad = ((0, 0), (1, 1), (1, 1), (0, 0))

    def conv(z, w, b):
        zp = jnp.pad(z, pad, mode="reflect")
        y = lax.conv_general_dilated(zp, w, (1, 1), "VALID",
                                     dimension_numbers=("NHWC", "HWIO", "NHWC"),
                                     precision=lax.Precision.HIGHEST)
        return y + b

    def inorm(y, g, beta):
        mean = jnp.mean(y, axis=(1, 2), keepdims=True)
        var = jnp.mean((y - mean) ** 2, axis=(1, 2), keepdims=True)
        return (y - mean) * lax.rsqrt(var + EPS) * g + beta

    h = jax.nn.relu(inorm(conv(x, p["w1"], p["b1"]), p["g1"], p["beta1"]))
    o = inorm(conv(h, p["w2"], p["b2"]), p["g2"], p["beta2"]) + x
    return jnp.transpose(o, (0, 3, 1, 2))


# ---------------- main ----------------

if __name__ == "__main__":
    N, C, H, W = 2, 4, 16, 16
    key = jax.random.PRNGKey(0)
    kx, kw1, kb1, kg1, kB1, kw2, kb2, kg2, kB2 = jax.random.split(key, 9)

    x = jax.random.normal(kx, (N, C, H, W), jnp.float32)

    # Conv weights stored HWIO (3,3,Cin,Cout); InstanceNorm affine per channel.
    # Biases are kept in params/reference only, to exercise the exact-cancellation.
    params = {
        "w1": 0.1 * jax.random.normal(kw1, (3, 3, C, C), jnp.float32),
        "b1": 0.1 * jax.random.normal(kb1, (C,), jnp.float32),
        "g1": 1.0 + 0.1 * jax.random.normal(kg1, (C,), jnp.float32),
        "beta1": 0.1 * jax.random.normal(kB1, (C,), jnp.float32),
        "w2": 0.1 * jax.random.normal(kw2, (3, 3, C, C), jnp.float32),
        "b2": 0.1 * jax.random.normal(kb2, (C,), jnp.float32),
        "g2": 1.0 + 0.1 * jax.random.normal(kg2, (C,), jnp.float32),
        "beta2": 0.1 * jax.random.normal(kB2, (C,), jnp.float32),
    }

    out = jax.block_until_ready(jax.jit(residual_block)(x, params))
    ref = jax.block_until_ready(_ref_block(x, params))

    assert out.shape == (N, C, H, W)
    assert jnp.allclose(out, ref, atol=2e-3, rtol=2e-3), "mismatch vs reference"

    print("KERNEL_OK")
</pallas_src>

<mosaic_0001>
module attributes {stable_mosaic.version = 11 : i64} {
  func.func @_residual_block_kernel(%arg0: i32, %arg1: memref<1x4x256xf32, #tpu.memory_space<vmem>>, %arg2: memref<3x3x4x4xf32, #tpu.memory_space<vmem>>, %arg3: memref<4x1xf32, #tpu.memory_space<vmem>>, %arg4: memref<4x1xf32, #tpu.memory_space<vmem>>, %arg5: memref<3x3x4x4xf32, #tpu.memory_space<vmem>>, %arg6: memref<4x1xf32, #tpu.memory_space<vmem>>, %arg7: memref<4x1xf32, #tpu.memory_space<vmem>>, %arg8: memref<1x4x256xf32, #tpu.memory_space<vmem>>, %arg9: memref<4x320xf32, #tpu.memory_space<vmem>>) attributes {dimension_semantics = [#tpu.dimension_semantics<parallel>], iteration_bounds = array<i64: 2>, scalar_prefetch = 0 : i64, scratch_operands = 1 : i64, tpu.core_type = #tpu.core_type<tc>, window_params = [{transform_indices = @transform_0, window_bounds = array<i64: 1, 4, 256>}, {pipeline_mode = #tpu.pipeline_mode<synchronous>, transform_indices = @transform_1, window_bounds = array<i64: 3, 3, 4, 4>}, {pipeline_mode = #tpu.pipeline_mode<synchronous>, transform_indices = @transform_2, window_bounds = array<i64: 4, 1>}, {pipeline_mode = #tpu.pipeline_mode<synchronous>, transform_indices = @transform_3, window_bounds = array<i64: 4, 1>}, {pipeline_mode = #tpu.pipeline_mode<synchronous>, transform_indices = @transform_4, window_bounds = array<i64: 3, 3, 4, 4>}, {pipeline_mode = #tpu.pipeline_mode<synchronous>, transform_indices = @transform_5, window_bounds = array<i64: 4, 1>}, {pipeline_mode = #tpu.pipeline_mode<synchronous>, transform_indices = @transform_6, window_bounds = array<i64: 4, 1>}, {transform_indices = @transform_7, window_bounds = array<i64: 1, 4, 256>}]} {
    %0 = tpu.iota {dimensions = array<i32: 1>} : vector<1x256xi32>
    %c16_i32 = arith.constant 16 : i32
    %c0_i32 = arith.constant 0 : i32
    %1 = arith.cmpi eq, %c16_i32, %c0_i32 : i32
    %c1_i32 = arith.constant 1 : i32
    %2 = arith.select %1, %c1_i32, %c16_i32 : i32
    %3 = vector.broadcast %2 : i32 to vector<1x256xi32>
    %4 = arith.remsi %0, %3 : vector<1x256xi32>
    %c0_i32_0 = arith.constant 0 : i32
    %5 = vector.broadcast %c0_i32_0 : i32 to vector<1x256xi32>
    %6 = arith.cmpi ne, %4, %5 : vector<1x256xi32>
    %c0_i32_1 = arith.constant 0 : i32
    %7 = vector.broadcast %c0_i32_1 : i32 to vector<1x256xi32>
    %8 = arith.cmpi slt, %4, %7 : vector<1x256xi32>
    %c0_i32_2 = arith.constant 0 : i32
    %9 = arith.cmpi slt, %2, %c0_i32_2 : i32
    %10 = vector.broadcast %9 : i1 to vector<1x256xi1>
    %11 = vector.broadcast %10 : vector<1x256xi1> to vector<1x256xi1>
    %12 = arith.xori %8, %11 : vector<1x256xi1>
    %13 = arith.andi %12, %6 : vector<1x256xi1>
    %14 = vector.broadcast %2 : i32 to vector<1x256xi32>
    %15 = arith.addi %4, %14 : vector<1x256xi32>
    %16 = arith.select %13, %15, %4 : vector<1x256xi1>, vector<1x256xi32>
    %c0_i32_3 = arith.constant 0 : i32
    %17 = vector.broadcast %c0_i32_3 : i32 to vector<1x256xi32>
    %18 = arith.cmpi eq, %16, %17 : vector<1x256xi32>
    %c15_i32 = arith.constant 15 : i32
    %19 = vector.broadcast %c15_i32 : i32 to vector<1x256xi32>
    %20 = arith.cmpi eq, %16, %19 : vector<1x256xi32>
    %c0 = arith.constant 0 : index
    %c0_4 = arith.constant 0 : index
    %c0_5 = arith.constant 0 : index
    %21 = vector.load %arg1[%c0, %c0_4, %c0_5] : memref<1x4x256xf32, #tpu.memory_space<vmem>>, vector<1x4x256xf32>
    %22 = vector.shape_cast %21 : vector<1x4x256xf32> to vector<4x256xf32>
    %cst = arith.constant 0.000000e+00 : f32
    %23 = vector.broadcast %cst : f32 to vector<4x16xf32>
    %c0_6 = arith.constant 0 : index
    %c32 = arith.constant 32 : index
    %24 = vector.load %arg9[%c0_6, %c32] : memref<4x320xf32, #tpu.memory_space<vmem>>, vector<4x256xf32>
    tpu.vector_store %arg9[%c0_6, %c32], %22 {strides = array<i32>} : memref<4x320xf32, #tpu.memory_space<vmem>>, vector<4x256xf32>,
    %25 = vector.extract_strided_slice %22 {offsets = [0, 16], sizes = [4, 16], strides = [1, 1]} : vector<4x256xf32> to vector<4x16xf32>
    %c0_7 = arith.constant 0 : index
    %c16 = arith.constant 16 : index
    %26 = vector.load %arg9[%c0_7, %c16] : memref<4x320xf32, #tpu.memory_space<vmem>>, vector<4x16xf32>
    tpu.vector_store %arg9[%c0_7, %c16], %25 {strides = array<i32>} : memref<4x320xf32, #tpu.memory_space<vmem>>, vector<4x16xf32>,
    %27 = vector.extract_strided_slice %22 {offsets = [0, 224], sizes = [4, 16], strides = [1, 1]} : vector<4x256xf32> to vector<4x16xf32>
    %c0_8 = arith.constant 0 : index
    %c288 = arith.constant 288 : index
    %28 = vector.load %arg9[%c0_8, %c288] : memref<4x320xf32, #tpu.memory_space<vmem>>, vector<4x16xf32>
    tpu.vector_store %arg9[%c0_8, %c288], %27 {strides = array<i32>} : memref<4x320xf32, #tpu.memory_space<vmem>>, vector<4x16xf32>,
    %c0_9 = arith.constant 0 : index
    %c0_10 = arith.constant 0 : index
    %29 = vector.load %arg9[%c0_9, %c0_10] : memref<4x320xf32, #tpu.memory_space<vmem>>, vector<4x16xf32>
    tpu.vector_store %arg9[%c0_9, %c0_10], %23 {strides = array<i32>} : memref<4x320xf32, #tpu.memory_space<vmem>>, vector<4x16xf32>,
    %c0_11 = arith.constant 0 : index
    %c304 = arith.constant 304 : index
    %30 = vector.load %arg9[%c0_11, %c304] : memref<4x320xf32, #tpu.memory_space<vmem>>, vector<4x16xf32>
    tpu.vector_store %arg9[%c0_11, %c304], %23 {strides = array<i32>} : memref<4x320xf32, #tpu.memory_space<vmem>>, vector<4x16xf32>,
    %cst_12 = arith.constant 0.000000e+00 : f32
    %31 = vector.broadcast %cst_12 : f32 to vector<4x256xf32>
    %c0_13 = arith.constant 0 : index
    %c15 = arith.constant 15 : index
    %32 = vector.load %arg9[%c0_13, %c15] : memref<4x320xf32, #tpu.memory_space<vmem>>, vector<4x256xf32>
    %c0_14 = arith.constant 0 : index
    %c16_15 = arith.constant 16 : index
    %33 = vector.load %arg9[%c0_14, %c16_15] : memref<4x320xf32, #tpu.memory_space<vmem>>, vector<4x256xf32>
    %c0_16 = arith.constant 0 : index
    %c17 = arith.constant 17 : index
    %34 = vector.load %arg9[%c0_16, %c17] : memref<4x320xf32, #tpu.memory_space<vmem>>, vector<4x256xf32>
    %35 = vector.shape_cast %18 : vector<1x256xi1> to vector<1x256xi1>
    %36 = vector.broadcast %35 : vector<1x256xi1> to vector<4x256xi1>
    %37 = arith.select %36, %34, %32 : vector<4x256xi1>, vector<4x256xf32>
    %38 = vector.shape_cast %20 : vector<1x256xi1> to vector<1x256xi1>
    %39 = vector.broadcast %38 : vector<1x256xi1> to vector<4x256xi1>
    %40 = arith.select %39, %32, %34 : vector<4x256xi1>, vector<4x256xf32>
    %c0_17 = arith.constant 0 : index
    %c0_18 = arith.constant 0 : index
    %c0_19 = arith.constant 0 : index
    %c0_20 = arith.constant 0 : index
    %41 = vector.load %arg2[%c0_17, %c0_18, %c0_19, %c0_20] : memref<3x3x4x4xf32, #tpu.memory_space<vmem>>, vector<1x1x4x4xf32>
    %42 = vector.shape_cast %41 : vector<1x1x4x4xf32> to vector<4x4xf32>
    %cst_21 = arith.constant dense<0.000000e+00> : vector<4x256xf32>
    %43 = tpu.matmul %42, %37, %cst_21 {dimension_numbers = #tpu.dot_dimension_numbers<[1], [0], [0], [1], [0, 0, 1, 1], [], []>, precision = #tpu.contract_precision<fp32>} : vector<4x4xf32>, vector<4x256xf32>, vector<4x256xf32> -> vector<4x256xf32>
    %44 = arith.addf %31, %43 : vector<4x256xf32>
    %c0_22 = arith.constant 0 : index
    %c1 = arith.constant 1 : index
    %c0_23 = arith.constant 0 : index
    %c0_24 = arith.constant 0 : index
    %45 = vector.load %arg2[%c0_22, %c1, %c0_23, %c0_24] : memref<3x3x4x4xf32, #tpu.memory_space<vmem>>, vector<1x1x4x4xf32>
    %46 = vector.shape_cast %45 : vector<1x1x4x4xf32> to vector<4x4xf32>
    %cst_25 = arith.constant dense<0.000000e+00> : vector<4x256xf32>
    %47 = tpu.matmul %46, %33, %cst_25 {dimension_numbers = #tpu.dot_dimension_numbers<[1], [0], [0], [1], [0, 0, 1, 1], [], []>, precision = #tpu.contract_precision<fp32>} : vector<4x4xf32>, vector<4x256xf32>, vector<4x256xf32> -> vector<4x256xf32>
    %48 = arith.addf %44, %47 : vector<4x256xf32>
    %c0_26 = arith.constant 0 : index
    %c2 = arith.constant 2 : index
    %c0_27 = arith.constant 0 : index
    %c0_28 = arith.constant 0 : index
    %49 = vector.load %arg2[%c0_26, %c2, %c0_27, %c0_28] : memref<3x3x4x4xf32, #tpu.memory_space<vmem>>, vector<1x1x4x4xf32>
    %50 = vector.shape_cast %49 : vector<1x1x4x4xf32> to vector<4x4xf32>
    %cst_29 = arith.constant dense<0.000000e+00> : vector<4x256xf32>
    %51 = tpu.matmul %50, %40, %cst_29 {dimension_numbers = #tpu.dot_dimension_numbers<[1], [0], [0], [1], [0, 0, 1, 1], [], []>, precision = #tpu.contract_precision<fp32>} : vector<4x4xf32>, vector<4x256xf32>, vector<4x256xf32> -> vector<4x256xf32>
    %52 = arith.addf %48, %51 : vector<4x256xf32>
    %c0_30 = arith.constant 0 : index
    %c31 = arith.constant 31 : index
    %53 = vector.load %arg9[%c0_30, %c31] : memref<4x320xf32, #tpu.memory_space<vmem>>, vector<4x256xf32>
    %c0_31 = arith.constant 0 : index
    %c32_32 = arith.constant 32 : index
    %54 = vector.load %arg9[%c0_31, %c32_32] : memref<4x320xf32, #tpu.memory_space<vmem>>, vector<4x256xf32>
    %c0_33 = arith.constant 0 : index
    %c33 = arith.constant 33 : index
    %55 = vector.load %arg9[%c0_33, %c33] : memref<4x320xf32, #tpu.memory_space<vmem>>, vector<4x256xf32>
    %56 = vector.shape_cast %18 : vector<1x256xi1> to vector<1x256xi1>
    %57 = vector.broadcast %56 : vector<1x256xi1> to vector<4x256xi1>
    %58 = arith.select %57, %55, %53 : vector<4x256xi1>, vector<4x256xf32>
    %59 = vector.shape_cast %20 : vector<1x256xi1> to vector<1x256xi1>
    %60 = vector.broadcast %59 : vector<1x256xi1> to vector<4x256xi1>
    %61 = arith.select %60, %53, %55 : vector<4x256xi1>, vector<4x256xf32>
    %c1_34 = arith.constant 1 : index
    %c0_35 = arith.constant 0 : index
    %c0_36 = arith.constant 0 : index
    %c0_37 = arith.constant 0 : index
    %62 = vector.load %arg2[%c1_34, %c0_35, %c0_36, %c0_37] : memref<3x3x4x4xf32, #tpu.memory_space<vmem>>, vector<1x1x4x4xf32>
    %63 = vector.shape_cast %62 : vector<1x1x4x4xf32> to vector<4x4xf32>
    %cst_38 = arith.constant dense<0.000000e+00> : vector<4x256xf32>
    %64 = tpu.matmul %63, %58, %cst_38 {dimension_numbers = #tpu.dot_dimension_numbers<[1], [0], [0], [1], [0, 0, 1, 1], [], []>, precision = #tpu.contract_precision<fp32>} : vector<4x4xf32>, vector<4x256xf32>, vector<4x256xf32> -> vector<4x256xf32>
    %65 = arith.addf %52, %64 : vector<4x256xf32>
    %c1_39 = arith.constant 1 : index
    %c1_40 = arith.constant 1 : index
    %c0_41 = arith.constant 0 : index
    %c0_42 = arith.constant 0 : index
    %66 = vector.load %arg2[%c1_39, %c1_40, %c0_41, %c0_42] : memref<3x3x4x4xf32, #tpu.memory_space<vmem>>, vector<1x1x4x4xf32>
    %67 = vector.shape_cast %66 : vector<1x1x4x4xf32> to vector<4x4xf32>
    %cst_43 = arith.constant dense<0.000000e+00> : vector<4x256xf32>
    %68 = tpu.matmul %67, %54, %cst_43 {dimension_numbers = #tpu.dot_dimension_numbers<[1], [0], [0], [1], [0, 0, 1, 1], [], []>, precision = #tpu.contract_precision<fp32>} : vector<4x4xf32>, vector<4x256xf32>, vector<4x256xf32> -> vector<4x256xf32>
    %69 = arith.addf %65, %68 : vector<4x256xf32>
    %c1_44 = arith.constant 1 : index
    %c2_45 = arith.constant 2 : index
    %c0_46 = arith.constant 0 : index
    %c0_47 = arith.constant 0 : index
    %70 = vector.load %arg2[%c1_44, %c2_45, %c0_46, %c0_47] : memref<3x3x4x4xf32, #tpu.memory_space<vmem>>, vector<1x1x4x4xf32>
    %71 = vector.shape_cast %70 : vector<1x1x4x4xf32> to vector<4x4xf32>
    %cst_48 = arith.constant dense<0.000000e+00> : vector<4x256xf32>
    %72 = tpu.matmul %71, %61, %cst_48 {dimension_numbers = #tpu.dot_dimension_numbers<[1], [0], [0], [1], [0, 0, 1, 1], [], []>, precision = #tpu.contract_precision<fp32>} : vector<4x4xf32>, vector<4x256xf32>, vector<4x256xf32> -> vector<4x256xf32>
    %73 = arith.addf %69, %72 : vector<4x256xf32>
    %c0_49 = arith.constant 0 : index
    %c47 = arith.constant 47 : index
    %74 = vector.load %arg9[%c0_49, %c47] : memref<4x320xf32, #tpu.memory_space<vmem>>, vector<4x256xf32>
    %c0_50 = arith.constant 0 : index
    %c48 = arith.constant 48 : index
    %75 = vector.load %arg9[%c0_50, %c48] : memref<4x320xf32, #tpu.memory_space<vmem>>, vector<4x256xf32>
    %c0_51 = arith.constant 0 : index
    %c49 = arith.constant 49 : index
    %76 = vector.load %arg9[%c0_51, %c49] : memref<4x320xf32, #tpu.memory_space<vmem>>, vector<4x256xf32>
    %77 = vector.shape_cast %18 : vector<1x256xi1> to vector<1x256xi1>
    %78 = vector.broadcast %77 : vector<1x256xi1> to vector<4x256xi1>
    %79 = arith.select %78, %76, %74 : vector<4x256xi1>, vector<4x256xf32>
    %80 = vector.shape_cast %20 : vector<1x256xi1> to vector<1x256xi1>
    %81 = vector.broadcast %80 : vector<1x256xi1> to vector<4x256xi1>
    %82 = arith.select %81, %74, %76 : vector<4x256xi1>, vector<4x256xf32>
    %c2_52 = arith.constant 2 : index
    %c0_53 = arith.constant 0 : index
    %c0_54 = arith.constant 0 : index
    %c0_55 = arith.constant 0 : index
    %83 = vector.load %arg2[%c2_52, %c0_53, %c0_54, %c0_55] : memref<3x3x4x4xf32, #tpu.memory_space<vmem>>, vector<1x1x4x4xf32>
    %84 = vector.shape_cast %83 : vector<1x1x4x4xf32> to vector<4x4xf32>
    %cst_56 = arith.constant dense<0.000000e+00> : vector<4x256xf32>
    %85 = tpu.matmul %84, %79, %cst_56 {dimension_numbers = #tpu.dot_dimension_numbers<[1], [0], [0], [1], [0, 0, 1, 1], [], []>, precision = #tpu.contract_precision<fp32>} : vector<4x4xf32>, vector<4x256xf32>, vector<4x256xf32> -> vector<4x256xf32>
    %86 = arith.addf %73, %85 : vector<4x256xf32>
    %c2_57 = arith.constant 2 : index
    %c1_58 = arith.constant 1 : index
    %c0_59 = arith.constant 0 : index
    %c0_60 = arith.constant 0 : index
    %87 = vector.load %arg2[%c2_57, %c1_58, %c0_59, %c0_60] : memref<3x3x4x4xf32, #tpu.memory_space<vmem>>, vector<1x1x4x4xf32>
    %88 = vector.shape_cast %87 : vector<1x1x4x4xf32> to vector<4x4xf32>
    %cst_61 = arith.constant dense<0.000000e+00> : vector<4x256xf32>
    %89 = tpu.matmul %88, %75, %cst_61 {dimension_numbers = #tpu.dot_dimension_numbers<[1], [0], [0], [1], [0, 0, 1, 1], [], []>, precision = #tpu.contract_precision<fp32>} : vector<4x4xf32>, vector<4x256xf32>, vector<4x256xf32> -> vector<4x256xf32>
    %90 = arith.addf %86, %89 : vector<4x256xf32>
    %c2_62 = arith.constant 2 : index
    %c2_63 = arith.constant 2 : index
    %c0_64 = arith.constant 0 : index
    %c0_65 = arith.constant 0 : index
    %91 = vector.load %arg2[%c2_62, %c2_63, %c0_64, %c0_65] : memref<3x3x4x4xf32, #tpu.memory_space<vmem>>, vector<1x1x4x4xf32>
    %92 = vector.shape_cast %91 : vector<1x1x4x4xf32> to vector<4x4xf32>
    %cst_66 = arith.constant dense<0.000000e+00> : vector<4x256xf32>
    %93 = tpu.matmul %92, %82, %cst_66 {dimension_numbers = #tpu.dot_dimension_numbers<[1], [0], [0], [1], [0, 0, 1, 1], [], []>, precision = #tpu.contract_precision<fp32>} : vector<4x4xf32>, vector<4x256xf32>, vector<4x256xf32> -> vector<4x256xf32>
    %94 = arith.addf %90, %93 : vector<4x256xf32>
    %cst_67 = arith.constant dense<0.000000e+00> : vector<4xf32>
    %95 = vector.multi_reduction <add>, %94, %cst_67 [1] : vector<4x256xf32> to vector<4xf32>
    %96 = vector.shape_cast %95 : vector<4xf32> to vector<4x1xf32>
    %cst_68 = arith.constant 2.560000e+02 : f32
    %97 = vector.broadcast %cst_68 : f32 to vector<4x1xf32>
    %98 = arith.divf %96, %97 : vector<4x1xf32>
    %99 = vector.broadcast %98 : vector<4x1xf32> to vector<4x256xf32>
    %100 = arith.subf %94, %99 : vector<4x256xf32>
    %101 = arith.mulf %100, %100 : vector<4x256xf32>
    %cst_69 = arith.constant dense<0.000000e+00> : vector<4xf32>
    %102 = vector.multi_reduction <add>, %101, %cst_69 [1] : vector<4x256xf32> to vector<4xf32>
    %103 = vector.shape_cast %102 : vector<4xf32> to vector<4x1xf32>
    %cst_70 = arith.constant 2.560000e+02 : f32
    %104 = vector.broadcast %cst_70 : f32 to vector<4x1xf32>
    %105 = arith.divf %103, %104 : vector<4x1xf32>
    %106 = vector.broadcast %98 : vector<4x1xf32> to vector<4x256xf32>
    %107 = arith.subf %94, %106 : vector<4x256xf32>
    %cst_71 = arith.constant 9.99999974E-6 : f32
    %108 = vector.broadcast %cst_71 : f32 to vector<4x1xf32>
    %109 = arith.addf %105, %108 : vector<4x1xf32>
    %110 = math.rsqrt %109 : vector<4x1xf32>
    %111 = vector.broadcast %110 : vector<4x1xf32> to vector<4x256xf32>
    %112 = arith.mulf %107, %111 : vector<4x256xf32>
    %c0_72 = arith.constant 0 : index
    %c0_73 = arith.constant 0 : index
    %113 = vector.load %arg3[%c0_72, %c0_73] : memref<4x1xf32, #tpu.memory_space<vmem>>, vector<4x1xf32>
    %114 = vector.broadcast %113 : vector<4x1xf32> to vector<4x256xf32>
    %115 = arith.mulf %112, %114 : vector<4x256xf32>
    %c0_74 = arith.constant 0 : index
    %c0_75 = arith.constant 0 : index
    %116 = vector.load %arg4[%c0_74, %c0_75] : memref<4x1xf32, #tpu.memory_space<vmem>>, vector<4x1xf32>
    %117 = vector.broadcast %116 : vector<4x1xf32> to vector<4x256xf32>
    %118 = arith.addf %115, %117 : vector<4x256xf32>
    %cst_76 = arith.constant 0.000000e+00 : f32
    %119 = vector.broadcast %cst_76 : f32 to vector<4x256xf32>
    %120 = arith.maximumf %118, %119 : vector<4x256xf32>
    %cst_77 = arith.constant 0.000000e+00 : f32
    %121 = vector.broadcast %cst_77 : f32 to vector<4x16xf32>
    %c0_78 = arith.constant 0 : index
    %c32_79 = arith.constant 32 : index
    %122 = vector.load %arg9[%c0_78, %c32_79] : memref<4x320xf32, #tpu.memory_space<vmem>>, vector<4x256xf32>
    tpu.vector_store %arg9[%c0_78, %c32_79], %120 {strides = array<i32>} : memref<4x320xf32, #tpu.memory_space<vmem>>, vector<4x256xf32>,
    %123 = vector.extract_strided_slice %120 {offsets = [0, 16], sizes = [4, 16], strides = [1, 1]} : vector<4x256xf32> to vector<4x16xf32>
    %c0_80 = arith.constant 0 : index
    %c16_81 = arith.constant 16 : index
    %124 = vector.load %arg9[%c0_80, %c16_81] : memref<4x320xf32, #tpu.memory_space<vmem>>, vector<4x16xf32>
    tpu.vector_store %arg9[%c0_80, %c16_81], %123 {strides = array<i32>} : memref<4x320xf32, #tpu.memory_space<vmem>>, vector<4x16xf32>,
    %125 = vector.extract_strided_slice %120 {offsets = [0, 224], sizes = [4, 16], strides = [1, 1]} : vector<4x256xf32> to vector<4x16xf32>
    %c0_82 = arith.constant 0 : index
    %c288_83 = arith.constant 288 : index
    %126 = vector.load %arg9[%c0_82, %c288_83] : memref<4x320xf32, #tpu.memory_space<vmem>>, vector<4x16xf32>
    tpu.vector_store %arg9[%c0_82, %c288_83], %125 {strides = array<i32>} : memref<4x320xf32, #tpu.memory_space<vmem>>, vector<4x16xf32>,
    %c0_84 = arith.constant 0 : index
    %c0_85 = arith.constant 0 : index
    %127 = vector.load %arg9[%c0_84, %c0_85] : memref<4x320xf32, #tpu.memory_space<vmem>>, vector<4x16xf32>
    tpu.vector_store %arg9[%c0_84, %c0_85], %121 {strides = array<i32>} : memref<4x320xf32, #tpu.memory_space<vmem>>, vector<4x16xf32>,
    %c0_86 = arith.constant 0 : index
    %c304_87 = arith.constant 304 : index
    %128 = vector.load %arg9[%c0_86, %c304_87] : memref<4x320xf32, #tpu.memory_space<vmem>>, vector<4x16xf32>
    tpu.vector_store %arg9[%c0_86, %c304_87], %121 {strides = array<i32>} : memref<4x320xf32, #tpu.memory_space<vmem>>, vector<4x16xf32>,
    %cst_88 = arith.constant 0.000000e+00 : f32
    %129 = vector.broadcast %cst_88 : f32 to vector<4x256xf32>
    %c0_89 = arith.constant 0 : index
    %c15_90 = arith.constant 15 : index
    %130 = vector.load %arg9[%c0_89, %c15_90] : memref<4x320xf32, #tpu.memory_space<vmem>>, vector<4x256xf32>
    %c0_91 = arith.constant 0 : index
    %c16_92 = arith.constant 16 : index
    %131 = vector.load %arg9[%c0_91, %c16_92] : memref<4x320xf32, #tpu.memory_space<vmem>>, vector<4x256xf32>
    %c0_93 = arith.constant 0 : index
    %c17_94 = arith.constant 17 : index
    %132 = vector.load %arg9[%c0_93, %c17_94] : memref<4x320xf32, #tpu.memory_space<vmem>>, vector<4x256xf32>
    %133 = vector.shape_cast %18 : vector<1x256xi1> to vector<1x256xi1>
    %134 = vector.broadcast %133 : vector<1x256xi1> to vector<4x256xi1>
    %135 = arith.select %134, %132, %130 : vector<4x256xi1>, vector<4x256xf32>
    %136 = vector.shape_cast %20 : vector<1x256xi1> to vector<1x256xi1>
    %137 = vector.broadcast %136 : vector<1x256xi1> to vector<4x256xi1>
    %138 = arith.select %137, %130, %132 : vector<4x256xi1>, vector<4x256xf32>
    %c0_95 = arith.constant 0 : index
    %c0_96 = arith.constant 0 : index
    %c0_97 = arith.constant 0 : index
    %c0_98 = arith.constant 0 : index
    %139 = vector.load %arg5[%c0_95, %c0_96, %c0_97, %c0_98] : memref<3x3x4x4xf32, #tpu.memory_space<vmem>>, vector<1x1x4x4xf32>
    %140 = vector.shape_cast %139 : vector<1x1x4x4xf32> to vector<4x4xf32>
    %cst_99 = arith.constant dense<0.000000e+00> : vector<4x256xf32>
    %141 = tpu.matmul %140, %135, %cst_99 {dimension_numbers = #tpu.dot_dimension_numbers<[1], [0], [0], [1], [0, 0, 1, 1], [], []>, precision = #tpu.contract_precision<fp32>} : vector<4x4xf32>, vector<4x256xf32>, vector<4x256xf32> -> vector<4x256xf32>
    %142 = arith.addf %129, %141 : vector<4x256xf32>
    %c0_100 = arith.constant 0 : index
    %c1_101 = arith.constant 1 : index
    %c0_102 = arith.constant 0 : index
    %c0_103 = arith.constant 0 : index
    %143 = vector.load %arg5[%c0_100, %c1_101, %c0_102, %c0_103] : memref<3x3x4x4xf32, #tpu.memory_space<vmem>>, vector<1x1x4x4xf32>
    %144 = vector.shape_cast %143 : vector<1x1x4x4xf32> to vector<4x4xf32>
    %cst_104 = arith.constant dense<0.000000e+00> : vector<4x256xf32>
    %145 = tpu.matmul %144, %131, %cst_104 {dimension_numbers = #tpu.dot_dimension_numbers<[1], [0], [0], [1], [0, 0, 1, 1], [], []>, precision = #tpu.contract_precision<fp32>} : vector<4x4xf32>, vector<4x256xf32>, vector<4x256xf32> -> vector<4x256xf32>
    %146 = arith.addf %142, %145 : vector<4x256xf32>
    %c0_105 = arith.constant 0 : index
    %c2_106 = arith.constant 2 : index
    %c0_107 = arith.constant 0 : index
    %c0_108 = arith.constant 0 : index
    %147 = vector.load %arg5[%c0_105, %c2_106, %c0_107, %c0_108] : memref<3x3x4x4xf32, #tpu.memory_space<vmem>>, vector<1x1x4x4xf32>
    %148 = vector.shape_cast %147 : vector<1x1x4x4xf32> to vector<4x4xf32>
    %cst_109 = arith.constant dense<0.000000e+00> : vector<4x256xf32>
    %149 = tpu.matmul %148, %138, %cst_109 {dimension_numbers = #tpu.dot_dimension_numbers<[1], [0], [0], [1], [0, 0, 1, 1], [], []>, precision = #tpu.contract_precision<fp32>} : vector<4x4xf32>, vector<4x256xf32>, vector<4x256xf32> -> vector<4x256xf32>
    %150 = arith.addf %146, %149 : vector<4x256xf32>
    %c0_110 = arith.constant 0 : index
    %c31_111 = arith.constant 31 : index
    %151 = vector.load %arg9[%c0_110, %c31_111] : memref<4x320xf32, #tpu.memory_space<vmem>>, vector<4x256xf32>
    %c0_112 = arith.constant 0 : index
    %c32_113 = arith.constant 32 : index
    %152 = vector.load %arg9[%c0_112, %c32_113] : memref<4x320xf32, #tpu.memory_space<vmem>>, vector<4x256xf32>
    %c0_114 = arith.constant 0 : index
    %c33_115 = arith.constant 33 : index
    %153 = vector.load %arg9[%c0_114, %c33_115] : memref<4x320xf32, #tpu.memory_space<vmem>>, vector<4x256xf32>
    %154 = vector.shape_cast %18 : vector<1x256xi1> to vector<1x256xi1>
    %155 = vector.broadcast %154 : vector<1x256xi1> to vector<4x256xi1>
    %156 = arith.select %155, %153, %151 : vector<4x256xi1>, vector<4x256xf32>
    %157 = vector.shape_cast %20 : vector<1x256xi1> to vector<1x256xi1>
    %158 = vector.broadcast %157 : vector<1x256xi1> to vector<4x256xi1>
    %159 = arith.select %158, %151, %153 : vector<4x256xi1>, vector<4x256xf32>
    %c1_116 = arith.constant 1 : index
    %c0_117 = arith.constant 0 : index
    %c0_118 = arith.constant 0 : index
    %c0_119 = arith.constant 0 : index
    %160 = vector.load %arg5[%c1_116, %c0_117, %c0_118, %c0_119] : memref<3x3x4x4xf32, #tpu.memory_space<vmem>>, vector<1x1x4x4xf32>
    %161 = vector.shape_cast %160 : vector<1x1x4x4xf32> to vector<4x4xf32>
    %cst_120 = arith.constant dense<0.000000e+00> : vector<4x256xf32>
    %162 = tpu.matmul %161, %156, %cst_120 {dimension_numbers = #tpu.dot_dimension_numbers<[1], [0], [0], [1], [0, 0, 1, 1], [], []>, precision = #tpu.contract_precision<fp32>} : vector<4x4xf32>, vector<4x256xf32>, vector<4x256xf32> -> vector<4x256xf32>
    %163 = arith.addf %150, %162 : vector<4x256xf32>
    %c1_121 = arith.constant 1 : index
    %c1_122 = arith.constant 1 : index
    %c0_123 = arith.constant 0 : index
    %c0_124 = arith.constant 0 : index
    %164 = vector.load %arg5[%c1_121, %c1_122, %c0_123, %c0_124] : memref<3x3x4x4xf32, #tpu.memory_space<vmem>>, vector<1x1x4x4xf32>
    %165 = vector.shape_cast %164 : vector<1x1x4x4xf32> to vector<4x4xf32>
    %cst_125 = arith.constant dense<0.000000e+00> : vector<4x256xf32>
    %166 = tpu.matmul %165, %152, %cst_125 {dimension_numbers = #tpu.dot_dimension_numbers<[1], [0], [0], [1], [0, 0, 1, 1], [], []>, precision = #tpu.contract_precision<fp32>} : vector<4x4xf32>, vector<4x256xf32>, vector<4x256xf32> -> vector<4x256xf32>
    %167 = arith.addf %163, %166 : vector<4x256xf32>
    %c1_126 = arith.constant 1 : index
    %c2_127 = arith.constant 2 : index
    %c0_128 = arith.constant 0 : index
    %c0_129 = arith.constant 0 : index
    %168 = vector.load %arg5[%c1_126, %c2_127, %c0_128, %c0_129] : memref<3x3x4x4xf32, #tpu.memory_space<vmem>>, vector<1x1x4x4xf32>
    %169 = vector.shape_cast %168 : vector<1x1x4x4xf32> to vector<4x4xf32>
    %cst_130 = arith.constant dense<0.000000e+00> : vector<4x256xf32>
    %170 = tpu.matmul %169, %159, %cst_130 {dimension_numbers = #tpu.dot_dimension_numbers<[1], [0], [0], [1], [0, 0, 1, 1], [], []>, precision = #tpu.contract_precision<fp32>} : vector<4x4xf32>, vector<4x256xf32>, vector<4x256xf32> -> vector<4x256xf32>
    %171 = arith.addf %167, %170 : vector<4x256xf32>
    %c0_131 = arith.constant 0 : index
    %c47_132 = arith.constant 47 : index
    %172 = vector.load %arg9[%c0_131, %c47_132] : memref<4x320xf32, #tpu.memory_space<vmem>>, vector<4x256xf32>
    %c0_133 = arith.constant 0 : index
    %c48_134 = arith.constant 48 : index
    %173 = vector.load %arg9[%c0_133, %c48_134] : memref<4x320xf32, #tpu.memory_space<vmem>>, vector<4x256xf32>
    %c0_135 = arith.constant 0 : index
    %c49_136 = arith.constant 49 : index
    %174 = vector.load %arg9[%c0_135, %c49_136] : memref<4x320xf32, #tpu.memory_space<vmem>>, vector<4x256xf32>
    %175 = vector.shape_cast %18 : vector<1x256xi1> to vector<1x256xi1>
    %176 = vector.broadcast %175 : vector<1x256xi1> to vector<4x256xi1>
    %177 = arith.select %176, %174, %172 : vector<4x256xi1>, vector<4x256xf32>
    %178 = vector.shape_cast %20 : vector<1x256xi1> to vector<1x256xi1>
    %179 = vector.broadcast %178 : vector<1x256xi1> to vector<4x256xi1>
    %180 = arith.select %179, %172, %174 : vector<4x256xi1>, vector<4x256xf32>
    %c2_137 = arith.constant 2 : index
    %c0_138 = arith.constant 0 : index
    %c0_139 = arith.constant 0 : index
    %c0_140 = arith.constant 0 : index
    %181 = vector.load %arg5[%c2_137, %c0_138, %c0_139, %c0_140] : memref<3x3x4x4xf32, #tpu.memory_space<vmem>>, vector<1x1x4x4xf32>
    %182 = vector.shape_cast %181 : vector<1x1x4x4xf32> to vector<4x4xf32>
    %cst_141 = arith.constant dense<0.000000e+00> : vector<4x256xf32>
    %183 = tpu.matmul %182, %177, %cst_141 {dimension_numbers = #tpu.dot_dimension_numbers<[1], [0], [0], [1], [0, 0, 1, 1], [], []>, precision = #tpu.contract_precision<fp32>} : vector<4x4xf32>, vector<4x256xf32>, vector<4x256xf32> -> vector<4x256xf32>
    %184 = arith.addf %171, %183 : vector<4x256xf32>
    %c2_142 = arith.constant 2 : index
    %c1_143 = arith.constant 1 : index
    %c0_144 = arith.constant 0 : index
    %c0_145 = arith.constant 0 : index
    %185 = vector.load %arg5[%c2_142, %c1_143, %c0_144, %c0_145] : memref<3x3x4x4xf32, #tpu.memory_space<vmem>>, vector<1x1x4x4xf32>
    %186 = vector.shape_cast %185 : vector<1x1x4x4xf32> to vector<4x4xf32>
    %cst_146 = arith.constant dense<0.000000e+00> : vector<4x256xf32>
    %187 = tpu.matmul %186, %173, %cst_146 {dimension_numbers = #tpu.dot_dimension_numbers<[1], [0], [0], [1], [0, 0, 1, 1], [], []>, precision = #tpu.contract_precision<fp32>} : vector<4x4xf32>, vector<4x256xf32>, vector<4x256xf32> -> vector<4x256xf32>
    %188 = arith.addf %184, %187 : vector<4x256xf32>
    %c2_147 = arith.constant 2 : index
    %c2_148 = arith.constant 2 : index
    %c0_149 = arith.constant 0 : index
    %c0_150 = arith.constant 0 : index
    %189 = vector.load %arg5[%c2_147, %c2_148, %c0_149, %c0_150] : memref<3x3x4x4xf32, #tpu.memory_space<vmem>>, vector<1x1x4x4xf32>
    %190 = vector.shape_cast %189 : vector<1x1x4x4xf32> to vector<4x4xf32>
    %cst_151 = arith.constant dense<0.000000e+00> : vector<4x256xf32>
    %191 = tpu.matmul %190, %180, %cst_151 {dimension_numbers = #tpu.dot_dimension_numbers<[1], [0], [0], [1], [0, 0, 1, 1], [], []>, precision = #tpu.contract_precision<fp32>} : vector<4x4xf32>, vector<4x256xf32>, vector<4x256xf32> -> vector<4x256xf32>
    %192 = arith.addf %188, %191 : vector<4x256xf32>
    %cst_152 = arith.constant dense<0.000000e+00> : vector<4xf32>
    %193 = vector.multi_reduction <add>, %192, %cst_152 [1] : vector<4x256xf32> to vector<4xf32>
    %194 = vector.shape_cast %193 : vector<4xf32> to vector<4x1xf32>
    %cst_153 = arith.constant 2.560000e+02 : f32
    %195 = vector.broadcast %cst_153 : f32 to vector<4x1xf32>
    %196 = arith.divf %194, %195 : vector<4x1xf32>
    %197 = vector.broadcast %196 : vector<4x1xf32> to vector<4x256xf32>
    %198 = arith.subf %192, %197 : vector<4x256xf32>
    %199 = arith.mulf %198, %198 : vector<4x256xf32>
    %cst_154 = arith.constant dense<0.000000e+00> : vector<4xf32>
    %200 = vector.multi_reduction <add>, %199, %cst_154 [1] : vector<4x256xf32> to vector<4xf32>
    %201 = vector.shape_cast %200 : vector<4xf32> to vector<4x1xf32>
    %cst_155 = arith.constant 2.560000e+02 : f32
    %202 = vector.broadcast %cst_155 : f32 to vector<4x1xf32>
    %203 = arith.divf %201, %202 : vector<4x1xf32>
    %204 = vector.broadcast %196 : vector<4x1xf32> to vector<4x256xf32>
    %205 = arith.subf %192, %204 : vector<4x256xf32>
    %cst_156 = arith.constant 9.99999974E-6 : f32
    %206 = vector.broadcast %cst_156 : f32 to vector<4x1xf32>
    %207 = arith.addf %203, %206 : vector<4x1xf32>
    %208 = math.rsqrt %207 : vector<4x1xf32>
    %209 = vector.broadcast %208 : vector<4x1xf32> to vector<4x256xf32>
    %210 = arith.mulf %205, %209 : vector<4x256xf32>
    %c0_157 = arith.constant 0 : index
    %c0_158 = arith.constant 0 : index
    %211 = vector.load %arg6[%c0_157, %c0_158] : memref<4x1xf32, #tpu.memory_space<vmem>>, vector<4x1xf32>
    %212 = vector.broadcast %211 : vector<4x1xf32> to vector<4x256xf32>
    %213 = arith.mulf %210, %212 : vector<4x256xf32>
    %c0_159 = arith.constant 0 : index
    %c0_160 = arith.constant 0 : index
    %214 = vector.load %arg7[%c0_159, %c0_160] : memref<4x1xf32, #tpu.memory_space<vmem>>, vector<4x1xf32>
    %215 = vector.broadcast %214 : vector<4x1xf32> to vector<4x256xf32>
    %216 = arith.addf %213, %215 : vector<4x256xf32>
    %c0_161 = arith.constant 0 : index
    %c0_162 = arith.constant 0 : index
    %c0_163 = arith.constant 0 : index
    %217 = vector.load %arg1[%c0_161, %c0_162, %c0_163] : memref<1x4x256xf32, #tpu.memory_space<vmem>>, vector<1x4x256xf32>
    %218 = vector.shape_cast %217 : vector<1x4x256xf32> to vector<4x256xf32>
    %219 = arith.addf %216, %218 : vector<4x256xf32>
    %c0_164 = arith.constant 0 : index
    %c0_165 = arith.constant 0 : index
    %c0_166 = arith.constant 0 : index
    %220 = vector.load %arg8[%c0_164, %c0_165, %c0_166] : memref<1x4x256xf32, #tpu.memory_space<vmem>>, vector<1x4x256xf32>
    %221 = vector.shape_cast %220 : vector<1x4x256xf32> to vector<4x256xf32>
    %222 = vector.shape_cast %219 : vector<4x256xf32> to vector<1x4x256xf32>
    tpu.vector_store %arg8[%c0_164, %c0_165, %c0_166], %222 {strides = array<i32>} : memref<1x4x256xf32, #tpu.memory_space<vmem>>, vector<1x4x256xf32>,
    return
  }
  func.func @transform_0(%arg0: i32) -> (i32, i32, i32) {
    %c0_i32 = arith.constant 0 : i32
    %c0_i32_0 = arith.constant 0 : i32
    %c0_i32_1 = arith.constant 0 : i32
    return %arg0, %c0_i32, %c0_i32_0 : i32, i32, i32
  }
  func.func @transform_1(%arg0: i32) -> (i32, i32, i32, i32) {
    %c0_i32 = arith.constant 0 : i32
    %c0_i32_0 = arith.constant 0 : i32
    %c0_i32_1 = arith.constant 0 : i32
    %c0_i32_2 = arith.constant 0 : i32
    %c0_i32_3 = arith.constant 0 : i32
    return %c0_i32, %c0_i32_0, %c0_i32_1, %c0_i32_2 : i32, i32, i32, i32
  }
  func.func @transform_2(%arg0: i32) -> (i32, i32) {
    %c0_i32 = arith.constant 0 : i32
    %c0_i32_0 = arith.constant 0 : i32
    %c0_i32_1 = arith.constant 0 : i32
    return %c0_i32, %c0_i32_0 : i32, i32
  }
  func.func @transform_3(%arg0: i32) -> (i32, i32) {
    %c0_i32 = arith.constant 0 : i32
    %c0_i32_0 = arith.constant 0 : i32
    %c0_i32_1 = arith.constant 0 : i32
    return %c0_i32, %c0_i32_0 : i32, i32
  }
  func.func @transform_4(%arg0: i32) -> (i32, i32, i32, i32) {
    %c0_i32 = arith.constant 0 : i32
    %c0_i32_0 = arith.constant 0 : i32
    %c0_i32_1 = arith.constant 0 : i32
    %c0_i32_2 = arith.constant 0 : i32
    %c0_i32_3 = arith.constant 0 : i32
    return %c0_i32, %c0_i32_0, %c0_i32_1, %c0_i32_2 : i32, i32, i32, i32
  }
  func.func @transform_5(%arg0: i32) -> (i32, i32) {
    %c0_i32 = arith.constant 0 : i32
    %c0_i32_0 = arith.constant 0 : i32
    %c0_i32_1 = arith.constant 0 : i32
    return %c0_i32, %c0_i32_0 : i32, i32
  }
  func.func @transform_6(%arg0: i32) -> (i32, i32) {
    %c0_i32 = arith.constant 0 : i32
    %c0_i32_0 = arith.constant 0 : i32
    %c0_i32_1 = arith.constant 0 : i32
    return %c0_i32, %c0_i32_0 : i32, i32
  }
  func.func @transform_7(%arg0: i32) -> (i32, i32, i32) {
    %c0_i32 = arith.constant 0 : i32
    %c0_i32_0 = arith.constant 0 : i32
    %c0_i32_1 = arith.constant 0 : i32
    return %arg0, %c0_i32, %c0_i32_0 : i32, i32, i32
  }
}

</mosaic_0001>

<llo_original>
// kernel: residual_block.1
$region0: #{residual_block.1}
  #allocation0 [shape = 'u32[]', space=smem, size = 0x4, offset = 0x4, fixed_abs, tag = 'smem constant byte address 0x4 - core index']
  #allocation1 [shape = 'u32[144,128]{1,0:T(1,128)}', space=vmem, size = 0x12000, scoped, tag = 'internal scratch']
  #allocation2 [shape = 'f32[4,320]{1,0:T(4,128)}', space=vmem, size = 0x1800, scoped, tag = 'scratch operand']
  %s0 = inlined_call_operand.vmem [shape: f32[2,4,256], index: 0, kind: input, shape index: {}]
  %s1 = inlined_call_operand.vmem [shape: f32[3,3,4,4], index: 1, kind: input, shape index: {}]
  %s2 = inlined_call_operand.vmem [shape: f32[4,1], index: 2, kind: input, shape index: {}]
  %s3 = inlined_call_operand.vmem [shape: f32[4,1], index: 3, kind: input, shape index: {}]
  %s4 = inlined_call_operand.vmem [shape: f32[3,3,4,4], index: 4, kind: input, shape index: {}]
  %s5 = inlined_call_operand.vmem [shape: f32[4,1], index: 5, kind: input, shape index: {}]
  %s6 = inlined_call_operand.vmem [shape: f32[4,1], index: 6, kind: input, shape index: {}]
  %s7 = inlined_call_operand.vmem [shape: f32[2,4,256], index: 7, kind: output, shape index: {}]
  %s8 = sld [smem:[#allocation0]]
  $region61: #{residual_block.1} parent=0
    _
  %s10 = ssub.s32 1, %s8
  %s11 = scalar_select 0, %s10, %s8
  loop: start=0, step=1, limit=4
  $region2: #{residual_block.1} parent=0 // loop_pre_header
    _
  $region3: #{residual_block.1} parent=0 // loop_header
    %s13 = sphi 0, %s17
    %p14 = scmp.ge.s32.totalorder %s13, 4
    %s23 = sphi 0, %s25
    %s26 = sphi 0, %s23
    %s27 = sphi 0, %s26
    %s43 = sphi 0, %s27
    %s47 = sphi 0, %s47
    %s49 = sphi 0, %s47
    %s50 = sphi 0, %s49
    %s64 = sphi 0, %s50
    %s68 = sphi 0, %s68
    %s70 = sphi 0, %s68
    %s71 = sphi 0, %s70
    %s85 = sphi 0, %s71
    %s89 = sphi 0, %s89
    %s91 = sphi 0, %s89
    %s92 = sphi 0, %s91
    %s106 = sphi 0, %s92
    %s110 = sphi 0, %s110
    %s112 = sphi 0, %s110
    %s113 = sphi 0, %s112
    %s127 = sphi 0, %s113
    %s131 = sphi 0, %s131
    %s133 = sphi 0, %s131
    %s134 = sphi 0, %s133
    %s148 = sphi 0, %s134
    %s152 = sphi 0, %s152
    %s154 = sphi 0, %s152
    %s155 = sphi 0, %s154
    %s169 = sphi 0, %s155
    %s175 = sphi 0, %s177
    %s178 = sphi 0, %s175
    %s179 = sphi 0, %s178
    %s195 = sphi 0, %s179
  $region4: #{residual_block.1} parent=0 // loop_header_branch
    %16 = sbr.rel (%p14) target = $region8
  $region5: #{residual_block.1} parent=0 // loop_body
    %s18 = ssub.s32 %s13, 1
    %s19 = ssub.s32 %s13, 2
    %s20 = sadd.s32 %s13, 1
    %s21 = ssub.s32 %s13, %s20
    %p22 = scmp.eq.s32.totalorder %s21, 0
    %s24 = sadd.s32 %s23, 1
    %s25 = scalar_select %p22, %s23, %s24
    %p28 = pneg %p22
    %p29 = scmp.eq.s32.totalorder %s13, 1
    %p30 = por %p28, %p29
    %p31 = scmp.ne.s32.totalorder %s23, %s26
    %p32 = scmp.eq.s32.totalorder %s13, 0
    %p33 = por %p31, %p32
    %p34 = scmp.ne.s32.totalorder %s23, %s26
    %p35 = scmp.eq.s32.totalorder %s18, 1
    %p36 = por %p34, %p35
    %p37 = scmp.ne.s32.totalorder %s26, %s27
    %p38 = scmp.eq.s32.totalorder %s18, 0
    %p39 = por %p37, %p38
    %p40 = scmp.ne.s32.totalorder %s26, %s27
    %p41 = scmp.eq.s32.totalorder %s19, 1
    %p42 = por %p40, %p41
    %p44 = scmp.ne.s32.totalorder %s27, %s43
    %p45 = scmp.eq.s32.totalorder %s19, 0
    %p46 = por %p44, %p45
    %s48 = sadd.s32 %s47, 1
    %p51 = scmp.eq.s32.totalorder %s13, 1
    %p52 = scmp.ne.s32.totalorder %s47, %s49
    %p53 = scmp.eq.s32.totalorder %s13, 0
    %p54 = por %p52, %p53
    %p55 = scmp.ne.s32.totalorder %s47, %s49
    %p56 = scmp.eq.s32.totalorder %s18, 1
    %p57 = por %p55, %p56
    %p58 = scmp.ne.s32.totalorder %s49, %s50
    %p59 = scmp.eq.s32.totalorder %s18, 0
    %p60 = por %p58, %p59
    %p61 = scmp.ne.s32.totalorder %s49, %s50
    %p62 = scmp.eq.s32.totalorder %s19, 1
    %p63 = por %p61, %p62
    %p65 = scmp.ne.s32.totalorder %s50, %s64
    %p66 = scmp.eq.s32.totalorder %s19, 0
    %p67 = por %p65, %p66
    %s69 = sadd.s32 %s68, 1
    %p72 = scmp.eq.s32.totalorder %s13, 1
    %p73 = scmp.ne.s32.totalorder %s68, %s70
    %p74 = scmp.eq.s32.totalorder %s13, 0
    %p75 = por %p73, %p74
    %p76 = scmp.ne.s32.totalorder %s68, %s70
    %p77 = scmp.eq.s32.totalorder %s18, 1
    %p78 = por %p76, %p77
    %p79 = scmp.ne.s32.totalorder %s70, %s71
    %p80 = scmp.eq.s32.totalorder %s18, 0
    %p81 = por %p79, %p80
    %p82 = scmp.ne.s32.totalorder %s70, %s71
    %p83 = scmp.eq.s32.totalorder %s19, 1
    %p84 = por %p82, %p83
    %p86 = scmp.ne.s32.totalorder %s71, %s85
    %p87 = scmp.eq.s32.totalorder %s19, 0
    %p88 = por %p86, %p87
    %s90 = sadd.s32 %s89, 1
    %p93 = scmp.eq.s32.totalorder %s13, 1
    %p94 = scmp.ne.s32.totalorder %s89, %s91
    %p95 = scmp.eq.s32.totalorder %s13, 0
    %p96 = por %p94, %p95
    %p97 = scmp.ne.s32.totalorder %s89, %s91
    %p98 = scmp.eq.s32.totalorder %s18, 1
    %p99 = por %p97, %p98
    %p100 = scmp.ne.s32.totalorder %s91, %s92
    %p101 = scmp.eq.s32.totalorder %s18, 0
    %p102 = por %p100, %p101
    %p103 = scmp.ne.s32.totalorder %s91, %s92
    %p104 = scmp.eq.s32.totalorder %s19, 1
    %p105 = por %p103, %p104
    %p107 = scmp.ne.s32.totalorder %s92, %s106
    %p108 = scmp.eq.s32.totalorder %s19, 0
    %p109 = por %p107, %p108
    %s111 = sadd.s32 %s110, 1
    %p114 = scmp.eq.s32.totalorder %s13, 1
    %p115 = scmp.ne.s32.totalorder %s110, %s112
    %p116 = scmp.eq.s32.totalorder %s13, 0
    %p117 = por %p115, %p116
    %p118 = scmp.ne.s32.totalorder %s110, %s112
    %p119 = scmp.eq.s32.totalorder %s18, 1
    %p120 = por %p118, %p119
    %p121 = scmp.ne.s32.totalorder %s112, %s113
    %p122 = scmp.eq.s32.totalorder %s18, 0
    %p123 = por %p121, %p122
    %p124 = scmp.ne.s32.totalorder %s112, %s113
    %p125 = scmp.eq.s32.totalorder %s19, 1
    %p126 = por %p124, %p125
    %p128 = scmp.ne.s32.totalorder %s113, %s127
    %p129 = scmp.eq.s32.totalorder %s19, 0
    %p130 = por %p128, %p129
    %s132 = sadd.s32 %s131, 1
    %p135 = scmp.eq.s32.totalorder %s13, 1
    %p136 = scmp.ne.s32.totalorder %s131, %s133
    %p137 = scmp.eq.s32.totalorder %s13, 0
    %p138 = por %p136, %p137
    %p139 = scmp.ne.s32.totalorder %s131, %s133
    %p140 = scmp.eq.s32.totalorder %s18, 1
    %p141 = por %p139, %p140
    %p142 = scmp.ne.s32.totalorder %s133, %s134
    %p143 = scmp.eq.s32.totalorder %s18, 0
    %p144 = por %p142, %p143
    %p145 = scmp.ne.s32.totalorder %s133, %s134
    %p146 = scmp.eq.s32.totalorder %s19, 1
    %p147 = por %p145, %p146
    %p149 = scmp.ne.s32.totalorder %s134, %s148
    %p150 = scmp.eq.s32.totalorder %s19, 0
    %p151 = por %p149, %p150
    %s153 = sadd.s32 %s152, 1
    %p156 = scmp.eq.s32.totalorder %s13, 1
    %p157 = scmp.ne.s32.totalorder %s152, %s154
    %p158 = scmp.eq.s32.totalorder %s13, 0
    %p159 = por %p157, %p158
    %p160 = scmp.ne.s32.totalorder %s152, %s154
    %p161 = scmp.eq.s32.totalorder %s18, 1
    %p162 = por %p160, %p161
    %p163 = scmp.ne.s32.totalorder %s154, %s155
    %p164 = scmp.eq.s32.totalorder %s18, 0
    %p165 = por %p163, %p164
    %p166 = scmp.ne.s32.totalorder %s154, %s155
    %p167 = scmp.eq.s32.totalorder %s19, 1
    %p168 = por %p166, %p167
    %p170 = scmp.ne.s32.totalorder %s155, %s169
    %p171 = scmp.eq.s32.totalorder %s19, 0
    %p172 = por %p170, %p171
    %s173 = ssub.s32 %s13, %s20
    %p174 = scmp.eq.s32.totalorder %s173, 0
    %s176 = sadd.s32 %s175, 1
    %s177 = scalar_select %p174, %s175, %s176
    %p180 = pneg %p174
    %p181 = scmp.eq.s32.totalorder %s13, 1
    %p182 = por %p180, %p181
    %p183 = scmp.ne.s32.totalorder %s175, %s178
    %p184 = scmp.eq.s32.totalorder %s13, 0
    %p185 = por %p183, %p184
    %p186 = scmp.ne.s32.totalorder %s175, %s178
    %p187 = scmp.eq.s32.totalorder %s18, 1
    %p188 = por %p186, %p187
    %p189 = scmp.ne.s32.totalorder %s178, %s179
    %p190 = scmp.eq.s32.totalorder %s18, 0
    %p191 = por %p189, %p190
    %p192 = scmp.ne.s32.totalorder %s178, %s179
    %p193 = scmp.eq.s32.totalorder %s19, 1
    %p194 = por %p192, %p193
    %p196 = scmp.ne.s32.totalorder %s179, %s195
    %p197 = scmp.eq.s32.totalorder %s19, 0
    %p198 = por %p196, %p197
    %p199 = scmp.le.s32.totalorder 1, %s13
    %p200 = scmp.lt.s32.totalorder %s13, 3
    %p201 = pnand %p199, %p200
    %p202 = pneg %p201
    // Predicated region
    $region9: #{residual_block.1} parent=5 // pred_check
      _
    $region10: #{residual_block.1} parent=5 // pred_check_branch
      %204 = sbr.rel (%p201) target = $region12
    $region11: #{residual_block.1} parent=5 // pred_region
      %s205 = ssub.s32 %s13, 1
      // Predicated region
      $region13: #{residual_block.1} parent=11 // pred_check
        %p206 = pneg %p60
      $region14: #{residual_block.1} parent=11 // pred_check_branch
        %208 = sbr.rel (%p206) target = $region16
      $region15: #{residual_block.1} parent=11 // pred_region
        _
      $region16: #{residual_block.1} parent=11 // pred_fallthru
        _
      // Predicated region
      $region17: #{residual_block.1} parent=11 // pred_check
        %p209 = pneg %p81
      $region18: #{residual_block.1} parent=11 // pred_check_branch
        %211 = sbr.rel (%p209) target = $region20
      $region19: #{residual_block.1} parent=11 // pred_region
        _
      $region20: #{residual_block.1} parent=11 // pred_fallthru
        _
      // Predicated region
      $region21: #{residual_block.1} parent=11 // pred_check
        %p212 = pneg %p102
      $region22: #{residual_block.1} parent=11 // pred_check_branch
        %214 = sbr.rel (%p212) target = $region24
      $region23: #{residual_block.1} parent=11 // pred_region
        _
      $region24: #{residual_block.1} parent=11 // pred_fallthru
        _
      // Predicated region
      $region25: #{residual_block.1} parent=11 // pred_check
        %p215 = pneg %p123
      $region26: #{residual_block.1} parent=11 // pred_check_branch
        %217 = sbr.rel (%p215) target = $region28
      $region27: #{residual_block.1} parent=11 // pred_region
        _
      $region28: #{residual_block.1} parent=11 // pred_fallthru
        _
      // Predicated region
      $region29: #{residual_block.1} parent=11 // pred_check
        %p218 = pneg %p144
      $region30: #{residual_block.1} parent=11 // pred_check_branch
        %220 = sbr.rel (%p218) target = $region32
      $region31: #{residual_block.1} parent=11 // pred_region
        _
      $region32: #{residual_block.1} parent=11 // pred_fallthru
        _
      // Predicated region
      $region33: #{residual_block.1} parent=11 // pred_check
        %p221 = pneg %p165
      $region34: #{residual_block.1} parent=11 // pred_check_branch
        %223 = sbr.rel (%p221) target = $region36
      $region35: #{residual_block.1} parent=11 // pred_region
        _
      $region36: #{residual_block.1} parent=11 // pred_fallthru
        _
    $region12: #{residual_block.1} parent=5 // pred_fallthru
      _
    %p224 = scmp.lt.s32.totalorder %s13, 2
    // Predicated region
    $region37: #{residual_block.1} parent=5 // pred_check
      %p225 = pneg %p224
    $region38: #{residual_block.1} parent=5 // pred_check_branch
      %227 = sbr.rel (%p225) target = $region40
    $region39: #{residual_block.1} parent=5 // pred_region
      // Predicated region
      $region41: #{residual_block.1} parent=39 // pred_check
        %p228 = pneg %p33
      $region42: #{residual_block.1} parent=39 // pred_check_branch
        %230 = sbr.rel (%p228) target = $region44
      $region43: #{residual_block.1} parent=39 // pred_region
        %p231 = scmp.lt.s32.totalorder %s13, 1
        %s232 = scalar_select %p231, %s13, 1
        %s233 = smul.addr %s232, 2
        %s234 = smul.addr %s233, 4
        %s235 = scalar_lea.vmem %s0, %s234
      $region44: #{residual_block.1} parent=39 // pred_fallthru
        _
    $region40: #{residual_block.1} parent=5 // pred_fallthru
      _
    %p236 = scmp.le.s32.totalorder 1, %s13
    %p237 = scmp.lt.s32.totalorder %s13, 3
    %p238 = pnand %p236, %p237
    %p239 = pneg %p238
    // Predicated region
    $region45: #{residual_block.1} parent=5 // pred_check
      _
    $region46: #{residual_block.1} parent=5 // pred_check_branch
      %241 = sbr.rel (%p238) target = $region48
    $region47: #{residual_block.1} parent=5 // pred_region
      %s242 = ssub.s32 %s13, 1
      %p243 = scmp.lt.s32.totalorder %s18, 1
      %s244 = scalar_select %p243, %s18, 1
      %s245 = smul.addr %s244, 2
      %s246 = smul.addr %s245, 4
      %s247 = scalar_lea.vmem %s0, %s246
      %p248 = pneg %p39
      %p249 = pneg %p36
      %p250 = pneg %p60
      %p251 = pneg %p57
      %p252 = pneg %p81
      %p253 = pneg %p78
      %p254 = pneg %p102
      %p255 = pneg %p99
      %p256 = pneg %p123
      %p257 = pneg %p120
      %p258 = pneg %p144
      %p259 = pneg %p141
      %p260 = pneg %p165
      %p261 = pneg %p162
      %p262 = pneg %p191
      %p263 = pneg %p188
      %p264 = scmp.lt.s32.totalorder %s18, 1
      %s265 = scalar_select %p264, %s18, 1
      %s266 = smul.addr %s265, 2
      %s267 = smul.addr %s266, 4
      %s268 = scalar_lea.vmem %s7, %s267
      %p269 = scmp.lt.s32.totalorder %s18, 1
      %s270 = scalar_select %p269, %s18, 1
      %s271 = smul.addr %s270, 2
      %s272 = smul.addr %s271, 4
      %s273 = scalar_lea.vmem %s0, %s272
      %p274 = scmp.lt.s32.totalorder %s18, 1
      %s275 = scalar_select %p274, %s18, 1
      %s276 = smul.addr %s275, 2
      %s277 = smul.addr %s276, 4
      %s278 = scalar_lea.vmem %s7, %s277
      %v279 = vlaneseq
      %v280 = vand.u32 %v279, 127
      %v281 = vadd.s32 %v280, 128
      %vm282 = vcmp.lt.s32.totalorder %v280, 0
      %v283 = vsub.s32 0, %v280
      %v284 = vsel %vm282, %v283, %v280
      %v285 = vshrl.u32 %v284, 4
      %v286 = vand.u32 %v284, 15
      %v287 = vsub.s32 0, %v286
      %v288 = vsel %vm282, %v287, %v286
      %vm289 = vcmp.lt.s32.totalorder %v281, 0
      %v290 = vsub.s32 0, %v281
      %v291 = vsel %vm289, %v290, %v281
      %v292 = vshrl.u32 %v291, 4
      %v293 = vand.u32 %v291, 15
      %v294 = vsub.s32 0, %v293
      %v295 = vsel %vm289, %v294, %v293
      %vm296 = vcmp.ne.s32.totalorder %v288, 0
      %vm297 = vcmp.ne.s32.totalorder %v295, 0
      %vm298 = vcmp.lt.s32.totalorder %v288, 0
      %vm299 = vcmp.lt.s32.totalorder %v295, 0
      %vm300 = vmand %vm298, %vm296
      %vm301 = vmand %vm299, %vm297
      %v302 = vadd.s32 %v288, 16
      %v303 = vadd.s32 %v295, 16
      %v304 = vsel %vm300, %v302, %v288
      %v305 = vsel %vm301, %v303, %v295
      %vm306 = vcmp.eq.s32.totalorder %v304, 0
      %vm307 = vcmp.eq.s32.totalorder %v305, 0
      %vm308 = vcmp.eq.s32.totalorder %v304, 15
      %vm309 = vcmp.eq.s32.totalorder %v305, 15
      %v310 = vld [vmem:[%s273] sm:$0xff]
      %312 = vrot.lane.b32.xlu0 %v310, 32
      %v313 = vpop.permute.xlu0 %312
      %v314 = vrot.slane %v313, 4
      %vm315 = vcmask 261120
      %v316 = vsel %vm315, %v314, %v313
      %vm319 = vcmask 1043712
      %vm320 = vcmask 1047556
      %vm321 = vmor %vm320, %vm319
      %322 = vst.msk [vmem:[#allocation2] sm:$0xff] %vm321, %v316
      %vm323 = vcmask 257024
      %324 = vst.msk [vmem:[#allocation2 + $0x8] sm:$0xf] %vm323, %v314
      %vm325 = vcmask 257152
      %326 = vst.msk [vmem:[#allocation2] sm:$0xf] %vm325, %v310
      %327 = vrot.lane.b32.xlu0 %v310, 64
      %v328 = vpop.permute.xlu0 %327
      %v329 = vrot.slane %v328, 4
      %vm331 = vcmask 388352
      %332 = vst.msk [vmem:[#allocation2 + $0x8] sm:$0xf] %vm331, %v329
      %vm333 = vcmask 125952
      %334 = vst.msk [vmem:[#allocation2] sm:$0xf] %vm333, 0.0
      %vm335 = vcmask 519552
      %336 = vst.msk [vmem:[#allocation2 + $0x8] sm:$0xf] %vm335, 0.0
      %v337 = vld [vmem:[#allocation2] sm:$0xff]
      %v338 = vld [vmem:[#allocation2 + $0x8] sm:$0xf]
      %v339 = vsel %vm306, 1, 0
      %v340 = vsel %vm307, 1, 0
      %vm341 = vcmp.eq.s32.totalorder %v339, 1
      %vm342 = vcmp.eq.s32.totalorder %v340, 1
      %v345 = vcombine.high %v337, %v337
      %346 = vrot.lane.b32.xlu0 %v337, 111
      %v347 = vpop.permute.xlu0 %346
      %348 = vrot.lane.b32.xlu0 %v345, 111
      %v349 = vpop.permute.xlu0 %348
      %350 = vrot.lane.b32.xlu0 %v338, 111
      %v351 = vpop.permute.xlu0 %350
      %vm352 = vcmask 908288
      %v353 = vsel %vm352, %v347, %v349
      %v354 = vsel %vm352, %v349, %v351
      %357 = vrot.lane.b32.xlu0 %v337, 113
      %v358 = vpop.permute.xlu0 %357
      %359 = vrot.lane.b32.xlu0 %v345, 113
      %v360 = vpop.permute.xlu0 %359
      %361 = vrot.lane.b32.xlu0 %v338, 113
      %v362 = vpop.permute.xlu0 %361
      %vm363 = vcmask 924672
      %v364 = vsel %vm363, %v358, %v360
      %v365 = vsel %vm363, %v360, %v362
      %v368 = vsel %vm341, %v353, %v364
      %v369 = vsel %vm342, %v354, %v365
      %v370 = vsel %vm308, 1, 0
      %v371 = vsel %vm309, 1, 0
      %vm372 = vcmp.eq.s32.totalorder %v370, 1
      %vm373 = vcmp.eq.s32.totalorder %v371, 1
      %v374 = vsel %vm372, %v364, %v353
      %v375 = vsel %vm373, %v365, %v354
      %v376 = vld [vmem:[%s1] sm:$0xf]
      %s377 = scalar_lea.vmem %s1, 4
      %v378 = vld [vmem:[%s377] sm:$0xf]
      %379 = vrot.lane.b32.xlu0 %v337, 112
      %v380 = vpop.permute.xlu0 %379
      %381 = vrot.lane.b32.xlu0 %v345, 112
      %v382 = vpop.permute.xlu0 %381
      %383 = vrot.lane.b32.xlu0 %v338, 112
      %v384 = vpop.permute.xlu0 %383
      %vm385 = vcmask 916480
      %v386 = vsel %vm385, %v380, %v382
      %v387 = vsel %vm385, %v382, %v384
      %vm388 = vcmask 31744
      %v390 = vsel %vm388, %v378, 0
      %vm392 = vcmask 1043456
      %v393 = vsel %vm392, %v386, 0
      %v395 = vsel %vm392, %v387, 0
      %v397 = vand.u32 %v395, 4294901760
      %398 = vmatprep.subr.mxu0 %v397
      %v399 = vand.u32 %v393, 4294901760
      %400 = vmatpush1.msra.mxu0 %v399
      %401 = vmatprep.subr.mxu0 0.0
      %402 = vmatpush1.msra.mxu0 0.0
      %403 = vmatprep.subr.mxu0 0.0
      %404 = vmatpush1.msra.mxu0 0.0
      %405 = vmatprep.subr.mxu0 0.0
      %406 = vmatpush1.msra.mxu0 0.0
      %407 = vmatprep.subr.mxu0 0.0
      %408 = vmatpush1.msra.mxu0 0.0
      %409 = vmatprep.subr.mxu0 0.0
      %410 = vmatpush1.msra.mxu0 0.0
      %411 = vmatprep.subr.mxu0 0.0
      %412 = vmatpush1.msra.mxu0 0.0
      %413 = vmatprep.subr.mxu0 0.0
      %414 = vmatpush1.msra.mxu0 0.0
      %415 = vmatprep.subr.mxu0 0.0
      %416 = vmatpush1.msra.mxu0 0.0
      %417 = vmatprep.subr.mxu0 0.0
      %418 = vmatpush1.msra.mxu0 0.0
      %419 = vmatprep.subr.mxu0 0.0
      %420 = vmatpush1.msra.mxu0 0.0
      %421 = vmatprep.subr.mxu0 0.0
      %422 = vmatpush1.msra.mxu0 0.0
      %423 = vmatprep.subr.mxu0 0.0
      %424 = vmatpush1.msra.mxu0 0.0
      %425 = vmatprep.subr.mxu0 0.0
      %426 = vmatpush1.msra.mxu0 0.0
      %427 = vmatprep.subr.mxu0 0.0
      %428 = vmatpush1.msra.mxu0 0.0
      %429 = vmatprep.subr.mxu0 0.0
      %430 = vmatpush1.msra.mxu0 0.0
      %431 = vmatprep.subr.mxu0 0.0
      %432 = vmatpush1.msra.mxu0 0.0
      %433 = vmatprep.subr.mxu0 0.0
      %434 = vmatpush1.msra.mxu0 0.0
      %435 = vmatprep.subr.mxu0 0.0
      %436 = vmatpush1.msra.mxu0 0.0
      %437 = vmatprep.subr.mxu0 0.0
      %438 = vmatpush1.msra.mxu0 0.0
      %439 = vmatprep.subr.mxu0 0.0
      %440 = vmatpush1.msra.mxu0 0.0
      %441 = vmatprep.subr.mxu0 0.0
      %442 = vmatpush1.msra.mxu0 0.0
      %443 = vmatprep.subr.mxu0 0.0
      %444 = vmatpush1.msra.mxu0 0.0
      %445 = vmatprep.subr.mxu0 0.0
      %446 = vmatpush1.msra.mxu0 0.0
      %447 = vmatprep.subr.mxu0 0.0
      %448 = vmatpush1.msra.mxu0 0.0
      %449 = vmatprep.subr.mxu0 0.0
      %450 = vmatpush1.msra.mxu0 0.0
      %451 = vmatprep.subr.mxu0 0.0
      %452 = vmatpush1.msra.mxu0 0.0
      %453 = vmatprep.subr.mxu0 0.0
      %454 = vmatpush1.msra.mxu0 0.0
      %455 = vmatprep.subr.mxu0 0.0
      %456 = vmatpush1.msra.mxu0 0.0
      %457 = vmatprep.subr.mxu0 0.0
      %458 = vmatpush1.msra.mxu0 0.0
      %459 = vmatprep.subr.mxu0 0.0
      %460 = vmatpush1.msra.mxu0 0.0
      %461 = vmatprep.subr.mxu0 0.0
      %462 = vmatpush1.msra.mxu0 0.0
      %463 = vmatprep.mubr.f32.mxu0 0.0
      %v464 = vand.u32 %v390, 4294901760
      %v465 = vsub.f32 %v390, %v464
      %v466 = vand.u32 %v465, 4294901760
      %v467 = vsub.f32 %v465, %v466
      %v468 = vand.u32 %v467, 4294901760
      %469 = vmatmul.mubr.f32.gmra.mrb[0].mxu0 %v468
      %v470 = vpop.f32.mrb[0].mxu0
      %v471 = vadd.f32 0.0, %v470
      %v472 = vpop.f32.mrb[0].mxu0
      %v473 = vadd.f32 0.0, %v472
      %474 = vdwg.mxu0
      %v475 = vand.u32 %v395, 4294901760
      %v476 = vsub.f32 %v395, %v475
      %v477 = vand.u32 %v476, 4294901760
      %v478 = vsub.f32 %v476, %v477
      %v479 = vand.u32 %v478, 4294901760
      %480 = vmatprep.subr.mxu0 %v479
      %v481 = vand.u32 %v393, 4294901760
      %v482 = vsub.f32 %v393, %v481
      %v483 = vand.u32 %v482, 4294901760
      %v484 = vsub.f32 %v482, %v483
      %v485 = vand.u32 %v484, 4294901760
      %486 = vmatpush1.msra.mxu0 %v485
      %487 = vmatprep.subr.mxu0 0.0
      %488 = vmatpush1.msra.mxu0 0.0
      %489 = vmatprep.subr.mxu0 0.0
      %490 = vmatpush1.msra.mxu0 0.0
      %491 = vmatprep.subr.mxu0 0.0
      %492 = vmatpush1.msra.mxu0 0.0
      %493 = vmatprep.subr.mxu0 0.0
      %494 = vmatpush1.msra.mxu0 0.0
      %495 = vmatprep.subr.mxu0 0.0
      %496 = vmatpush1.msra.mxu0 0.0
      %497 = vmatprep.subr.mxu0 0.0
      %498 = vmatpush1.msra.mxu0 0.0
      %499 = vmatprep.subr.mxu0 0.0
      %500 = vmatpush1.msra.mxu0 0.0
      %501 = vmatprep.subr.mxu0 0.0
      %502 = vmatpush1.msra.mxu0 0.0
      %503 = vmatprep.subr.mxu0 0.0
      %504 = vmatpush1.msra.mxu0 0.0
      %505 = vmatprep.subr.mxu0 0.0
      %506 = vmatpush1.msra.mxu0 0.0
      %507 = vmatprep.subr.mxu0 0.0
      %508 = vmatpush1.msra.mxu0 0.0
      %509 = vmatprep.subr.mxu0 0.0
      %510 = vmatpush1.msra.mxu0 0.0
      %511 = vmatprep.subr.mxu0 0.0
      %512 = vmatpush1.msra.mxu0 0.0
      %513 = vmatprep.subr.mxu0 0.0
      %514 = vmatpush1.msra.mxu0 0.0
      %515 = vmatprep.subr.mxu0 0.0
      %516 = vmatpush1.msra.mxu0 0.0
      %517 = vmatprep.subr.mxu0 0.0
      %518 = vmatpush1.msra.mxu0 0.0
      %519 = vmatprep.subr.mxu0 0.0
      %520 = vmatpush1.msra.mxu0 0.0
      %521 = vmatprep.subr.mxu0 0.0
      %522 = vmatpush1.msra.mxu0 0.0
      %523 = vmatprep.subr.mxu0 0.0
      %524 = vmatpush1.msra.mxu0 0.0
      %525 = vmatprep.subr.mxu0 0.0
      %526 = vmatpush1.msra.mxu0 0.0
      %527 = vmatprep.subr.mxu0 0.0
      %528 = vmatpush1.msra.mxu0 0.0
      %529 = vmatprep.subr.mxu0 0.0
      %530 = vmatpush1.msra.mxu0 0.0
      %531 = vmatprep.subr.mxu0 0.0
      %532 = vmatpush1.msra.mxu0 0.0
      %533 = vmatprep.subr.mxu0 0.0
      %534 = vmatpush1.msra.mxu0 0.0
      %535 = vmatprep.subr.mxu0 0.0
      %536 = vmatpush1.msra.mxu0 0.0
      %537 = vmatprep.subr.mxu0 0.0
      %538 = vmatpush1.msra.mxu0 0.0
      %539 = vmatprep.subr.mxu0 0.0
      %540 = vmatpush1.msra.mxu0 0.0
      %541 = vmatprep.subr.mxu0 0.0
      %542 = vmatpush1.msra.mxu0 0.0
      %543 = vmatprep.subr.mxu0 0.0
      %544 = vmatpush1.msra.mxu0 0.0
      %545 = vmatprep.subr.mxu0 0.0
      %546 = vmatpush1.msra.mxu0 0.0
      %547 = vmatprep.subr.mxu0 0.0
      %548 = vmatpush1.msra.mxu0 0.0
      %549 = vmatprep.mubr.f32.mxu0 0.0
      %v550 = vand.u32 %v390, 4294901760
      %551 = vmatmul.mubr.f32.gmra.mrb[0].mxu0 %v550
      %v552 = vpop.f32.mrb[0].mxu0
      %v553 = vadd.f32 %v471, %v552
      %v554 = vpop.f32.mrb[0].mxu0
      %v555 = vadd.f32 %v473, %v554
      %556 = vdwg.mxu0
      %v557 = vand.u32 %v395, 4294901760
      %v558 = vsub.f32 %v395, %v557
      %559 = vmatprep.subr.mxu0 %v558
      %v560 = vand.u32 %v393, 4294901760
      %v561 = vsub.f32 %v393, %v560
      %562 = vmatpush1.msra.mxu0 %v561
      %563 = vmatprep.subr.mxu0 0.0
      %564 = vmatpush1.msra.mxu0 0.0
      %565 = vmatprep.subr.mxu0 0.0
      %566 = vmatpush1.msra.mxu0 0.0
      %567 = vmatprep.subr.mxu0 0.0
      %568 = vmatpush1.msra.mxu0 0.0
      %569 = vmatprep.subr.mxu0 0.0
      %570 = vmatpush1.msra.mxu0 0.0
      %571 = vmatprep.subr.mxu0 0.0
      %572 = vmatpush1.msra.mxu0 0.0
      %573 = vmatprep.subr.mxu0 0.0
      %574 = vmatpush1.msra.mxu0 0.0
      %575 = vmatprep.subr.mxu0 0.0
      %576 = vmatpush1.msra.mxu0 0.0
      %577 = vmatprep.subr.mxu0 0.0
      %578 = vmatpush1.msra.mxu0 0.0
      %579 = vmatprep.subr.mxu0 0.0
      %580 = vmatpush1.msra.mxu0 0.0
      %581 = vmatprep.subr.mxu0 0.0
      %582 = vmatpush1.msra.mxu0 0.0
      %583 = vmatprep.subr.mxu0 0.0
      %584 = vmatpush1.msra.mxu0 0.0
      %585 = vmatprep.subr.mxu0 0.0
      %586 = vmatpush1.msra.mxu0 0.0
      %587 = vmatprep.subr.mxu0 0.0
      %588 = vmatpush1.msra.mxu0 0.0
      %589 = vmatprep.subr.mxu0 0.0
      %590 = vmatpush1.msra.mxu0 0.0
      %591 = vmatprep.subr.mxu0 0.0
      %592 = vmatpush1.msra.mxu0 0.0
      %593 = vmatprep.subr.mxu0 0.0
      %594 = vmatpush1.msra.mxu0 0.0
      %595 = vmatprep.subr.mxu0 0.0
      %596 = vmatpush1.msra.mxu0 0.0
      %597 = vmatprep.subr.mxu0 0.0
      %598 = vmatpush1.msra.mxu0 0.0
      %599 = vmatprep.subr.mxu0 0.0
      %600 = vmatpush1.msra.mxu0 0.0
      %601 = vmatprep.subr.mxu0 0.0
      %602 = vmatpush1.msra.mxu0 0.0
      %603 = vmatprep.subr.mxu0 0.0
      %604 = vmatpush1.msra.mxu0 0.0
      %605 = vmatprep.subr.mxu0 0.0
      %606 = vmatpush1.msra.mxu0 0.0
      %607 = vmatprep.subr.mxu0 0.0
      %608 = vmatpush1.msra.mxu0 0.0
      %609 = vmatprep.subr.mxu0 0.0
      %610 = vmatpush1.msra.mxu0 0.0
      %611 = vmatprep.subr.mxu0 0.0
      %612 = vmatpush1.msra.mxu0 0.0
      %613 = vmatprep.subr.mxu0 0.0
      %614 = vmatpush1.msra.mxu0 0.0
      %615 = vmatprep.subr.mxu0 0.0
      %616 = vmatpush1.msra.mxu0 0.0
      %617 = vmatprep.subr.mxu0 0.0
      %618 = vmatpush1.msra.mxu0 0.0
      %619 = vmatprep.subr.mxu0 0.0
      %620 = vmatpush1.msra.mxu0 0.0
      %621 = vmatprep.subr.mxu0 0.0
      %622 = vmatpush1.msra.mxu0 0.0
      %623 = vmatprep.subr.mxu0 0.0
      %624 = vmatpush1.msra.mxu0 0.0
      %625 = vmatprep.mubr.f32.mxu0 0.0
      %v626 = vand.u32 %v390, 4294901760
      %v627 = vsub.f32 %v390, %v626
      %628 = vmatmul.mubr.f32.gmra.mrb[0].mxu0 %v627
      %v629 = vpop.f32.mrb[0].mxu0
      %v630 = vadd.f32 %v553, %v629
      %v631 = vpop.f32.mrb[0].mxu0
      %v632 = vadd.f32 %v555, %v631
      %633 = vdwg.mxu0
      %v634 = vand.u32 %v395, 4294901760
      %635 = vmatprep.subr.mxu0 %v634
      %v636 = vand.u32 %v393, 4294901760
      %637 = vmatpush1.msra.mxu0 %v636
      %638 = vmatprep.subr.mxu0 0.0
      %639 = vmatpush1.msra.mxu0 0.0
      %640 = vmatprep.subr.mxu0 0.0
      %641 = vmatpush1.msra.mxu0 0.0
      %642 = vmatprep.subr.mxu0 0.0
      %643 = vmatpush1.msra.mxu0 0.0
      %644 = vmatprep.subr.mxu0 0.0
      %645 = vmatpush1.msra.mxu0 0.0
      %646 = vmatprep.subr.mxu0 0.0
      %647 = vmatpush1.msra.mxu0 0.0
      %648 = vmatprep.subr.mxu0 0.0
      %649 = vmatpush1.msra.mxu0 0.0
      %650 = vmatprep.subr.mxu0 0.0
      %651 = vmatpush1.msra.mxu0 0.0
      %652 = vmatprep.subr.mxu0 0.0
      %653 = vmatpush1.msra.mxu0 0.0
      %654 = vmatprep.subr.mxu0 0.0
      %655 = vmatpush1.msra.mxu0 0.0
      %656 = vmatprep.subr.mxu0 0.0
      %657 = vmatpush1.msra.mxu0 0.0
      %658 = vmatprep.subr.mxu0 0.0
      %659 = vmatpush1.msra.mxu0 0.0
      %660 = vmatprep.subr.mxu0 0.0
      %661 = vmatpush1.msra.mxu0 0.0
      %662 = vmatprep.subr.mxu0 0.0
      %663 = vmatpush1.msra.mxu0 0.0
      %664 = vmatprep.subr.mxu0 0.0
      %665 = vmatpush1.msra.mxu0 0.0
      %666 = vmatprep.subr.mxu0 0.0
      %667 = vmatpush1.msra.mxu0 0.0
      %668 = vmatprep.subr.mxu0 0.0
      %669 = vmatpush1.msra.mxu0 0.0
      %670 = vmatprep.subr.mxu0 0.0
      %671 = vmatpush1.msra.mxu0 0.0
      %672 = vmatprep.subr.mxu0 0.0
      %673 = vmatpush1.msra.mxu0 0.0
      %674 = vmatprep.subr.mxu0 0.0
      %675 = vmatpush1.msra.mxu0 0.0
      %676 = vmatprep.subr.mxu0 0.0
      %677 = vmatpush1.msra.mxu0 0.0
      %678 = vmatprep.subr.mxu0 0.0
      %679 = vmatpush1.msra.mxu0 0.0
      %680 = vmatprep.subr.mxu0 0.0
      %681 = vmatpush1.msra.mxu0 0.0
      %682 = vmatprep.subr.mxu0 0.0
      %683 = vmatpush1.msra.mxu0 0.0
      %684 = vmatprep.subr.mxu0 0.0
      %685 = vmatpush1.msra.mxu0 0.0
      %686 = vmatprep.subr.mxu0 0.0
      %687 = vmatpush1.msra.mxu0 0.0
      %688 = vmatprep.subr.mxu0 0.0
      %689 = vmatpush1.msra.mxu0 0.0
      %690 = vmatprep.subr.mxu0 0.0
      %691 = vmatpush1.msra.mxu0 0.0
      %692 = vmatprep.subr.mxu0 0.0
      %693 = vmatpush1.msra.mxu0 0.0
      %694 = vmatprep.subr.mxu0 0.0
      %695 = vmatpush1.msra.mxu0 0.0
      %696 = vmatprep.subr.mxu0 0.0
      %697 = vmatpush1.msra.mxu0 0.0
      %698 = vmatprep.subr.mxu0 0.0
      %699 = vmatpush1.msra.mxu0 0.0
      %700 = vmatprep.mubr.f32.mxu0 0.0
      %v701 = vand.u32 %v390, 4294901760
      %v702 = vsub.f32 %v390, %v701
      %v703 = vand.u32 %v702, 4294901760
      %704 = vmatmul.mubr.f32.gmra.mrb[0].mxu0 %v703
      %v705 = vpop.f32.mrb[0].mxu0
      %v706 = vadd.f32 %v630, %v705
      %v707 = vpop.f32.mrb[0].mxu0
      %v708 = vadd.f32 %v632, %v707
      %709 = vdwg.mxu0
      %v710 = vand.u32 %v395, 4294901760
      %v711 = vsub.f32 %v395, %v710
      %v712 = vand.u32 %v711, 4294901760
      %713 = vmatprep.subr.mxu0 %v712
      %v714 = vand.u32 %v393, 4294901760
      %v715 = vsub.f32 %v393, %v714
      %v716 = vand.u32 %v715, 4294901760
      %717 = vmatpush1.msra.mxu0 %v716
      %718 = vmatprep.subr.mxu0 0.0
      %719 = vmatpush1.msra.mxu0 0.0
      %720 = vmatprep.subr.mxu0 0.0
      %721 = vmatpush1.msra.mxu0 0.0
      %722 = vmatprep.subr.mxu0 0.0
      %723 = vmatpush1.msra.mxu0 0.0
      %724 = vmatprep.subr.mxu0 0.0
      %725 = vmatpush1.msra.mxu0 0.0
      %726 = vmatprep.subr.mxu0 0.0
      %727 = vmatpush1.msra.mxu0 0.0
      %728 = vmatprep.subr.mxu0 0.0
      %729 = vmatpush1.msra.mxu0 0.0
      %730 = vmatprep.subr.mxu0 0.0
      %731 = vmatpush1.msra.mxu0 0.0
      %732 = vmatprep.subr.mxu0 0.0
      %733 = vmatpush1.msra.mxu0 0.0
      %734 = vmatprep.subr.mxu0 0.0
      %735 = vmatpush1.msra.mxu0 0.0
      %736 = vmatprep.subr.mxu0 0.0
      %737 = vmatpush1.msra.mxu0 0.0
      %738 = vmatprep.subr.mxu0 0.0
      %739 = vmatpush1.msra.mxu0 0.0
      %740 = vmatprep.subr.mxu0 0.0
      %741 = vmatpush1.msra.mxu0 0.0
      %742 = vmatprep.subr.mxu0 0.0
      %743 = vmatpush1.msra.mxu0 0.0
      %744 = vmatprep.subr.mxu0 0.0
      %745 = vmatpush1.msra.mxu0 0.0
      %746 = vmatprep.subr.mxu0 0.0
      %747 = vmatpush1.msra.mxu0 0.0
      %748 = vmatprep.subr.mxu0 0.0
      %749 = vmatpush1.msra.mxu0 0.0
      %750 = vmatprep.subr.mxu0 0.0
      %751 = vmatpush1.msra.mxu0 0.0
      %752 = vmatprep.subr.mxu0 0.0
      %753 = vmatpush1.msra.mxu0 0.0
      %754 = vmatprep.subr.mxu0 0.0
      %755 = vmatpush1.msra.mxu0 0.0
      %756 = vmatprep.subr.mxu0 0.0
      %757 = vmatpush1.msra.mxu0 0.0
      %758 = vmatprep.subr.mxu0 0.0
      %759 = vmatpush1.msra.mxu0 0.0
      %760 = vmatprep.subr.mxu0 0.0
      %761 = vmatpush1.msra.mxu0 0.0
      %762 = vmatprep.subr.mxu0 0.0
      %763 = vmatpush1.msra.mxu0 0.0
      %764 = vmatprep.subr.mxu0 0.0
      %765 = vmatpush1.msra.mxu0 0.0
      %766 = vmatprep.subr.mxu0 0.0
      %767 = vmatpush1.msra.mxu0 0.0
      %768 = vmatprep.subr.mxu0 0.0
      %769 = vmatpush1.msra.mxu0 0.0
      %770 = vmatprep.subr.mxu0 0.0
      %771 = vmatpush1.msra.mxu0 0.0
      %772 = vmatprep.subr.mxu0 0.0
      %773 = vmatpush1.msra.mxu0 0.0
      %774 = vmatprep.subr.mxu0 0.0
      %775 = vmatpush1.msra.mxu0 0.0
      %776 = vmatprep.subr.mxu0 0.0
      %777 = vmatpush1.msra.mxu0 0.0
      %778 = vmatprep.subr.mxu0 0.0
      %779 = vmatpush1.msra.mxu0 0.0
      %780 = vmatprep.mubr.f32.mxu0 0.0
      %v781 = vand.u32 %v390, 4294901760
      %782 = vmatmul.mubr.f32.gmra.mrb[0].mxu0 %v781
      %v783 = vpop.f32.mrb[0].mxu0
      %v784 = vadd.f32 %v706, %v783
      %v785 = vpop.f32.mrb[0].mxu0
      %v786 = vadd.f32 %v708, %v785
      %787 = vdwg.mxu0
      %v788 = vand.u32 %v395, 4294901760
      %789 = vmatprep.subr.mxu0 %v788
      %v790 = vand.u32 %v393, 4294901760
      %791 = vmatpush1.msra.mxu0 %v790
      %792 = vmatprep.subr.mxu0 0.0
      %793 = vmatpush1.msra.mxu0 0.0
      %794 = vmatprep.subr.mxu0 0.0
      %795 = vmatpush1.msra.mxu0 0.0
      %796 = vmatprep.subr.mxu0 0.0
      %797 = vmatpush1.msra.mxu0 0.0
      %798 = vmatprep.subr.mxu0 0.0
      %799 = vmatpush1.msra.mxu0 0.0
      %800 = vmatprep.subr.mxu0 0.0
      %801 = vmatpush1.msra.mxu0 0.0
      %802 = vmatprep.subr.mxu0 0.0
      %803 = vmatpush1.msra.mxu0 0.0
      %804 = vmatprep.subr.mxu0 0.0
      %805 = vmatpush1.msra.mxu0 0.0
      %806 = vmatprep.subr.mxu0 0.0
      %807 = vmatpush1.msra.mxu0 0.0
      %808 = vmatprep.subr.mxu0 0.0
      %809 = vmatpush1.msra.mxu0 0.0
      %810 = vmatprep.subr.mxu0 0.0
      %811 = vmatpush1.msra.mxu0 0.0
      %812 = vmatprep.subr.mxu0 0.0
      %813 = vmatpush1.msra.mxu0 0.0
      %814 = vmatprep.subr.mxu0 0.0
      %815 = vmatpush1.msra.mxu0 0.0
      %816 = vmatprep.subr.mxu0 0.0
      %817 = vmatpush1.msra.mxu0 0.0
      %818 = vmatprep.subr.mxu0 0.0
      %819 = vmatpush1.msra.mxu0 0.0
      %820 = vmatprep.subr.mxu0 0.0
      %821 = vmatpush1.msra.mxu0 0.0
      %822 = vmatprep.subr.mxu0 0.0
      %823 = vmatpush1.msra.mxu0 0.0
      %824 = vmatprep.subr.mxu0 0.0
      %825 = vmatpush1.msra.mxu0 0.0
      %826 = vmatprep.subr.mxu0 0.0
      %827 = vmatpush1.msra.mxu0 0.0
      %828 = vmatprep.subr.mxu0 0.0
      %829 = vmatpush1.msra.mxu0 0.0
      %830 = vmatprep.subr.mxu0 0.0
      %831 = vmatpush1.msra.mxu0 0.0
      %832 = vmatprep.subr.mxu0 0.0
      %833 = vmatpush1.msra.mxu0 0.0
      %834 = vmatprep.subr.mxu0 0.0
      %835 = vmatpush1.msra.mxu0 0.0
      %836 = vmatprep.subr.mxu0 0.0
      %837 = vmatpush1.msra.mxu0 0.0
      %838 = vmatprep.subr.mxu0 0.0
      %839 = vmatpush1.msra.mxu0 0.0
      %840 = vmatprep.subr.mxu0 0.0
      %841 = vmatpush1.msra.mxu0 0.0
      %842 = vmatprep.subr.mxu0 0.0
      %843 = vmatpush1.msra.mxu0 0.0
      %844 = vmatprep.subr.mxu0 0.0
      %845 = vmatpush1.msra.mxu0 0.0
      %846 = vmatprep.subr.mxu0 0.0
      %847 = vmatpush1.msra.mxu0 0.0
      %848 = vmatprep.subr.mxu0 0.0
      %849 = vmatpush1.msra.mxu0 0.0
      %850 = vmatprep.subr.mxu0 0.0
      %851 = vmatpush1.msra.mxu0 0.0
      %852 = vmatprep.subr.mxu0 0.0
      %853 = vmatpush1.msra.mxu0 0.0
      %854 = vmatprep.mubr.f32.mxu0 0.0
      %v855 = vand.u32 %v390, 4294901760
      %856 = vmatmul.mubr.f32.gmra.mrb[0].mxu0 %v855
      %v857 = vpop.f32.mrb[0].mxu0
      %v858 = vadd.f32 %v784, %v857
      %v859 = vpop.f32.mrb[0].mxu0
      %v860 = vadd.f32 %v786, %v859
      %861 = vdwg.mxu0
      %v863 = vsel %vm388, %v376, 0
      %v866 = vsel %vm392, %v368, 0
      %v869 = vsel %vm392, %v369, 0
      %v871 = vand.u32 %v869, 4294901760
      %872 = vmatprep.subr.mxu0 %v871
      %v873 = vand.u32 %v866, 4294901760
      %874 = vmatpush1.msra.mxu0 %v873
      %875 = vmatprep.subr.mxu0 0.0
      %876 = vmatpush1.msra.mxu0 0.0
      %877 = vmatprep.subr.mxu0 0.0
      %878 = vmatpush1.msra.mxu0 0.0
      %879 = vmatprep.subr.mxu0 0.0
      %880 = vmatpush1.msra.mxu0 0.0
      %881 = vmatprep.subr.mxu0 0.0
      %882 = vmatpush1.msra.mxu0 0.0
      %883 = vmatprep.subr.mxu0 0.0
      %884 = vmatpush1.msra.mxu0 0.0
      %885 = vmatprep.subr.mxu0 0.0
      %886 = vmatpush1.msra.mxu0 0.0
      %887 = vmatprep.subr.mxu0 0.0
      %888 = vmatpush1.msra.mxu0 0.0
      %889 = vmatprep.subr.mxu0 0.0
      %890 = vmatpush1.msra.mxu0 0.0
      %891 = vmatprep.subr.mxu0 0.0
      %892 = vmatpush1.msra.mxu0 0.0
      %893 = vmatprep.subr.mxu0 0.0
      %894 = vmatpush1.msra.mxu0 0.0
      %895 = vmatprep.subr.mxu0 0.0
      %896 = vmatpush1.msra.mxu0 0.0
      %897 = vmatprep.subr.mxu0 0.0
      %898 = vmatpush1.msra.mxu0 0.0
      %899 = vmatprep.subr.mxu0 0.0
      %900 = vmatpush1.msra.mxu0 0.0
      %901 = vmatprep.subr.mxu0 0.0
      %902 = vmatpush1.msra.mxu0 0.0
      %903 = vmatprep.subr.mxu0 0.0
      %904 = vmatpush1.msra.mxu0 0.0
      %905 = vmatprep.subr.mxu0 0.0
      %906 = vmatpush1.msra.mxu0 0.0
      %907 = vmatprep.subr.mxu0 0.0
      %908 = vmatpush1.msra.mxu0 0.0
      %909 = vmatprep.subr.mxu0 0.0
      %910 = vmatpush1.msra.mxu0 0.0
      %911 = vmatprep.subr.mxu0 0.0
      %912 = vmatpush1.msra.mxu0 0.0
      %913 = vmatprep.subr.mxu0 0.0
      %914 = vmatpush1.msra.mxu0 0.0
      %915 = vmatprep.subr.mxu0 0.0
      %916 = vmatpush1.msra.mxu0 0.0
      %917 = vmatprep.subr.mxu0 0.0
      %918 = vmatpush1.msra.mxu0 0.0
      %919 = vmatprep.subr.mxu0 0.0
      %920 = vmatpush1.msra.mxu0 0.0
      %921 = vmatprep.subr.mxu0 0.0
      %922 = vmatpush1.msra.mxu0 0.0
      %923 = vmatprep.subr.mxu0 0.0
      %924 = vmatpush1.msra.mxu0 0.0
      %925 = vmatprep.subr.mxu0 0.0
      %926 = vmatpush1.msra.mxu0 0.0
      %927 = vmatprep.subr.mxu0 0.0
      %928 = vmatpush1.msra.mxu0 0.0
      %929 = vmatprep.subr.mxu0 0.0
      %930 = vmatpush1.msra.mxu0 0.0
      %931 = vmatprep.subr.mxu0 0.0
      %932 = vmatpush1.msra.mxu0 0.0
      %933 = vmatprep.subr.mxu0 0.0
      %934 = vmatpush1.msra.mxu0 0.0
      %935 = vmatprep.subr.mxu0 0.0
      %936 = vmatpush1.msra.mxu0 0.0
      %937 = vmatprep.mubr.f32.mxu0 0.0
      %v938 = vand.u32 %v863, 4294901760
      %v939 = vsub.f32 %v863, %v938
      %v940 = vand.u32 %v939, 4294901760
      %v941 = vsub.f32 %v939, %v940
      %v942 = vand.u32 %v941, 4294901760
      %943 = vmatmul.mubr.f32.gmra.mrb[0].mxu0 %v942
      %v944 = vpop.f32.mrb[0].mxu0
      %v945 = vadd.f32 %v858, %v944
      %v946 = vpop.f32.mrb[0].mxu0
      %v947 = vadd.f32 %v860, %v946
      %948 = vdwg.mxu0
      %v949 = vand.u32 %v869, 4294901760
      %v950 = vsub.f32 %v869, %v949
      %v951 = vand.u32 %v950, 4294901760
      %v952 = vsub.f32 %v950, %v951
      %v953 = vand.u32 %v952, 4294901760
      %954 = vmatprep.subr.mxu0 %v953
      %v955 = vand.u32 %v866, 4294901760
      %v956 = vsub.f32 %v866, %v955
      %v957 = vand.u32 %v956, 4294901760
      %v958 = vsub.f32 %v956, %v957
      %v959 = vand.u32 %v958, 4294901760
      %960 = vmatpush1.msra.mxu0 %v959
      %961 = vmatprep.subr.mxu0 0.0
      %962 = vmatpush1.msra.mxu0 0.0
      %963 = vmatprep.subr.mxu0 0.0
      %964 = vmatpush1.msra.mxu0 0.0
      %965 = vmatprep.subr.mxu0 0.0
      %966 = vmatpush1.msra.mxu0 0.0
      %967 = vmatprep.subr.mxu0 0.0
      %968 = vmatpush1.msra.mxu0 0.0
      %969 = vmatprep.subr.mxu0 0.0
      %970 = vmatpush1.msra.mxu0 0.0
      %971 = vmatprep.subr.mxu0 0.0
      %972 = vmatpush1.msra.mxu0 0.0
      %973 = vmatprep.subr.mxu0 0.0
      %974 = vmatpush1.msra.mxu0 0.0
      %975 = vmatprep.subr.mxu0 0.0
      %976 = vmatpush1.msra.mxu0 0.0
      %977 = vmatprep.subr.mxu0 0.0
      %978 = vmatpush1.msra.mxu0 0.0
      %979 = vmatprep.subr.mxu0 0.0
      %980 = vmatpush1.msra.mxu0 0.0
      %981 = vmatprep.subr.mxu0 0.0
      %982 = vmatpush1.msra.mxu0 0.0
      %983 = vmatprep.subr.mxu0 0.0
      %984 = vmatpush1.msra.mxu0 0.0
      %985 = vmatprep.subr.mxu0 0.0
      %986 = vmatpush1.msra.mxu0 0.0
      %987 = vmatprep.subr.mxu0 0.0
      %988 = vmatpush1.msra.mxu0 0.0
      %989 = vmatprep.subr.mxu0 0.0
      %990 = vmatpush1.msra.mxu0 0.0
      %991 = vmatprep.subr.mxu0 0.0
      %992 = vmatpush1.msra.mxu0 0.0
      %993 = vmatprep.subr.mxu0 0.0
      %994 = vmatpush1.msra.mxu0 0.0
      %995 = vmatprep.subr.mxu0 0.0
      %996 = vmatpush1.msra.mxu0 0.0
      %997 = vmatprep.subr.mxu0 0.0
      %998 = vmatpush1.msra.mxu0 0.0
      %999 = vmatprep.subr.mxu0 0.0
      %1000 = vmatpush1.msra.mxu0 0.0
      %1001 = vmatprep.subr.mxu0 0.0
      %1002 = vmatpush1.msra.mxu0 0.0
      %1003 = vmatprep.subr.mxu0 0.0
      %1004 = vmatpush1.msra.mxu0 0.0
      %1005 = vmatprep.subr.mxu0 0.0
      %1006 = vmatpush1.msra.mxu0 0.0
      %1007 = vmatprep.subr.mxu0 0.0
      %1008 = vmatpush1.msra.mxu0 0.0
      %1009 = vmatprep.subr.mxu0 0.0
      %1010 = vmatpush1.msra.mxu0 0.0
      %1011 = vmatprep.subr.mxu0 0.0
      %1012 = vmatpush1.msra.mxu0 0.0
      %1013 = vmatprep.subr.mxu0 0.0
      %1014 = vmatpush1.msra.mxu0 0.0
      %1015 = vmatprep.subr.mxu0 0.0
      %1016 = vmatpush1.msra.mxu0 0.0
      %1017 = vmatprep.subr.mxu0 0.0
      %1018 = vmatpush1.msra.mxu0 0.0
      %1019 = vmatprep.subr.mxu0 0.0
      %1020 = vmatpush1.msra.mxu0 0.0
      %1021 = vmatprep.subr.mxu0 0.0
      %1022 = vmatpush1.msra.mxu0 0.0
      %1023 = vmatprep.mubr.f32.mxu0 0.0
      %v1024 = vand.u32 %v863, 4294901760
      %1025 = vmatmul.mubr.f32.gmra.mrb[0].mxu0 %v1024
      %v1026 = vpop.f32.mrb[0].mxu0
      %v1027 = vadd.f32 %v945, %v1026
      %v1028 = vpop.f32.mrb[0].mxu0
      %v1029 = vadd.f32 %v947, %v1028
      %1030 = vdwg.mxu0
      %v1031 = vand.u32 %v869, 4294901760
      %v1032 = vsub.f32 %v869, %v1031
      %1033 = vmatprep.subr.mxu0 %v1032
      %v1034 = vand.u32 %v866, 4294901760
      %v1035 = vsub.f32 %v866, %v1034
      %1036 = vmatpush1.msra.mxu0 %v1035
      %1037 = vmatprep.subr.mxu0 0.0
      %1038 = vmatpush1.msra.mxu0 0.0
      %1039 = vmatprep.subr.mxu0 0.0
      %1040 = vmatpush1.msra.mxu0 0.0
      %1041 = vmatprep.subr.mxu0 0.0
      %1042 = vmatpush1.msra.mxu0 0.0
      %1043 = vmatprep.subr.mxu0 0.0
      %1044 = vmatpush1.msra.mxu0 0.0
      %1045 = vmatprep.subr.mxu0 0.0
      %1046 = vmatpush1.msra.mxu0 0.0
      %1047 = vmatprep.subr.mxu0 0.0
      %1048 = vmatpush1.msra.mxu0 0.0
      %1049 = vmatprep.subr.mxu0 0.0
      %1050 = vmatpush1.msra.mxu0 0.0
      %1051 = vmatprep.subr.mxu0 0.0
      %1052 = vmatpush1.msra.mxu0 0.0
      %1053 = vmatprep.subr.mxu0 0.0
      %1054 = vmatpush1.msra.mxu0 0.0
      %1055 = vmatprep.subr.mxu0 0.0
      %1056 = vmatpush1.msra.mxu0 0.0
      %1057 = vmatprep.subr.mxu0 0.0
      %1058 = vmatpush1.msra.mxu0 0.0
      %1059 = vmatprep.subr.mxu0 0.0
      %1060 = vmatpush1.msra.mxu0 0.0
      %1061 = vmatprep.subr.mxu0 0.0
      %1062 = vmatpush1.msra.mxu0 0.0
      %1063 = vmatprep.subr.mxu0 0.0
      %1064 = vmatpush1.msra.mxu0 0.0
      %1065 = vmatprep.subr.mxu0 0.0
      %1066 = vmatpush1.msra.mxu0 0.0
      %1067 = vmatprep.subr.mxu0 0.0
      %1068 = vmatpush1.msra.mxu0 0.0
      %1069 = vmatprep.subr.mxu0 0.0
      %1070 = vmatpush1.msra.mxu0 0.0
      %1071 = vmatprep.subr.mxu0 0.0
      %1072 = vmatpush1.msra.mxu0 0.0
      %1073 = vmatprep.subr.mxu0 0.0
      %1074 = vmatpush1.msra.mxu0 0.0
      %1075 = vmatprep.subr.mxu0 0.0
      %1076 = vmatpush1.msra.mxu0 0.0
      %1077 = vmatprep.subr.mxu0 0.0
      %1078 = vmatpush1.msra.mxu0 0.0
      %1079 = vmatprep.subr.mxu0 0.0
      %1080 = vmatpush1.msra.mxu0 0.0
      %1081 = vmatprep.subr.mxu0 0.0
      %1082 = vmatpush1.msra.mxu0 0.0
      %1083 = vmatprep.subr.mxu0 0.0
      %1084 = vmatpush1.msra.mxu0 0.0
      %1085 = vmatprep.subr.mxu0 0.0
      %1086 = vmatpush1.msra.mxu0 0.0
      %1087 = vmatprep.subr.mxu0 0.0
      %1088 = vmatpush1.msra.mxu0 0.0
      %1089 = vmatprep.subr.mxu0 0.0
      %1090 = vmatpush1.msra.mxu0 0.0
      %1091 = vmatprep.subr.mxu0 0.0
      %1092 = vmatpush1.msra.mxu0 0.0
      %1093 = vmatprep.subr.mxu0 0.0
      %1094 = vmatpush1.msra.mxu0 0.0
      %1095 = vmatprep.subr.mxu0 0.0
      %1096 = vmatpush1.msra.mxu0 0.0
      %1097 = vmatprep.subr.mxu0 0.0
      %1098 = vmatpush1.msra.mxu0 0.0
      %1099 = vmatprep.mubr.f32.mxu0 0.0
      %v1100 = vand.u32 %v863, 4294901760
      %v1101 = vsub.f32 %v863, %v1100
      %1102 = vmatmul.mubr.f32.gmra.mrb[0].mxu0 %v1101
      %v1103 = vpop.f32.mrb[0].mxu0
      %v1104 = vadd.f32 %v1027, %v1103
      %v1105 = vpop.f32.mrb[0].mxu0
      %v1106 = vadd.f32 %v1029, %v1105
      %1107 = vdwg.mxu0
      %v1108 = vand.u32 %v869, 4294901760
      %1109 = vmatprep.subr.mxu0 %v1108
      %v1110 = vand.u32 %v866, 4294901760
      %1111 = vmatpush1.msra.mxu0 %v1110
      %1112 = vmatprep.subr.mxu0 0.0
      %1113 = vmatpush1.msra.mxu0 0.0
      %1114 = vmatprep.subr.mxu0 0.0
      %1115 = vmatpush1.msra.mxu0 0.0
      %1116 = vmatprep.subr.mxu0 0.0
      %1117 = vmatpush1.msra.mxu0 0.0
      %1118 = vmatprep.subr.mxu0 0.0
      %1119 = vmatpush1.msra.mxu0 0.0
      %1120 = vmatprep.subr.mxu0 0.0
      %1121 = vmatpush1.msra.mxu0 0.0
      %1122 = vmatprep.subr.mxu0 0.0
      %1123 = vmatpush1.msra.mxu0 0.0
      %1124 = vmatprep.subr.mxu0 0.0
      %1125 = vmatpush1.msra.mxu0 0.0
      %1126 = vmatprep.subr.mxu0 0.0
      %1127 = vmatpush1.msra.mxu0 0.0
      %1128 = vmatprep.subr.mxu0 0.0
      %1129 = vmatpush1.msra.mxu0 0.0
      %1130 = vmatprep.subr.mxu0 0.0
      %1131 = vmatpush1.msra.mxu0 0.0
      %1132 = vmatprep.subr.mxu0 0.0
      %1133 = vmatpush1.msra.mxu0 0.0
      %1134 = vmatprep.subr.mxu0 0.0
      %1135 = vmatpush1.msra.mxu0 0.0
      %1136 = vmatprep.subr.mxu0 0.0
      %1137 = vmatpush1.msra.mxu0 0.0
      %1138 = vmatprep.subr.mxu0 0.0
      %1139 = vmatpush1.msra.mxu0 0.0
      %1140 = vmatprep.subr.mxu0 0.0
      %1141 = vmatpush1.msra.mxu0 0.0
      %1142 = vmatprep.subr.mxu0 0.0
      %1143 = vmatpush1.msra.mxu0 0.0
      %1144 = vmatprep.subr.mxu0 0.0
      %1145 = vmatpush1.msra.mxu0 0.0
      %1146 = vmatprep.subr.mxu0 0.0
      %1147 = vmatpush1.msra.mxu0 0.0
      %1148 = vmatprep.subr.mxu0 0.0
      %1149 = vmatpush1.msra.mxu0 0.0
      %1150 = vmatprep.subr.mxu0 0.0
      %1151 = vmatpush1.msra.mxu0 0.0
      %1152 = vmatprep.subr.mxu0 0.0
      %1153 = vmatpush1.msra.mxu0 0.0
      %1154 = vmatprep.subr.mxu0 0.0
      %1155 = vmatpush1.msra.mxu0 0.0
      %1156 = vmatprep.subr.mxu0 0.0
      %1157 = vmatpush1.msra.mxu0 0.0
      %1158 = vmatprep.subr.mxu0 0.0
      %1159 = vmatpush1.msra.mxu0 0.0
      %1160 = vmatprep.subr.mxu0 0.0
      %1161 = vmatpush1.msra.mxu0 0.0
      %1162 = vmatprep.subr.mxu0 0.0
      %1163 = vmatpush1.msra.mxu0 0.0
      %1164 = vmatprep.subr.mxu0 0.0
      %1165 = vmatpush1.msra.mxu0 0.0
      %1166 = vmatprep.subr.mxu0 0.0
      %1167 = vmatpush1.msra.mxu0 0.0
      %1168 = vmatprep.subr.mxu0 0.0
      %1169 = vmatpush1.msra.mxu0 0.0
      %1170 = vmatprep.subr.mxu0 0.0
      %1171 = vmatpush1.msra.mxu0 0.0
      %1172 = vmatprep.subr.mxu0 0.0
      %1173 = vmatpush1.msra.mxu0 0.0
      %1174 = vmatprep.mubr.f32.mxu0 0.0
      %v1175 = vand.u32 %v863, 4294901760
      %v1176 = vsub.f32 %v863, %v1175
      %v1177 = vand.u32 %v1176, 4294901760
      %1178 = vmatmul.mubr.f32.gmra.mrb[0].mxu0 %v1177
      %v1179 = vpop.f32.mrb[0].mxu0
      %v1180 = vadd.f32 %v1104, %v1179
      %v1181 = vpop.f32.mrb[0].mxu0
      %v1182 = vadd.f32 %v1106, %v1181
      %1183 = vdwg.mxu0
      %v1184 = vand.u32 %v869, 4294901760
      %v1185 = vsub.f32 %v869, %v1184
      %v1186 = vand.u32 %v1185, 4294901760
      %1187 = vmatprep.subr.mxu0 %v1186
      %v1188 = vand.u32 %v866, 4294901760
      %v1189 = vsub.f32 %v866, %v1188
      %v1190 = vand.u32 %v1189, 4294901760
      %1191 = vmatpush1.msra.mxu0 %v1190
      %1192 = vmatprep.subr.mxu0 0.0
      %1193 = vmatpush1.msra.mxu0 0.0
      %1194 = vmatprep.subr.mxu0 0.0
      %1195 = vmatpush1.msra.mxu0 0.0
      %1196 = vmatprep.subr.mxu0 0.0
      %1197 = vmatpush1.msra.mxu0 0.0
      %1198 = vmatprep.subr.mxu0 0.0
      %1199 = vmatpush1.msra.mxu0 0.0
      %1200 = vmatprep.subr.mxu0 0.0
      %1201 = vmatpush1.msra.mxu0 0.0
      %1202 = vmatprep.subr.mxu0 0.0
      %1203 = vmatpush1.msra.mxu0 0.0
      %1204 = vmatprep.subr.mxu0 0.0
      %1205 = vmatpush1.msra.mxu0 0.0
      %1206 = vmatprep.subr.mxu0 0.0
      %1207 = vmatpush1.msra.mxu0 0.0
      %1208 = vmatprep.subr.mxu0 0.0
      %1209 = vmatpush1.msra.mxu0 0.0
      %1210 = vmatprep.subr.mxu0 0.0
      %1211 = vmatpush1.msra.mxu0 0.0
      %1212 = vmatprep.subr.mxu0 0.0
      %1213 = vmatpush1.msra.mxu0 0.0
      %1214 = vmatprep.subr.mxu0 0.0
      %1215 = vmatpush1.msra.mxu0 0.0
      %1216 = vmatprep.subr.mxu0 0.0
      %1217 = vmatpush1.msra.mxu0 0.0
      %1218 = vmatprep.subr.mxu0 0.0
      %1219 = vmatpush1.msra.mxu0 0.0
      %1220 = vmatprep.subr.mxu0 0.0
      %1221 = vmatpush1.msra.mxu0 0.0
      %1222 = vmatprep.subr.mxu0 0.0
      %1223 = vmatpush1.msra.mxu0 0.0
      %1224 = vmatprep.subr.mxu0 0.0
      %1225 = vmatpush1.msra.mxu0 0.0
      %1226 = vmatprep.subr.mxu0 0.0
      %1227 = vmatpush1.msra.mxu0 0.0
      %1228 = vmatprep.subr.mxu0 0.0
      %1229 = vmatpush1.msra.mxu0 0.0
      %1230 = vmatprep.subr.mxu0 0.0
      %1231 = vmatpush1.msra.mxu0 0.0
      %1232 = vmatprep.subr.mxu0 0.0
      %1233 = vmatpush1.msra.mxu0 0.0
      %1234 = vmatprep.subr.mxu0 0.0
      %1235 = vmatpush1.msra.mxu0 0.0
      %1236 = vmatprep.subr.mxu0 0.0
      %1237 = vmatpush1.msra.mxu0 0.0
      %1238 = vmatprep.subr.mxu0 0.0
      %1239 = vmatpush1.msra.mxu0 0.0
      %1240 = vmatprep.subr.mxu0 0.0
      %1241 = vmatpush1.msra.mxu0 0.0
      %1242 = vmatprep.subr.mxu0 0.0
      %1243 = vmatpush1.msra.mxu0 0.0
      %1244 = vmatprep.subr.mxu0 0.0
      %1245 = vmatpush1.msra.mxu0 0.0
      %1246 = vmatprep.subr.mxu0 0.0
      %1247 = vmatpush1.msra.mxu0 0.0
      %1248 = vmatprep.subr.mxu0 0.0
      %1249 = vmatpush1.msra.mxu0 0.0
      %1250 = vmatprep.subr.mxu0 0.0
      %1251 = vmatpush1.msra.mxu0 0.0
      %1252 = vmatprep.subr.mxu0 0.0
      %1253 = vmatpush1.msra.mxu0 0.0
      %1254 = vmatprep.mubr.f32.mxu0 0.0
      %v1255 = vand.u32 %v863, 4294901760
      %1256 = vmatmul.mubr.f32.gmra.mrb[0].mxu0 %v1255
      %v1257 = vpop.f32.mrb[0].mxu0
      %v1258 = vadd.f32 %v1180, %v1257
      %v1259 = vpop.f32.mrb[0].mxu0
      %v1260 = vadd.f32 %v1182, %v1259
      %1261 = vdwg.mxu0
      %v1262 = vand.u32 %v869, 4294901760
      %1263 = vmatprep.subr.mxu0 %v1262
      %v1264 = vand.u32 %v866, 4294901760
      %1265 = vmatpush1.msra.mxu0 %v1264
      %1266 = vmatprep.subr.mxu0 0.0
      %1267 = vmatpush1.msra.mxu0 0.0
      %1268 = vmatprep.subr.mxu0 0.0
      %1269 = vmatpush1.msra.mxu0 0.0
      %1270 = vmatprep.subr.mxu0 0.0
      %1271 = vmatpush1.msra.mxu0 0.0
      %1272 = vmatprep.subr.mxu0 0.0
      %1273 = vmatpush1.msra.mxu0 0.0
      %1274 = vmatprep.subr.mxu0 0.0
      %1275 = vmatpush1.msra.mxu0 0.0
      %1276 = vmatprep.subr.mxu0 0.0
      %1277 = vmatpush1.msra.mxu0 0.0
      %1278 = vmatprep.subr.mxu0 0.0
      %1279 = vmatpush1.msra.mxu0 0.0
      %1280 = vmatprep.subr.mxu0 0.0
      %1281 = vmatpush1.msra.mxu0 0.0
      %1282 = vmatprep.subr.mxu0 0.0
      %1283 = vmatpush1.msra.mxu0 0.0
      %1284 = vmatprep.subr.mxu0 0.0
      %1285 = vmatpush1.msra.mxu0 0.0
      %1286 = vmatprep.subr.mxu0 0.0
      %1287 = vmatpush1.msra.mxu0 0.0
      %1288 = vmatprep.subr.mxu0 0.0
      %1289 = vmatpush1.msra.mxu0 0.0
      %1290 = vmatprep.subr.mxu0 0.0
      %1291 = vmatpush1.msra.mxu0 0.0
      %1292 = vmatprep.subr.mxu0 0.0
      %1293 = vmatpush1.msra.mxu0 0.0
      %1294 = vmatprep.subr.mxu0 0.0
      %1295 = vmatpush1.msra.mxu0 0.0
      %1296 = vmatprep.subr.mxu0 0.0
      %1297 = vmatpush1.msra.mxu0 0.0
      %1298 = vmatprep.subr.mxu0 0.0
      %1299 = vmatpush1.msra.mxu0 0.0
      %1300 = vmatprep.subr.mxu0 0.0
      %1301 = vmatpush1.msra.mxu0 0.0
      %1302 = vmatprep.subr.mxu0 0.0
      %1303 = vmatpush1.msra.mxu0 0.0
      %1304 = vmatprep.subr.mxu0 0.0
      %1305 = vmatpush1.msra.mxu0 0.0
      %1306 = vmatprep.subr.mxu0 0.0
      %1307 = vmatpush1.msra.mxu0 0.0
      %1308 = vmatprep.subr.mxu0 0.0
      %1309 = vmatpush1.msra.mxu0 0.0
      %1310 = vmatprep.subr.mxu0 0.0
      %1311 = vmatpush1.msra.mxu0 0.0
      %1312 = vmatprep.subr.mxu0 0.0
      %1313 = vmatpush1.msra.mxu0 0.0
      %1314 = vmatprep.subr.mxu0 0.0
      %1315 = vmatpush1.msra.mxu0 0.0
      %1316 = vmatprep.subr.mxu0 0.0
      %1317 = vmatpush1.msra.mxu0 0.0
      %1318 = vmatprep.subr.mxu0 0.0
      %1319 = vmatpush1.msra.mxu0 0.0
      %1320 = vmatprep.subr.mxu0 0.0
      %1321 = vmatpush1.msra.mxu0 0.0
      %1322 = vmatprep.subr.mxu0 0.0
      %1323 = vmatpush1.msra.mxu0 0.0
      %1324 = vmatprep.subr.mxu0 0.0
      %1325 = vmatpush1.msra.mxu0 0.0
      %1326 = vmatprep.subr.mxu0 0.0
      %1327 = vmatpush1.msra.mxu0 0.0
      %1328 = vmatprep.mubr.f32.mxu0 0.0
      %v1329 = vand.u32 %v863, 4294901760
      %1330 = vmatmul.mubr.f32.gmra.mrb[0].mxu0 %v1329
      %v1331 = vpop.f32.mrb[0].mxu0
      %v1332 = vadd.f32 %v1258, %v1331
      %v1333 = vpop.f32.mrb[0].mxu0
      %v1334 = vadd.f32 %v1260, %v1333
      %1335 = vdwg.mxu0
      %s1336 = scalar_lea.vmem %s1, 8
      %v1337 = vld [vmem:[%s1336] sm:$0xf]
      %v1339 = vsel %vm388, %v1337, 0
      %v1342 = vsel %vm392, %v374, 0
      %v1345 = vsel %vm392, %v375, 0
      %v1347 = vand.u32 %v1345, 4294901760
      %1348 = vmatprep.subr.mxu0 %v1347
      %v1349 = vand.u32 %v1342, 4294901760
      %1350 = vmatpush1.msra.mxu0 %v1349
      %1351 = vmatprep.subr.mxu0 0.0
      %1352 = vmatpush1.msra.mxu0 0.0
      %1353 = vmatprep.subr.mxu0 0.0
      %1354 = vmatpush1.msra.mxu0 0.0
      %1355 = vmatprep.subr.mxu0 0.0
      %1356 = vmatpush1.msra.mxu0 0.0
      %1357 = vmatprep.subr.mxu0 0.0
      %1358 = vmatpush1.msra.mxu0 0.0
      %1359 = vmatprep.subr.mxu0 0.0
      %1360 = vmatpush1.msra.mxu0 0.0
      %1361 = vmatprep.subr.mxu0 0.0
      %1362 = vmatpush1.msra.mxu0 0.0
      %1363 = vmatprep.subr.mxu0 0.0
      %1364 = vmatpush1.msra.mxu0 0.0
      %1365 = vmatprep.subr.mxu0 0.0
      %1366 = vmatpush1.msra.mxu0 0.0
      %1367 = vmatprep.subr.mxu0 0.0
      %1368 = vmatpush1.msra.mxu0 0.0
      %1369 = vmatprep.subr.mxu0 0.0
      %1370 = vmatpush1.msra.mxu0 0.0
      %1371 = vmatprep.subr.mxu0 0.0
      %1372 = vmatpush1.msra.mxu0 0.0
      %1373 = vmatprep.subr.mxu0 0.0
      %1374 = vmatpush1.msra.mxu0 0.0
      %1375 = vmatprep.subr.mxu0 0.0
      %1376 = vmatpush1.msra.mxu0 0.0
      %1377 = vmatprep.subr.mxu0 0.0
      %1378 = vmatpush1.msra.mxu0 0.0
      %1379 = vmatprep.subr.mxu0 0.0
      %1380 = vmatpush1.msra.mxu0 0.0
      %1381 = vmatprep.subr.mxu0 0.0
      %1382 = vmatpush1.msra.mxu0 0.0
      %1383 = vmatprep.subr.mxu0 0.0
      %1384 = vmatpush1.msra.mxu0 0.0
      %1385 = vmatprep.subr.mxu0 0.0
      %1386 = vmatpush1.msra.mxu0 0.0
      %1387 = vmatprep.subr.mxu0 0.0
      %1388 = vmatpush1.msra.mxu0 0.0
      %1389 = vmatprep.subr.mxu0 0.0
      %1390 = vmatpush1.msra.mxu0 0.0
      %1391 = vmatprep.subr.mxu0 0.0
      %1392 = vmatpush1.msra.mxu0 0.0
      %1393 = vmatprep.subr.mxu0 0.0
      %1394 = vmatpush1.msra.mxu0 0.0
      %1395 = vmatprep.subr.mxu0 0.0
      %1396 = vmatpush1.msra.mxu0 0.0
      %1397 = vmatprep.subr.mxu0 0.0
      %1398 = vmatpush1.msra.mxu0 0.0
      %1399 = vmatprep.subr.mxu0 0.0
      %1400 = vmatpush1.msra.mxu0 0.0
      %1401 = vmatprep.subr.mxu0 0.0
      %1402 = vmatpush1.msra.mxu0 0.0
      %1403 = vmatprep.subr.mxu0 0.0
      %1404 = vmatpush1.msra.mxu0 0.0
      %1405 = vmatprep.subr.mxu0 0.0
      %1406 = vmatpush1.msra.mxu0 0.0
      %1407 = vmatprep.subr.mxu0 0.0
      %1408 = vmatpush1.msra.mxu0 0.0
      %1409 = vmatprep.subr.mxu0 0.0
      %1410 = vmatpush1.msra.mxu0 0.0
      %1411 = vmatprep.subr.mxu0 0.0
      %1412 = vmatpush1.msra.mxu0 0.0
      %1413 = vmatprep.mubr.f32.mxu0 0.0
      %v1414 = vand.u32 %v1339, 4294901760
      %v1415 = vsub.f32 %v1339, %v1414
      %v1416 = vand.u32 %v1415, 4294901760
      %v1417 = vsub.f32 %v1415, %v1416
      %v1418 = vand.u32 %v1417, 4294901760
      %1419 = vmatmul.mubr.f32.gmra.mrb[0].mxu0 %v1418
      %v1420 = vpop.f32.mrb[0].mxu0
      %v1421 = vadd.f32 0.0, %v1420
      %v1422 = vpop.f32.mrb[0].mxu0
      %v1423 = vadd.f32 0.0, %v1422
      %1424 = vdwg.mxu0
      %v1425 = vand.u32 %v1345, 4294901760
      %v1426 = vsub.f32 %v1345, %v1425
      %v1427 = vand.u32 %v1426, 4294901760
      %v1428 = vsub.f32 %v1426, %v1427
      %v1429 = vand.u32 %v1428, 4294901760
      %1430 = vmatprep.subr.mxu0 %v1429
      %v1431 = vand.u32 %v1342, 4294901760
      %v1432 = vsub.f32 %v1342, %v1431
      %v1433 = vand.u32 %v1432, 4294901760
      %v1434 = vsub.f32 %v1432, %v1433
      %v1435 = vand.u32 %v1434, 4294901760
      %1436 = vmatpush1.msra.mxu0 %v1435
      %1437 = vmatprep.subr.mxu0 0.0
      %1438 = vmatpush1.msra.mxu0 0.0
      %1439 = vmatprep.subr.mxu0 0.0
      %1440 = vmatpush1.msra.mxu0 0.0
      %1441 = vmatprep.subr.mxu0 0.0
      %1442 = vmatpush1.msra.mxu0 0.0
      %1443 = vmatprep.subr.mxu0 0.0
      %1444 = vmatpush1.msra.mxu0 0.0
      %1445 = vmatprep.subr.mxu0 0.0
      %1446 = vmatpush1.msra.mxu0 0.0
      %1447 = vmatprep.subr.mxu0 0.0
      %1448 = vmatpush1.msra.mxu0 0.0
      %1449 = vmatprep.subr.mxu0 0.0
      %1450 = vmatpush1.msra.mxu0 0.0
      %1451 = vmatprep.subr.mxu0 0.0
      %1452 = vmatpush1.msra.mxu0 0.0
      %1453 = vmatprep.subr.mxu0 0.0
      %1454 = vmatpush1.msra.mxu0 0.0
      %1455 = vmatprep.subr.mxu0 0.0
      %1456 = vmatpush1.msra.mxu0 0.0
      %1457 = vmatprep.subr.mxu0 0.0
      %1458 = vmatpush1.msra.mxu0 0.0
      %1459 = vmatprep.subr.mxu0 0.0
      %1460 = vmatpush1.msra.mxu0 0.0
      %1461 = vmatprep.subr.mxu0 0.0
      %1462 = vmatpush1.msra.mxu0 0.0
      %1463 = vmatprep.subr.mxu0 0.0
      %1464 = vmatpush1.msra.mxu0 0.0
      %1465 = vmatprep.subr.mxu0 0.0
      %1466 = vmatpush1.msra.mxu0 0.0
      %1467 = vmatprep.subr.mxu0 0.0
      %1468 = vmatpush1.msra.mxu0 0.0
      %1469 = vmatprep.subr.mxu0 0.0
      %1470 = vmatpush1.msra.mxu0 0.0
      %1471 = vmatprep.subr.mxu0 0.0
      %1472 = vmatpush1.msra.mxu0 0.0
      %1473 = vmatprep.subr.mxu0 0.0
      %1474 = vmatpush1.msra.mxu0 0.0
      %1475 = vmatprep.subr.mxu0 0.0
      %1476 = vmatpush1.msra.mxu0 0.0
      %1477 = vmatprep.subr.mxu0 0.0
      %1478 = vmatpush1.msra.mxu0 0.0
      %1479 = vmatprep.subr.mxu0 0.0
      %1480 = vmatpush1.msra.mxu0 0.0
      %1481 = vmatprep.subr.mxu0 0.0
      %1482 = vmatpush1.msra.mxu0 0.0
      %1483 = vmatprep.subr.mxu0 0.0
      %1484 = vmatpush1.msra.mxu0 0.0
      %1485 = vmatprep.subr.mxu0 0.0
      %1486 = vmatpush1.msra.mxu0 0.0
      %1487 = vmatprep.subr.mxu0 0.0
      %1488 = vmatpush1.msra.mxu0 0.0
      %1489 = vmatprep.subr.mxu0 0.0
      %1490 = vmatpush1.msra.mxu0 0.0
      %1491 = vmatprep.subr.mxu0 0.0
      %1492 = vmatpush1.msra.mxu0 0.0
      %1493 = vmatprep.subr.mxu0 0.0
      %1494 = vmatpush1.msra.mxu0 0.0
      %1495 = vmatprep.subr.mxu0 0.0
      %1496 = vmatpush1.msra.mxu0 0.0
      %1497 = vmatprep.subr.mxu0 0.0
      %1498 = vmatpush1.msra.mxu0 0.0
      %1499 = vmatprep.mubr.f32.mxu0 0.0
      %v1500 = vand.u32 %v1339, 4294901760
      %1501 = vmatmul.mubr.f32.gmra.mrb[0].mxu0 %v1500
      %v1502 = vpop.f32.mrb[0].mxu0
      %v1503 = vadd.f32 %v1421, %v1502
      %v1504 = vpop.f32.mrb[0].mxu0
      %v1505 = vadd.f32 %v1423, %v1504
      %1506 = vdwg.mxu0
      %v1507 = vand.u32 %v1345, 4294901760
      %v1508 = vsub.f32 %v1345, %v1507
      %1509 = vmatprep.subr.mxu0 %v1508
      %v1510 = vand.u32 %v1342, 4294901760
      %v1511 = vsub.f32 %v1342, %v1510
      %1512 = vmatpush1.msra.mxu0 %v1511
      %1513 = vmatprep.subr.mxu0 0.0
      %1514 = vmatpush1.msra.mxu0 0.0
      %1515 = vmatprep.subr.mxu0 0.0
      %1516 = vmatpush1.msra.mxu0 0.0
      %1517 = vmatprep.subr.mxu0 0.0
      %1518 = vmatpush1.msra.mxu0 0.0
      %1519 = vmatprep.subr.mxu0 0.0
      %1520 = vmatpush1.msra.mxu0 0.0
      %1521 = vmatprep.subr.mxu0 0.0
      %1522 = vmatpush1.msra.mxu0 0.0
      %1523 = vmatprep.subr.mxu0 0.0
      %1524 = vmatpush1.msra.mxu0 0.0
      %1525 = vmatprep.subr.mxu0 0.0
      %1526 = vmatpush1.msra.mxu0 0.0
      %1527 = vmatprep.subr.mxu0 0.0
      %1528 = vmatpush1.msra.mxu0 0.0
      %1529 = vmatprep.subr.mxu0 0.0
      %1530 = vmatpush1.msra.mxu0 0.0
      %1531 = vmatprep.subr.mxu0 0.0
      %1532 = vmatpush1.msra.mxu0 0.0
      %1533 = vmatprep.subr.mxu0 0.0
      %1534 = vmatpush1.msra.mxu0 0.0
      %1535 = vmatprep.subr.mxu0 0.0
      %1536 = vmatpush1.msra.mxu0 0.0
      %1537 = vmatprep.subr.mxu0 0.0
      %1538 = vmatpush1.msra.mxu0 0.0
      %1539 = vmatprep.subr.mxu0 0.0
      %1540 = vmatpush1.msra.mxu0 0.0
      %1541 = vmatprep.subr.mxu0 0.0
      %1542 = vmatpush1.msra.mxu0 0.0
      %1543 = vmatprep.subr.mxu0 0.0
      %1544 = vmatpush1.msra.mxu0 0.0
      %1545 = vmatprep.subr.mxu0 0.0
      %1546 = vmatpush1.msra.mxu0 0.0
      %1547 = vmatprep.subr.mxu0 0.0
      %1548 = vmatpush1.msra.mxu0 0.0
      %1549 = vmatprep.subr.mxu0 0.0
      %1550 = vmatpush1.msra.mxu0 0.0
      %1551 = vmatprep.subr.mxu0 0.0
      %1552 = vmatpush1.msra.mxu0 0.0
      %1553 = vmatprep.subr.mxu0 0.0
      %1554 = vmatpush1.msra.mxu0 0.0
      %1555 = vmatprep.subr.mxu0 0.0
      %1556 = vmatpush1.msra.mxu0 0.0
      %1557 = vmatprep.subr.mxu0 0.0
      %1558 = vmatpush1.msra.mxu0 0.0
      %1559 = vmatprep.subr.mxu0 0.0
      %1560 = vmatpush1.msra.mxu0 0.0
      %1561 = vmatprep.subr.mxu0 0.0
      %1562 = vmatpush1.msra.mxu0 0.0
      %1563 = vmatprep.subr.mxu0 0.0
      %1564 = vmatpush1.msra.mxu0 0.0
      %1565 = vmatprep.subr.mxu0 0.0
      %1566 = vmatpush1.msra.mxu0 0.0
      %1567 = vmatprep.subr.mxu0 0.0
      %1568 = vmatpush1.msra.mxu0 0.0
      %1569 = vmatprep.subr.mxu0 0.0
      %1570 = vmatpush1.msra.mxu0 0.0
      %1571 = vmatprep.subr.mxu0 0.0
      %1572 = vmatpush1.msra.mxu0 0.0
      %1573 = vmatprep.subr.mxu0 0.0
      %1574 = vmatpush1.msra.mxu0 0.0
      %1575 = vmatprep.mubr.f32.mxu0 0.0
      %v1576 = vand.u32 %v1339, 4294901760
      %v1577 = vsub.f32 %v1339, %v1576
      %1578 = vmatmul.mubr.f32.gmra.mrb[0].mxu0 %v1577
      %v1579 = vpop.f32.mrb[0].mxu0
      %v1580 = vadd.f32 %v1503, %v1579
      %v1581 = vpop.f32.mrb[0].mxu0
      %v1582 = vadd.f32 %v1505, %v1581
      %1583 = vdwg.mxu0
      %v1584 = vand.u32 %v1345, 4294901760
      %1585 = vmatprep.subr.mxu0 %v1584
      %v1586 = vand.u32 %v1342, 4294901760
      %1587 = vmatpush1.msra.mxu0 %v1586
      %1588 = vmatprep.subr.mxu0 0.0
      %1589 = vmatpush1.msra.mxu0 0.0
      %1590 = vmatprep.subr.mxu0 0.0
      %1591 = vmatpush1.msra.mxu0 0.0
      %1592 = vmatprep.subr.mxu0 0.0
      %1593 = vmatpush1.msra.mxu0 0.0
      %1594 = vmatprep.subr.mxu0 0.0
      %1595 = vmatpush1.msra.mxu0 0.0
      %1596 = vmatprep.subr.mxu0 0.0
      %1597 = vmatpush1.msra.mxu0 0.0
      %1598 = vmatprep.subr.mxu0 0.0
      %1599 = vmatpush1.msra.mxu0 0.0
      %1600 = vmatprep.subr.mxu0 0.0
      %1601 = vmatpush1.msra.mxu0 0.0
      %1602 = vmatprep.subr.mxu0 0.0
      %1603 = vmatpush1.msra.mxu0 0.0
      %1604 = vmatprep.subr.mxu0 0.0
      %1605 = vmatpush1.msra.mxu0 0.0
      %1606 = vmatprep.subr.mxu0 0.0
      %1607 = vmatpush1.msra.mxu0 0.0
      %1608 = vmatprep.subr.mxu0 0.0
      %1609 = vmatpush1.msra.mxu0 0.0
      %1610 = vmatprep.subr.mxu0 0.0
      %1611 = vmatpush1.msra.mxu0 0.0
      %1612 = vmatprep.subr.mxu0 0.0
      %1613 = vmatpush1.msra.mxu0 0.0
      %1614 = vmatprep.subr.mxu0 0.0
      %1615 = vmatpush1.msra.mxu0 0.0
      %1616 = vmatprep.subr.mxu0 0.0
      %1617 = vmatpush1.msra.mxu0 0.0
      %1618 = vmatprep.subr.mxu0 0.0
      %1619 = vmatpush1.msra.mxu0 0.0
      %1620 = vmatprep.subr.mxu0 0.0
      %1621 = vmatpush1.msra.mxu0 0.0
      %1622 = vmatprep.subr.mxu0 0.0
      %1623 = vmatpush1.msra.mxu0 0.0
      %1624 = vmatprep.subr.mxu0 0.0
      %1625 = vmatpush1.msra.mxu0 0.0
      %1626 = vmatprep.subr.mxu0 0.0
      %1627 = vmatpush1.msra.mxu0 0.0
      %1628 = vmatprep.subr.mxu0 0.0
      %1629 = vmatpush1.msra.mxu0 0.0
      %1630 = vmatprep.subr.mxu0 0.0
      %1631 = vmatpush1.msra.mxu0 0.0
      %1632 = vmatprep.subr.mxu0 0.0
      %1633 = vmatpush1.msra.mxu0 0.0
      %1634 = vmatprep.subr.mxu0 0.0
      %1635 = vmatpush1.msra.mxu0 0.0
      %1636 = vmatprep.subr.mxu0 0.0
      %1637 = vmatpush1.msra.mxu0 0.0
      %1638 = vmatprep.subr.mxu0 0.0
      %1639 = vmatpush1.msra.mxu0 0.0
      %1640 = vmatprep.subr.mxu0 0.0
      %1641 = vmatpush1.msra.mxu0 0.0
      %1642 = vmatprep.subr.mxu0 0.0
      %1643 = vmatpush1.msra.mxu0 0.0
      %1644 = vmatprep.subr.mxu0 0.0
      %1645 = vmatpush1.msra.mxu0 0.0
      %1646 = vmatprep.subr.mxu0 0.0
      %1647 = vmatpush1.msra.mxu0 0.0
      %1648 = vmatprep.subr.mxu0 0.0
      %1649 = vmatpush1.msra.mxu0 0.0
      %1650 = vmatprep.mubr.f32.mxu0 0.0
      %v1651 = vand.u32 %v1339, 4294901760
      %v1652 = vsub.f32 %v1339, %v1651
      %v1653 = vand.u32 %v1652, 4294901760
      %1654 = vmatmul.mubr.f32.gmra.mrb[0].mxu0 %v1653
      %v1655 = vpop.f32.mrb[0].mxu0
      %v1656 = vadd.f32 %v1580, %v1655
      %v1657 = vpop.f32.mrb[0].mxu0
      %v1658 = vadd.f32 %v1582, %v1657
      %1659 = vdwg.mxu0
      %v1660 = vand.u32 %v1345, 4294901760
      %v1661 = vsub.f32 %v1345, %v1660
      %v1662 = vand.u32 %v1661, 4294901760
      %1663 = vmatprep.subr.mxu0 %v1662
      %v1664 = vand.u32 %v1342, 4294901760
      %v1665 = vsub.f32 %v1342, %v1664
      %v1666 = vand.u32 %v1665, 4294901760
      %1667 = vmatpush1.msra.mxu0 %v1666
      %1668 = vmatprep.subr.mxu0 0.0
      %1669 = vmatpush1.msra.mxu0 0.0
      %1670 = vmatprep.subr.mxu0 0.0
      %1671 = vmatpush1.msra.mxu0 0.0
      %1672 = vmatprep.subr.mxu0 0.0
      %1673 = vmatpush1.msra.mxu0 0.0
      %1674 = vmatprep.subr.mxu0 0.0
      %1675 = vmatpush1.msra.mxu0 0.0
      %1676 = vmatprep.subr.mxu0 0.0
      %1677 = vmatpush1.msra.mxu0 0.0
      %1678 = vmatprep.subr.mxu0 0.0
      %1679 = vmatpush1.msra.mxu0 0.0
      %1680 = vmatprep.subr.mxu0 0.0
      %1681 = vmatpush1.msra.mxu0 0.0
      %1682 = vmatprep.subr.mxu0 0.0
      %1683 = vmatpush1.msra.mxu0 0.0
      %1684 = vmatprep.subr.mxu0 0.0
      %1685 = vmatpush1.msra.mxu0 0.0
      %1686 = vmatprep.subr.mxu0 0.0
      %1687 = vmatpush1.msra.mxu0 0.0
      %1688 = vmatprep.subr.mxu0 0.0
      %1689 = vmatpush1.msra.mxu0 0.0
      %1690 = vmatprep.subr.mxu0 0.0
      %1691 = vmatpush1.msra.mxu0 0.0
      %1692 = vmatprep.subr.mxu0 0.0
      %1693 = vmatpush1.msra.mxu0 0.0
      %1694 = vmatprep.subr.mxu0 0.0
      %1695 = vmatpush1.msra.mxu0 0.0
      %1696 = vmatprep.subr.mxu0 0.0
      %1697 = vmatpush1.msra.mxu0 0.0
      %1698 = vmatprep.subr.mxu0 0.0
      %1699 = vmatpush1.msra.mxu0 0.0
      %1700 = vmatprep.subr.mxu0 0.0
      %1701 = vmatpush1.msra.mxu0 0.0
      %1702 = vmatprep.subr.mxu0 0.0
      %1703 = vmatpush1.msra.mxu0 0.0
      %1704 = vmatprep.subr.mxu0 0.0
      %1705 = vmatpush1.msra.mxu0 0.0
      %1706 = vmatprep.subr.mxu0 0.0
      %1707 = vmatpush1.msra.mxu0 0.0
      %1708 = vmatprep.subr.mxu0 0.0
      %1709 = vmatpush1.msra.mxu0 0.0
      %1710 = vmatprep.subr.mxu0 0.0
      %1711 = vmatpush1.msra.mxu0 0.0
      %1712 = vmatprep.subr.mxu0 0.0
      %1713 = vmatpush1.msra.mxu0 0.0
      %1714 = vmatprep.subr.mxu0 0.0
      %1715 = vmatpush1.msra.mxu0 0.0
      %1716 = vmatprep.subr.mxu0 0.0
      %1717 = vmatpush1.msra.mxu0 0.0
      %1718 = vmatprep.subr.mxu0 0.0
      %1719 = vmatpush1.msra.mxu0 0.0
      %1720 = vmatprep.subr.mxu0 0.0
      %1721 = vmatpush1.msra.mxu0 0.0
      %1722 = vmatprep.subr.mxu0 0.0
      %1723 = vmatpush1.msra.mxu0 0.0
      %1724 = vmatprep.subr.mxu0 0.0
      %1725 = vmatpush1.msra.mxu0 0.0
      %1726 = vmatprep.subr.mxu0 0.0
      %1727 = vmatpush1.msra.mxu0 0.0
      %1728 = vmatprep.subr.mxu0 0.0
      %1729 = vmatpush1.msra.mxu0 0.0
      %1730 = vmatprep.mubr.f32.mxu0 0.0
      %v1731 = vand.u32 %v1339, 4294901760
      %1732 = vmatmul.mubr.f32.gmra.mrb[0].mxu0 %v1731
      %v1733 = vpop.f32.mrb[0].mxu0
      %v1734 = vadd.f32 %v1656, %v1733
      %v1735 = vpop.f32.mrb[0].mxu0
      %v1736 = vadd.f32 %v1658, %v1735
      %1737 = vdwg.mxu0
      %v1738 = vand.u32 %v1345, 4294901760
      %1739 = vmatprep.subr.mxu0 %v1738
      %v1740 = vand.u32 %v1342, 4294901760
      %1741 = vmatpush1.msra.mxu0 %v1740
      %1742 = vmatprep.subr.mxu0 0.0
      %1743 = vmatpush1.msra.mxu0 0.0
      %1744 = vmatprep.subr.mxu0 0.0
      %1745 = vmatpush1.msra.mxu0 0.0
      %1746 = vmatprep.subr.mxu0 0.0
      %1747 = vmatpush1.msra.mxu0 0.0
      %1748 = vmatprep.subr.mxu0 0.0
      %1749 = vmatpush1.msra.mxu0 0.0
      %1750 = vmatprep.subr.mxu0 0.0
      %1751 = vmatpush1.msra.mxu0 0.0
      %1752 = vmatprep.subr.mxu0 0.0
      %1753 = vmatpush1.msra.mxu0 0.0
      %1754 = vmatprep.subr.mxu0 0.0
      %1755 = vmatpush1.msra.mxu0 0.0
      %1756 = vmatprep.subr.mxu0 0.0
      %1757 = vmatpush1.msra.mxu0 0.0
      %1758 = vmatprep.subr.mxu0 0.0
      %1759 = vmatpush1.msra.mxu0 0.0
      %1760 = vmatprep.subr.mxu0 0.0
      %1761 = vmatpush1.msra.mxu0 0.0
      %1762 = vmatprep.subr.mxu0 0.0
      %1763 = vmatpush1.msra.mxu0 0.0
      %1764 = vmatprep.subr.mxu0 0.0
      %1765 = vmatpush1.msra.mxu0 0.0
      %1766 = vmatprep.subr.mxu0 0.0
      %1767 = vmatpush1.msra.mxu0 0.0
      %1768 = vmatprep.subr.mxu0 0.0
      %1769 = vmatpush1.msra.mxu0 0.0
      %1770 = vmatprep.subr.mxu0 0.0
      %1771 = vmatpush1.msra.mxu0 0.0
      %1772 = vmatprep.subr.mxu0 0.0
      %1773 = vmatpush1.msra.mxu0 0.0
      %1774 = vmatprep.subr.mxu0 0.0
      %1775 = vmatpush1.msra.mxu0 0.0
      %1776 = vmatprep.subr.mxu0 0.0
      %1777 = vmatpush1.msra.mxu0 0.0
      %1778 = vmatprep.subr.mxu0 0.0
      %1779 = vmatpush1.msra.mxu0 0.0
      %1780 = vmatprep.subr.mxu0 0.0
      %1781 = vmatpush1.msra.mxu0 0.0
      %1782 = vmatprep.subr.mxu0 0.0
      %1783 = vmatpush1.msra.mxu0 0.0
      %1784 = vmatprep.subr.mxu0 0.0
      %1785 = vmatpush1.msra.mxu0 0.0
      %1786 = vmatprep.subr.mxu0 0.0
      %1787 = vmatpush1.msra.mxu0 0.0
      %1788 = vmatprep.subr.mxu0 0.0
      %1789 = vmatpush1.msra.mxu0 0.0
      %1790 = vmatprep.subr.mxu0 0.0
      %1791 = vmatpush1.msra.mxu0 0.0
      %1792 = vmatprep.subr.mxu0 0.0
      %1793 = vmatpush1.msra.mxu0 0.0
      %1794 = vmatprep.subr.mxu0 0.0
      %1795 = vmatpush1.msra.mxu0 0.0
      %1796 = vmatprep.subr.mxu0 0.0
      %1797 = vmatpush1.msra.mxu0 0.0
      %1798 = vmatprep.subr.mxu0 0.0
      %1799 = vmatpush1.msra.mxu0 0.0
      %1800 = vmatprep.subr.mxu0 0.0
      %1801 = vmatpush1.msra.mxu0 0.0
      %1802 = vmatprep.subr.mxu0 0.0
      %1803 = vmatpush1.msra.mxu0 0.0
      %1804 = vmatprep.mubr.f32.mxu0 0.0
      %v1805 = vand.u32 %v1339, 4294901760
      %1806 = vmatmul.mubr.f32.gmra.mrb[0].mxu0 %v1805
      %v1807 = vpop.f32.mrb[0].mxu0
      %v1808 = vadd.f32 %v1734, %v1807
      %v1809 = vpop.f32.mrb[0].mxu0
      %v1810 = vadd.f32 %v1736, %v1809
      %1811 = vdwg.mxu0
      %v1812 = vadd.f32 %v1332, %v1808
      %v1813 = vadd.f32 %v1334, %v1810
      %v1814 = vld [vmem:[#allocation2] sm:$0xff]
      %v1815 = vld [vmem:[#allocation2 + $0x8] sm:$0xf]
      %v1818 = vcombine.high %v1814, %v1814
      %1819 = vrot.lane.b32.xlu0 %v1814, 95
      %v1820 = vpop.permute.xlu0 %1819
      %1821 = vrot.lane.b32.xlu0 %v1818, 95
      %v1822 = vpop.permute.xlu0 %1821
      %1823 = vrot.lane.b32.xlu0 %v1815, 95
      %v1824 = vpop.permute.xlu0 %1823
      %vm1825 = vcmask 777216
      %v1826 = vsel %vm1825, %v1820, %v1822
      %v1827 = vsel %vm1825, %v1822, %v1824
      %1830 = vrot.lane.b32.xlu0 %v1814, 97
      %v1831 = vpop.permute.xlu0 %1830
      %1832 = vrot.lane.b32.xlu0 %v1818, 97
      %v1833 = vpop.permute.xlu0 %1832
      %1834 = vrot.lane.b32.xlu0 %v1815, 97
      %v1835 = vpop.permute.xlu0 %1834
      %vm1836 = vcmask 793600
      %v1837 = vsel %vm1836, %v1831, %v1833
      %v1838 = vsel %vm1836, %v1833, %v1835
      %v1841 = vsel %vm341, %v1826, %v1837
      %v1842 = vsel %vm342, %v1827, %v1838
      %v1843 = vsel %vm372, %v1837, %v1826
      %v1844 = vsel %vm373, %v1838, %v1827
      %s1845 = scalar_lea.vmem %s1, 12
      %v1846 = vld [vmem:[%s1845] sm:$0xf]
      %v1848 = vsel %vm388, %v1846, 0
      %v1851 = vsel %vm392, %v1841, 0
      %v1854 = vsel %vm392, %v1842, 0
      %v1856 = vand.u32 %v1854, 4294901760
      %1857 = vmatprep.subr.mxu0 %v1856
      %v1858 = vand.u32 %v1851, 4294901760
      %1859 = vmatpush1.msra.mxu0 %v1858
      %1860 = vmatprep.subr.mxu0 0.0
      %1861 = vmatpush1.msra.mxu0 0.0
      %1862 = vmatprep.subr.mxu0 0.0
      %1863 = vmatpush1.msra.mxu0 0.0
      %1864 = vmatprep.subr.mxu0 0.0
      %1865 = vmatpush1.msra.mxu0 0.0
      %1866 = vmatprep.subr.mxu0 0.0
      %1867 = vmatpush1.msra.mxu0 0.0
      %1868 = vmatprep.subr.mxu0 0.0
      %1869 = vmatpush1.msra.mxu0 0.0
      %1870 = vmatprep.subr.mxu0 0.0
      %1871 = vmatpush1.msra.mxu0 0.0
      %1872 = vmatprep.subr.mxu0 0.0
      %1873 = vmatpush1.msra.mxu0 0.0
      %1874 = vmatprep.subr.mxu0 0.0
      %1875 = vmatpush1.msra.mxu0 0.0
      %1876 = vmatprep.subr.mxu0 0.0
      %1877 = vmatpush1.msra.mxu0 0.0
      %1878 = vmatprep.subr.mxu0 0.0
      %1879 = vmatpush1.msra.mxu0 0.0
      %1880 = vmatprep.subr.mxu0 0.0
      %1881 = vmatpush1.msra.mxu0 0.0
      %1882 = vmatprep.subr.mxu0 0.0
      %1883 = vmatpush1.msra.mxu0 0.0
      %1884 = vmatprep.subr.mxu0 0.0
      %1885 = vmatpush1.msra.mxu0 0.0
      %1886 = vmatprep.subr.mxu0 0.0
      %1887 = vmatpush1.msra.mxu0 0.0
      %1888 = vmatprep.subr.mxu0 0.0
      %1889 = vmatpush1.msra.mxu0 0.0
      %1890 = vmatprep.subr.mxu0 0.0
      %1891 = vmatpush1.msra.mxu0 0.0
      %1892 = vmatprep.subr.mxu0 0.0
      %1893 = vmatpush1.msra.mxu0 0.0
      %1894 = vmatprep.subr.mxu0 0.0
      %1895 = vmatpush1.msra.mxu0 0.0
      %1896 = vmatprep.subr.mxu0 0.0
      %1897 = vmatpush1.msra.mxu0 0.0
      %1898 = vmatprep.subr.mxu0 0.0
      %1899 = vmatpush1.msra.mxu0 0.0
      %1900 = vmatprep.subr.mxu0 0.0
      %1901 = vmatpush1.msra.mxu0 0.0
      %1902 = vmatprep.subr.mxu0 0.0
      %1903 = vmatpush1.msra.mxu0 0.0
      %1904 = vmatprep.subr.mxu0 0.0
      %1905 = vmatpush1.msra.mxu0 0.0
      %1906 = vmatprep.subr.mxu0 0.0
      %1907 = vmatpush1.msra.mxu0 0.0
      %1908 = vmatprep.subr.mxu0 0.0
      %1909 = vmatpush1.msra.mxu0 0.0
      %1910 = vmatprep.subr.mxu0 0.0
      %1911 = vmatpush1.msra.mxu0 0.0
      %1912 = vmatprep.subr.mxu0 0.0
      %1913 = vmatpush1.msra.mxu0 0.0
      %1914 = vmatprep.subr.mxu0 0.0
      %1915 = vmatpush1.msra.mxu0 0.0
      %1916 = vmatprep.subr.mxu0 0.0
      %1917 = vmatpush1.msra.mxu0 0.0
      %1918 = vmatprep.subr.mxu0 0.0
      %1919 = vmatpush1.msra.mxu0 0.0
      %1920 = vmatprep.subr.mxu0 0.0
      %1921 = vmatpush1.msra.mxu0 0.0
      %1922 = vmatprep.mubr.f32.mxu0 0.0
      %v1923 = vand.u32 %v1848, 4294901760
      %v1924 = vsub.f32 %v1848, %v1923
      %v1925 = vand.u32 %v1924, 4294901760
      %v1926 = vsub.f32 %v1924, %v1925
      %v1927 = vand.u32 %v1926, 4294901760
      %1928 = vmatmul.mubr.f32.gmra.mrb[0].mxu0 %v1927
      %v1929 = vpop.f32.mrb[0].mxu0
      %v1930 = vadd.f32 0.0, %v1929
      %v1931 = vpop.f32.mrb[0].mxu0
      %v1932 = vadd.f32 0.0, %v1931
      %1933 = vdwg.mxu0
      %v1934 = vand.u32 %v1854, 4294901760
      %v1935 = vsub.f32 %v1854, %v1934
      %v1936 = vand.u32 %v1935, 4294901760
      %v1937 = vsub.f32 %v1935, %v1936
      %v1938 = vand.u32 %v1937, 4294901760
      %1939 = vmatprep.subr.mxu0 %v1938
      %v1940 = vand.u32 %v1851, 4294901760
      %v1941 = vsub.f32 %v1851, %v1940
      %v1942 = vand.u32 %v1941, 4294901760
      %v1943 = vsub.f32 %v1941, %v1942
      %v1944 = vand.u32 %v1943, 4294901760
      %1945 = vmatpush1.msra.mxu0 %v1944
      %1946 = vmatprep.subr.mxu0 0.0
      %1947 = vmatpush1.msra.mxu0 0.0
      %1948 = vmatprep.subr.mxu0 0.0
      %1949 = vmatpush1.msra.mxu0 0.0
      %1950 = vmatprep.subr.mxu0 0.0
      %1951 = vmatpush1.msra.mxu0 0.0
      %1952 = vmatprep.subr.mxu0 0.0
      %1953 = vmatpush1.msra.mxu0 0.0
      %1954 = vmatprep.subr.mxu0 0.0
      %1955 = vmatpush1.msra.mxu0 0.0
      %1956 = vmatprep.subr.mxu0 0.0
      %1957 = vmatpush1.msra.mxu0 0.0
      %1958 = vmatprep.subr.mxu0 0.0
      %1959 = vmatpush1.msra.mxu0 0.0
      %1960 = vmatprep.subr.mxu0 0.0
      %1961 = vmatpush1.msra.mxu0 0.0
      %1962 = vmatprep.subr.mxu0 0.0
      %1963 = vmatpush1.msra.mxu0 0.0
      %1964 = vmatprep.subr.mxu0 0.0
      %1965 = vmatpush1.msra.mxu0 0.0
      %1966 = vmatprep.subr.mxu0 0.0
      %1967 = vmatpush1.msra.mxu0 0.0
      %1968 = vmatprep.subr.mxu0 0.0
      %1969 = vmatpush1.msra.mxu0 0.0
      %1970 = vmatprep.subr.mxu0 0.0
      %1971 = vmatpush1.msra.mxu0 0.0
      %1972 = vmatprep.subr.mxu0 0.0
      %1973 = vmatpush1.msra.mxu0 0.0
      %1974 = vmatprep.subr.mxu0 0.0
      %1975 = vmatpush1.msra.mxu0 0.0
      %1976 = vmatprep.subr.mxu0 0.0
      %1977 = vmatpush1.msra.mxu0 0.0
      %1978 = vmatprep.subr.mxu0 0.0
      %1979 = vmatpush1.msra.mxu0 0.0
      %1980 = vmatprep.subr.mxu0 0.0
      %1981 = vmatpush1.msra.mxu0 0.0
      %1982 = vmatprep.subr.mxu0 0.0
      %1983 = vmatpush1.msra.mxu0 0.0
      %1984 = vmatprep.subr.mxu0 0.0
      %1985 = vmatpush1.msra.mxu0 0.0
      %1986 = vmatprep.subr.mxu0 0.0
      %1987 = vmatpush1.msra.mxu0 0.0
      %1988 = vmatprep.subr.mxu0 0.0
      %1989 = vmatpush1.msra.mxu0 0.0
      %1990 = vmatprep.subr.mxu0 0.0
      %1991 = vmatpush1.msra.mxu0 0.0
      %1992 = vmatprep.subr.mxu0 0.0
      %1993 = vmatpush1.msra.mxu0 0.0
      %1994 = vmatprep.subr.mxu0 0.0
      %1995 = vmatpush1.msra.mxu0 0.0
      %1996 = vmatprep.subr.mxu0 0.0
      %1997 = vmatpush1.msra.mxu0 0.0
      %1998 = vmatprep.subr.mxu0 0.0
      %1999 = vmatpush1.msra.mxu0 0.0
      %2000 = vmatprep.subr.mxu0 0.0
      %2001 = vmatpush1.msra.mxu0 0.0
      %2002 = vmatprep.subr.mxu0 0.0
      %2003 = vmatpush1.msra.mxu0 0.0
      %2004 = vmatprep.subr.mxu0 0.0
      %2005 = vmatpush1.msra.mxu0 0.0
      %2006 = vmatprep.subr.mxu0 0.0
      %2007 = vmatpush1.msra.mxu0 0.0
      %2008 = vmatprep.mubr.f32.mxu0 0.0
      %v2009 = vand.u32 %v1848, 4294901760
      %2010 = vmatmul.mubr.f32.gmra.mrb[0].mxu0 %v2009
      %v2011 = vpop.f32.mrb[0].mxu0
      %v2012 = vadd.f32 %v1930, %v2011
      %v2013 = vpop.f32.mrb[0].mxu0
      %v2014 = vadd.f32 %v1932, %v2013
      %2015 = vdwg.mxu0
      %v2016 = vand.u32 %v1854, 4294901760
      %v2017 = vsub.f32 %v1854, %v2016
      %2018 = vmatprep.subr.mxu0 %v2017
      %v2019 = vand.u32 %v1851, 4294901760
      %v2020 = vsub.f32 %v1851, %v2019
      %2021 = vmatpush1.msra.mxu0 %v2020
      %2022 = vmatprep.subr.mxu0 0.0
      %2023 = vmatpush1.msra.mxu0 0.0
      %2024 = vmatprep.subr.mxu0 0.0
      %2025 = vmatpush1.msra.mxu0 0.0
      %2026 = vmatprep.subr.mxu0 0.0
      %2027 = vmatpush1.msra.mxu0 0.0
      %2028 = vmatprep.subr.mxu0 0.0
      %2029 = vmatpush1.msra.mxu0 0.0
      %2030 = vmatprep.subr.mxu0 0.0
      %2031 = vmatpush1.msra.mxu0 0.0
      %2032 = vmatprep.subr.mxu0 0.0
      %2033 = vmatpush1.msra.mxu0 0.0
      %2034 = vmatprep.subr.mxu0 0.0
      %2035 = vmatpush1.msra.mxu0 0.0
      %2036 = vmatprep.subr.mxu0 0.0
      %2037 = vmatpush1.msra.mxu0 0.0
      %2038 = vmatprep.subr.mxu0 0.0
      %2039 = vmatpush1.msra.mxu0 0.0
      %2040 = vmatprep.subr.mxu0 0.0
      %2041 = vmatpush1.msra.mxu0 0.0
      %2042 = vmatprep.subr.mxu0 0.0
      %2043 = vmatpush1.msra.mxu0 0.0
      %2044 = vmatprep.subr.mxu0 0.0
      %2045 = vmatpush1.msra.mxu0 0.0
      %2046 = vmatprep.subr.mxu0 0.0
      %2047 = vmatpush1.msra.mxu0 0.0
      %2048 = vmatprep.subr.mxu0 0.0
      %2049 = vmatpush1.msra.mxu0 0.0
      %2050 = vmatprep.subr.mxu0 0.0
      %2051 = vmatpush1.msra.mxu0 0.0
      %2052 = vmatprep.subr.mxu0 0.0
      %2053 = vmatpush1.msra.mxu0 0.0
      %2054 = vmatprep.subr.mxu0 0.0
      %2055 = vmatpush1.msra.mxu0 0.0
      %2056 = vmatprep.subr.mxu0 0.0
      %2057 = vmatpush1.msra.mxu0 0.0
      %2058 = vmatprep.subr.mxu0 0.0
      %2059 = vmatpush1.msra.mxu0 0.0
      %2060 = vmatprep.subr.mxu0 0.0
      %2061 = vmatpush1.msra.mxu0 0.0
      %2062 = vmatprep.subr.mxu0 0.0
      %2063 = vmatpush1.msra.mxu0 0.0
      %2064 = vmatprep.subr.mxu0 0.0
      %2065 = vmatpush1.msra.mxu0 0.0
      %2066 = vmatprep.subr.mxu0 0.0
      %2067 = vmatpush1.msra.mxu0 0.0
      %2068 = vmatprep.subr.mxu0 0.0
      %2069 = vmatpush1.msra.mxu0 0.0
      %2070 = vmatprep.subr.mxu0 0.0
      %2071 = vmatpush1.msra.mxu0 0.0
      %2072 = vmatprep.subr.mxu0 0.0
      %2073 = vmatpush1.msra.mxu0 0.0
      %2074 = vmatprep.subr.mxu0 0.0
      %2075 = vmatpush1.msra.mxu0 0.0
      %2076 = vmatprep.subr.mxu0 0.0
      %2077 = vmatpush1.msra.mxu0 0.0
      %2078 = vmatprep.subr.mxu0 0.0
      %2079 = vmatpush1.msra.mxu0 0.0
      %2080 = vmatprep.subr.mxu0 0.0
      %2081 = vmatpush1.msra.mxu0 0.0
      %2082 = vmatprep.subr.mxu0 0.0
      %2083 = vmatpush1.msra.mxu0 0.0
      %2084 = vmatprep.mubr.f32.mxu0 0.0
      %v2085 = vand.u32 %v1848, 4294901760
      %v2086 = vsub.f32 %v1848, %v2085
      %2087 = vmatmul.mubr.f32.gmra.mrb[0].mxu0 %v2086
      %v2088 = vpop.f32.mrb[0].mxu0
      %v2089 = vadd.f32 %v2012, %v2088
      %v2090 = vpop.f32.mrb[0].mxu0
      %v2091 = vadd.f32 %v2014, %v2090
      %2092 = vdwg.mxu0
      %v2093 = vand.u32 %v1854, 4294901760
      %2094 = vmatprep.subr.mxu0 %v2093
      %v2095 = vand.u32 %v1851, 4294901760
      %2096 = vmatpush1.msra.mxu0 %v2095
      %2097 = vmatprep.subr.mxu0 0.0
      %2098 = vmatpush1.msra.mxu0 0.0
      %2099 = vmatprep.subr.mxu0 0.0
      %2100 = vmatpush1.msra.mxu0 0.0
      %2101 = vmatprep.subr.mxu0 0.0
      %2102 = vmatpush1.msra.mxu0 0.0
      %2103 = vmatprep.subr.mxu0 0.0
      %2104 = vmatpush1.msra.mxu0 0.0
      %2105 = vmatprep.subr.mxu0 0.0
      %2106 = vmatpush1.msra.mxu0 0.0
      %2107 = vmatprep.subr.mxu0 0.0
      %2108 = vmatpush1.msra.mxu0 0.0
      %2109 = vmatprep.subr.mxu0 0.0
      %2110 = vmatpush1.msra.mxu0 0.0
      %2111 = vmatprep.subr.mxu0 0.0
      %2112 = vmatpush1.msra.mxu0 0.0
      %2113 = vmatprep.subr.mxu0 0.0
      %2114 = vmatpush1.msra.mxu0 0.0
      %2115 = vmatprep.subr.mxu0 0.0
      %2116 = vmatpush1.msra.mxu0 0.0
      %2117 = vmatprep.subr.mxu0 0.0
      %2118 = vmatpush1.msra.mxu0 0.0
      %2119 = vmatprep.subr.mxu0 0.0
      %2120 = vmatpush1.msra.mxu0 0.0
      %2121 = vmatprep.subr.mxu0 0.0
      %2122 = vmatpush1.msra.mxu0 0.0
      %2123 = vmatprep.subr.mxu0 0.0
      %2124 = vmatpush1.msra.mxu0 0.0
      %2125 = vmatprep.subr.mxu0 0.0
      %2126 = vmatpush1.msra.mxu0 0.0
      %2127 = vmatprep.subr.mxu0 0.0
      %2128 = vmatpush1.msra.mxu0 0.0
      %2129 = vmatprep.subr.mxu0 0.0
      %2130 = vmatpush1.msra.mxu0 0.0
      %2131 = vmatprep.subr.mxu0 0.0
      %2132 = vmatpush1.msra.mxu0 0.0
      %2133 = vmatprep.subr.mxu0 0.0
      %2134 = vmatpush1.msra.mxu0 0.0
      %2135 = vmatprep.subr.mxu0 0.0
      %2136 = vmatpush1.msra.mxu0 0.0
      %2137 = vmatprep.subr.mxu0 0.0
      %2138 = vmatpush1.msra.mxu0 0.0
      %2139 = vmatprep.subr.mxu0 0.0
      %2140 = vmatpush1.msra.mxu0 0.0
      %2141 = vmatprep.subr.mxu0 0.0
      %2142 = vmatpush1.msra.mxu0 0.0
      %2143 = vmatprep.subr.mxu0 0.0
      %2144 = vmatpush1.msra.mxu0 0.0
      %2145 = vmatprep.subr.mxu0 0.0
      %2146 = vmatpush1.msra.mxu0 0.0
      %2147 = vmatprep.subr.mxu0 0.0
      %2148 = vmatpush1.msra.mxu0 0.0
      %2149 = vmatprep.subr.mxu0 0.0
      %2150 = vmatpush1.msra.mxu0 0.0
      %2151 = vmatprep.subr.mxu0 0.0
      %2152 = vmatpush1.msra.mxu0 0.0
      %2153 = vmatprep.subr.mxu0 0.0
      %2154 = vmatpush1.msra.mxu0 0.0
      %2155 = vmatprep.subr.mxu0 0.0
      %2156 = vmatpush1.msra.mxu0 0.0
      %2157 = vmatprep.subr.mxu0 0.0
      %2158 = vmatpush1.msra.mxu0 0.0
      %2159 = vmatprep.mubr.f32.mxu0 0.0
      %v2160 = vand.u32 %v1848, 4294901760
      %v2161 = vsub.f32 %v1848, %v2160
      %v2162 = vand.u32 %v2161, 4294901760
      %2163 = vmatmul.mubr.f32.gmra.mrb[0].mxu0 %v2162
      %v2164 = vpop.f32.mrb[0].mxu0
      %v2165 = vadd.f32 %v2089, %v2164
      %v2166 = vpop.f32.mrb[0].mxu0
      %v2167 = vadd.f32 %v2091, %v2166
      %2168 = vdwg.mxu0
      %v2169 = vand.u32 %v1854, 4294901760
      %v2170 = vsub.f32 %v1854, %v2169
      %v2171 = vand.u32 %v2170, 4294901760
      %2172 = vmatprep.subr.mxu0 %v2171
      %v2173 = vand.u32 %v1851, 4294901760
      %v2174 = vsub.f32 %v1851, %v2173
      %v2175 = vand.u32 %v2174, 4294901760
      %2176 = vmatpush1.msra.mxu0 %v2175
      %2177 = vmatprep.subr.mxu0 0.0
      %2178 = vmatpush1.msra.mxu0 0.0
      %2179 = vmatprep.subr.mxu0 0.0
      %2180 = vmatpush1.msra.mxu0 0.0
      %2181 = vmatprep.subr.mxu0 0.0
      %2182 = vmatpush1.msra.mxu0 0.0
      %2183 = vmatprep.subr.mxu0 0.0
      %2184 = vmatpush1.msra.mxu0 0.0
      %2185 = vmatprep.subr.mxu0 0.0
      %2186 = vmatpush1.msra.mxu0 0.0
      %2187 = vmatprep.subr.mxu0 0.0
      %2188 = vmatpush1.msra.mxu0 0.0
      %2189 = vmatprep.subr.mxu0 0.0
      %2190 = vmatpush1.msra.mxu0 0.0
      %2191 = vmatprep.subr.mxu0 0.0
      %2192 = vmatpush1.msra.mxu0 0.0
      %2193 = vmatprep.subr.mxu0 0.0
      %2194 = vmatpush1.msra.mxu0 0.0
      %2195 = vmatprep.subr.mxu0 0.0
      %2196 = vmatpush1.msra.mxu0 0.0
      %2197 = vmatprep.subr.mxu0 0.0
      %2198 = vmatpush1.msra.mxu0 0.0
      %2199 = vmatprep.subr.mxu0 0.0
      %2200 = vmatpush1.msra.mxu0 0.0
      %2201 = vmatprep.subr.mxu0 0.0
      %2202 = vmatpush1.msra.mxu0 0.0
      %2203 = vmatprep.subr.mxu0 0.0
      %2204 = vmatpush1.msra.mxu0 0.0
      %2205 = vmatprep.subr.mxu0 0.0
      %2206 = vmatpush1.msra.mxu0 0.0
      %2207 = vmatprep.subr.mxu0 0.0
      %2208 = vmatpush1.msra.mxu0 0.0
      %2209 = vmatprep.subr.mxu0 0.0
      %2210 = vmatpush1.msra.mxu0 0.0
      %2211 = vmatprep.subr.mxu0 0.0
      %2212 = vmatpush1.msra.mxu0 0.0
      %2213 = vmatprep.subr.mxu0 0.0
      %2214 = vmatpush1.msra.mxu0 0.0
      %2215 = vmatprep.subr.mxu0 0.0
      %2216 = vmatpush1.msra.mxu0 0.0
      %2217 = vmatprep.subr.mxu0 0.0
      %2218 = vmatpush1.msra.mxu0 0.0
      %2219 = vmatprep.subr.mxu0 0.0
      %2220 = vmatpush1.msra.mxu0 0.0
      %2221 = vmatprep.subr.mxu0 0.0
      %2222 = vmatpush1.msra.mxu0 0.0
      %2223 = vmatprep.subr.mxu0 0.0
      %2224 = vmatpush1.msra.mxu0 0.0
      %2225 = vmatprep.subr.mxu0 0.0
      %2226 = vmatpush1.msra.mxu0 0.0
      %2227 = vmatprep.subr.mxu0 0.0
      %2228 = vmatpush1.msra.mxu0 0.0
      %2229 = vmatprep.subr.mxu0 0.0
      %2230 = vmatpush1.msra.mxu0 0.0
      %2231 = vmatprep.subr.mxu0 0.0
      %2232 = vmatpush1.msra.mxu0 0.0
      %2233 = vmatprep.subr.mxu0 0.0
      %2234 = vmatpush1.msra.mxu0 0.0
      %2235 = vmatprep.subr.mxu0 0.0
      %2236 = vmatpush1.msra.mxu0 0.0
      %2237 = vmatprep.subr.mxu0 0.0
      %2238 = vmatpush1.msra.mxu0 0.0
      %2239 = vmatprep.mubr.f32.mxu0 0.0
      %v2240 = vand.u32 %v1848, 4294901760
      %2241 = vmatmul.mubr.f32.gmra.mrb[0].mxu0 %v2240
      %v2242 = vpop.f32.mrb[0].mxu0
      %v2243 = vadd.f32 %v2165, %v2242
      %v2244 = vpop.f32.mrb[0].mxu0
      %v2245 = vadd.f32 %v2167, %v2244
      %2246 = vdwg.mxu0
      %v2247 = vand.u32 %v1854, 4294901760
      %2248 = vmatprep.subr.mxu0 %v2247
      %v2249 = vand.u32 %v1851, 4294901760
      %2250 = vmatpush1.msra.mxu0 %v2249
      %2251 = vmatprep.subr.mxu0 0.0
      %2252 = vmatpush1.msra.mxu0 0.0
      %2253 = vmatprep.subr.mxu0 0.0
      %2254 = vmatpush1.msra.mxu0 0.0
      %2255 = vmatprep.subr.mxu0 0.0
      %2256 = vmatpush1.msra.mxu0 0.0
      %2257 = vmatprep.subr.mxu0 0.0
      %2258 = vmatpush1.msra.mxu0 0.0
      %2259 = vmatprep.subr.mxu0 0.0
      %2260 = vmatpush1.msra.mxu0 0.0
      %2261 = vmatprep.subr.mxu0 0.0
      %2262 = vmatpush1.msra.mxu0 0.0
      %2263 = vmatprep.subr.mxu0 0.0
      %2264 = vmatpush1.msra.mxu0 0.0
      %2265 = vmatprep.subr.mxu0 0.0
      %2266 = vmatpush1.msra.mxu0 0.0
      %2267 = vmatprep.subr.mxu0 0.0
      %2268 = vmatpush1.msra.mxu0 0.0
      %2269 = vmatprep.subr.mxu0 0.0
      %2270 = vmatpush1.msra.mxu0 0.0
      %2271 = vmatprep.subr.mxu0 0.0
      %2272 = vmatpush1.msra.mxu0 0.0
      %2273 = vmatprep.subr.mxu0 0.0
      %2274 = vmatpush1.msra.mxu0 0.0
      %2275 = vmatprep.subr.mxu0 0.0
      %2276 = vmatpush1.msra.mxu0 0.0
      %2277 = vmatprep.subr.mxu0 0.0
      %2278 = vmatpush1.msra.mxu0 0.0
      %2279 = vmatprep.subr.mxu0 0.0
      %2280 = vmatpush1.msra.mxu0 0.0
      %2281 = vmatprep.subr.mxu0 0.0
      %2282 = vmatpush1.msra.mxu0 0.0
      %2283 = vmatprep.subr.mxu0 0.0
      %2284 = vmatpush1.msra.mxu0 0.0
      %2285 = vmatprep.subr.mxu0 0.0
      %2286 = vmatpush1.msra.mxu0 0.0
      %2287 = vmatprep.subr.mxu0 0.0
      %2288 = vmatpush1.msra.mxu0 0.0
      %2289 = vmatprep.subr.mxu0 0.0
      %2290 = vmatpush1.msra.mxu0 0.0
      %2291 = vmatprep.subr.mxu0 0.0
      %2292 = vmatpush1.msra.mxu0 0.0
      %2293 = vmatprep.subr.mxu0 0.0
      %2294 = vmatpush1.msra.mxu0 0.0
      %2295 = vmatprep.subr.mxu0 0.0
      %2296 = vmatpush1.msra.mxu0 0.0
      %2297 = vmatprep.subr.mxu0 0.0
      %2298 = vmatpush1.msra.mxu0 0.0
      %2299 = vmatprep.subr.mxu0 0.0
      %2300 = vmatpush1.msra.mxu0 0.0
      %2301 = vmatprep.subr.mxu0 0.0
      %2302 = vmatpush1.msra.mxu0 0.0
      %2303 = vmatprep.subr.mxu0 0.0
      %2304 = vmatpush1.msra.mxu0 0.0
      %2305 = vmatprep.subr.mxu0 0.0
      %2306 = vmatpush1.msra.mxu0 0.0
      %2307 = vmatprep.subr.mxu0 0.0
      %2308 = vmatpush1.msra.mxu0 0.0
      %2309 = vmatprep.subr.mxu0 0.0
      %2310 = vmatpush1.msra.mxu0 0.0
      %2311 = vmatprep.subr.mxu0 0.0
      %2312 = vmatpush1.msra.mxu0 0.0
      %2313 = vmatprep.mubr.f32.mxu0 0.0
      %v2314 = vand.u32 %v1848, 4294901760
      %2315 = vmatmul.mubr.f32.gmra.mrb[0].mxu0 %v2314
      %v2316 = vpop.f32.mrb[0].mxu0
      %v2317 = vadd.f32 %v2243, %v2316
      %v2318 = vpop.f32.mrb[0].mxu0
      %v2319 = vadd.f32 %v2245, %v2318
      %2320 = vdwg.mxu0
      %v2321 = vadd.f32 %v1812, %v2317
      %v2322 = vadd.f32 %v1813, %v2319
      %s2323 = scalar_lea.vmem %s1, 16
      %v2324 = vld [vmem:[%s2323] sm:$0xf]
      %2325 = vrot.lane.b32.xlu0 %v1814, 96
      %v2326 = vpop.permute.xlu0 %2325
      %2327 = vrot.lane.b32.xlu0 %v1818, 96
      %v2328 = vpop.permute.xlu0 %2327
      %2329 = vrot.lane.b32.xlu0 %v1815, 96
      %v2330 = vpop.permute.xlu0 %2329
      %vm2331 = vcmask 785408
      %v2332 = vsel %vm2331, %v2326, %v2328
      %v2333 = vsel %vm2331, %v2328, %v2330
      %v2335 = vsel %vm388, %v2324, 0
      %v2337 = vsel %vm392, %v2332, 0
      %v2339 = vsel %vm392, %v2333, 0
      %v2341 = vand.u32 %v2339, 4294901760
      %2342 = vmatprep.subr.mxu0 %v2341
      %v2343 = vand.u32 %v2337, 4294901760
      %2344 = vmatpush1.msra.mxu0 %v2343
      %2345 = vmatprep.subr.mxu0 0.0
      %2346 = vmatpush1.msra.mxu0 0.0
      %2347 = vmatprep.subr.mxu0 0.0
      %2348 = vmatpush1.msra.mxu0 0.0
      %2349 = vmatprep.subr.mxu0 0.0
      %2350 = vmatpush1.msra.mxu0 0.0
      %2351 = vmatprep.subr.mxu0 0.0
      %2352 = vmatpush1.msra.mxu0 0.0
      %2353 = vmatprep.subr.mxu0 0.0
      %2354 = vmatpush1.msra.mxu0 0.0
      %2355 = vmatprep.subr.mxu0 0.0
      %2356 = vmatpush1.msra.mxu0 0.0
      %2357 = vmatprep.subr.mxu0 0.0
      %2358 = vmatpush1.msra.mxu0 0.0
      %2359 = vmatprep.subr.mxu0 0.0
      %2360 = vmatpush1.msra.mxu0 0.0
      %2361 = vmatprep.subr.mxu0 0.0
      %2362 = vmatpush1.msra.mxu0 0.0
      %2363 = vmatprep.subr.mxu0 0.0
      %2364 = vmatpush1.msra.mxu0 0.0
      %2365 = vmatprep.subr.mxu0 0.0
      %2366 = vmatpush1.msra.mxu0 0.0
      %2367 = vmatprep.subr.mxu0 0.0
      %2368 = vmatpush1.msra.mxu0 0.0
      %2369 = vmatprep.subr.mxu0 0.0
      %2370 = vmatpush1.msra.mxu0 0.0
      %2371 = vmatprep.subr.mxu0 0.0
      %2372 = vmatpush1.msra.mxu0 0.0
      %2373 = vmatprep.subr.mxu0 0.0
      %2374 = vmatpush1.msra.mxu0 0.0
      %2375 = vmatprep.subr.mxu0 0.0
      %2376 = vmatpush1.msra.mxu0 0.0
      %2377 = vmatprep.subr.mxu0 0.0
      %2378 = vmatpush1.msra.mxu0 0.0
      %2379 = vmatprep.subr.mxu0 0.0
      %2380 = vmatpush1.msra.mxu0 0.0
      %2381 = vmatprep.subr.mxu0 0.0
      %2382 = vmatpush1.msra.mxu0 0.0
      %2383 = vmatprep.subr.mxu0 0.0
      %2384 = vmatpush1.msra.mxu0 0.0
      %2385 = vmatprep.subr.mxu0 0.0
      %2386 = vmatpush1.msra.mxu0 0.0
      %2387 = vmatprep.subr.mxu0 0.0
      %2388 = vmatpush1.msra.mxu0 0.0
      %2389 = vmatprep.subr.mxu0 0.0
      %2390 = vmatpush1.msra.mxu0 0.0
      %2391 = vmatprep.subr.mxu0 0.0
      %2392 = vmatpush1.msra.mxu0 0.0
      %2393 = vmatprep.subr.mxu0 0.0
      %2394 = vmatpush1.msra.mxu0 0.0
      %2395 = vmatprep.subr.mxu0 0.0
      %2396 = vmatpush1.msra.mxu0 0.0
      %2397 = vmatprep.subr.mxu0 0.0
      %2398 = vmatpush1.msra.mxu0 0.0
      %2399 = vmatprep.subr.mxu0 0.0
      %2400 = vmatpush1.msra.mxu0 0.0
      %2401 = vmatprep.subr.mxu0 0.0
      %2402 = vmatpush1.msra.mxu0 0.0
      %2403 = vmatprep.subr.mxu0 0.0
      %2404 = vmatpush1.msra.mxu0 0.0
      %2405 = vmatprep.subr.mxu0 0.0
      %2406 = vmatpush1.msra.mxu0 0.0
      %2407 = vmatprep.mubr.f32.mxu0 0.0
      %v2408 = vand.u32 %v2335, 4294901760
      %v2409 = vsub.f32 %v2335, %v2408
      %v2410 = vand.u32 %v2409, 4294901760
      %v2411 = vsub.f32 %v2409, %v2410
      %v2412 = vand.u32 %v2411, 4294901760
      %2413 = vmatmul.mubr.f32.gmra.mrb[0].mxu0 %v2412
      %v2414 = vpop.f32.mrb[0].mxu0
      %v2415 = vadd.f32 0.0, %v2414
      %v2416 = vpop.f32.mrb[0].mxu0
      %v2417 = vadd.f32 0.0, %v2416
      %2418 = vdwg.mxu0
      %v2419 = vand.u32 %v2339, 4294901760
      %v2420 = vsub.f32 %v2339, %v2419
      %v2421 = vand.u32 %v2420, 4294901760
      %v2422 = vsub.f32 %v2420, %v2421
      %v2423 = vand.u32 %v2422, 4294901760
      %2424 = vmatprep.subr.mxu0 %v2423
      %v2425 = vand.u32 %v2337, 4294901760
      %v2426 = vsub.f32 %v2337, %v2425
      %v2427 = vand.u32 %v2426, 4294901760
      %v2428 = vsub.f32 %v2426, %v2427
      %v2429 = vand.u32 %v2428, 4294901760
      %2430 = vmatpush1.msra.mxu0 %v2429
      %2431 = vmatprep.subr.mxu0 0.0
      %2432 = vmatpush1.msra.mxu0 0.0
      %2433 = vmatprep.subr.mxu0 0.0
      %2434 = vmatpush1.msra.mxu0 0.0
      %2435 = vmatprep.subr.mxu0 0.0
      %2436 = vmatpush1.msra.mxu0 0.0
      %2437 = vmatprep.subr.mxu0 0.0
      %2438 = vmatpush1.msra.mxu0 0.0
      %2439 = vmatprep.subr.mxu0 0.0
      %2440 = vmatpush1.msra.mxu0 0.0
      %2441 = vmatprep.subr.mxu0 0.0
      %2442 = vmatpush1.msra.mxu0 0.0
      %2443 = vmatprep.subr.mxu0 0.0
      %2444 = vmatpush1.msra.mxu0 0.0
      %2445 = vmatprep.subr.mxu0 0.0
      %2446 = vmatpush1.msra.mxu0 0.0
      %2447 = vmatprep.subr.mxu0 0.0
      %2448 = vmatpush1.msra.mxu0 0.0
      %2449 = vmatprep.subr.mxu0 0.0
      %2450 = vmatpush1.msra.mxu0 0.0
      %2451 = vmatprep.subr.mxu0 0.0
      %2452 = vmatpush1.msra.mxu0 0.0
      %2453 = vmatprep.subr.mxu0 0.0
      %2454 = vmatpush1.msra.mxu0 0.0
      %2455 = vmatprep.subr.mxu0 0.0
      %2456 = vmatpush1.msra.mxu0 0.0
      %2457 = vmatprep.subr.mxu0 0.0
      %2458 = vmatpush1.msra.mxu0 0.0
      %2459 = vmatprep.subr.mxu0 0.0
      %2460 = vmatpush1.msra.mxu0 0.0
      %2461 = vmatprep.subr.mxu0 0.0
      %2462 = vmatpush1.msra.mxu0 0.0
      %2463 = vmatprep.subr.mxu0 0.0
      %2464 = vmatpush1.msra.mxu0 0.0
      %2465 = vmatprep.subr.mxu0 0.0
      %2466 = vmatpush1.msra.mxu0 0.0
      %2467 = vmatprep.subr.mxu0 0.0
      %2468 = vmatpush1.msra.mxu0 0.0
      %2469 = vmatprep.subr.mxu0 0.0
      %2470 = vmatpush1.msra.mxu0 0.0
      %2471 = vmatprep.subr.mxu0 0.0
      %2472 = vmatpush1.msra.mxu0 0.0
      %2473 = vmatprep.subr.mxu0 0.0
      %2474 = vmatpush1.msra.mxu0 0.0
      %2475 = vmatprep.subr.mxu0 0.0
      %2476 = vmatpush1.msra.mxu0 0.0
      %2477 = vmatprep.subr.mxu0 0.0
      %2478 = vmatpush1.msra.mxu0 0.0
      %2479 = vmatprep.subr.mxu0 0.0
      %2480 = vmatpush1.msra.mxu0 0.0
      %2481 = vmatprep.subr.mxu0 0.0
      %2482 = vmatpush1.msra.mxu0 0.0
      %2483 = vmatprep.subr.mxu0 0.0
      %2484 = vmatpush1.msra.mxu0 0.0
      %2485 = vmatprep.subr.mxu0 0.0
      %2486 = vmatpush1.msra.mxu0 0.0
      %2487 = vmatprep.subr.mxu0 0.0
      %2488 = vmatpush1.msra.mxu0 0.0
      %2489 = vmatprep.subr.mxu0 0.0
      %2490 = vmatpush1.msra.mxu0 0.0
      %2491 = vmatprep.subr.mxu0 0.0
      %2492 = vmatpush1.msra.mxu0 0.0
      %2493 = vmatprep.mubr.f32.mxu0 0.0
      %v2494 = vand.u32 %v2335, 4294901760
      %2495 = vmatmul.mubr.f32.gmra.mrb[0].mxu0 %v2494
      %v2496 = vpop.f32.mrb[0].mxu0
      %v2497 = vadd.f32 %v2415, %v2496
      %v2498 = vpop.f32.mrb[0].mxu0
      %v2499 = vadd.f32 %v2417, %v2498
      %2500 = vdwg.mxu0
      %v2501 = vand.u32 %v2339, 4294901760
      %v2502 = vsub.f32 %v2339, %v2501
      %2503 = vmatprep.subr.mxu0 %v2502
      %v2504 = vand.u32 %v2337, 4294901760
      %v2505 = vsub.f32 %v2337, %v2504
      %2506 = vmatpush1.msra.mxu0 %v2505
      %2507 = vmatprep.subr.mxu0 0.0
      %2508 = vmatpush1.msra.mxu0 0.0
      %2509 = vmatprep.subr.mxu0 0.0
      %2510 = vmatpush1.msra.mxu0 0.0
      %2511 = vmatprep.subr.mxu0 0.0
      %2512 = vmatpush1.msra.mxu0 0.0
      %2513 = vmatprep.subr.mxu0 0.0
      %2514 = vmatpush1.msra.mxu0 0.0
      %2515 = vmatprep.subr.mxu0 0.0
      %2516 = vmatpush1.msra.mxu0 0.0
      %2517 = vmatprep.subr.mxu0 0.0
      %2518 = vmatpush1.msra.mxu0 0.0
      %2519 = vmatprep.subr.mxu0 0.0
      %2520 = vmatpush1.msra.mxu0 0.0
      %2521 = vmatprep.subr.mxu0 0.0
      %2522 = vmatpush1.msra.mxu0 0.0
      %2523 = vmatprep.subr.mxu0 0.0
      %2524 = vmatpush1.msra.mxu0 0.0
      %2525 = vmatprep.subr.mxu0 0.0
      %2526 = vmatpush1.msra.mxu0 0.0
      %2527 = vmatprep.subr.mxu0 0.0
      %2528 = vmatpush1.msra.mxu0 0.0
      %2529 = vmatprep.subr.mxu0 0.0
      %2530 = vmatpush1.msra.mxu0 0.0
      %2531 = vmatprep.subr.mxu0 0.0
      %2532 = vmatpush1.msra.mxu0 0.0
      %2533 = vmatprep.subr.mxu0 0.0
      %2534 = vmatpush1.msra.mxu0 0.0
      %2535 = vmatprep.subr.mxu0 0.0
      %2536 = vmatpush1.msra.mxu0 0.0
      %2537 = vmatprep.subr.mxu0 0.0
      %2538 = vmatpush1.msra.mxu0 0.0
      %2539 = vmatprep.subr.mxu0 0.0
      %2540 = vmatpush1.msra.mxu0 0.0
      %2541 = vmatprep.subr.mxu0 0.0
      %2542 = vmatpush1.msra.mxu0 0.0
      %2543 = vmatprep.subr.mxu0 0.0
      %2544 = vmatpush1.msra.mxu0 0.0
      %2545 = vmatprep.subr.mxu0 0.0
      %2546 = vmatpush1.msra.mxu0 0.0
      %2547 = vmatprep.subr.mxu0 0.0
      %2548 = vmatpush1.msra.mxu0 0.0
      %2549 = vmatprep.subr.mxu0 0.0
      %2550 = vmatpush1.msra.mxu0 0.0
      %2551 = vmatprep.subr.mxu0 0.0
      %2552 = vmatpush1.msra.mxu0 0.0
      %2553 = vmatprep.subr.mxu0 0.0
      %2554 = vmatpush1.msra.mxu0 0.0
      %2555 = vmatprep.subr.mxu0 0.0
      %2556 = vmatpush1.msra.mxu0 0.0
      %2557 = vmatprep.subr.mxu0 0.0
      %2558 = vmatpush1.msra.mxu0 0.0
      %2559 = vmatprep.subr.mxu0 0.0
      %2560 = vmatpush1.msra.mxu0 0.0
      %2561 = vmatprep.subr.mxu0 0.0
      %2562 = vmatpush1.msra.mxu0 0.0
      %2563 = vmatprep.subr.mxu0 0.0
      %2564 = vmatpush1.msra.mxu0 0.0
      %2565 = vmatprep.subr.mxu0 0.0
      %2566 = vmatpush1.msra.mxu0 0.0
      %2567 = vmatprep.subr.mxu0 0.0
      %2568 = vmatpush1.msra.mxu0 0.0
      %2569 = vmatprep.mubr.f32.mxu0 0.0
      %v2570 = vand.u32 %v2335, 4294901760
      %v2571 = vsub.f32 %v2335, %v2570
      %2572 = vmatmul.mubr.f32.gmra.mrb[0].mxu0 %v2571
      %v2573 = vpop.f32.mrb[0].mxu0
      %v2574 = vadd.f32 %v2497, %v2573
      %v2575 = vpop.f32.mrb[0].mxu0
      %v2576 = vadd.f32 %v2499, %v2575
      %2577 = vdwg.mxu0
      %v2578 = vand.u32 %v2339, 4294901760
      %2579 = vmatprep.subr.mxu0 %v2578
      %v2580 = vand.u32 %v2337, 4294901760
      %2581 = vmatpush1.msra.mxu0 %v2580
      %2582 = vmatprep.subr.mxu0 0.0
      %2583 = vmatpush1.msra.mxu0 0.0
      %2584 = vmatprep.subr.mxu0 0.0
      %2585 = vmatpush1.msra.mxu0 0.0
      %2586 = vmatprep.subr.mxu0 0.0
      %2587 = vmatpush1.msra.mxu0 0.0
      %2588 = vmatprep.subr.mxu0 0.0
      %2589 = vmatpush1.msra.mxu0 0.0
      %2590 = vmatprep.subr.mxu0 0.0
      %2591 = vmatpush1.msra.mxu0 0.0
      %2592 = vmatprep.subr.mxu0 0.0
      %2593 = vmatpush1.msra.mxu0 0.0
      %2594 = vmatprep.subr.mxu0 0.0
      %2595 = vmatpush1.msra.mxu0 0.0
      %2596 = vmatprep.subr.mxu0 0.0
      %2597 = vmatpush1.msra.mxu0 0.0
      %2598 = vmatprep.subr.mxu0 0.0
      %2599 = vmatpush1.msra.mxu0 0.0
      %2600 = vmatprep.subr.mxu0 0.0
      %2601 = vmatpush1.msra.mxu0 0.0
      %2602 = vmatprep.subr.mxu0 0.0
      %2603 = vmatpush1.msra.mxu0 0.0
      %2604 = vmatprep.subr.mxu0 0.0
      %2605 = vmatpush1.msra.mxu0 0.0
      %2606 = vmatprep.subr.mxu0 0.0
      %2607 = vmatpush1.msra.mxu0 0.0
      %2608 = vmatprep.subr.mxu0 0.0
      %2609 = vmatpush1.msra.mxu0 0.0
      %2610 = vmatprep.subr.mxu0 0.0
      %2611 = vmatpush1.msra.mxu0 0.0
      %2612 = vmatprep.subr.mxu0 0.0
      %2613 = vmatpush1.msra.mxu0 0.0
      %2614 = vmatprep.subr.mxu0 0.0
      %2615 = vmatpush1.msra.mxu0 0.0
      %2616 = vmatprep.subr.mxu0 0.0
      %2617 = vmatpush1.msra.mxu0 0.0
      %2618 = vmatprep.subr.mxu0 0.0
      %2619 = vmatpush1.msra.mxu0 0.0
      %2620 = vmatprep.subr.mxu0 0.0
      %2621 = vmatpush1.msra.mxu0 0.0
      %2622 = vmatprep.subr.mxu0 0.0
      %2623 = vmatpush1.msra.mxu0 0.0
      %2624 = vmatprep.subr.mxu0 0.0
      %2625 = vmatpush1.msra.mxu0 0.0
      %2626 = vmatprep.subr.mxu0 0.0
      %2627 = vmatpush1.msra.mxu0 0.0
      %2628 = vmatprep.subr.mxu0 0.0
      %2629 = vmatpush1.msra.mxu0 0.0
      %2630 = vmatprep.subr.mxu0 0.0
      %2631 = vmatpush1.msra.mxu0 0.0
      %2632 = vmatprep.subr.mxu0 0.0
      %2633 = vmatpush1.msra.mxu0 0.0
      %2634 = vmatprep.subr.mxu0 0.0
      %2635 = vmatpush1.msra.mxu0 0.0
      %2636 = vmatprep.subr.mxu0 0.0
      %2637 = vmatpush1.msra.mxu0 0.0
      %2638 = vmatprep.subr.mxu0 0.0
      %2639 = vmatpush1.msra.mxu0 0.0
      %2640 = vmatprep.subr.mxu0 0.0
      %2641 = vmatpush1.msra.mxu0 0.0
      %2642 = vmatprep.subr.mxu0 0.0
      %2643 = vmatpush1.msra.mxu0 0.0
      %2644 = vmatprep.mubr.f32.mxu0 0.0
      %v2645 = vand.u32 %v2335, 4294901760
      %v2646 = vsub.f32 %v2335, %v2645
      %v2647 = vand.u32 %v2646, 4294901760
      %2648 = vmatmul.mubr.f32.gmra.mrb[0].mxu0 %v2647
      %v2649 = vpop.f32.mrb[0].mxu0
      %v2650 = vadd.f32 %v2574, %v2649
      %v2651 = vpop.f32.mrb[0].mxu0
      %v2652 = vadd.f32 %v2576, %v2651
      %2653 = vdwg.mxu0
      %v2654 = vand.u32 %v2339, 4294901760
      %v2655 = vsub.f32 %v2339, %v2654
      %v2656 = vand.u32 %v2655, 4294901760
      %2657 = vmatprep.subr.mxu0 %v2656
      %v2658 = vand.u32 %v2337, 4294901760
      %v2659 = vsub.f32 %v2337, %v2658
      %v2660 = vand.u32 %v2659, 4294901760
      %2661 = vmatpush1.msra.mxu0 %v2660
      %2662 = vmatprep.subr.mxu0 0.0
      %2663 = vmatpush1.msra.mxu0 0.0
      %2664 = vmatprep.subr.mxu0 0.0
      %2665 = vmatpush1.msra.mxu0 0.0
      %2666 = vmatprep.subr.mxu0 0.0
      %2667 = vmatpush1.msra.mxu0 0.0
      %2668 = vmatprep.subr.mxu0 0.0
      %2669 = vmatpush1.msra.mxu0 0.0
      %2670 = vmatprep.subr.mxu0 0.0
      %2671 = vmatpush1.msra.mxu0 0.0
      %2672 = vmatprep.subr.mxu0 0.0
      %2673 = vmatpush1.msra.mxu0 0.0
      %2674 = vmatprep.subr.mxu0 0.0
      %2675 = vmatpush1.msra.mxu0 0.0
      %2676 = vmatprep.subr.mxu0 0.0
      %2677 = vmatpush1.msra.mxu0 0.0
      %2678 = vmatprep.subr.mxu0 0.0
      %2679 = vmatpush1.msra.mxu0 0.0
      %2680 = vmatprep.subr.mxu0 0.0
      %2681 = vmatpush1.msra.mxu0 0.0
      %2682 = vmatprep.subr.mxu0 0.0
      %2683 = vmatpush1.msra.mxu0 0.0
      %2684 = vmatprep.subr.mxu0 0.0
      %2685 = vmatpush1.msra.mxu0 0.0
      %2686 = vmatprep.subr.mxu0 0.0
      %2687 = vmatpush1.msra.mxu0 0.0
      %2688 = vmatprep.subr.mxu0 0.0
      %2689 = vmatpush1.msra.mxu0 0.0
      %2690 = vmatprep.subr.mxu0 0.0
      %2691 = vmatpush1.msra.mxu0 0.0
      %2692 = vmatprep.subr.mxu0 0.0
      %2693 = vmatpush1.msra.mxu0 0.0
      %2694 = vmatprep.subr.mxu0 0.0
      %2695 = vmatpush1.msra.mxu0 0.0
      %2696 = vmatprep.subr.mxu0 0.0
      %2697 = vmatpush1.msra.mxu0 0.0
      %2698 = vmatprep.subr.mxu0 0.0
      %2699 = vmatpush1.msra.mxu0 0.0
      %2700 = vmatprep.subr.mxu0 0.0
      %2701 = vmatpush1.msra.mxu0 0.0
      %2702 = vmatprep.subr.mxu0 0.0
      %2703 = vmatpush1.msra.mxu0 0.0
      %2704 = vmatprep.subr.mxu0 0.0
      %2705 = vmatpush1.msra.mxu0 0.0
      %2706 = vmatprep.subr.mxu0 0.0
      %2707 = vmatpush1.msra.mxu0 0.0
      %2708 = vmatprep.subr.mxu0 0.0
      %2709 = vmatpush1.msra.mxu0 0.0
      %2710 = vmatprep.subr.mxu0 0.0
      %2711 = vmatpush1.msra.mxu0 0.0
      %2712 = vmatprep.subr.mxu0 0.0
      %2713 = vmatpush1.msra.mxu0 0.0
      %2714 = vmatprep.subr.mxu0 0.0
      %2715 = vmatpush1.msra.mxu0 0.0
      %2716 = vmatprep.subr.mxu0 0.0
      %2717 = vmatpush1.msra.mxu0 0.0
      %2718 = vmatprep.subr.mxu0 0.0
      %2719 = vmatpush1.msra.mxu0 0.0
      %2720 = vmatprep.subr.mxu0 0.0
      %2721 = vmatpush1.msra.mxu0 0.0
      %2722 = vmatprep.subr.mxu0 0.0
      %2723 = vmatpush1.msra.mxu0 0.0
      %2724 = vmatprep.mubr.f32.mxu0 0.0
      %v2725 = vand.u32 %v2335, 4294901760
      %2726 = vmatmul.mubr.f32.gmra.mrb[0].mxu0 %v2725
      %v2727 = vpop.f32.mrb[0].mxu0
      %v2728 = vadd.f32 %v2650, %v2727
      %v2729 = vpop.f32.mrb[0].mxu0
      %v2730 = vadd.f32 %v2652, %v2729
      %2731 = vdwg.mxu0
      %v2732 = vand.u32 %v2339, 4294901760
      %2733 = vmatprep.subr.mxu0 %v2732
      %v2734 = vand.u32 %v2337, 4294901760
      %2735 = vmatpush1.msra.mxu0 %v2734
      %2736 = vmatprep.subr.mxu0 0.0
      %2737 = vmatpush1.msra.mxu0 0.0
      %2738 = vmatprep.subr.mxu0 0.0
      %2739 = vmatpush1.msra.mxu0 0.0
      %2740 = vmatprep.subr.mxu0 0.0
      %2741 = vmatpush1.msra.mxu0 0.0
      %2742 = vmatprep.subr.mxu0 0.0
      %2743 = vmatpush1.msra.mxu0 0.0
      %2744 = vmatprep.subr.mxu0 0.0
      %2745 = vmatpush1.msra.mxu0 0.0
      %2746 = vmatprep.subr.mxu0 0.0
      %2747 = vmatpush1.msra.mxu0 0.0
      %2748 = vmatprep.subr.mxu0 0.0
      %2749 = vmatpush1.msra.mxu0 0.0
      %2750 = vmatprep.subr.mxu0 0.0
      %2751 = vmatpush1.msra.mxu0 0.0
      %2752 = vmatprep.subr.mxu0 0.0
      %2753 = vmatpush1.msra.mxu0 0.0
      %2754 = vmatprep.subr.mxu0 0.0
      %2755 = vmatpush1.msra.mxu0 0.0
      %2756 = vmatprep.subr.mxu0 0.0
      %2757 = vmatpush1.msra.mxu0 0.0
      %2758 = vmatprep.subr.mxu0 0.0
      %2759 = vmatpush1.msra.mxu0 0.0
      %2760 = vmatprep.subr.mxu0 0.0
      %2761 = vmatpush1.msra.mxu0 0.0
      %2762 = vmatprep.subr.mxu0 0.0
      %2763 = vmatpush1.msra.mxu0 0.0
      %2764 = vmatprep.subr.mxu0 0.0
      %2765 = vmatpush1.msra.mxu0 0.0
      %2766 = vmatprep.subr.mxu0 0.0
      %2767 = vmatpush1.msra.mxu0 0.0
      %2768 = vmatprep.subr.mxu0 0.0
      %2769 = vmatpush1.msra.mxu0 0.0
      %2770 = vmatprep.subr.mxu0 0.0
      %2771 = vmatpush1.msra.mxu0 0.0
      %2772 = vmatprep.subr.mxu0 0.0
      %2773 = vmatpush1.msra.mxu0 0.0
      %2774 = vmatprep.subr.mxu0 0.0
      %2775 = vmatpush1.msra.mxu0 0.0
      %2776 = vmatprep.subr.mxu0 0.0
      %2777 = vmatpush1.msra.mxu0 0.0
      %2778 = vmatprep.subr.mxu0 0.0
      %2779 = vmatpush1.msra.mxu0 0.0
      %2780 = vmatprep.subr.mxu0 0.0
      %2781 = vmatpush1.msra.mxu0 0.0
      %2782 = vmatprep.subr.mxu0 0.0
      %2783 = vmatpush1.msra.mxu0 0.0
      %2784 = vmatprep.subr.mxu0 0.0
      %2785 = vmatpush1.msra.mxu0 0.0
      %2786 = vmatprep.subr.mxu0 0.0
      %2787 = vmatpush1.msra.mxu0 0.0
      %2788 = vmatprep.subr.mxu0 0.0
      %2789 = vmatpush1.msra.mxu0 0.0
      %2790 = vmatprep.subr.mxu0 0.0
      %2791 = vmatpush1.msra.mxu0 0.0
      %2792 = vmatprep.subr.mxu0 0.0
      %2793 = vmatpush1.msra.mxu0 0.0
      %2794 = vmatprep.subr.mxu0 0.0
      %2795 = vmatpush1.msra.mxu0 0.0
      %2796 = vmatprep.subr.mxu0 0.0
      %2797 = vmatpush1.msra.mxu0 0.0
      %2798 = vmatprep.mubr.f32.mxu0 0.0
      %v2799 = vand.u32 %v2335, 4294901760
      %2800 = vmatmul.mubr.f32.gmra.mrb[0].mxu0 %v2799
      %v2801 = vpop.f32.mrb[0].mxu0
      %v2802 = vadd.f32 %v2728, %v2801
      %v2803 = vpop.f32.mrb[0].mxu0
      %v2804 = vadd.f32 %v2730, %v2803
      %2805 = vdwg.mxu0
      %v2806 = vadd.f32 %v2321, %v2802
      %v2807 = vadd.f32 %v2322, %v2804
      %s2808 = scalar_lea.vmem %s1, 20
      %v2809 = vld [vmem:[%s2808] sm:$0xf]
      %v2811 = vsel %vm388, %v2809, 0
      %v2814 = vsel %vm392, %v1843, 0
      %v2817 = vsel %vm392, %v1844, 0
      %v2819 = vand.u32 %v2817, 4294901760
      %2820 = vmatprep.subr.mxu0 %v2819
      %v2821 = vand.u32 %v2814, 4294901760
      %2822 = vmatpush1.msra.mxu0 %v2821
      %2823 = vmatprep.subr.mxu0 0.0
      %2824 = vmatpush1.msra.mxu0 0.0
      %2825 = vmatprep.subr.mxu0 0.0
      %2826 = vmatpush1.msra.mxu0 0.0
      %2827 = vmatprep.subr.mxu0 0.0
      %2828 = vmatpush1.msra.mxu0 0.0
      %2829 = vmatprep.subr.mxu0 0.0
      %2830 = vmatpush1.msra.mxu0 0.0
      %2831 = vmatprep.subr.mxu0 0.0
      %2832 = vmatpush1.msra.mxu0 0.0
      %2833 = vmatprep.subr.mxu0 0.0
      %2834 = vmatpush1.msra.mxu0 0.0
      %2835 = vmatprep.subr.mxu0 0.0
      %2836 = vmatpush1.msra.mxu0 0.0
      %2837 = vmatprep.subr.mxu0 0.0
      %2838 = vmatpush1.msra.mxu0 0.0
      %2839 = vmatprep.subr.mxu0 0.0
      %2840 = vmatpush1.msra.mxu0 0.0
      %2841 = vmatprep.subr.mxu0 0.0
      %2842 = vmatpush1.msra.mxu0 0.0
      %2843 = vmatprep.subr.mxu0 0.0
      %2844 = vmatpush1.msra.mxu0 0.0
      %2845 = vmatprep.subr.mxu0 0.0
      %2846 = vmatpush1.msra.mxu0 0.0
      %2847 = vmatprep.subr.mxu0 0.0
      %2848 = vmatpush1.msra.mxu0 0.0
      %2849 = vmatprep.subr.mxu0 0.0
      %2850 = vmatpush1.msra.mxu0 0.0
      %2851 = vmatprep.subr.mxu0 0.0
      %2852 = vmatpush1.msra.mxu0 0.0
      %2853 = vmatprep.subr.mxu0 0.0
      %2854 = vmatpush1.msra.mxu0 0.0
      %2855 = vmatprep.subr.mxu0 0.0
      %2856 = vmatpush1.msra.mxu0 0.0
      %2857 = vmatprep.subr.mxu0 0.0
      %2858 = vmatpush1.msra.mxu0 0.0
      %2859 = vmatprep.subr.mxu0 0.0
      %2860 = vmatpush1.msra.mxu0 0.0
      %2861 = vmatprep.subr.mxu0 0.0
      %2862 = vmatpush1.msra.mxu0 0.0
      %2863 = vmatprep.subr.mxu0 0.0
      %2864 = vmatpush1.msra.mxu0 0.0
      %2865 = vmatprep.subr.mxu0 0.0
      %2866 = vmatpush1.msra.mxu0 0.0
      %2867 = vmatprep.subr.mxu0 0.0
      %2868 = vmatpush1.msra.mxu0 0.0
      %2869 = vmatprep.subr.mxu0 0.0
      %2870 = vmatpush1.msra.mxu0 0.0
      %2871 = vmatprep.subr.mxu0 0.0
      %2872 = vmatpush1.msra.mxu0 0.0
      %2873 = vmatprep.subr.mxu0 0.0
      %2874 = vmatpush1.msra.mxu0 0.0
      %2875 = vmatprep.subr.mxu0 0.0
      %2876 = vmatpush1.msra.mxu0 0.0
      %2877 = vmatprep.subr.mxu0 0.0
      %2878 = vmatpush1.msra.mxu0 0.0
      %2879 = vmatprep.subr.mxu0 0.0
      %2880 = vmatpush1.msra.mxu0 0.0
      %2881 = vmatprep.subr.mxu0 0.0
      %2882 = vmatpush1.msra.mxu0 0.0
      %2883 = vmatprep.subr.mxu0 0.0
      %2884 = vmatpush1.msra.mxu0 0.0
      %2885 = vmatprep.mubr.f32.mxu0 0.0
      %v2886 = vand.u32 %v2811, 4294901760
      %v2887 = vsub.f32 %v2811, %v2886
      %v2888 = vand.u32 %v2887, 4294901760
      %v2889 = vsub.f32 %v2887, %v2888
      %v2890 = vand.u32 %v2889, 4294901760
      %2891 = vmatmul.mubr.f32.gmra.mrb[0].mxu0 %v2890
      %v2892 = vpop.f32.mrb[0].mxu0
      %v2893 = vadd.f32 0.0, %v2892
      %v2894 = vpop.f32.mrb[0].mxu0
      %v2895 = vadd.f32 0.0, %v2894
      %2896 = vdwg.mxu0
      %v2897 = vand.u32 %v2817, 4294901760
      %v2898 = vsub.f32 %v2817, %v2897
      %v2899 = vand.u32 %v2898, 4294901760
      %v2900 = vsub.f32 %v2898, %v2899
      %v2901 = vand.u32 %v2900, 4294901760
      %2902 = vmatprep.subr.mxu0 %v2901
      %v2903 = vand.u32 %v2814, 4294901760
      %v2904 = vsub.f32 %v2814, %v2903
      %v2905 = vand.u32 %v2904, 4294901760
      %v2906 = vsub.f32 %v2904, %v2905
      %v2907 = vand.u32 %v2906, 4294901760
      %2908 = vmatpush1.msra.mxu0 %v2907
      %2909 = vmatprep.subr.mxu0 0.0
      %2910 = vmatpush1.msra.mxu0 0.0
      %2911 = vmatprep.subr.mxu0 0.0
      %2912 = vmatpush1.msra.mxu0 0.0
      %2913 = vmatprep.subr.mxu0 0.0
      %2914 = vmatpush1.msra.mxu0 0.0
      %2915 = vmatprep.subr.mxu0 0.0
      %2916 = vmatpush1.msra.mxu0 0.0
      %2917 = vmatprep.subr.mxu0 0.0
      %2918 = vmatpush1.msra.mxu0 0.0
      %2919 = vmatprep.subr.mxu0 0.0
      %2920 = vmatpush1.msra.mxu0 0.0
      %2921 = vmatprep.subr.mxu0 0.0
      %2922 = vmatpush1.msra.mxu0 0.0
      %2923 = vmatprep.subr.mxu0 0.0
      %2924 = vmatpush1.msra.mxu0 0.0
      %2925 = vmatprep.subr.mxu0 0.0
      %2926 = vmatpush1.msra.mxu0 0.0
      %2927 = vmatprep.subr.mxu0 0.0
      %2928 = vmatpush1.msra.mxu0 0.0
      %2929 = vmatprep.subr.mxu0 0.0
      %2930 = vmatpush1.msra.mxu0 0.0
      %2931 = vmatprep.subr.mxu0 0.0
      %2932 = vmatpush1.msra.mxu0 0.0
      %2933 = vmatprep.subr.mxu0 0.0
      %2934 = vmatpush1.msra.mxu0 0.0
      %2935 = vmatprep.subr.mxu0 0.0
      %2936 = vmatpush1.msra.mxu0 0.0
      %2937 = vmatprep.subr.mxu0 0.0
      %2938 = vmatpush1.msra.mxu0 0.0
      %2939 = vmatprep.subr.mxu0 0.0
      %2940 = vmatpush1.msra.mxu0 0.0
      %2941 = vmatprep.subr.mxu0 0.0
      %2942 = vmatpush1.msra.mxu0 0.0
      %2943 = vmatprep.subr.mxu0 0.0
      %2944 = vmatpush1.msra.mxu0 0.0
      %2945 = vmatprep.subr.mxu0 0.0
      %2946 = vmatpush1.msra.mxu0 0.0
      %2947 = vmatprep.subr.mxu0 0.0
      %2948 = vmatpush1.msra.mxu0 0.0
      %2949 = vmatprep.subr.mxu0 0.0
      %2950 = vmatpush1.msra.mxu0 0.0
      %2951 = vmatprep.subr.mxu0 0.0
      %2952 = vmatpush1.msra.mxu0 0.0
      %2953 = vmatprep.subr.mxu0 0.0
      %2954 = vmatpush1.msra.mxu0 0.0
      %2955 = vmatprep.subr.mxu0 0.0
      %2956 = vmatpush1.msra.mxu0 0.0
      %2957 = vmatprep.subr.mxu0 0.0
      %2958 = vmatpush1.msra.mxu0 0.0
      %2959 = vmatprep.subr.mxu0 0.0
      %2960 = vmatpush1.msra.mxu0 0.0
      %2961 = vmatprep.subr.mxu0 0.0
      %2962 = vmatpush1.msra.mxu0 0.0
      %2963 = vmatprep.subr.mxu0 0.0
      %2964 = vmatpush1.msra.mxu0 0.0
      %2965 = vmatprep.subr.mxu0 0.0
      %2966 = vmatpush1.msra.mxu0 0.0
      %2967 = vmatprep.subr.mxu0 0.0
      %2968 = vmatpush1.msra.mxu0 0.0
      %2969 = vmatprep.subr.mxu0 0.0
      %2970 = vmatpush1.msra.mxu0 0.0
      %2971 = vmatprep.mubr.f32.mxu0 0.0
      %v2972 = vand.u32 %v2811, 4294901760
      %2973 = vmatmul.mubr.f32.gmra.mrb[0].mxu0 %v2972
      %v2974 = vpop.f32.mrb[0].mxu0
      %v2975 = vadd.f32 %v2893, %v2974
      %v2976 = vpop.f32.mrb[0].mxu0
      %v2977 = vadd.f32 %v2895, %v2976
      %2978 = vdwg.mxu0
      %v2979 = vand.u32 %v2817, 4294901760
      %v2980 = vsub.f32 %v2817, %v2979
      %2981 = vmatprep.subr.mxu0 %v2980
      %v2982 = vand.u32 %v2814, 4294901760
      %v2983 = vsub.f32 %v2814, %v2982
      %2984 = vmatpush1.msra.mxu0 %v2983
      %2985 = vmatprep.subr.mxu0 0.0
      %2986 = vmatpush1.msra.mxu0 0.0
      %2987 = vmatprep.subr.mxu0 0.0
      %2988 = vmatpush1.msra.mxu0 0.0
      %2989 = vmatprep.subr.mxu0 0.0
      %2990 = vmatpush1.msra.mxu0 0.0
      %2991 = vmatprep.subr.mxu0 0.0
      %2992 = vmatpush1.msra.mxu0 0.0
      %2993 = vmatprep.subr.mxu0 0.0
      %2994 = vmatpush1.msra.mxu0 0.0
      %2995 = vmatprep.subr.mxu0 0.0
      %2996 = vmatpush1.msra.mxu0 0.0
      %2997 = vmatprep.subr.mxu0 0.0
      %2998 = vmatpush1.msra.mxu0 0.0
      %2999 = vmatprep.subr.mxu0 0.0
      %3000 = vmatpush1.msra.mxu0 0.0
      %3001 = vmatprep.subr.mxu0 0.0
      %3002 = vmatpush1.msra.mxu0 0.0
      %3003 = vmatprep.subr.mxu0 0.0
      %3004 = vmatpush1.msra.mxu0 0.0
      %3005 = vmatprep.subr.mxu0 0.0
      %3006 = vmatpush1.msra.mxu0 0.0
      %3007 = vmatprep.subr.mxu0 0.0
      %3008 = vmatpush1.msra.mxu0 0.0
      %3009 = vmatprep.subr.mxu0 0.0
      %3010 = vmatpush1.msra.mxu0 0.0
      %3011 = vmatprep.subr.mxu0 0.0
      %3012 = vmatpush1.msra.mxu0 0.0
      %3013 = vmatprep.subr.mxu0 0.0
      %3014 = vmatpush1.msra.mxu0 0.0
      %3015 = vmatprep.subr.mxu0 0.0
      %3016 = vmatpush1.msra.mxu0 0.0
      %3017 = vmatprep.subr.mxu0 0.0
      %3018 = vmatpush1.msra.mxu0 0.0
      %3019 = vmatprep.subr.mxu0 0.0
      %3020 = vmatpush1.msra.mxu0 0.0
      %3021 = vmatprep.subr.mxu0 0.0
      %3022 = vmatpush1.msra.mxu0 0.0
      %3023 = vmatprep.subr.mxu0 0.0
      %3024 = vmatpush1.msra.mxu0 0.0
      %3025 = vmatprep.subr.mxu0 0.0
      %3026 = vmatpush1.msra.mxu0 0.0
      %3027 = vmatprep.subr.mxu0 0.0
      %3028 = vmatpush1.msra.mxu0 0.0
      %3029 = vmatprep.subr.mxu0 0.0
      %3030 = vmatpush1.msra.mxu0 0.0
      %3031 = vmatprep.subr.mxu0 0.0
      %3032 = vmatpush1.msra.mxu0 0.0
      %3033 = vmatprep.subr.mxu0 0.0
      %3034 = vmatpush1.msra.mxu0 0.0
      %3035 = vmatprep.subr.mxu0 0.0
      %3036 = vmatpush1.msra.mxu0 0.0
      %3037 = vmatprep.subr.mxu0 0.0
      %3038 = vmatpush1.msra.mxu0 0.0
      %3039 = vmatprep.subr.mxu0 0.0
      %3040 = vmatpush1.msra.mxu0 0.0
      %3041 = vmatprep.subr.mxu0 0.0
      %3042 = vmatpush1.msra.mxu0 0.0
      %3043 = vmatprep.subr.mxu0 0.0
      %3044 = vmatpush1.msra.mxu0 0.0
      %3045 = vmatprep.subr.mxu0 0.0
      %3046 = vmatpush1.msra.mxu0 0.0
      %3047 = vmatprep.mubr.f32.mxu0 0.0
      %v3048 = vand.u32 %v2811, 4294901760
      %v3049 = vsub.f32 %v2811, %v3048
      %3050 = vmatmul.mubr.f32.gmra.mrb[0].mxu0 %v3049
      %v3051 = vpop.f32.mrb[0].mxu0
      %v3052 = vadd.f32 %v2975, %v3051
      %v3053 = vpop.f32.mrb[0].mxu0
      %v3054 = vadd.f32 %v2977, %v3053
      %3055 = vdwg.mxu0
      %v3056 = vand.u32 %v2817, 4294901760
      %3057 = vmatprep.subr.mxu0 %v3056
      %v3058 = vand.u32 %v2814, 4294901760
      %3059 = vmatpush1.msra.mxu0 %v3058
      %3060 = vmatprep.subr.mxu0 0.0
      %3061 = vmatpush1.msra.mxu0 0.0
      %3062 = vmatprep.subr.mxu0 0.0
      %3063 = vmatpush1.msra.mxu0 0.0
      %3064 = vmatprep.subr.mxu0 0.0
      %3065 = vmatpush1.msra.mxu0 0.0
      %3066 = vmatprep.subr.mxu0 0.0
      %3067 = vmatpush1.msra.mxu0 0.0
      %3068 = vmatprep.subr.mxu0 0.0
      %3069 = vmatpush1.msra.mxu0 0.0
      %3070 = vmatprep.subr.mxu0 0.0
      %3071 = vmatpush1.msra.mxu0 0.0
      %3072 = vmatprep.subr.mxu0 0.0
      %3073 = vmatpush1.msra.mxu0 0.0
      %3074 = vmatprep.subr.mxu0 0.0
      %3075 = vmatpush1.msra.mxu0 0.0
      %3076 = vmatprep.subr.mxu0 0.0
      %3077 = vmatpush1.msra.mxu0 0.0
      %3078 = vmatprep.subr.mxu0 0.0
      %3079 = vmatpush1.msra.mxu0 0.0
      %3080 = vmatprep.subr.mxu0 0.0
      %3081 = vmatpush1.msra.mxu0 0.0
      %3082 = vmatprep.subr.mxu0 0.0
      %3083 = vmatpush1.msra.mxu0 0.0
      %3084 = vmatprep.subr.mxu0 0.0
      %3085 = vmatpush1.msra.mxu0 0.0
      %3086 = vmatprep.subr.mxu0 0.0
      %3087 = vmatpush1.msra.mxu0 0.0
      %3088 = vmatprep.subr.mxu0 0.0
      %3089 = vmatpush1.msra.mxu0 0.0
      %3090 = vmatprep.subr.mxu0 0.0
      %3091 = vmatpush1.msra.mxu0 0.0
      %3092 = vmatprep.subr.mxu0 0.0
      %3093 = vmatpush1.msra.mxu0 0.0
      %3094 = vmatprep.subr.mxu0 0.0
      %3095 = vmatpush1.msra.mxu0 0.0
      %3096 = vmatprep.subr.mxu0 0.0
      %3097 = vmatpush1.msra.mxu0 0.0
      %3098 = vmatprep.subr.mxu0 0.0
      %3099 = vmatpush1.msra.mxu0 0.0
      %3100 = vmatprep.subr.mxu0 0.0
      %3101 = vmatpush1.msra.mxu0 0.0
      %3102 = vmatprep.subr.mxu0 0.0
      %3103 = vmatpush1.msra.mxu0 0.0
      %3104 = vmatprep.subr.mxu0 0.0
      %3105 = vmatpush1.msra.mxu0 0.0
      %3106 = vmatprep.subr.mxu0 0.0
      %3107 = vmatpush1.msra.mxu0 0.0
      %3108 = vmatprep.subr.mxu0 0.0
      %3109 = vmatpush1.msra.mxu0 0.0
      %3110 = vmatprep.subr.mxu0 0.0
      %3111 = vmatpush1.msra.mxu0 0.0
      %3112 = vmatprep.subr.mxu0 0.0
      %3113 = vmatpush1.msra.mxu0 0.0
      %3114 = vmatprep.subr.mxu0 0.0
      %3115 = vmatpush1.msra.mxu0 0.0
      %3116 = vmatprep.subr.mxu0 0.0
      %3117 = vmatpush1.msra.mxu0 0.0
      %3118 = vmatprep.subr.mxu0 0.0
      %3119 = vmatpush1.msra.mxu0 0.0
      %3120 = vmatprep.subr.mxu0 0.0
      %3121 = vmatpush1.msra.mxu0 0.0
      %3122 = vmatprep.mubr.f32.mxu0 0.0
      %v3123 = vand.u32 %v2811, 4294901760
      %v3124 = vsub.f32 %v2811, %v3123
      %v3125 = vand.u32 %v3124, 4294901760
      %3126 = vmatmul.mubr.f32.gmra.mrb[0].mxu0 %v3125
      %v3127 = vpop.f32.mrb[0].mxu0
      %v3128 = vadd.f32 %v3052, %v3127
      %v3129 = vpop.f32.mrb[0].mxu0
      %v3130 = vadd.f32 %v3054, %v3129
      %3131 = vdwg.mxu0
      %v3132 = vand.u32 %v2817, 4294901760
      %v3133 = vsub.f32 %v2817, %v3132
      %v3134 = vand.u32 %v3133, 4294901760
      %3135 = vmatprep.subr.mxu0 %v3134
      %v3136 = vand.u32 %v2814, 4294901760
      %v3137 = vsub.f32 %v2814, %v3136
      %v3138 = vand.u32 %v3137, 4294901760
      %3139 = vmatpush1.msra.mxu0 %v3138
      %3140 = vmatprep.subr.mxu0 0.0
      %3141 = vmatpush1.msra.mxu0 0.0
      %3142 = vmatprep.subr.mxu0 0.0
      %3143 = vmatpush1.msra.mxu0 0.0
      %3144 = vmatprep.subr.mxu0 0.0
      %3145 = vmatpush1.msra.mxu0 0.0
      %3146 = vmatprep.subr.mxu0 0.0
      %3147 = vmatpush1.msra.mxu0 0.0
      %3148 = vmatprep.subr.mxu0 0.0
      %3149 = vmatpush1.msra.mxu0 0.0
      %3150 = vmatprep.subr.mxu0 0.0
      %3151 = vmatpush1.msra.mxu0 0.0
      %3152 = vmatprep.subr.mxu0 0.0
      %3153 = vmatpush1.msra.mxu0 0.0
      %3154 = vmatprep.subr.mxu0 0.0
      %3155 = vmatpush1.msra.mxu0 0.0
      %3156 = vmatprep.subr.mxu0 0.0
      %3157 = vmatpush1.msra.mxu0 0.0
      %3158 = vmatprep.subr.mxu0 0.0
      %3159 = vmatpush1.msra.mxu0 0.0
      %3160 = vmatprep.subr.mxu0 0.0
      %3161 = vmatpush1.msra.mxu0 0.0
      %3162 = vmatprep.subr.mxu0 0.0
      %3163 = vmatpush1.msra.mxu0 0.0
      %3164 = vmatprep.subr.mxu0 0.0
      %3165 = vmatpush1.msra.mxu0 0.0
      %3166 = vmatprep.subr.mxu0 0.0
      %3167 = vmatpush1.msra.mxu0 0.0
      %3168 = vmatprep.subr.mxu0 0.0
      %3169 = vmatpush1.msra.mxu0 0.0
      %3170 = vmatprep.subr.mxu0 0.0
      %3171 = vmatpush1.msra.mxu0 0.0
      %3172 = vmatprep.subr.mxu0 0.0
      %3173 = vmatpush1.msra.mxu0 0.0
      %3174 = vmatprep.subr.mxu0 0.0
      %3175 = vmatpush1.msra.mxu0 0.0
      %3176 = vmatprep.subr.mxu0 0.0
      %3177 = vmatpush1.msra.mxu0 0.0
      %3178 = vmatprep.subr.mxu0 0.0
      %3179 = vmatpush1.msra.mxu0 0.0
      %3180 = vmatprep.subr.mxu0 0.0
      %3181 = vmatpush1.msra.mxu0 0.0
      %3182 = vmatprep.subr.mxu0 0.0
      %3183 = vmatpush1.msra.mxu0 0.0
      %3184 = vmatprep.subr.mxu0 0.0
      %3185 = vmatpush1.msra.mxu0 0.0
      %3186 = vmatprep.subr.mxu0 0.0
      %3187 = vmatpush1.msra.mxu0 0.0
      %3188 = vmatprep.subr.mxu0 0.0
      %3189 = vmatpush1.msra.mxu0 0.0
      %3190 = vmatprep.subr.mxu0 0.0
      %3191 = vmatpush1.msra.mxu0 0.0
      %3192 = vmatprep.subr.mxu0 0.0
      %3193 = vmatpush1.msra.mxu0 0.0
      %3194 = vmatprep.subr.mxu0 0.0
      %3195 = vmatpush1.msra.mxu0 0.0
      %3196 = vmatprep.subr.mxu0 0.0
      %3197 = vmatpush1.msra.mxu0 0.0
      %3198 = vmatprep.subr.mxu0 0.0
      %3199 = vmatpush1.msra.mxu0 0.0
      %3200 = vmatprep.subr.mxu0 0.0
      %3201 = vmatpush1.msra.mxu0 0.0
      %3202 = vmatprep.mubr.f32.mxu0 0.0
      %v3203 = vand.u32 %v2811, 4294901760
      %3204 = vmatmul.mubr.f32.gmra.mrb[0].mxu0 %v3203
      %v3205 = vpop.f32.mrb[0].mxu0
      %v3206 = vadd.f32 %v3128, %v3205
      %v3207 = vpop.f32.mrb[0].mxu0
      %v3208 = vadd.f32 %v3130, %v3207
      %3209 = vdwg.mxu0
      %v3210 = vand.u32 %v2817, 4294901760
      %3211 = vmatprep.subr.mxu0 %v3210
      %v3212 = vand.u32 %v2814, 4294901760
      %3213 = vmatpush1.msra.mxu0 %v3212
      %3214 = vmatprep.subr.mxu0 0.0
      %3215 = vmatpush1.msra.mxu0 0.0
      %3216 = vmatprep.subr.mxu0 0.0
      %3217 = vmatpush1.msra.mxu0 0.0
      %3218 = vmatprep.subr.mxu0 0.0
      %3219 = vmatpush1.msra.mxu0 0.0
      %3220 = vmatprep.subr.mxu0 0.0
      %3221 = vmatpush1.msra.mxu0 0.0
      %3222 = vmatprep.subr.mxu0 0.0
      %3223 = vmatpush1.msra.mxu0 0.0
      %3224 = vmatprep.subr.mxu0 0.0
      %3225 = vmatpush1.msra.mxu0 0.0
      %3226 = vmatprep.subr.mxu0 0.0
      %3227 = vmatpush1.msra.mxu0 0.0
      %3228 = vmatprep.subr.mxu0 0.0
      %3229 = vmatpush1.msra.mxu0 0.0
      %3230 = vmatprep.subr.mxu0 0.0
      %3231 = vmatpush1.msra.mxu0 0.0
      %3232 = vmatprep.subr.mxu0 0.0
      %3233 = vmatpush1.msra.mxu0 0.0
      %3234 = vmatprep.subr.mxu0 0.0
      %3235 = vmatpush1.msra.mxu0 0.0
      %3236 = vmatprep.subr.mxu0 0.0
      %3237 = vmatpush1.msra.mxu0 0.0
      %3238 = vmatprep.subr.mxu0 0.0
      %3239 = vmatpush1.msra.mxu0 0.0
      %3240 = vmatprep.subr.mxu0 0.0
      %3241 = vmatpush1.msra.mxu0 0.0
      %3242 = vmatprep.subr.mxu0 0.0
      %3243 = vmatpush1.msra.mxu0 0.0
      %3244 = vmatprep.subr.mxu0 0.0
      %3245 = vmatpush1.msra.mxu0 0.0
      %3246 = vmatprep.subr.mxu0 0.0
      %3247 = vmatpush1.msra.mxu0 0.0
      %3248 = vmatprep.subr.mxu0 0.0
      %3249 = vmatpush1.msra.mxu0 0.0
      %3250 = vmatprep.subr.mxu0 0.0
      %3251 = vmatpush1.msra.mxu0 0.0
      %3252 = vmatprep.subr.mxu0 0.0
      %3253 = vmatpush1.msra.mxu0 0.0
      %3254 = vmatprep.subr.mxu0 0.0
      %3255 = vmatpush1.msra.mxu0 0.0
      %3256 = vmatprep.subr.mxu0 0.0
      %3257 = vmatpush1.msra.mxu0 0.0
      %3258 = vmatprep.subr.mxu0 0.0
      %3259 = vmatpush1.msra.mxu0 0.0
      %3260 = vmatprep.subr.mxu0 0.0
      %3261 = vmatpush1.msra.mxu0 0.0
      %3262 = vmatprep.subr.mxu0 0.0
      %3263 = vmatpush1.msra.mxu0 0.0
      %3264 = vmatprep.subr.mxu0 0.0
      %3265 = vmatpush1.msra.mxu0 0.0
      %3266 = vmatprep.subr.mxu0 0.0
      %3267 = vmatpush1.msra.mxu0 0.0
      %3268 = vmatprep.subr.mxu0 0.0
      %3269 = vmatpush1.msra.mxu0 0.0
      %3270 = vmatprep.subr.mxu0 0.0
      %3271 = vmatpush1.msra.mxu0 0.0
      %3272 = vmatprep.subr.mxu0 0.0
      %3273 = vmatpush1.msra.mxu0 0.0
      %3274 = vmatprep.subr.mxu0 0.0
      %3275 = vmatpush1.msra.mxu0 0.0
      %3276 = vmatprep.mubr.f32.mxu0 0.0
      %v3277 = vand.u32 %v2811, 4294901760
      %3278 = vmatmul.mubr.f32.gmra.mrb[0].mxu0 %v3277
      %v3279 = vpop.f32.mrb[0].mxu0
      %v3280 = vadd.f32 %v3206, %v3279
      %v3281 = vpop.f32.mrb[0].mxu0
      %v3282 = vadd.f32 %v3208, %v3281
      %3283 = vdwg.mxu0
      %v3284 = vadd.f32 %v2806, %v3280
      %v3285 = vadd.f32 %v2807, %v3282
      %v3286 = vld [vmem:[#allocation2] sm:$0xff]
      %v3287 = vld [vmem:[#allocation2 + $0x8] sm:$0xf]
      %v3290 = vcombine.high %v3286, %v3286
      %3291 = vrot.lane.b32.xlu0 %v3286, 79
      %v3292 = vpop.permute.xlu0 %3291
      %3293 = vrot.lane.b32.xlu0 %v3290, 79
      %v3294 = vpop.permute.xlu0 %3293
      %3295 = vrot.lane.b32.xlu0 %v3287, 79
      %v3296 = vpop.permute.xlu0 %3295
      %vm3297 = vcmask 646144
      %v3298 = vsel %vm3297, %v3292, %v3294
      %v3299 = vsel %vm3297, %v3294, %v3296
      %3302 = vrot.lane.b32.xlu0 %v3286, 81
      %v3303 = vpop.permute.xlu0 %3302
      %3304 = vrot.lane.b32.xlu0 %v3290, 81
      %v3305 = vpop.permute.xlu0 %3304
      %3306 = vrot.lane.b32.xlu0 %v3287, 81
      %v3307 = vpop.permute.xlu0 %3306
      %vm3308 = vcmask 662528
      %v3309 = vsel %vm3308, %v3303, %v3305
      %v3310 = vsel %vm3308, %v3305, %v3307
      %v3313 = vsel %vm341, %v3298, %v3309
      %v3314 = vsel %vm342, %v3299, %v3310
      %v3315 = vsel %vm372, %v3309, %v3298
      %v3316 = vsel %vm373, %v3310, %v3299
      %s3317 = scalar_lea.vmem %s1, 24
      %v3318 = vld [vmem:[%s3317] sm:$0xf]
      %v3320 = vsel %vm388, %v3318, 0
      %v3323 = vsel %vm392, %v3313, 0
      %v3326 = vsel %vm392, %v3314, 0
      %v3328 = vand.u32 %v3326, 4294901760
      %3329 = vmatprep.subr.mxu0 %v3328
      %v3330 = vand.u32 %v3323, 4294901760
      %3331 = vmatpush1.msra.mxu0 %v3330
      %3332 = vmatprep.subr.mxu0 0.0
      %3333 = vmatpush1.msra.mxu0 0.0
      %3334 = vmatprep.subr.mxu0 0.0
      %3335 = vmatpush1.msra.mxu0 0.0
      %3336 = vmatprep.subr.mxu0 0.0
      %3337 = vmatpush1.msra.mxu0 0.0
      %3338 = vmatprep.subr.mxu0 0.0
      %3339 = vmatpush1.msra.mxu0 0.0
      %3340 = vmatprep.subr.mxu0 0.0
      %3341 = vmatpush1.msra.mxu0 0.0
      %3342 = vmatprep.subr.mxu0 0.0
      %3343 = vmatpush1.msra.mxu0 0.0
      %3344 = vmatprep.subr.mxu0 0.0
      %3345 = vmatpush1.msra.mxu0 0.0
      %3346 = vmatprep.subr.mxu0 0.0
      %3347 = vmatpush1.msra.mxu0 0.0
      %3348 = vmatprep.subr.mxu0 0.0
      %3349 = vmatpush1.msra.mxu0 0.0
      %3350 = vmatprep.subr.mxu0 0.0
      %3351 = vmatpush1.msra.mxu0 0.0
      %3352 = vmatprep.subr.mxu0 0.0
      %3353 = vmatpush1.msra.mxu0 0.0
      %3354 = vmatprep.subr.mxu0 0.0
      %3355 = vmatpush1.msra.mxu0 0.0
      %3356 = vmatprep.subr.mxu0 0.0
      %3357 = vmatpush1.msra.mxu0 0.0
      %3358 = vmatprep.subr.mxu0 0.0
      %3359 = vmatpush1.msra.mxu0 0.0
      %3360 = vmatprep.subr.mxu0 0.0
      %3361 = vmatpush1.msra.mxu0 0.0
      %3362 = vmatprep.subr.mxu0 0.0
      %3363 = vmatpush1.msra.mxu0 0.0
      %3364 = vmatprep.subr.mxu0 0.0
      %3365 = vmatpush1.msra.mxu0 0.0
      %3366 = vmatprep.subr.mxu0 0.0
      %3367 = vmatpush1.msra.mxu0 0.0
      %3368 = vmatprep.subr.mxu0 0.0
      %3369 = vmatpush1.msra.mxu0 0.0
      %3370 = vmatprep.subr.mxu0 0.0
      %3371 = vmatpush1.msra.mxu0 0.0
      %3372 = vmatprep.subr.mxu0 0.0
      %3373 = vmatpush1.msra.mxu0 0.0
      %3374 = vmatprep.subr.mxu0 0.0
      %3375 = vmatpush1.msra.mxu0 0.0
      %3376 = vmatprep.subr.mxu0 0.0
      %3377 = vmatpush1.msra.mxu0 0.0
      %3378 = vmatprep.subr.mxu0 0.0
      %3379 = vmatpush1.msra.mxu0 0.0
      %3380 = vmatprep.subr.mxu0 0.0
      %3381 = vmatpush1.msra.mxu0 0.0
      %3382 = vmatprep.subr.mxu0 0.0
      %3383 = vmatpush1.msra.mxu0 0.0
      %3384 = vmatprep.subr.mxu0 0.0
      %3385 = vmatpush1.msra.mxu0 0.0
      %3386 = vmatprep.subr.mxu0 0.0
      %3387 = vmatpush1.msra.mxu0 0.0
      %3388 = vmatprep.subr.mxu0 0.0
      %3389 = vmatpush1.msra.mxu0 0.0
      %3390 = vmatprep.subr.mxu0 0.0
      %3391 = vmatpush1.msra.mxu0 0.0
      %3392 = vmatprep.subr.mxu0 0.0
      %3393 = vmatpush1.msra.mxu0 0.0
      %3394 = vmatprep.mubr.f32.mxu0 0.0
      %v3395 = vand.u32 %v3320, 4294901760
      %v3396 = vsub.f32 %v3320, %v3395
      %v3397 = vand.u32 %v3396, 4294901760
      %v3398 = vsub.f32 %v3396, %v3397
      %v3399 = vand.u32 %v3398, 4294901760
      %3400 = vmatmul.mubr.f32.gmra.mrb[0].mxu0 %v3399
      %v3401 = vpop.f32.mrb[0].mxu0
      %v3402 = vadd.f32 0.0, %v3401
      %v3403 = vpop.f32.mrb[0].mxu0
      %v3404 = vadd.f32 0.0, %v3403
      %3405 = vdwg.mxu0
      %v3406 = vand.u32 %v3326, 4294901760
      %v3407 = vsub.f32 %v3326, %v3406
      %v3408 = vand.u32 %v3407, 4294901760
      %v3409 = vsub.f32 %v3407, %v3408
      %v3410 = vand.u32 %v3409, 4294901760
      %3411 = vmatprep.subr.mxu0 %v3410
      %v3412 = vand.u32 %v3323, 4294901760
      %v3413 = vsub.f32 %v3323, %v3412
      %v3414 = vand.u32 %v3413, 4294901760
      %v3415 = vsub.f32 %v3413, %v3414
      %v3416 = vand.u32 %v3415, 4294901760
      %3417 = vmatpush1.msra.mxu0 %v3416
      %3418 = vmatprep.subr.mxu0 0.0
      %3419 = vmatpush1.msra.mxu0 0.0
      %3420 = vmatprep.subr.mxu0 0.0
      %3421 = vmatpush1.msra.mxu0 0.0
      %3422 = vmatprep.subr.mxu0 0.0
      %3423 = vmatpush1.msra.mxu0 0.0
      %3424 = vmatprep.subr.mxu0 0.0
      %3425 = vmatpush1.msra.mxu0 0.0
      %3426 = vmatprep.subr.mxu0 0.0
      %3427 = vmatpush1.msra.mxu0 0.0
      %3428 = vmatprep.subr.mxu0 0.0
      %3429 = vmatpush1.msra.mxu0 0.0
      %3430 = vmatprep.subr.mxu0 0.0
      %3431 = vmatpush1.msra.mxu0 0.0
      %3432 = vmatprep.subr.mxu0 0.0
      %3433 = vmatpush1.msra.mxu0 0.0
      %3434 = vmatprep.subr.mxu0 0.0
      %3435 = vmatpush1.msra.mxu0 0.0
      %3436 = vmatprep.subr.mxu0 0.0
      %3437 = vmatpush1.msra.mxu0 0.0
      %3438 = vmatprep.subr.mxu0 0.0
      %3439 = vmatpush1.msra.mxu0 0.0
      %3440 = vmatprep.subr.mxu0 0.0
      %3441 = vmatpush1.msra.mxu0 0.0
      %3442 = vmatprep.subr.mxu0 0.0
      %3443 = vmatpush1.msra.mxu0 0.0
      %3444 = vmatprep.subr.mxu0 0.0
      %3445 = vmatpush1.msra.mxu0 0.0
      %3446 = vmatprep.subr.mxu0 0.0
      %3447 = vmatpush1.msra.mxu0 0.0
      %3448 = vmatprep.subr.mxu0 0.0
      %3449 = vmatpush1.msra.mxu0 0.0
      %3450 = vmatprep.subr.mxu0 0.0
      %3451 = vmatpush1.msra.mxu0 0.0
      %3452 = vmatprep.subr.mxu0 0.0
      %3453 = vmatpush1.msra.mxu0 0.0
      %3454 = vmatprep.subr.mxu0 0.0
      %3455 = vmatpush1.msra.mxu0 0.0
      %3456 = vmatprep.subr.mxu0 0.0
      %3457 = vmatpush1.msra.mxu0 0.0
      %3458 = vmatprep.subr.mxu0 0.0
      %3459 = vmatpush1.msra.mxu0 0.0
      %3460 = vmatprep.subr.mxu0 0.0
      %3461 = vmatpush1.msra.mxu0 0.0
      %3462 = vmatprep.subr.mxu0 0.0
      %3463 = vmatpush1.msra.mxu0 0.0
      %3464 = vmatprep.subr.mxu0 0.0
      %3465 = vmatpush1.msra.mxu0 0.0
      %3466 = vmatprep.subr.mxu0 0.0
      %3467 = vmatpush1.msra.mxu0 0.0
      %3468 = vmatprep.subr.mxu0 0.0
      %3469 = vmatpush1.msra.mxu0 0.0
      %3470 = vmatprep.subr.mxu0 0.0
      %3471 = vmatpush1.msra.mxu0 0.0
      %3472 = vmatprep.subr.mxu0 0.0
      %3473 = vmatpush1.msra.mxu0 0.0
      %3474 = vmatprep.subr.mxu0 0.0
      %3475 = vmatpush1.msra.mxu0 0.0
      %3476 = vmatprep.subr.mxu0 0.0
      %3477 = vmatpush1.msra.mxu0 0.0
      %3478 = vmatprep.subr.mxu0 0.0
      %3479 = vmatpush1.msra.mxu0 0.0
      %3480 = vmatprep.mubr.f32.mxu0 0.0
      %v3481 = vand.u32 %v3320, 4294901760
      %3482 = vmatmul.mubr.f32.gmra.mrb[0].mxu0 %v3481
      %v3483 = vpop.f32.mrb[0].mxu0
      %v3484 = vadd.f32 %v3402, %v3483
      %v3485 = vpop.f32.mrb[0].mxu0
      %v3486 = vadd.f32 %v3404, %v3485
      %3487 = vdwg.mxu0
      %v3488 = vand.u32 %v3326, 4294901760
      %v3489 = vsub.f32 %v3326, %v3488
      %3490 = vmatprep.subr.mxu0 %v3489
      %v3491 = vand.u32 %v3323, 4294901760
      %v3492 = vsub.f32 %v3323, %v3491
      %3493 = vmatpush1.msra.mxu0 %v3492
      %3494 = vmatprep.subr.mxu0 0.0
      %3495 = vmatpush1.msra.mxu0 0.0
      %3496 = vmatprep.subr.mxu0 0.0
      %3497 = vmatpush1.msra.mxu0 0.0
      %3498 = vmatprep.subr.mxu0 0.0
      %3499 = vmatpush1.msra.mxu0 0.0
      %3500 = vmatprep.subr.mxu0 0.0
      %3501 = vmatpush1.msra.mxu0 0.0
      %3502 = vmatprep.subr.mxu0 0.0
      %3503 = vmatpush1.msra.mxu0 0.0
      %3504 = vmatprep.subr.mxu0 0.0
      %3505 = vmatpush1.msra.mxu0 0.0
      %3506 = vmatprep.subr.mxu0 0.0
      %3507 = vmatpush1.msra.mxu0 0.0
      %3508 = vmatprep.subr.mxu0 0.0
      %3509 = vmatpush1.msra.mxu0 0.0
      %3510 = vmatprep.subr.mxu0 0.0
      %3511 = vmatpush1.msra.mxu0 0.0
      %3512 = vmatprep.subr.mxu0 0.0
      %3513 = vmatpush1.msra.mxu0 0.0
      %3514 = vmatprep.subr.mxu0 0.0
      %3515 = vmatpush1.msra.mxu0 0.0
      %3516 = vmatprep.subr.mxu0 0.0
      %3517 = vmatpush1.msra.mxu0 0.0
      %3518 = vmatprep.subr.mxu0 0.0
      %3519 = vmatpush1.msra.mxu0 0.0
      %3520 = vmatprep.subr.mxu0 0.0
      %3521 = vmatpush1.msra.mxu0 0.0
      %3522 = vmatprep.subr.mxu0 0.0
      %3523 = vmatpush1.msra.mxu0 0.0
      %3524 = vmatprep.subr.mxu0 0.0
      %3525 = vmatpush1.msra.mxu0 0.0
      %3526 = vmatprep.subr.mxu0 0.0
      %3527 = vmatpush1.msra.mxu0 0.0
      %3528 = vmatprep.subr.mxu0 0.0
      %3529 = vmatpush1.msra.mxu0 0.0
      %3530 = vmatprep.subr.mxu0 0.0
      %3531 = vmatpush1.msra.mxu0 0.0
      %3532 = vmatprep.subr.mxu0 0.0
      %3533 = vmatpush1.msra.mxu0 0.0
      %3534 = vmatprep.subr.mxu0 0.0
      %3535 = vmatpush1.msra.mxu0 0.0
      %3536 = vmatprep.subr.mxu0 0.0
      %3537 = vmatpush1.msra.mxu0 0.0
      %3538 = vmatprep.subr.mxu0 0.0
      %3539 = vmatpush1.msra.mxu0 0.0
      %3540 = vmatprep.subr.mxu0 0.0
      %3541 = vmatpush1.msra.mxu0 0.0
      %3542 = vmatprep.subr.mxu0 0.0
      %3543 = vmatpush1.msra.mxu0 0.0
      %3544 = vmatprep.subr.mxu0 0.0
      %3545 = vmatpush1.msra.mxu0 0.0
      %3546 = vmatprep.subr.mxu0 0.0
      %3547 = vmatpush1.msra.mxu0 0.0
      %3548 = vmatprep.subr.mxu0 0.0
      %3549 = vmatpush1.msra.mxu0 0.0
      %3550 = vmatprep.subr.mxu0 0.0
      %3551 = vmatpush1.msra.mxu0 0.0
      %3552 = vmatprep.subr.mxu0 0.0
      %3553 = vmatpush1.msra.mxu0 0.0
      %3554 = vmatprep.subr.mxu0 0.0
      %3555 = vmatpush1.msra.mxu0 0.0
      %3556 = vmatprep.mubr.f32.mxu0 0.0
      %v3557 = vand.u32 %v3320, 4294901760
      %v3558 = vsub.f32 %v3320, %v3557
      %3559 = vmatmul.mubr.f32.gmra.mrb[0].mxu0 %v3558
      %v3560 = vpop.f32.mrb[0].mxu0
      %v3561 = vadd.f32 %v3484, %v3560
      %v3562 = vpop.f32.mrb[0].mxu0
      %v3563 = vadd.f32 %v3486, %v3562
      %3564 = vdwg.mxu0
      %v3565 = vand.u32 %v3326, 4294901760
      %3566 = vmatprep.subr.mxu0 %v3565
      %v3567 = vand.u32 %v3323, 4294901760
      %3568 = vmatpush1.msra.mxu0 %v3567
      %3569 = vmatprep.subr.mxu0 0.0
      %3570 = vmatpush1.msra.mxu0 0.0
      %3571 = vmatprep.subr.mxu0 0.0
      %3572 = vmatpush1.msra.mxu0 0.0
      %3573 = vmatprep.subr.mxu0 0.0
      %3574 = vmatpush1.msra.mxu0 0.0
      %3575 = vmatprep.subr.mxu0 0.0
      %3576 = vmatpush1.msra.mxu0 0.0
      %3577 = vmatprep.subr.mxu0 0.0
      %3578 = vmatpush1.msra.mxu0 0.0
      %3579 = vmatprep.subr.mxu0 0.0
      %3580 = vmatpush1.msra.mxu0 0.0
      %3581 = vmatprep.subr.mxu0 0.0
      %3582 = vmatpush1.msra.mxu0 0.0
      %3583 = vmatprep.subr.mxu0 0.0
      %3584 = vmatpush1.msra.mxu0 0.0
      %3585 = vmatprep.subr.mxu0 0.0
      %3586 = vmatpush1.msra.mxu0 0.0
      %3587 = vmatprep.subr.mxu0 0.0
      %3588 = vmatpush1.msra.mxu0 0.0
      %3589 = vmatprep.subr.mxu0 0.0
      %3590 = vmatpush1.msra.mxu0 0.0
      %3591 = vmatprep.subr.mxu0 0.0
      %3592 = vmatpush1.msra.mxu0 0.0
      %3593 = vmatprep.subr.mxu0 0.0
      %3594 = vmatpush1.msra.mxu0 0.0
      %3595 = vmatprep.subr.mxu0 0.0
      %3596 = vmatpush1.msra.mxu0 0.0
      %3597 = vmatprep.subr.mxu0 0.0
      %3598 = vmatpush1.msra.mxu0 0.0
      %3599 = vmatprep.subr.mxu0 0.0
      %3600 = vmatpush1.msra.mxu0 0.0
      %3601 = vmatprep.subr.mxu0 0.0
      %3602 = vmatpush1.msra.mxu0 0.0
      %3603 = vmatprep.subr.mxu0 0.0
      %3604 = vmatpush1.msra.mxu0 0.0
      %3605 = vmatprep.subr.mxu0 0.0
      %3606 = vmatpush1.msra.mxu0 0.0
      %3607 = vmatprep.subr.mxu0 0.0
      %3608 = vmatpush1.msra.mxu0 0.0
      %3609 = vmatprep.subr.mxu0 0.0
      %3610 = vmatpush1.msra.mxu0 0.0
      %3611 = vmatprep.subr.mxu0 0.0
      %3612 = vmatpush1.msra.mxu0 0.0
      %3613 = vmatprep.subr.mxu0 0.0
      %3614 = vmatpush1.msra.mxu0 0.0
      %3615 = vmatprep.subr.mxu0 0.0
      %3616 = vmatpush1.msra.mxu0 0.0
      %3617 = vmatprep.subr.mxu0 0.0
      %3618 = vmatpush1.msra.mxu0 0.0
      %3619 = vmatprep.subr.mxu0 0.0
      %3620 = vmatpush1.msra.mxu0 0.0
      %3621 = vmatprep.subr.mxu0 0.0
      %3622 = vmatpush1.msra.mxu0 0.0
      %3623 = vmatprep.subr.mxu0 0.0
      %3624 = vmatpush1.msra.mxu0 0.0
      %3625 = vmatprep.subr.mxu0 0.0
      %3626 = vmatpush1.msra.mxu0 0.0
      %3627 = vmatprep.subr.mxu0 0.0
      %3628 = vmatpush1.msra.mxu0 0.0
      %3629 = vmatprep.subr.mxu0 0.0
      %3630 = vmatpush1.msra.mxu0 0.0
      %3631 = vmatprep.mubr.f32.mxu0 0.0
      %v3632 = vand.u32 %v3320, 4294901760
      %v3633 = vsub.f32 %v3320, %v3632
      %v3634 = vand.u32 %v3633, 4294901760
      %3635 = vmatmul.mubr.f32.gmra.mrb[0].mxu0 %v3634
      %v3636 = vpop.f32.mrb[0].mxu0
      %v3637 = vadd.f32 %v3561, %v3636
      %v3638 = vpop.f32.mrb[0].mxu0
      %v3639 = vadd.f32 %v3563, %v3638
      %3640 = vdwg.mxu0
      %v3641 = vand.u32 %v3326, 4294901760
      %v3642 = vsub.f32 %v3326, %v3641
      %v3643 = vand.u32 %v3642, 4294901760
      %3644 = vmatprep.subr.mxu0 %v3643
      %v3645 = vand.u32 %v3323, 4294901760
      %v3646 = vsub.f32 %v3323, %v3645
      %v3647 = vand.u32 %v3646, 4294901760
      %3648 = vmatpush1.msra.mxu0 %v3647
      %3649 = vmatprep.subr.mxu0 0.0
      %3650 = vmatpush1.msra.mxu0 0.0
      %3651 = vmatprep.subr.mxu0 0.0
      %3652 = vmatpush1.msra.mxu0 0.0
      %3653 = vmatprep.subr.mxu0 0.0
      %3654 = vmatpush1.msra.mxu0 0.0
      %3655 = vmatprep.subr.mxu0 0.0
      %3656 = vmatpush1.msra.mxu0 0.0
      %3657 = vmatprep.subr.mxu0 0.0
      %3658 = vmatpush1.msra.mxu0 0.0
      %3659 = vmatprep.subr.mxu0 0.0
      %3660 = vmatpush1.msra.mxu0 0.0
      %3661 = vmatprep.subr.mxu0 0.0
      %3662 = vmatpush1.msra.mxu0 0.0
      %3663 = vmatprep.subr.mxu0 0.0
      %3664 = vmatpush1.msra.mxu0 0.0
      %3665 = vmatprep.subr.mxu0 0.0
      %3666 = vmatpush1.msra.mxu0 0.0
      %3667 = vmatprep.subr.mxu0 0.0
      %3668 = vmatpush1.msra.mxu0 0.0
      %3669 = vmatprep.subr.mxu0 0.0
      %3670 = vmatpush1.msra.mxu0 0.0
      %3671 = vmatprep.subr.mxu0 0.0
      %3672 = vmatpush1.msra.mxu0 0.0
      %3673 = vmatprep.subr.mxu0 0.0
      %3674 = vmatpush1.msra.mxu0 0.0
      %3675 = vmatprep.subr.mxu0 0.0
      %3676 = vmatpush1.msra.mxu0 0.0
      %3677 = vmatprep.subr.mxu0 0.0
      %3678 = vmatpush1.msra.mxu0 0.0
      %3679 = vmatprep.subr.mxu0 0.0
      %3680 = vmatpush1.msra.mxu0 0.0
      %3681 = vmatprep.subr.mxu0 0.0
      %3682 = vmatpush1.msra.mxu0 0.0
      %3683 = vmatprep.subr.mxu0 0.0
      %3684 = vmatpush1.msra.mxu0 0.0
      %3685 = vmatprep.subr.mxu0 0.0
      %3686 = vmatpush1.msra.mxu0 0.0
      %3687 = vmatprep.subr.mxu0 0.0
      %3688 = vmatpush1.msra.mxu0 0.0
      %3689 = vmatprep.subr.mxu0 0.0
      %3690 = vmatpush1.msra.mxu0 0.0
      %3691 = vmatprep.subr.mxu0 0.0
      %3692 = vmatpush1.msra.mxu0 0.0
      %3693 = vmatprep.subr.mxu0 0.0
      %3694 = vmatpush1.msra.mxu0 0.0
      %3695 = vmatprep.subr.mxu0 0.0
      %3696 = vmatpush1.msra.mxu0 0.0
      %3697 = vmatprep.subr.mxu0 0.0
      %3698 = vmatpush1.msra.mxu0 0.0
      %3699 = vmatprep.subr.mxu0 0.0
      %3700 = vmatpush1.msra.mxu0 0.0
      %3701 = vmatprep.subr.mxu0 0.0
      %3702 = vmatpush1.msra.mxu0 0.0
      %3703 = vmatprep.subr.mxu0 0.0
      %3704 = vmatpush1.msra.mxu0 0.0
      %3705 = vmatprep.subr.mxu0 0.0
      %3706 = vmatpush1.msra.mxu0 0.0
      %3707 = vmatprep.subr.mxu0 0.0
      %3708 = vmatpush1.msra.mxu0 0.0
      %3709 = vmatprep.subr.mxu0 0.0
      %3710 = vmatpush1.msra.mxu0 0.0
      %3711 = vmatprep.mubr.f32.mxu0 0.0
      %v3712 = vand.u32 %v3320, 4294901760
      %3713 = vmatmul.mubr.f32.gmra.mrb[0].mxu0 %v3712
      %v3714 = vpop.f32.mrb[0].mxu0
      %v3715 = vadd.f32 %v3637, %v3714
      %v3716 = vpop.f32.mrb[0].mxu0
      %v3717 = vadd.f32 %v3639, %v3716
      %3718 = vdwg.mxu0
      %v3719 = vand.u32 %v3326, 4294901760
      %3720 = vmatprep.subr.mxu0 %v3719
      %v3721 = vand.u32 %v3323, 4294901760
      %3722 = vmatpush1.msra.mxu0 %v3721
      %3723 = vmatprep.subr.mxu0 0.0
      %3724 = vmatpush1.msra.mxu0 0.0
      %3725 = vmatprep.subr.mxu0 0.0
      %3726 = vmatpush1.msra.mxu0 0.0
      %3727 = vmatprep.subr.mxu0 0.0
      %3728 = vmatpush1.msra.mxu0 0.0
      %3729 = vmatprep.subr.mxu0 0.0
      %3730 = vmatpush1.msra.mxu0 0.0
      %3731 = vmatprep.subr.mxu0 0.0
      %3732 = vmatpush1.msra.mxu0 0.0
      %3733 = vmatprep.subr.mxu0 0.0
      %3734 = vmatpush1.msra.mxu0 0.0
      %3735 = vmatprep.subr.mxu0 0.0
      %3736 = vmatpush1.msra.mxu0 0.0
      %3737 = vmatprep.subr.mxu0 0.0
      %3738 = vmatpush1.msra.mxu0 0.0
      %3739 = vmatprep.subr.mxu0 0.0
      %3740 = vmatpush1.msra.mxu0 0.0
      %3741 = vmatprep.subr.mxu0 0.0
      %3742 = vmatpush1.msra.mxu0 0.0
      %3743 = vmatprep.subr.mxu0 0.0
      %3744 = vmatpush1.msra.mxu0 0.0
      %3745 = vmatprep.subr.mxu0 0.0
      %3746 = vmatpush1.msra.mxu0 0.0
      %3747 = vmatprep.subr.mxu0 0.0
      %3748 = vmatpush1.msra.mxu0 0.0
      %3749 = vmatprep.subr.mxu0 0.0
      %3750 = vmatpush1.msra.mxu0 0.0
      %3751 = vmatprep.subr.mxu0 0.0
      %3752 = vmatpush1.msra.mxu0 0.0
      %3753 = vmatprep.subr.mxu0 0.0
      %3754 = vmatpush1.msra.mxu0 0.0
      %3755 = vmatprep.subr.mxu0 0.0
      %3756 = vmatpush1.msra.mxu0 0.0
      %3757 = vmatprep.subr.mxu0 0.0
      %3758 = vmatpush1.msra.mxu0 0.0
      %3759 = vmatprep.subr.mxu0 0.0
      %3760 = vmatpush1.msra.mxu0 0.0
      %3761 = vmatprep.subr.mxu0 0.0
      %3762 = vmatpush1.msra.mxu0 0.0
      %3763 = vmatprep.subr.mxu0 0.0
      %3764 = vmatpush1.msra.mxu0 0.0
      %3765 = vmatprep.subr.mxu0 0.0
      %3766 = vmatpush1.msra.mxu0 0.0
      %3767 = vmatprep.subr.mxu0 0.0
      %3768 = vmatpush1.msra.mxu0 0.0
      %3769 = vmatprep.subr.mxu0 0.0
      %3770 = vmatpush1.msra.mxu0 0.0
      %3771 = vmatprep.subr.mxu0 0.0
      %3772 = vmatpush1.msra.mxu0 0.0
      %3773 = vmatprep.subr.mxu0 0.0
      %3774 = vmatpush1.msra.mxu0 0.0
      %3775 = vmatprep.subr.mxu0 0.0
      %3776 = vmatpush1.msra.mxu0 0.0
      %3777 = vmatprep.subr.mxu0 0.0
      %3778 = vmatpush1.msra.mxu0 0.0
      %3779 = vmatprep.subr.mxu0 0.0
      %3780 = vmatpush1.msra.mxu0 0.0
      %3781 = vmatprep.subr.mxu0 0.0
      %3782 = vmatpush1.msra.mxu0 0.0
      %3783 = vmatprep.subr.mxu0 0.0
      %3784 = vmatpush1.msra.mxu0 0.0
      %3785 = vmatprep.mubr.f32.mxu0 0.0
      %v3786 = vand.u32 %v3320, 4294901760
      %3787 = vmatmul.mubr.f32.gmra.mrb[0].mxu0 %v3786
      %v3788 = vpop.f32.mrb[0].mxu0
      %v3789 = vadd.f32 %v3715, %v3788
      %v3790 = vpop.f32.mrb[0].mxu0
      %v3791 = vadd.f32 %v3717, %v3790
      %3792 = vdwg.mxu0
      %v3793 = vadd.f32 %v3284, %v3789
      %v3794 = vadd.f32 %v3285, %v3791
      %s3795 = scalar_lea.vmem %s1, 28
      %v3796 = vld [vmem:[%s3795] sm:$0xf]
      %3797 = vrot.lane.b32.xlu0 %v3286, 80
      %v3798 = vpop.permute.xlu0 %3797
      %3799 = vrot.lane.b32.xlu0 %v3290, 80
      %v3800 = vpop.permute.xlu0 %3799
      %3801 = vrot.lane.b32.xlu0 %v3287, 80
      %v3802 = vpop.permute.xlu0 %3801
      %vm3803 = vcmask 654336
      %v3804 = vsel %vm3803, %v3798, %v3800
      %v3805 = vsel %vm3803, %v3800, %v3802
      %v3807 = vsel %vm388, %v3796, 0
      %v3809 = vsel %vm392, %v3804, 0
      %v3811 = vsel %vm392, %v3805, 0
      %v3813 = vand.u32 %v3811, 4294901760
      %3814 = vmatprep.subr.mxu0 %v3813
      %v3815 = vand.u32 %v3809, 4294901760
      %3816 = vmatpush1.msra.mxu0 %v3815
      %3817 = vmatprep.subr.mxu0 0.0
      %3818 = vmatpush1.msra.mxu0 0.0
      %3819 = vmatprep.subr.mxu0 0.0
      %3820 = vmatpush1.msra.mxu0 0.0
      %3821 = vmatprep.subr.mxu0 0.0
      %3822 = vmatpush1.msra.mxu0 0.0
      %3823 = vmatprep.subr.mxu0 0.0
      %3824 = vmatpush1.msra.mxu0 0.0
      %3825 = vmatprep.subr.mxu0 0.0
      %3826 = vmatpush1.msra.mxu0 0.0
      %3827 = vmatprep.subr.mxu0 0.0
      %3828 = vmatpush1.msra.mxu0 0.0
      %3829 = vmatprep.subr.mxu0 0.0
      %3830 = vmatpush1.msra.mxu0 0.0
      %3831 = vmatprep.subr.mxu0 0.0
      %3832 = vmatpush1.msra.mxu0 0.0
      %3833 = vmatprep.subr.mxu0 0.0
      %3834 = vmatpush1.msra.mxu0 0.0
      %3835 = vmatprep.subr.mxu0 0.0
      %3836 = vmatpush1.msra.mxu0 0.0
      %3837 = vmatprep.subr.mxu0 0.0
      %3838 = vmatpush1.msra.mxu0 0.0
      %3839 = vmatprep.subr.mxu0 0.0
      %3840 = vmatpush1.msra.mxu0 0.0
      %3841 = vmatprep.subr.mxu0 0.0
      %3842 = vmatpush1.msra.mxu0 0.0
      %3843 = vmatprep.subr.mxu0 0.0
      %3844 = vmatpush1.msra.mxu0 0.0
      %3845 = vmatprep.subr.mxu0 0.0
      %3846 = vmatpush1.msra.mxu0 0.0
      %3847 = vmatprep.subr.mxu0 0.0
      %3848 = vmatpush1.msra.mxu0 0.0
      %3849 = vmatprep.subr.mxu0 0.0
      %3850 = vmatpush1.msra.mxu0 0.0
      %3851 = vmatprep.subr.mxu0 0.0
      %3852 = vmatpush1.msra.mxu0 0.0
      %3853 = vmatprep.subr.mxu0 0.0
      %3854 = vmatpush1.msra.mxu0 0.0
      %3855 = vmatprep.subr.mxu0 0.0
      %3856 = vmatpush1.msra.mxu0 0.0
      %3857 = vmatprep.subr.mxu0 0.0
      %3858 = vmatpush1.msra.mxu0 0.0
      %3859 = vmatprep.subr.mxu0 0.0
      %3860 = vmatpush1.msra.mxu0 0.0
      %3861 = vmatprep.subr.mxu0 0.0
      %3862 = vmatpush1.msra.mxu0 0.0
      %3863 = vmatprep.subr.mxu0 0.0
      %3864 = vmatpush1.msra.mxu0 0.0
      %3865 = vmatprep.subr.mxu0 0.0
      %3866 = vmatpush1.msra.mxu0 0.0
      %3867 = vmatprep.subr.mxu0 0.0
      %3868 = vmatpush1.msra.mxu0 0.0
      %3869 = vmatprep.subr.mxu0 0.0
      %3870 = vmatpush1.msra.mxu0 0.0
      %3871 = vmatprep.subr.mxu0 0.0
      %3872 = vmatpush1.msra.mxu0 0.0
      %3873 = vmatprep.subr.mxu0 0.0
      %3874 = vmatpush1.msra.mxu0 0.0
      %3875 = vmatprep.subr.mxu0 0.0
      %3876 = vmatpush1.msra.mxu0 0.0
      %3877 = vmatprep.subr.mxu0 0.0
      %3878 = vmatpush1.msra.mxu0 0.0
      %3879 = vmatprep.mubr.f32.mxu0 0.0
      %v3880 = vand.u32 %v3807, 4294901760
      %v3881 = vsub.f32 %v3807, %v3880
      %v3882 = vand.u32 %v3881, 4294901760
      %v3883 = vsub.f32 %v3881, %v3882
      %v3884 = vand.u32 %v3883, 4294901760
      %3885 = vmatmul.mubr.f32.gmra.mrb[0].mxu0 %v3884
      %v3886 = vpop.f32.mrb[0].mxu0
      %v3887 = vadd.f32 0.0, %v3886
      %v3888 = vpop.f32.mrb[0].mxu0
      %v3889 = vadd.f32 0.0, %v3888
      %3890 = vdwg.mxu0
      %v3891 = vand.u32 %v3811, 4294901760
      %v3892 = vsub.f32 %v3811, %v3891
      %v3893 = vand.u32 %v3892, 4294901760
      %v3894 = vsub.f32 %v3892, %v3893
      %v3895 = vand.u32 %v3894, 4294901760
      %3896 = vmatprep.subr.mxu0 %v3895
      %v3897 = vand.u32 %v3809, 4294901760
      %v3898 = vsub.f32 %v3809, %v3897
      %v3899 = vand.u32 %v3898, 4294901760
      %v3900 = vsub.f32 %v3898, %v3899
      %v3901 = vand.u32 %v3900, 4294901760
      %3902 = vmatpush1.msra.mxu0 %v3901
      %3903 = vmatprep.subr.mxu0 0.0
      %3904 = vmatpush1.msra.mxu0 0.0
      %3905 = vmatprep.subr.mxu0 0.0
      %3906 = vmatpush1.msra.mxu0 0.0
      %3907 = vmatprep.subr.mxu0 0.0
      %3908 = vmatpush1.msra.mxu0 0.0
      %3909 = vmatprep.subr.mxu0 0.0
      %3910 = vmatpush1.msra.mxu0 0.0
      %3911 = vmatprep.subr.mxu0 0.0
      %3912 = vmatpush1.msra.mxu0 0.0
      %3913 = vmatprep.subr.mxu0 0.0
      %3914 = vmatpush1.msra.mxu0 0.0
      %3915 = vmatprep.subr.mxu0 0.0
      %3916 = vmatpush1.msra.mxu0 0.0
      %3917 = vmatprep.subr.mxu0 0.0
      %3918 = vmatpush1.msra.mxu0 0.0
      %3919 = vmatprep.subr.mxu0 0.0
      %3920 = vmatpush1.msra.mxu0 0.0
      %3921 = vmatprep.subr.mxu0 0.0
      %3922 = vmatpush1.msra.mxu0 0.0
      %3923 = vmatprep.subr.mxu0 0.0
      %3924 = vmatpush1.msra.mxu0 0.0
      %3925 = vmatprep.subr.mxu0 0.0
      %3926 = vmatpush1.msra.mxu0 0.0
      %3927 = vmatprep.subr.mxu0 0.0
      %3928 = vmatpush1.msra.mxu0 0.0
      %3929 = vmatprep.subr.mxu0 0.0
      %3930 = vmatpush1.msra.mxu0 0.0
      %3931 = vmatprep.subr.mxu0 0.0
      %3932 = vmatpush1.msra.mxu0 0.0
      %3933 = vmatprep.subr.mxu0 0.0
      %3934 = vmatpush1.msra.mxu0 0.0
      %3935 = vmatprep.subr.mxu0 0.0
      %3936 = vmatpush1.msra.mxu0 0.0
      %3937 = vmatprep.subr.mxu0 0.0
      %3938 = vmatpush1.msra.mxu0 0.0
      %3939 = vmatprep.subr.mxu0 0.0
      %3940 = vmatpush1.msra.mxu0 0.0
      %3941 = vmatprep.subr.mxu0 0.0
      %3942 = vmatpush1.msra.mxu0 0.0
      %3943 = vmatprep.subr.mxu0 0.0
      %3944 = vmatpush1.msra.mxu0 0.0
      %3945 = vmatprep.subr.mxu0 0.0
      %3946 = vmatpush1.msra.mxu0 0.0
      %3947 = vmatprep.subr.mxu0 0.0
      %3948 = vmatpush1.msra.mxu0 0.0
      %3949 = vmatprep.subr.mxu0 0.0
      %3950 = vmatpush1.msra.mxu0 0.0
      %3951 = vmatprep.subr.mxu0 0.0
      %3952 = vmatpush1.msra.mxu0 0.0
      %3953 = vmatprep.subr.mxu0 0.0
      %3954 = vmatpush1.msra.mxu0 0.0
      %3955 = vmatprep.subr.mxu0 0.0
      %3956 = vmatpush1.msra.mxu0 0.0
      %3957 = vmatprep.subr.mxu0 0.0
      %3958 = vmatpush1.msra.mxu0 0.0
      %3959 = vmatprep.subr.mxu0 0.0
      %3960 = vmatpush1.msra.mxu0 0.0
      %3961 = vmatprep.subr.mxu0 0.0
      %3962 = vmatpush1.msra.mxu0 0.0
      %3963 = vmatprep.subr.mxu0 0.0
      %3964 = vmatpush1.msra.mxu0 0.0
      %3965 = vmatprep.mubr.f32.mxu0 0.0
      %v3966 = vand.u32 %v3807, 4294901760
      %3967 = vmatmul.mubr.f32.gmra.mrb[0].mxu0 %v3966
      %v3968 = vpop.f32.mrb[0].mxu0
      %v3969 = vadd.f32 %v3887, %v3968
      %v3970 = vpop.f32.mrb[0].mxu0
      %v3971 = vadd.f32 %v3889, %v3970
      %3972 = vdwg.mxu0
      %v3973 = vand.u32 %v3811, 4294901760
      %v3974 = vsub.f32 %v3811, %v3973
      %3975 = vmatprep.subr.mxu0 %v3974
      %v3976 = vand.u32 %v3809, 4294901760
      %v3977 = vsub.f32 %v3809, %v3976
      %3978 = vmatpush1.msra.mxu0 %v3977
      %3979 = vmatprep.subr.mxu0 0.0
      %3980 = vmatpush1.msra.mxu0 0.0
      %3981 = vmatprep.subr.mxu0 0.0
      %3982 = vmatpush1.msra.mxu0 0.0
      %3983 = vmatprep.subr.mxu0 0.0
      %3984 = vmatpush1.msra.mxu0 0.0
      %3985 = vmatprep.subr.mxu0 0.0
      %3986 = vmatpush1.msra.mxu0 0.0
      %3987 = vmatprep.subr.mxu0 0.0
      %3988 = vmatpush1.msra.mxu0 0.0
      %3989 = vmatprep.subr.mxu0 0.0
      %3990 = vmatpush1.msra.mxu0 0.0
      %3991 = vmatprep.subr.mxu0 0.0
      %3992 = vmatpush1.msra.mxu0 0.0
      %3993 = vmatprep.subr.mxu0 0.0
      %3994 = vmatpush1.msra.mxu0 0.0
      %3995 = vmatprep.subr.mxu0 0.0
      %3996 = vmatpush1.msra.mxu0 0.0
      %3997 = vmatprep.subr.mxu0 0.0
      %3998 = vmatpush1.msra.mxu0 0.0
      %3999 = vmatprep.subr.mxu0 0.0
      %4000 = vmatpush1.msra.mxu0 0.0
      %4001 = vmatprep.subr.mxu0 0.0
      %4002 = vmatpush1.msra.mxu0 0.0
      %4003 = vmatprep.subr.mxu0 0.0
      %4004 = vmatpush1.msra.mxu0 0.0
      %4005 = vmatprep.subr.mxu0 0.0
      %4006 = vmatpush1.msra.mxu0 0.0
      %4007 = vmatprep.subr.mxu0 0.0
      %4008 = vmatpush1.msra.mxu0 0.0
      %4009 = vmatprep.subr.mxu0 0.0
      %4010 = vmatpush1.msra.mxu0 0.0
      %4011 = vmatprep.subr.mxu0 0.0
      %4012 = vmatpush1.msra.mxu0 0.0
      %4013 = vmatprep.subr.mxu0 0.0
      %4014 = vmatpush1.msra.mxu0 0.0
      %4015 = vmatprep.subr.mxu0 0.0
      %4016 = vmatpush1.msra.mxu0 0.0
      %4017 = vmatprep.subr.mxu0 0.0
      %4018 = vmatpush1.msra.mxu0 0.0
      %4019 = vmatprep.subr.mxu0 0.0
      %4020 = vmatpush1.msra.mxu0 0.0
      %4021 = vmatprep.subr.mxu0 0.0
      %4022 = vmatpush1.msra.mxu0 0.0
      %4023 = vmatprep.subr.mxu0 0.0
      %4024 = vmatpush1.msra.mxu0 0.0
      %4025 = vmatprep.subr.mxu0 0.0
      %4026 = vmatpush1.msra.mxu0 0.0
      %4027 = vmatprep.subr.mxu0 0.0
      %4028 = vmatpush1.msra.mxu0 0.0
      %4029 = vmatprep.subr.mxu0 0.0
      %4030 = vmatpush1.msra.mxu0 0.0
      %4031 = vmatprep.subr.mxu0 0.0
      %4032 = vmatpush1.msra.mxu0 0.0
      %4033 = vmatprep.subr.mxu0 0.0
      %4034 = vmatpush1.msra.mxu0 0.0
      %4035 = vmatprep.subr.mxu0 0.0
      %4036 = vmatpush1.msra.mxu0 0.0
      %4037 = vmatprep.subr.mxu0 0.0
      %4038 = vmatpush1.msra.mxu0 0.0
      %4039 = vmatprep.subr.mxu0 0.0
      %4040 = vmatpush1.msra.mxu0 0.0
      %4041 = vmatprep.mubr.f32.mxu0 0.0
      %v4042 = vand.u32 %v3807, 4294901760
      %v4043 = vsub.f32 %v3807, %v4042
      %4044 = vmatmul.mubr.f32.gmra.mrb[0].mxu0 %v4043
      %v4045 = vpop.f32.mrb[0].mxu0
      %v4046 = vadd.f32 %v3969, %v4045
      %v4047 = vpop.f32.mrb[0].mxu0
      %v4048 = vadd.f32 %v3971, %v4047
      %4049 = vdwg.mxu0
      %v4050 = vand.u32 %v3811, 4294901760
      %4051 = vmatprep.subr.mxu0 %v4050
      %v4052 = vand.u32 %v3809, 4294901760
      %4053 = vmatpush1.msra.mxu0 %v4052
      %4054 = vmatprep.subr.mxu0 0.0
      %4055 = vmatpush1.msra.mxu0 0.0
      %4056 = vmatprep.subr.mxu0 0.0
      %4057 = vmatpush1.msra.mxu0 0.0
      %4058 = vmatprep.subr.mxu0 0.0
      %4059 = vmatpush1.msra.mxu0 0.0
      %4060 = vmatprep.subr.mxu0 0.0
      %4061 = vmatpush1.msra.mxu0 0.0
      %4062 = vmatprep.subr.mxu0 0.0
      %4063 = vmatpush1.msra.mxu0 0.0
      %4064 = vmatprep.subr.mxu0 0.0
      %4065 = vmatpush1.msra.mxu0 0.0
      %4066 = vmatprep.subr.mxu0 0.0
      %4067 = vmatpush1.msra.mxu0 0.0
      %4068 = vmatprep.subr.mxu0 0.0
      %4069 = vmatpush1.msra.mxu0 0.0
      %4070 = vmatprep.subr.mxu0 0.0
      %4071 = vmatpush1.msra.mxu0 0.0
      %4072 = vmatprep.subr.mxu0 0.0
      %4073 = vmatpush1.msra.mxu0 0.0
      %4074 = vmatprep.subr.mxu0 0.0
      %4075 = vmatpush1.msra.mxu0 0.0
      %4076 = vmatprep.subr.mxu0 0.0
      %4077 = vmatpush1.msra.mxu0 0.0
      %4078 = vmatprep.subr.mxu0 0.0
      %4079 = vmatpush1.msra.mxu0 0.0
      %4080 = vmatprep.subr.mxu0 0.0
      %4081 = vmatpush1.msra.mxu0 0.0
      %4082 = vmatprep.subr.mxu0 0.0
      %4083 = vmatpush1.msra.mxu0 0.0
      %4084 = vmatprep.subr.mxu0 0.0
      %4085 = vmatpush1.msra.mxu0 0.0
      %4086 = vmatprep.subr.mxu0 0.0
      %4087 = vmatpush1.msra.mxu0 0.0
      %4088 = vmatprep.subr.mxu0 0.0
      %4089 = vmatpush1.msra.mxu0 0.0
      %4090 = vmatprep.subr.mxu0 0.0
      %4091 = vmatpush1.msra.mxu0 0.0
      %4092 = vmatprep.subr.mxu0 0.0
      %4093 = vmatpush1.msra.mxu0 0.0
      %4094 = vmatprep.subr.mxu0 0.0
      %4095 = vmatpush1.msra.mxu0 0.0
      %4096 = vmatprep.subr.mxu0 0.0
      %4097 = vmatpush1.msra.mxu0 0.0
      %4098 = vmatprep.subr.mxu0 0.0
      %4099 = vmatpush1.msra.mxu0 0.0
      %4100 = vmatprep.subr.mxu0 0.0
      %4101 = vmatpush1.msra.mxu0 0.0
      %4102 = vmatprep.subr.mxu0 0.0
      %4103 = vmatpush1.msra.mxu0 0.0
      %4104 = vmatprep.subr.mxu0 0.0
      %4105 = vmatpush1.msra.mxu0 0.0
      %4106 = vmatprep.subr.mxu0 0.0
      %4107 = vmatpush1.msra.mxu0 0.0
      %4108 = vmatprep.subr.mxu0 0.0
      %4109 = vmatpush1.msra.mxu0 0.0
      %4110 = vmatprep.subr.mxu0 0.0
      %4111 = vmatpush1.msra.mxu0 0.0
      %4112 = vmatprep.subr.mxu0 0.0
      %4113 = vmatpush1.msra.mxu0 0.0
      %4114 = vmatprep.subr.mxu0 0.0
      %4115 = vmatpush1.msra.mxu0 0.0
      %4116 = vmatprep.mubr.f32.mxu0 0.0
      %v4117 = vand.u32 %v3807, 4294901760
      %v4118 = vsub.f32 %v3807, %v4117
      %v4119 = vand.u32 %v4118, 4294901760
      %4120 = vmatmul.mubr.f32.gmra.mrb[0].mxu0 %v4119
      %v4121 = vpop.f32.mrb[0].mxu0
      %v4122 = vadd.f32 %v4046, %v4121
      %v4123 = vpop.f32.mrb[0].mxu0
      %v4124 = vadd.f32 %v4048, %v4123
      %4125 = vdwg.mxu0
      %v4126 = vand.u32 %v3811, 4294901760
      %v4127 = vsub.f32 %v3811, %v4126
      %v4128 = vand.u32 %v4127, 4294901760
      %4129 = vmatprep.subr.mxu0 %v4128
      %v4130 = vand.u32 %v3809, 4294901760
      %v4131 = vsub.f32 %v3809, %v4130
      %v4132 = vand.u32 %v4131, 4294901760
      %4133 = vmatpush1.msra.mxu0 %v4132
      %4134 = vmatprep.subr.mxu0 0.0
      %4135 = vmatpush1.msra.mxu0 0.0
      %4136 = vmatprep.subr.mxu0 0.0
      %4137 = vmatpush1.msra.mxu0 0.0
      %4138 = vmatprep.subr.mxu0 0.0
      %4139 = vmatpush1.msra.mxu0 0.0
      %4140 = vmatprep.subr.mxu0 0.0
      %4141 = vmatpush1.msra.mxu0 0.0
      %4142 = vmatprep.subr.mxu0 0.0
      %4143 = vmatpush1.msra.mxu0 0.0
      %4144 = vmatprep.subr.mxu0 0.0
      %4145 = vmatpush1.msra.mxu0 0.0
      %4146 = vmatprep.subr.mxu0 0.0
      %4147 = vmatpush1.msra.mxu0 0.0
      %4148 = vmatprep.subr.mxu0 0.0
      %4149 = vmatpush1.msra.mxu0 0.0
      %4150 = vmatprep.subr.mxu0 0.0
      %4151 = vmatpush1.msra.mxu0 0.0
      %4152 = vmatprep.subr.mxu0 0.0
      %4153 = vmatpush1.msra.mxu0 0.0
      %4154 = vmatprep.subr.mxu0 0.0
      %4155 = vmatpush1.msra.mxu0 0.0
      %4156 = vmatprep.subr.mxu0 0.0
      %4157 = vmatpush1.msra.mxu0 0.0
      %4158 = vmatprep.subr.mxu0 0.0
      %4159 = vmatpush1.msra.mxu0 0.0
      %4160 = vmatprep.subr.mxu0 0.0
      %4161 = vmatpush1.msra.mxu0 0.0
      %4162 = vmatprep.subr.mxu0 0.0
      %4163 = vmatpush1.msra.mxu0 0.0
      %4164 = vmatprep.subr.mxu0 0.0
      %4165 = vmatpush1.msra.mxu0 0.0
      %4166 = vmatprep.subr.mxu0 0.0
      %4167 = vmatpush1.msra.mxu0 0.0
      %4168 = vmatprep.subr.mxu0 0.0
      %4169 = vmatpush1.msra.mxu0 0.0
      %4170 = vmatprep.subr.mxu0 0.0
      %4171 = vmatpush1.msra.mxu0 0.0
      %4172 = vmatprep.subr.mxu0 0.0
      %4173 = vmatpush1.msra.mxu0 0.0
      %4174 = vmatprep.subr.mxu0 0.0
      %4175 = vmatpush1.msra.mxu0 0.0
      %4176 = vmatprep.subr.mxu0 0.0
      %4177 = vmatpush1.msra.mxu0 0.0
      %4178 = vmatprep.subr.mxu0 0.0
      %4179 = vmatpush1.msra.mxu0 0.0
      %4180 = vmatprep.subr.mxu0 0.0
      %4181 = vmatpush1.msra.mxu0 0.0
      %4182 = vmatprep.subr.mxu0 0.0
      %4183 = vmatpush1.msra.mxu0 0.0
      %4184 = vmatprep.subr.mxu0 0.0
      %4185 = vmatpush1.msra.mxu0 0.0
      %4186 = vmatprep.subr.mxu0 0.0
      %4187 = vmatpush1.msra.mxu0 0.0
      %4188 = vmatprep.subr.mxu0 0.0
      %4189 = vmatpush1.msra.mxu0 0.0
      %4190 = vmatprep.subr.mxu0 0.0
      %4191 = vmatpush1.msra.mxu0 0.0
      %4192 = vmatprep.subr.mxu0 0.0
      %4193 = vmatpush1.msra.mxu0 0.0
      %4194 = vmatprep.subr.mxu0 0.0
      %4195 = vmatpush1.msra.mxu0 0.0
      %4196 = vmatprep.mubr.f32.mxu0 0.0
      %v4197 = vand.u32 %v3807, 4294901760
      %4198 = vmatmul.mubr.f32.gmra.mrb[0].mxu0 %v4197
      %v4199 = vpop.f32.mrb[0].mxu0
      %v4200 = vadd.f32 %v4122, %v4199
      %v4201 = vpop.f32.mrb[0].mxu0
      %v4202 = vadd.f32 %v4124, %v4201
      %4203 = vdwg.mxu0
      %v4204 = vand.u32 %v3811, 4294901760
      %4205 = vmatprep.subr.mxu0 %v4204
      %v4206 = vand.u32 %v3809, 4294901760
      %4207 = vmatpush1.msra.mxu0 %v4206
      %4208 = vmatprep.subr.mxu0 0.0
      %4209 = vmatpush1.msra.mxu0 0.0
      %4210 = vmatprep.subr.mxu0 0.0
      %4211 = vmatpush1.msra.mxu0 0.0
      %4212 = vmatprep.subr.mxu0 0.0
      %4213 = vmatpush1.msra.mxu0 0.0
      %4214 = vmatprep.subr.mxu0 0.0
      %4215 = vmatpush1.msra.mxu0 0.0
      %4216 = vmatprep.subr.mxu0 0.0
      %4217 = vmatpush1.msra.mxu0 0.0
      %4218 = vmatprep.subr.mxu0 0.0
      %4219 = vmatpush1.msra.mxu0 0.0
      %4220 = vmatprep.subr.mxu0 0.0
      %4221 = vmatpush1.msra.mxu0 0.0
      %4222 = vmatprep.subr.mxu0 0.0
      %4223 = vmatpush1.msra.mxu0 0.0
      %4224 = vmatprep.subr.mxu0 0.0
      %4225 = vmatpush1.msra.mxu0 0.0
      %4226 = vmatprep.subr.mxu0 0.0
      %4227 = vmatpush1.msra.mxu0 0.0
      %4228 = vmatprep.subr.mxu0 0.0
      %4229 = vmatpush1.msra.mxu0 0.0
      %4230 = vmatprep.subr.mxu0 0.0
      %4231 = vmatpush1.msra.mxu0 0.0
      %4232 = vmatprep.subr.mxu0 0.0
      %4233 = vmatpush1.msra.mxu0 0.0
      %4234 = vmatprep.subr.mxu0 0.0
      %4235 = vmatpush1.msra.mxu0 0.0
      %4236 = vmatprep.subr.mxu0 0.0
      %4237 = vmatpush1.msra.mxu0 0.0
      %4238 = vmatprep.subr.mxu0 0.0
      %4239 = vmatpush1.msra.mxu0 0.0
      %4240 = vmatprep.subr.mxu0 0.0
      %4241 = vmatpush1.msra.mxu0 0.0
      %4242 = vmatprep.subr.mxu0 0.0
      %4243 = vmatpush1.msra.mxu0 0.0
      %4244 = vmatprep.subr.mxu0 0.0
      %4245 = vmatpush1.msra.mxu0 0.0
      %4246 = vmatprep.subr.mxu0 0.0
      %4247 = vmatpush1.msra.mxu0 0.0
      %4248 = vmatprep.subr.mxu0 0.0
      %4249 = vmatpush1.msra.mxu0 0.0
      %4250 = vmatprep.subr.mxu0 0.0
      %4251 = vmatpush1.msra.mxu0 0.0
      %4252 = vmatprep.subr.mxu0 0.0
      %4253 = vmatpush1.msra.mxu0 0.0
      %4254 = vmatprep.subr.mxu0 0.0
      %4255 = vmatpush1.msra.mxu0 0.0
      %4256 = vmatprep.subr.mxu0 0.0
      %4257 = vmatpush1.msra.mxu0 0.0
      %4258 = vmatprep.subr.mxu0 0.0
      %4259 = vmatpush1.msra.mxu0 0.0
      %4260 = vmatprep.subr.mxu0 0.0
      %4261 = vmatpush1.msra.mxu0 0.0
      %4262 = vmatprep.subr.mxu0 0.0
      %4263 = vmatpush1.msra.mxu0 0.0
      %4264 = vmatprep.subr.mxu0 0.0
      %4265 = vmatpush1.msra.mxu0 0.0
      %4266 = vmatprep.subr.mxu0 0.0
      %4267 = vmatpush1.msra.mxu0 0.0
      %4268 = vmatprep.subr.mxu0 0.0
      %4269 = vmatpush1.msra.mxu0 0.0
      %4270 = vmatprep.mubr.f32.mxu0 0.0
      %v4271 = vand.u32 %v3807, 4294901760
      %4272 = vmatmul.mubr.f32.gmra.mrb[0].mxu0 %v4271
      %v4273 = vpop.f32.mrb[0].mxu0
      %v4274 = vadd.f32 %v4200, %v4273
      %v4275 = vpop.f32.mrb[0].mxu0
      %v4276 = vadd.f32 %v4202, %v4275
      %4277 = vdwg.mxu0
      %v4278 = vadd.f32 %v3793, %v4274
      %v4279 = vadd.f32 %v3794, %v4276
      %s4280 = scalar_lea.vmem %s1, 32
      %v4281 = vld [vmem:[%s4280] sm:$0xf]
      %v4283 = vsel %vm388, %v4281, 0
      %v4286 = vsel %vm392, %v3315, 0
      %v4289 = vsel %vm392, %v3316, 0
      %v4291 = vand.u32 %v4289, 4294901760
      %4292 = vmatprep.subr.mxu0 %v4291
      %v4293 = vand.u32 %v4286, 4294901760
      %4294 = vmatpush1.msra.mxu0 %v4293
      %4295 = vmatprep.subr.mxu0 0.0
      %4296 = vmatpush1.msra.mxu0 0.0
      %4297 = vmatprep.subr.mxu0 0.0
      %4298 = vmatpush1.msra.mxu0 0.0
      %4299 = vmatprep.subr.mxu0 0.0
      %4300 = vmatpush1.msra.mxu0 0.0
      %4301 = vmatprep.subr.mxu0 0.0
      %4302 = vmatpush1.msra.mxu0 0.0
      %4303 = vmatprep.subr.mxu0 0.0
      %4304 = vmatpush1.msra.mxu0 0.0
      %4305 = vmatprep.subr.mxu0 0.0
      %4306 = vmatpush1.msra.mxu0 0.0
      %4307 = vmatprep.subr.mxu0 0.0
      %4308 = vmatpush1.msra.mxu0 0.0
      %4309 = vmatprep.subr.mxu0 0.0
      %4310 = vmatpush1.msra.mxu0 0.0
      %4311 = vmatprep.subr.mxu0 0.0
      %4312 = vmatpush1.msra.mxu0 0.0
      %4313 = vmatprep.subr.mxu0 0.0
      %4314 = vmatpush1.msra.mxu0 0.0
      %4315 = vmatprep.subr.mxu0 0.0
      %4316 = vmatpush1.msra.mxu0 0.0
      %4317 = vmatprep.subr.mxu0 0.0
      %4318 = vmatpush1.msra.mxu0 0.0
      %4319 = vmatprep.subr.mxu0 0.0
      %4320 = vmatpush1.msra.mxu0 0.0
      %4321 = vmatprep.subr.mxu0 0.0
      %4322 = vmatpush1.msra.mxu0 0.0
      %4323 = vmatprep.subr.mxu0 0.0
      %4324 = vmatpush1.msra.mxu0 0.0
      %4325 = vmatprep.subr.mxu0 0.0
      %4326 = vmatpush1.msra.mxu0 0.0
      %4327 = vmatprep.subr.mxu0 0.0
      %4328 = vmatpush1.msra.mxu0 0.0
      %4329 = vmatprep.subr.mxu0 0.0
      %4330 = vmatpush1.msra.mxu0 0.0
      %4331 = vmatprep.subr.mxu0 0.0
      %4332 = vmatpush1.msra.mxu0 0.0
      %4333 = vmatprep.subr.mxu0 0.0
      %4334 = vmatpush1.msra.mxu0 0.0
      %4335 = vmatprep.subr.mxu0 0.0
      %4336 = vmatpush1.msra.mxu0 0.0
      %4337 = vmatprep.subr.mxu0 0.0
      %4338 = vmatpush1.msra.mxu0 0.0
      %4339 = vmatprep.subr.mxu0 0.0
      %4340 = vmatpush1.msra.mxu0 0.0
      %4341 = vmatprep.subr.mxu0 0.0
      %4342 = vmatpush1.msra.mxu0 0.0
      %4343 = vmatprep.subr.mxu0 0.0
      %4344 = vmatpush1.msra.mxu0 0.0
      %4345 = vmatprep.subr.mxu0 0.0
      %4346 = vmatpush1.msra.mxu0 0.0
      %4347 = vmatprep.subr.mxu0 0.0
      %4348 = vmatpush1.msra.mxu0 0.0
      %4349 = vmatprep.subr.mxu0 0.0
      %4350 = vmatpush1.msra.mxu0 0.0
      %4351 = vmatprep.subr.mxu0 0.0
      %4352 = vmatpush1.msra.mxu0 0.0
      %4353 = vmatprep.subr.mxu0 0.0
      %4354 = vmatpush1.msra.mxu0 0.0
      %4355 = vmatprep.subr.mxu0 0.0
      %4356 = vmatpush1.msra.mxu0 0.0
      %4357 = vmatprep.mubr.f32.mxu0 0.0
      %v4358 = vand.u32 %v4283, 4294901760
      %v4359 = vsub.f32 %v4283, %v4358
      %v4360 = vand.u32 %v4359, 4294901760
      %v4361 = vsub.f32 %v4359, %v4360
      %v4362 = vand.u32 %v4361, 4294901760
      %4363 = vmatmul.mubr.f32.gmra.mrb[0].mxu0 %v4362
      %v4364 = vpop.f32.mrb[0].mxu0
      %v4365 = vadd.f32 0.0, %v4364
      %v4366 = vpop.f32.mrb[0].mxu0
      %v4367 = vadd.f32 0.0, %v4366
      %4368 = vdwg.mxu0
      %v4369 = vand.u32 %v4289, 4294901760
      %v4370 = vsub.f32 %v4289, %v4369
      %v4371 = vand.u32 %v4370, 4294901760
      %v4372 = vsub.f32 %v4370, %v4371
      %v4373 = vand.u32 %v4372, 4294901760
      %4374 = vmatprep.subr.mxu0 %v4373
      %v4375 = vand.u32 %v4286, 4294901760
      %v4376 = vsub.f32 %v4286, %v4375
      %v4377 = vand.u32 %v4376, 4294901760
      %v4378 = vsub.f32 %v4376, %v4377
      %v4379 = vand.u32 %v4378, 4294901760
      %4380 = vmatpush1.msra.mxu0 %v4379
      %4381 = vmatprep.subr.mxu0 0.0
      %4382 = vmatpush1.msra.mxu0 0.0
      %4383 = vmatprep.subr.mxu0 0.0
      %4384 = vmatpush1.msra.mxu0 0.0
      %4385 = vmatprep.subr.mxu0 0.0
      %4386 = vmatpush1.msra.mxu0 0.0
      %4387 = vmatprep.subr.mxu0 0.0
      %4388 = vmatpush1.msra.mxu0 0.0
      %4389 = vmatprep.subr.mxu0 0.0
      %4390 = vmatpush1.msra.mxu0 0.0
      %4391 = vmatprep.subr.mxu0 0.0
      %4392 = vmatpush1.msra.mxu0 0.0
      %4393 = vmatprep.subr.mxu0 0.0
      %4394 = vmatpush1.msra.mxu0 0.0
      %4395 = vmatprep.subr.mxu0 0.0
      %4396 = vmatpush1.msra.mxu0 0.0
      %4397 = vmatprep.subr.mxu0 0.0
      %4398 = vmatpush1.msra.mxu0 0.0
      %4399 = vmatprep.subr.mxu0 0.0
      %4400 = vmatpush1.msra.mxu0 0.0
      %4401 = vmatprep.subr.mxu0 0.0
      %4402 = vmatpush1.msra.mxu0 0.0
      %4403 = vmatprep.subr.mxu0 0.0
      %4404 = vmatpush1.msra.mxu0 0.0
      %4405 = vmatprep.subr.mxu0 0.0
      %4406 = vmatpush1.msra.mxu0 0.0
      %4407 = vmatprep.subr.mxu0 0.0
      %4408 = vmatpush1.msra.mxu0 0.0
      %4409 = vmatprep.subr.mxu0 0.0
      %4410 = vmatpush1.msra.mxu0 0.0
      %4411 = vmatprep.subr.mxu0 0.0
      %4412 = vmatpush1.msra.mxu0 0.0
      %4413 = vmatprep.subr.mxu0 0.0
      %4414 = vmatpush1.msra.mxu0 0.0
      %4415 = vmatprep.subr.mxu0 0.0
      %4416 = vmatpush1.msra.mxu0 0.0
      %4417 = vmatprep.subr.mxu0 0.0
      %4418 = vmatpush1.msra.mxu0 0.0
      %4419 = vmatprep.subr.mxu0 0.0
      %4420 = vmatpush1.msra.mxu0 0.0
      %4421 = vmatprep.subr.mxu0 0.0
      %4422 = vmatpush1.msra.mxu0 0.0
      %4423 = vmatprep.subr.mxu0 0.0
      %4424 = vmatpush1.msra.mxu0 0.0
      %4425 = vmatprep.subr.mxu0 0.0
      %4426 = vmatpush1.msra.mxu0 0.0
      %4427 = vmatprep.subr.mxu0 0.0
      %4428 = vmatpush1.msra.mxu0 0.0
      %4429 = vmatprep.subr.mxu0 0.0
      %4430 = vmatpush1.msra.mxu0 0.0
      %4431 = vmatprep.subr.mxu0 0.0
      %4432 = vmatpush1.msra.mxu0 0.0
      %4433 = vmatprep.subr.mxu0 0.0
      %4434 = vmatpush1.msra.mxu0 0.0
      %4435 = vmatprep.subr.mxu0 0.0
      %4436 = vmatpush1.msra.mxu0 0.0
      %4437 = vmatprep.subr.mxu0 0.0
      %4438 = vmatpush1.msra.mxu0 0.0
      %4439 = vmatprep.subr.mxu0 0.0
      %4440 = vmatpush1.msra.mxu0 0.0
      %4441 = vmatprep.subr.mxu0 0.0
      %4442 = vmatpush1.msra.mxu0 0.0
      %4443 = vmatprep.mubr.f32.mxu0 0.0
      %v4444 = vand.u32 %v4283, 4294901760
      %4445 = vmatmul.mubr.f32.gmra.mrb[0].mxu0 %v4444
      %v4446 = vpop.f32.mrb[0].mxu0
      %v4447 = vadd.f32 %v4365, %v4446
      %v4448 = vpop.f32.mrb[0].mxu0
      %v4449 = vadd.f32 %v4367, %v4448
      %4450 = vdwg.mxu0
      %v4451 = vand.u32 %v4289, 4294901760
      %v4452 = vsub.f32 %v4289, %v4451
      %4453 = vmatprep.subr.mxu0 %v4452
      %v4454 = vand.u32 %v4286, 4294901760
      %v4455 = vsub.f32 %v4286, %v4454
      %4456 = vmatpush1.msra.mxu0 %v4455
      %4457 = vmatprep.subr.mxu0 0.0
      %4458 = vmatpush1.msra.mxu0 0.0
      %4459 = vmatprep.subr.mxu0 0.0
      %4460 = vmatpush1.msra.mxu0 0.0
      %4461 = vmatprep.subr.mxu0 0.0
      %4462 = vmatpush1.msra.mxu0 0.0
      %4463 = vmatprep.subr.mxu0 0.0
      %4464 = vmatpush1.msra.mxu0 0.0
      %4465 = vmatprep.subr.mxu0 0.0
      %4466 = vmatpush1.msra.mxu0 0.0
      %4467 = vmatprep.subr.mxu0 0.0
      %4468 = vmatpush1.msra.mxu0 0.0
      %4469 = vmatprep.subr.mxu0 0.0
      %4470 = vmatpush1.msra.mxu0 0.0
      %4471 = vmatprep.subr.mxu0 0.0
      %4472 = vmatpush1.msra.mxu0 0.0
      %4473 = vmatprep.subr.mxu0 0.0
      %4474 = vmatpush1.msra.mxu0 0.0
      %4475 = vmatprep.subr.mxu0 0.0
      %4476 = vmatpush1.msra.mxu0 0.0
      %4477 = vmatprep.subr.mxu0 0.0
      %4478 = vmatpush1.msra.mxu0 0.0
      %4479 = vmatprep.subr.mxu0 0.0
      %4480 = vmatpush1.msra.mxu0 0.0
      %4481 = vmatprep.subr.mxu0 0.0
      %4482 = vmatpush1.msra.mxu0 0.0
      %4483 = vmatprep.subr.mxu0 0.0
      %4484 = vmatpush1.msra.mxu0 0.0
      %4485 = vmatprep.subr.mxu0 0.0
      %4486 = vmatpush1.msra.mxu0 0.0
      %4487 = vmatprep.subr.mxu0 0.0
      %4488 = vmatpush1.msra.mxu0 0.0
      %4489 = vmatprep.subr.mxu0 0.0
      %4490 = vmatpush1.msra.mxu0 0.0
      %4491 = vmatprep.subr.mxu0 0.0
      %4492 = vmatpush1.msra.mxu0 0.0
      %4493 = vmatprep.subr.mxu0 0.0
      %4494 = vmatpush1.msra.mxu0 0.0
      %4495 = vmatprep.subr.mxu0 0.0
      %4496 = vmatpush1.msra.mxu0 0.0
      %4497 = vmatprep.subr.mxu0 0.0
      %4498 = vmatpush1.msra.mxu0 0.0
      %4499 = vmatprep.subr.mxu0 0.0
      %4500 = vmatpush1.msra.mxu0 0.0
      %4501 = vmatprep.subr.mxu0 0.0
      %4502 = vmatpush1.msra.mxu0 0.0
      %4503 = vmatprep.subr.mxu0 0.0
      %4504 = vmatpush1.msra.mxu0 0.0
      %4505 = vmatprep.subr.mxu0 0.0
      %4506 = vmatpush1.msra.mxu0 0.0
      %4507 = vmatprep.subr.mxu0 0.0
      %4508 = vmatpush1.msra.mxu0 0.0
      %4509 = vmatprep.subr.mxu0 0.0
      %4510 = vmatpush1.msra.mxu0 0.0
      %4511 = vmatprep.subr.mxu0 0.0
      %4512 = vmatpush1.msra.mxu0 0.0
      %4513 = vmatprep.subr.mxu0 0.0
      %4514 = vmatpush1.msra.mxu0 0.0
      %4515 = vmatprep.subr.mxu0 0.0
      %4516 = vmatpush1.msra.mxu0 0.0
      %4517 = vmatprep.subr.mxu0 0.0
      %4518 = vmatpush1.msra.mxu0 0.0
      %4519 = vmatprep.mubr.f32.mxu0 0.0
      %v4520 = vand.u32 %v4283, 4294901760
      %v4521 = vsub.f32 %v4283, %v4520
      %4522 = vmatmul.mubr.f32.gmra.mrb[0].mxu0 %v4521
      %v4523 = vpop.f32.mrb[0].mxu0
      %v4524 = vadd.f32 %v4447, %v4523
      %v4525 = vpop.f32.mrb[0].mxu0
      %v4526 = vadd.f32 %v4449, %v4525
      %4527 = vdwg.mxu0
      %v4528 = vand.u32 %v4289, 4294901760
      %4529 = vmatprep.subr.mxu0 %v4528
      %v4530 = vand.u32 %v4286, 4294901760
      %4531 = vmatpush1.msra.mxu0 %v4530
      %4532 = vmatprep.subr.mxu0 0.0
      %4533 = vmatpush1.msra.mxu0 0.0
      %4534 = vmatprep.subr.mxu0 0.0
      %4535 = vmatpush1.msra.mxu0 0.0
      %4536 = vmatprep.subr.mxu0 0.0
      %4537 = vmatpush1.msra.mxu0 0.0
      %4538 = vmatprep.subr.mxu0 0.0
      %4539 = vmatpush1.msra.mxu0 0.0
      %4540 = vmatprep.subr.mxu0 0.0
      %4541 = vmatpush1.msra.mxu0 0.0
      %4542 = vmatprep.subr.mxu0 0.0
      %4543 = vmatpush1.msra.mxu0 0.0
      %4544 = vmatprep.subr.mxu0 0.0
      %4545 = vmatpush1.msra.mxu0 0.0
      %4546 = vmatprep.subr.mxu0 0.0
      %4547 = vmatpush1.msra.mxu0 0.0
      %4548 = vmatprep.subr.mxu0 0.0
      %4549 = vmatpush1.msra.mxu0 0.0
      %4550 = vmatprep.subr.mxu0 0.0
      %4551 = vmatpush1.msra.mxu0 0.0
      %4552 = vmatprep.subr.mxu0 0.0
      %4553 = vmatpush1.msra.mxu0 0.0
      %4554 = vmatprep.subr.mxu0 0.0
      %4555 = vmatpush1.msra.mxu0 0.0
      %4556 = vmatprep.subr.mxu0 0.0
      %4557 = vmatpush1.msra.mxu0 0.0
      %4558 = vmatprep.subr.mxu0 0.0
      %4559 = vmatpush1.msra.mxu0 0.0
      %4560 = vmatprep.subr.mxu0 0.0
      %4561 = vmatpush1.msra.mxu0 0.0
      %4562 = vmatprep.subr.mxu0 0.0
      %4563 = vmatpush1.msra.mxu0 0.0
      %4564 = vmatprep.subr.mxu0 0.0
      %4565 = vmatpush1.msra.mxu0 0.0
      %4566 = vmatprep.subr.mxu0 0.0
      %4567 = vmatpush1.msra.mxu0 0.0
      %4568 = vmatprep.subr.mxu0 0.0
      %4569 = vmatpush1.msra.mxu0 0.0
      %4570 = vmatprep.subr.mxu0 0.0
      %4571 = vmatpush1.msra.mxu0 0.0
      %4572 = vmatprep.subr.mxu0 0.0
      %4573 = vmatpush1.msra.mxu0 0.0
      %4574 = vmatprep.subr.mxu0 0.0
      %4575 = vmatpush1.msra.mxu0 0.0
      %4576 = vmatprep.subr.mxu0 0.0
      %4577 = vmatpush1.msra.mxu0 0.0
      %4578 = vmatprep.subr.mxu0 0.0
      %4579 = vmatpush1.msra.mxu0 0.0
      %4580 = vmatprep.subr.mxu0 0.0
      %4581 = vmatpush1.msra.mxu0 0.0
      %4582 = vmatprep.subr.mxu0 0.0
      %4583 = vmatpush1.msra.mxu0 0.0
      %4584 = vmatprep.subr.mxu0 0.0
      %4585 = vmatpush1.msra.mxu0 0.0
      %4586 = vmatprep.subr.mxu0 0.0
      %4587 = vmatpush1.msra.mxu0 0.0
      %4588 = vmatprep.subr.mxu0 0.0
      %4589 = vmatpush1.msra.mxu0 0.0
      %4590 = vmatprep.subr.mxu0 0.0
      %4591 = vmatpush1.msra.mxu0 0.0
      %4592 = vmatprep.subr.mxu0 0.0
      %4593 = vmatpush1.msra.mxu0 0.0
      %4594 = vmatprep.mubr.f32.mxu0 0.0
      %v4595 = vand.u32 %v4283, 4294901760
      %v4596 = vsub.f32 %v4283, %v4595
      %v4597 = vand.u32 %v4596, 4294901760
      %4598 = vmatmul.mubr.f32.gmra.mrb[0].mxu0 %v4597
      %v4599 = vpop.f32.mrb[0].mxu0
      %v4600 = vadd.f32 %v4524, %v4599
      %v4601 = vpop.f32.mrb[0].mxu0
      %v4602 = vadd.f32 %v4526, %v4601
      %4603 = vdwg.mxu0
      %v4604 = vand.u32 %v4289, 4294901760
      %v4605 = vsub.f32 %v4289, %v4604
      %v4606 = vand.u32 %v4605, 4294901760
      %4607 = vmatprep.subr.mxu0 %v4606
      %v4608 = vand.u32 %v4286, 4294901760
      %v4609 = vsub.f32 %v4286, %v4608
      %v4610 = vand.u32 %v4609, 4294901760
      %4611 = vmatpush1.msra.mxu0 %v4610
      %4612 = vmatprep.subr.mxu0 0.0
      %4613 = vmatpush1.msra.mxu0 0.0
      %4614 = vmatprep.subr.mxu0 0.0
      %4615 = vmatpush1.msra.mxu0 0.0
      %4616 = vmatprep.subr.mxu0 0.0
      %4617 = vmatpush1.msra.mxu0 0.0
      %4618 = vmatprep.subr.mxu0 0.0
      %4619 = vmatpush1.msra.mxu0 0.0
      %4620 = vmatprep.subr.mxu0 0.0
      %4621 = vmatpush1.msra.mxu0 0.0
      %4622 = vmatprep.subr.mxu0 0.0
      %4623 = vmatpush1.msra.mxu0 0.0
      %4624 = vmatprep.subr.mxu0 0.0
      %4625 = vmatpush1.msra.mxu0 0.0
      %4626 = vmatprep.subr.mxu0 0.0
      %4627 = vmatpush1.msra.mxu0 0.0
      %4628 = vmatprep.subr.mxu0 0.0
      %4629 = vmatpush1.msra.mxu0 0.0
      %4630 = vmatprep.subr.mxu0 0.0
      %4631 = vmatpush1.msra.mxu0 0.0
      %4632 = vmatprep.subr.mxu0 0.0
      %4633 = vmatpush1.msra.mxu0 0.0
      %4634 = vmatprep.subr.mxu0 0.0
      %4635 = vmatpush1.msra.mxu0 0.0
      %4636 = vmatprep.subr.mxu0 0.0
      %4637 = vmatpush1.msra.mxu0 0.0
      %4638 = vmatprep.subr.mxu0 0.0
      %4639 = vmatpush1.msra.mxu0 0.0
      %4640 = vmatprep.subr.mxu0 0.0
      %4641 = vmatpush1.msra.mxu0 0.0
      %4642 = vmatprep.subr.mxu0 0.0
      %4643 = vmatpush1.msra.mxu0 0.0
      %4644 = vmatprep.subr.mxu0 0.0
      %4645 = vmatpush1.msra.mxu0 0.0
      %4646 = vmatprep.subr.mxu0 0.0
      %4647 = vmatpush1.msra.mxu0 0.0
      %4648 = vmatprep.subr.mxu0 0.0
      %4649 = vmatpush1.msra.mxu0 0.0
      %4650 = vmatprep.subr.mxu0 0.0
      %4651 = vmatpush1.msra.mxu0 0.0
      %4652 = vmatprep.subr.mxu0 0.0
      %4653 = vmatpush1.msra.mxu0 0.0
      %4654 = vmatprep.subr.mxu0 0.0
      %4655 = vmatpush1.msra.mxu0 0.0
      %4656 = vmatprep.subr.mxu0 0.0
      %4657 = vmatpush1.msra.mxu0 0.0
      %4658 = vmatprep.subr.mxu0 0.0
      %4659 = vmatpush1.msra.mxu0 0.0
      %4660 = vmatprep.subr.mxu0 0.0
      %4661 = vmatpush1.msra.mxu0 0.0
      %4662 = vmatprep.subr.mxu0 0.0
      %4663 = vmatpush1.msra.mxu0 0.0
      %4664 = vmatprep.subr.mxu0 0.0
      %4665 = vmatpush1.msra.mxu0 0.0
      %4666 = vmatprep.subr.mxu0 0.0
      %4667 = vmatpush1.msra.mxu0 0.0
      %4668 = vmatprep.subr.mxu0 0.0
      %4669 = vmatpush1.msra.mxu0 0.0
      %4670 = vmatprep.subr.mxu0 0.0
      %4671 = vmatpush1.msra.mxu0 0.0
      %4672 = vmatprep.subr.mxu0 0.0
      %4673 = vmatpush1.msra.mxu0 0.0
      %4674 = vmatprep.mubr.f32.mxu0 0.0
      %v4675 = vand.u32 %v4283, 4294901760
      %4676 = vmatmul.mubr.f32.gmra.mrb[0].mxu0 %v4675
      %v4677 = vpop.f32.mrb[0].mxu0
      %v4678 = vadd.f32 %v4600, %v4677
      %v4679 = vpop.f32.mrb[0].mxu0
      %v4680 = vadd.f32 %v4602, %v4679
      %4681 = vdwg.mxu0
      %v4682 = vand.u32 %v4289, 4294901760
      %4683 = vmatprep.subr.mxu0 %v4682
      %v4684 = vand.u32 %v4286, 4294901760
      %4685 = vmatpush1.msra.mxu0 %v4684
      %4686 = vmatprep.subr.mxu0 0.0
      %4687 = vmatpush1.msra.mxu0 0.0
      %4688 = vmatprep.subr.mxu0 0.0
      %4689 = vmatpush1.msra.mxu0 0.0
      %4690 = vmatprep.subr.mxu0 0.0
      %4691 = vmatpush1.msra.mxu0 0.0
      %4692 = vmatprep.subr.mxu0 0.0
      %4693 = vmatpush1.msra.mxu0 0.0
      %4694 = vmatprep.subr.mxu0 0.0
      %4695 = vmatpush1.msra.mxu0 0.0
      %4696 = vmatprep.subr.mxu0 0.0
      %4697 = vmatpush1.msra.mxu0 0.0
      %4698 = vmatprep.subr.mxu0 0.0
      %4699 = vmatpush1.msra.mxu0 0.0
      %4700 = vmatprep.subr.mxu0 0.0
      %4701 = vmatpush1.msra.mxu0 0.0
      %4702 = vmatprep.subr.mxu0 0.0
      %4703 = vmatpush1.msra.mxu0 0.0
      %4704 = vmatprep.subr.mxu0 0.0
      %4705 = vmatpush1.msra.mxu0 0.0
      %4706 = vmatprep.subr.mxu0 0.0
      %4707 = vmatpush1.msra.mxu0 0.0
      %4708 = vmatprep.subr.mxu0 0.0
      %4709 = vmatpush1.msra.mxu0 0.0
      %4710 = vmatprep.subr.mxu0 0.0
      %4711 = vmatpush1.msra.mxu0 0.0
      %4712 = vmatprep.subr.mxu0 0.0
      %4713 = vmatpush1.msra.mxu0 0.0
      %4714 = vmatprep.subr.mxu0 0.0
      %4715 = vmatpush1.msra.mxu0 0.0
      %4716 = vmatprep.subr.mxu0 0.0
      %4717 = vmatpush1.msra.mxu0 0.0
      %4718 = vmatprep.subr.mxu0 0.0
      %4719 = vmatpush1.msra.mxu0 0.0
      %4720 = vmatprep.subr.mxu0 0.0
      %4721 = vmatpush1.msra.mxu0 0.0
      %4722 = vmatprep.subr.mxu0 0.0
      %4723 = vmatpush1.msra.mxu0 0.0
      %4724 = vmatprep.subr.mxu0 0.0
      %4725 = vmatpush1.msra.mxu0 0.0
      %4726 = vmatprep.subr.mxu0 0.0
      %4727 = vmatpush1.msra.mxu0 0.0
      %4728 = vmatprep.subr.mxu0 0.0
      %4729 = vmatpush1.msra.mxu0 0.0
      %4730 = vmatprep.subr.mxu0 0.0
      %4731 = vmatpush1.msra.mxu0 0.0
      %4732 = vmatprep.subr.mxu0 0.0
      %4733 = vmatpush1.msra.mxu0 0.0
      %4734 = vmatprep.subr.mxu0 0.0
      %4735 = vmatpush1.msra.mxu0 0.0
      %4736 = vmatprep.subr.mxu0 0.0
      %4737 = vmatpush1.msra.mxu0 0.0
      %4738 = vmatprep.subr.mxu0 0.0
      %4739 = vmatpush1.msra.mxu0 0.0
      %4740 = vmatprep.subr.mxu0 0.0
      %4741 = vmatpush1.msra.mxu0 0.0
      %4742 = vmatprep.subr.mxu0 0.0
      %4743 = vmatpush1.msra.mxu0 0.0
      %4744 = vmatprep.subr.mxu0 0.0
      %4745 = vmatpush1.msra.mxu0 0.0
      %4746 = vmatprep.subr.mxu0 0.0
      %4747 = vmatpush1.msra.mxu0 0.0
      %4748 = vmatprep.mubr.f32.mxu0 0.0
      %v4749 = vand.u32 %v4283, 4294901760
      %4750 = vmatmul.mubr.f32.gmra.mrb[0].mxu0 %v4749
      %v4751 = vpop.f32.mrb[0].mxu0
      %v4752 = vadd.f32 %v4678, %v4751
      %v4753 = vpop.f32.mrb[0].mxu0
      %v4754 = vadd.f32 %v4680, %v4753
      %4755 = vdwg.mxu0
      %v4756 = vadd.f32 %v4278, %v4752
      %v4757 = vadd.f32 %v4279, %v4754
      %v4758 = vsel %vm392, %v4756, 0.0
      %v4759 = vsel %vm392, %v4757, 0.0
      %v4760 = vadd.f32 %v4758, %v4759
      %4761 = vadd.xlane.f32.xlu0 %v4760
      %v4762 = vpop.xlane.xlu0 %4761
      %v4763 = vrcp.pop 256.0
      %v4764 = vmul.f32 %v4762, %v4763
      %v4765 = vsub.f32 %v4756, %v4764
      %v4766 = vsub.f32 %v4757, %v4764
      %v4767 = vmul.f32 %v4765, %v4765
      %v4768 = vmul.f32 %v4766, %v4766
      %v4769 = vsel %vm392, %v4767, 0.0
      %v4770 = vsel %vm392, %v4768, 0.0
      %v4771 = vadd.f32 %v4769, %v4770
      %4772 = vadd.xlane.f32.xlu0 %v4771
      %v4773 = vpop.xlane.xlu0 %4772
      %v4774 = vmul.f32 %v4773, %v4763
      %v4775 = vadd.f32 %v4774, 1e-05
      %v4776 = vrsqrt.pop %v4775
      %v4777 = vmul.f32 %v4765, %v4776
      %v4778 = vmul.f32 %v4766, %v4776
      %v4779 = vld [vmem:[%s2] sm:$0xf]
      %4781 = vset.pattern.permute.xlu0 0
      %4782 = vperm.xlu0 %4781, %v4779
      %v4783 = vpop.permute.xlu0 %4782
      %v4785 = vmul.f32 %v4777, %v4783
      %v4786 = vmul.f32 %v4778, %v4783
      %v4787 = vld [vmem:[%s3] sm:$0xf]
      %4789 = vset.pattern.permute.xlu0 0
      %4790 = vperm.xlu0 %4789, %v4787
      %v4791 = vpop.permute.xlu0 %4790
      %v4793 = vadd.f32 %v4785, %v4791
      %v4794 = vadd.f32 %v4786, %v4791
      %v4795 = vmax.f32 %v4793, 0.0
      %v4796 = vmax.f32 %v4794, 0.0
      %v4799 = vcombine.low %v4795, %v4796
      %4800 = vrot.lane.b32.xlu0 %v4799, 32
      %v4801 = vpop.permute.xlu0 %4800
      %v4802 = vrot.slane %v4801, 4
      %v4803 = vsel %vm315, %v4802, %v4801
      %4806 = vst.msk [vmem:[#allocation2] sm:$0xff] %vm321, %v4803
      %4807 = vst.msk [vmem:[#allocation2 + $0x8] sm:$0xf] %vm323, %v4802
      %4808 = vst.msk [vmem:[#allocation2] sm:$0xf] %vm325, %v4795
      %4809 = vrot.lane.b32.xlu0 %v4796, 64
      %v4810 = vpop.permute.xlu0 %4809
      %4812 = vst.msk [vmem:[#allocation2 + $0x8] sm:$0xf] %vm331, %v4810
      %4813 = vst.msk [vmem:[#allocation2] sm:$0xf] %vm333, 0.0
      %4814 = vst.msk [vmem:[#allocation2 + $0x8] sm:$0xf] %vm335, 0.0
      %v4815 = vld [vmem:[#allocation2] sm:$0xff]
      %v4816 = vld [vmem:[#allocation2 + $0x8] sm:$0xf]
      %v4819 = vcombine.high %v4815, %v4815
      %4820 = vrot.lane.b32.xlu0 %v4815, 111
      %v4821 = vpop.permute.xlu0 %4820
      %4822 = vrot.lane.b32.xlu0 %v4819, 111
      %v4823 = vpop.permute.xlu0 %4822
      %4824 = vrot.lane.b32.xlu0 %v4816, 111
      %v4825 = vpop.permute.xlu0 %4824
      %v4826 = vsel %vm352, %v4821, %v4823
      %v4827 = vsel %vm352, %v4823, %v4825
      %4830 = vrot.lane.b32.xlu0 %v4815, 113
      %v4831 = vpop.permute.xlu0 %4830
      %4832 = vrot.lane.b32.xlu0 %v4819, 113
      %v4833 = vpop.permute.xlu0 %4832
      %4834 = vrot.lane.b32.xlu0 %v4816, 113
      %v4835 = vpop.permute.xlu0 %4834
      %v4836 = vsel %vm363, %v4831, %v4833
      %v4837 = vsel %vm363, %v4833, %v4835
      %v4840 = vsel %vm341, %v4826, %v4836
      %v4841 = vsel %vm342, %v4827, %v4837
      %v4842 = vsel %vm372, %v4836, %v4826
      %v4843 = vsel %vm373, %v4837, %v4827
      %v4844 = vld [vmem:[%s4] sm:$0xf]
      %s4845 = scalar_lea.vmem %s4, 4
      %v4846 = vld [vmem:[%s4845] sm:$0xf]
      %4847 = vrot.lane.b32.xlu0 %v4815, 112
      %v4848 = vpop.permute.xlu0 %4847
      %4849 = vrot.lane.b32.xlu0 %v4819, 112
      %v4850 = vpop.permute.xlu0 %4849
      %4851 = vrot.lane.b32.xlu0 %v4816, 112
      %v4852 = vpop.permute.xlu0 %4851
      %v4853 = vsel %vm385, %v4848, %v4850
      %v4854 = vsel %vm385, %v4850, %v4852
      %v4856 = vsel %vm388, %v4846, 0
      %v4858 = vsel %vm392, %v4853, 0
      %v4860 = vsel %vm392, %v4854, 0
      %v4862 = vand.u32 %v4860, 4294901760
      %4863 = vmatprep.subr.mxu0 %v4862
      %v4864 = vand.u32 %v4858, 4294901760
      %4865 = vmatpush1.msra.mxu0 %v4864
      %4866 = vmatprep.subr.mxu0 0.0
      %4867 = vmatpush1.msra.mxu0 0.0
      %4868 = vmatprep.subr.mxu0 0.0
      %4869 = vmatpush1.msra.mxu0 0.0
      %4870 = vmatprep.subr.mxu0 0.0
      %4871 = vmatpush1.msra.mxu0 0.0
      %4872 = vmatprep.subr.mxu0 0.0
      %4873 = vmatpush1.msra.mxu0 0.0
      %4874 = vmatprep.subr.mxu0 0.0
      %4875 = vmatpush1.msra.mxu0 0.0
      %4876 = vmatprep.subr.mxu0 0.0
      %4877 = vmatpush1.msra.mxu0 0.0
      %4878 = vmatprep.subr.mxu0 0.0
      %4879 = vmatpush1.msra.mxu0 0.0
      %4880 = vmatprep.subr.mxu0 0.0
      %4881 = vmatpush1.msra.mxu0 0.0
      %4882 = vmatprep.subr.mxu0 0.0
      %4883 = vmatpush1.msra.mxu0 0.0
      %4884 = vmatprep.subr.mxu0 0.0
      %4885 = vmatpush1.msra.mxu0 0.0
      %4886 = vmatprep.subr.mxu0 0.0
      %4887 = vmatpush1.msra.mxu0 0.0
      %4888 = vmatprep.subr.mxu0 0.0
      %4889 = vmatpush1.msra.mxu0 0.0
      %4890 = vmatprep.subr.mxu0 0.0
      %4891 = vmatpush1.msra.mxu0 0.0
      %4892 = vmatprep.subr.mxu0 0.0
      %4893 = vmatpush1.msra.mxu0 0.0
      %4894 = vmatprep.subr.mxu0 0.0
      %4895 = vmatpush1.msra.mxu0 0.0
      %4896 = vmatprep.subr.mxu0 0.0
      %4897 = vmatpush1.msra.mxu0 0.0
      %4898 = vmatprep.subr.mxu0 0.0
      %4899 = vmatpush1.msra.mxu0 0.0
      %4900 = vmatprep.subr.mxu0 0.0
      %4901 = vmatpush1.msra.mxu0 0.0
      %4902 = vmatprep.subr.mxu0 0.0
      %4903 = vmatpush1.msra.mxu0 0.0
      %4904 = vmatprep.subr.mxu0 0.0
      %4905 = vmatpush1.msra.mxu0 0.0
      %4906 = vmatprep.subr.mxu0 0.0
      %4907 = vmatpush1.msra.mxu0 0.0
      %4908 = vmatprep.subr.mxu0 0.0
      %4909 = vmatpush1.msra.mxu0 0.0
      %4910 = vmatprep.subr.mxu0 0.0
      %4911 = vmatpush1.msra.mxu0 0.0
      %4912 = vmatprep.subr.mxu0 0.0
      %4913 = vmatpush1.msra.mxu0 0.0
      %4914 = vmatprep.subr.mxu0 0.0
      %4915 = vmatpush1.msra.mxu0 0.0
      %4916 = vmatprep.subr.mxu0 0.0
      %4917 = vmatpush1.msra.mxu0 0.0
      %4918 = vmatprep.subr.mxu0 0.0
      %4919 = vmatpush1.msra.mxu0 0.0
      %4920 = vmatprep.subr.mxu0 0.0
      %4921 = vmatpush1.msra.mxu0 0.0
      %4922 = vmatprep.subr.mxu0 0.0
      %4923 = vmatpush1.msra.mxu0 0.0
      %4924 = vmatprep.subr.mxu0 0.0
      %4925 = vmatpush1.msra.mxu0 0.0
      %4926 = vmatprep.subr.mxu0 0.0
      %4927 = vmatpush1.msra.mxu0 0.0
      %4928 = vmatprep.mubr.f32.mxu0 0.0
      %v4929 = vand.u32 %v4856, 4294901760
      %v4930 = vsub.f32 %v4856, %v4929
      %v4931 = vand.u32 %v4930, 4294901760
      %v4932 = vsub.f32 %v4930, %v4931
      %v4933 = vand.u32 %v4932, 4294901760
      %4934 = vmatmul.mubr.f32.gmra.mrb[0].mxu0 %v4933
      %v4935 = vpop.f32.mrb[0].mxu0
      %v4936 = vadd.f32 0.0, %v4935
      %v4937 = vpop.f32.mrb[0].mxu0
      %v4938 = vadd.f32 0.0, %v4937
      %4939 = vdwg.mxu0
      %v4940 = vand.u32 %v4860, 4294901760
      %v4941 = vsub.f32 %v4860, %v4940
      %v4942 = vand.u32 %v4941, 4294901760
      %v4943 = vsub.f32 %v4941, %v4942
      %v4944 = vand.u32 %v4943, 4294901760
      %4945 = vmatprep.subr.mxu0 %v4944
      %v4946 = vand.u32 %v4858, 4294901760
      %v4947 = vsub.f32 %v4858, %v4946
      %v4948 = vand.u32 %v4947, 4294901760
      %v4949 = vsub.f32 %v4947, %v4948
      %v4950 = vand.u32 %v4949, 4294901760
      %4951 = vmatpush1.msra.mxu0 %v4950
      %4952 = vmatprep.subr.mxu0 0.0
      %4953 = vmatpush1.msra.mxu0 0.0
      %4954 = vmatprep.subr.mxu0 0.0
      %4955 = vmatpush1.msra.mxu0 0.0
      %4956 = vmatprep.subr.mxu0 0.0
      %4957 = vmatpush1.msra.mxu0 0.0
      %4958 = vmatprep.subr.mxu0 0.0
      %4959 = vmatpush1.msra.mxu0 0.0
      %4960 = vmatprep.subr.mxu0 0.0
      %4961 = vmatpush1.msra.mxu0 0.0
      %4962 = vmatprep.subr.mxu0 0.0
      %4963 = vmatpush1.msra.mxu0 0.0
      %4964 = vmatprep.subr.mxu0 0.0
      %4965 = vmatpush1.msra.mxu0 0.0
      %4966 = vmatprep.subr.mxu0 0.0
      %4967 = vmatpush1.msra.mxu0 0.0
      %4968 = vmatprep.subr.mxu0 0.0
      %4969 = vmatpush1.msra.mxu0 0.0
      %4970 = vmatprep.subr.mxu0 0.0
      %4971 = vmatpush1.msra.mxu0 0.0
      %4972 = vmatprep.subr.mxu0 0.0
      %4973 = vmatpush1.msra.mxu0 0.0
      %4974 = vmatprep.subr.mxu0 0.0
      %4975 = vmatpush1.msra.mxu0 0.0
      %4976 = vmatprep.subr.mxu0 0.0
      %4977 = vmatpush1.msra.mxu0 0.0
      %4978 = vmatprep.subr.mxu0 0.0
      %4979 = vmatpush1.msra.mxu0 0.0
      %4980 = vmatprep.subr.mxu0 0.0
      %4981 = vmatpush1.msra.mxu0 0.0
      %4982 = vmatprep.subr.mxu0 0.0
      %4983 = vmatpush1.msra.mxu0 0.0
      %4984 = vmatprep.subr.mxu0 0.0
      %4985 = vmatpush1.msra.mxu0 0.0
      %4986 = vmatprep.subr.mxu0 0.0
      %4987 = vmatpush1.msra.mxu0 0.0
      %4988 = vmatprep.subr.mxu0 0.0
      %4989 = vmatpush1.msra.mxu0 0.0
      %4990 = vmatprep.subr.mxu0 0.0
      %4991 = vmatpush1.msra.mxu0 0.0
      %4992 = vmatprep.subr.mxu0 0.0
      %4993 = vmatpush1.msra.mxu0 0.0
      %4994 = vmatprep.subr.mxu0 0.0
      %4995 = vmatpush1.msra.mxu0 0.0
      %4996 = vmatprep.subr.mxu0 0.0
      %4997 = vmatpush1.msra.mxu0 0.0
      %4998 = vmatprep.subr.mxu0 0.0
      %4999 = vmatpush1.msra.mxu0 0.0
      %5000 = vmatprep.subr.mxu0 0.0
      %5001 = vmatpush1.msra.mxu0 0.0
      %5002 = vmatprep.subr.mxu0 0.0
      %5003 = vmatpush1.msra.mxu0 0.0
      %5004 = vmatprep.subr.mxu0 0.0
      %5005 = vmatpush1.msra.mxu0 0.0
      %5006 = vmatprep.subr.mxu0 0.0
      %5007 = vmatpush1.msra.mxu0 0.0
      %5008 = vmatprep.subr.mxu0 0.0
      %5009 = vmatpush1.msra.mxu0 0.0
      %5010 = vmatprep.subr.mxu0 0.0
      %5011 = vmatpush1.msra.mxu0 0.0
      %5012 = vmatprep.subr.mxu0 0.0
      %5013 = vmatpush1.msra.mxu0 0.0
      %5014 = vmatprep.mubr.f32.mxu0 0.0
      %v5015 = vand.u32 %v4856, 4294901760
      %5016 = vmatmul.mubr.f32.gmra.mrb[0].mxu0 %v5015
      %v5017 = vpop.f32.mrb[0].mxu0
      %v5018 = vadd.f32 %v4936, %v5017
      %v5019 = vpop.f32.mrb[0].mxu0
      %v5020 = vadd.f32 %v4938, %v5019
      %5021 = vdwg.mxu0
      %v5022 = vand.u32 %v4860, 4294901760
      %v5023 = vsub.f32 %v4860, %v5022
      %5024 = vmatprep.subr.mxu0 %v5023
      %v5025 = vand.u32 %v4858, 4294901760
      %v5026 = vsub.f32 %v4858, %v5025
      %5027 = vmatpush1.msra.mxu0 %v5026
      %5028 = vmatprep.subr.mxu0 0.0
      %5029 = vmatpush1.msra.mxu0 0.0
      %5030 = vmatprep.subr.mxu0 0.0
      %5031 = vmatpush1.msra.mxu0 0.0
      %5032 = vmatprep.subr.mxu0 0.0
      %5033 = vmatpush1.msra.mxu0 0.0
      %5034 = vmatprep.subr.mxu0 0.0
      %5035 = vmatpush1.msra.mxu0 0.0
      %5036 = vmatprep.subr.mxu0 0.0
      %5037 = vmatpush1.msra.mxu0 0.0
      %5038 = vmatprep.subr.mxu0 0.0
      %5039 = vmatpush1.msra.mxu0 0.0
      %5040 = vmatprep.subr.mxu0 0.0
      %5041 = vmatpush1.msra.mxu0 0.0
      %5042 = vmatprep.subr.mxu0 0.0
      %5043 = vmatpush1.msra.mxu0 0.0
      %5044 = vmatprep.subr.mxu0 0.0
      %5045 = vmatpush1.msra.mxu0 0.0
      %5046 = vmatprep.subr.mxu0 0.0
      %5047 = vmatpush1.msra.mxu0 0.0
      %5048 = vmatprep.subr.mxu0 0.0
      %5049 = vmatpush1.msra.mxu0 0.0
      %5050 = vmatprep.subr.mxu0 0.0
      %5051 = vmatpush1.msra.mxu0 0.0
      %5052 = vmatprep.subr.mxu0 0.0
      %5053 = vmatpush1.msra.mxu0 0.0
      %5054 = vmatprep.subr.mxu0 0.0
      %5055 = vmatpush1.msra.mxu0 0.0
      %5056 = vmatprep.subr.mxu0 0.0
      %5057 = vmatpush1.msra.mxu0 0.0
      %5058 = vmatprep.subr.mxu0 0.0
      %5059 = vmatpush1.msra.mxu0 0.0
      %5060 = vmatprep.subr.mxu0 0.0
      %5061 = vmatpush1.msra.mxu0 0.0
      %5062 = vmatprep.subr.mxu0 0.0
      %5063 = vmatpush1.msra.mxu0 0.0
      %5064 = vmatprep.subr.mxu0 0.0
      %5065 = vmatpush1.msra.mxu0 0.0
      %5066 = vmatprep.subr.mxu0 0.0
      %5067 = vmatpush1.msra.mxu0 0.0
      %5068 = vmatprep.subr.mxu0 0.0
      %5069 = vmatpush1.msra.mxu0 0.0
      %5070 = vmatprep.subr.mxu0 0.0
      %5071 = vmatpush1.msra.mxu0 0.0
      %5072 = vmatprep.subr.mxu0 0.0
      %5073 = vmatpush1.msra.mxu0 0.0
      %5074 = vmatprep.subr.mxu0 0.0
      %5075 = vmatpush1.msra.mxu0 0.0
      %5076 = vmatprep.subr.mxu0 0.0
      %5077 = vmatpush1.msra.mxu0 0.0
      %5078 = vmatprep.subr.mxu0 0.0
      %5079 = vmatpush1.msra.mxu0 0.0
      %5080 = vmatprep.subr.mxu0 0.0
      %5081 = vmatpush1.msra.mxu0 0.0
      %5082 = vmatprep.subr.mxu0 0.0
      %5083 = vmatpush1.msra.mxu0 0.0
      %5084 = vmatprep.subr.mxu0 0.0
      %5085 = vmatpush1.msra.mxu0 0.0
      %5086 = vmatprep.subr.mxu0 0.0
      %5087 = vmatpush1.msra.mxu0 0.0
      %5088 = vmatprep.subr.mxu0 0.0
      %5089 = vmatpush1.msra.mxu0 0.0
      %5090 = vmatprep.mubr.f32.mxu0 0.0
      %v5091 = vand.u32 %v4856, 4294901760
      %v5092 = vsub.f32 %v4856, %v5091
      %5093 = vmatmul.mubr.f32.gmra.mrb[0].mxu0 %v5092
      %v5094 = vpop.f32.mrb[0].mxu0
      %v5095 = vadd.f32 %v5018, %v5094
      %v5096 = vpop.f32.mrb[0].mxu0
      %v5097 = vadd.f32 %v5020, %v5096
      %5098 = vdwg.mxu0
      %v5099 = vand.u32 %v4860, 4294901760
      %5100 = vmatprep.subr.mxu0 %v5099
      %v5101 = vand.u32 %v4858, 4294901760
      %5102 = vmatpush1.msra.mxu0 %v5101
      %5103 = vmatprep.subr.mxu0 0.0
      %5104 = vmatpush1.msra.mxu0 0.0
      %5105 = vmatprep.subr.mxu0 0.0
      %5106 = vmatpush1.msra.mxu0 0.0
      %5107 = vmatprep.subr.mxu0 0.0
      %5108 = vmatpush1.msra.mxu0 0.0
      %5109 = vmatprep.subr.mxu0 0.0
      %5110 = vmatpush1.msra.mxu0 0.0
      %5111 = vmatprep.subr.mxu0 0.0
      %5112 = vmatpush1.msra.mxu0 0.0
      %5113 = vmatprep.subr.mxu0 0.0
      %5114 = vmatpush1.msra.mxu0 0.0
      %5115 = vmatprep.subr.mxu0 0.0
      %5116 = vmatpush1.msra.mxu0 0.0
      %5117 = vmatprep.subr.mxu0 0.0
      %5118 = vmatpush1.msra.mxu0 0.0
      %5119 = vmatprep.subr.mxu0 0.0
      %5120 = vmatpush1.msra.mxu0 0.0
      %5121 = vmatprep.subr.mxu0 0.0
      %5122 = vmatpush1.msra.mxu0 0.0
      %5123 = vmatprep.subr.mxu0 0.0
      %5124 = vmatpush1.msra.mxu0 0.0
      %5125 = vmatprep.subr.mxu0 0.0
      %5126 = vmatpush1.msra.mxu0 0.0
      %5127 = vmatprep.subr.mxu0 0.0
      %5128 = vmatpush1.msra.mxu0 0.0
      %5129 = vmatprep.subr.mxu0 0.0
      %5130 = vmatpush1.msra.mxu0 0.0
      %5131 = vmatprep.subr.mxu0 0.0
      %5132 = vmatpush1.msra.mxu0 0.0
      %5133 = vmatprep.subr.mxu0 0.0
      %5134 = vmatpush1.msra.mxu0 0.0
      %5135 = vmatprep.subr.mxu0 0.0
      %5136 = vmatpush1.msra.mxu0 0.0
      %5137 = vmatprep.subr.mxu0 0.0
      %5138 = vmatpush1.msra.mxu0 0.0
      %5139 = vmatprep.subr.mxu0 0.0
      %5140 = vmatpush1.msra.mxu0 0.0
      %5141 = vmatprep.subr.mxu0 0.0
      %5142 = vmatpush1.msra.mxu0 0.0
      %5143 = vmatprep.subr.mxu0 0.0
      %5144 = vmatpush1.msra.mxu0 0.0
      %5145 = vmatprep.subr.mxu0 0.0
      %5146 = vmatpush1.msra.mxu0 0.0
      %5147 = vmatprep.subr.mxu0 0.0
      %5148 = vmatpush1.msra.mxu0 0.0
      %5149 = vmatprep.subr.mxu0 0.0
      %5150 = vmatpush1.msra.mxu0 0.0
      %5151 = vmatprep.subr.mxu0 0.0
      %5152 = vmatpush1.msra.mxu0 0.0
      %5153 = vmatprep.subr.mxu0 0.0
      %5154 = vmatpush1.msra.mxu0 0.0
      %5155 = vmatprep.subr.mxu0 0.0
      %5156 = vmatpush1.msra.mxu0 0.0
      %5157 = vmatprep.subr.mxu0 0.0
      %5158 = vmatpush1.msra.mxu0 0.0
      %5159 = vmatprep.subr.mxu0 0.0
      %5160 = vmatpush1.msra.mxu0 0.0
      %5161 = vmatprep.subr.mxu0 0.0
      %5162 = vmatpush1.msra.mxu0 0.0
      %5163 = vmatprep.subr.mxu0 0.0
      %5164 = vmatpush1.msra.mxu0 0.0
      %5165 = vmatprep.mubr.f32.mxu0 0.0
      %v5166 = vand.u32 %v4856, 4294901760
      %v5167 = vsub.f32 %v4856, %v5166
      %v5168 = vand.u32 %v5167, 4294901760
      %5169 = vmatmul.mubr.f32.gmra.mrb[0].mxu0 %v5168
      %v5170 = vpop.f32.mrb[0].mxu0
      %v5171 = vadd.f32 %v5095, %v5170
      %v5172 = vpop.f32.mrb[0].mxu0
      %v5173 = vadd.f32 %v5097, %v5172
      %5174 = vdwg.mxu0
      %v5175 = vand.u32 %v4860, 4294901760
      %v5176 = vsub.f32 %v4860, %v5175
      %v5177 = vand.u32 %v5176, 4294901760
      %5178 = vmatprep.subr.mxu0 %v5177
      %v5179 = vand.u32 %v4858, 4294901760
      %v5180 = vsub.f32 %v4858, %v5179
      %v5181 = vand.u32 %v5180, 4294901760
      %5182 = vmatpush1.msra.mxu0 %v5181
      %5183 = vmatprep.subr.mxu0 0.0
      %5184 = vmatpush1.msra.mxu0 0.0
      %5185 = vmatprep.subr.mxu0 0.0
      %5186 = vmatpush1.msra.mxu0 0.0
      %5187 = vmatprep.subr.mxu0 0.0
      %5188 = vmatpush1.msra.mxu0 0.0
      %5189 = vmatprep.subr.mxu0 0.0
      %5190 = vmatpush1.msra.mxu0 0.0
      %5191 = vmatprep.subr.mxu0 0.0
      %5192 = vmatpush1.msra.mxu0 0.0
      %5193 = vmatprep.subr.mxu0 0.0
      %5194 = vmatpush1.msra.mxu0 0.0
      %5195 = vmatprep.subr.mxu0 0.0
      %5196 = vmatpush1.msra.mxu0 0.0
      %5197 = vmatprep.subr.mxu0 0.0
      %5198 = vmatpush1.msra.mxu0 0.0
      %5199 = vmatprep.subr.mxu0 0.0
      %5200 = vmatpush1.msra.mxu0 0.0
      %5201 = vmatprep.subr.mxu0 0.0
      %5202 = vmatpush1.msra.mxu0 0.0
      %5203 = vmatprep.subr.mxu0 0.0
      %5204 = vmatpush1.msra.mxu0 0.0
      %5205 = vmatprep.subr.mxu0 0.0
      %5206 = vmatpush1.msra.mxu0 0.0
      %5207 = vmatprep.subr.mxu0 0.0
      %5208 = vmatpush1.msra.mxu0 0.0
      %5209 = vmatprep.subr.mxu0 0.0
      %5210 = vmatpush1.msra.mxu0 0.0
      %5211 = vmatprep.subr.mxu0 0.0
      %5212 = vmatpush1.msra.mxu0 0.0
      %5213 = vmatprep.subr.mxu0 0.0
      %5214 = vmatpush1.msra.mxu0 0.0
      %5215 = vmatprep.subr.mxu0 0.0
      %5216 = vmatpush1.msra.mxu0 0.0
      %5217 = vmatprep.subr.mxu0 0.0
      %5218 = vmatpush1.msra.mxu0 0.0
      %5219 = vmatprep.subr.mxu0 0.0
      %5220 = vmatpush1.msra.mxu0 0.0
      %5221 = vmatprep.subr.mxu0 0.0
      %5222 = vmatpush1.msra.mxu0 0.0
      %5223 = vmatprep.subr.mxu0 0.0
      %5224 = vmatpush1.msra.mxu0 0.0
      %5225 = vmatprep.subr.mxu0 0.0
      %5226 = vmatpush1.msra.mxu0 0.0
      %5227 = vmatprep.subr.mxu0 0.0
      %5228 = vmatpush1.msra.mxu0 0.0
      %5229 = vmatprep.subr.mxu0 0.0
      %5230 = vmatpush1.msra.mxu0 0.0
      %5231 = vmatprep.subr.mxu0 0.0
      %5232 = vmatpush1.msra.mxu0 0.0
      %5233 = vmatprep.subr.mxu0 0.0
      %5234 = vmatpush1.msra.mxu0 0.0
      %5235 = vmatprep.subr.mxu0 0.0
      %5236 = vmatpush1.msra.mxu0 0.0
      %5237 = vmatprep.subr.mxu0 0.0
      %5238 = vmatpush1.msra.mxu0 0.0
      %5239 = vmatprep.subr.mxu0 0.0
      %5240 = vmatpush1.msra.mxu0 0.0
      %5241 = vmatprep.subr.mxu0 0.0
      %5242 = vmatpush1.msra.mxu0 0.0
      %5243 = vmatprep.subr.mxu0 0.0
      %5244 = vmatpush1.msra.mxu0 0.0
      %5245 = vmatprep.mubr.f32.mxu0 0.0
      %v5246 = vand.u32 %v4856, 4294901760
      %5247 = vmatmul.mubr.f32.gmra.mrb[0].mxu0 %v5246
      %v5248 = vpop.f32.mrb[0].mxu0
      %v5249 = vadd.f32 %v5171, %v5248
      %v5250 = vpop.f32.mrb[0].mxu0
      %v5251 = vadd.f32 %v5173, %v5250
      %5252 = vdwg.mxu0
      %v5253 = vand.u32 %v4860, 4294901760
      %5254 = vmatprep.subr.mxu0 %v5253
      %v5255 = vand.u32 %v4858, 4294901760
      %5256 = vmatpush1.msra.mxu0 %v5255
      %5257 = vmatprep.subr.mxu0 0.0
      %5258 = vmatpush1.msra.mxu0 0.0
      %5259 = vmatprep.subr.mxu0 0.0
      %5260 = vmatpush1.msra.mxu0 0.0
      %5261 = vmatprep.subr.mxu0 0.0
      %5262 = vmatpush1.msra.mxu0 0.0
      %5263 = vmatprep.subr.mxu0 0.0
      %5264 = vmatpush1.msra.mxu0 0.0
      %5265 = vmatprep.subr.mxu0 0.0
      %5266 = vmatpush1.msra.mxu0 0.0
      %5267 = vmatprep.subr.mxu0 0.0
      %5268 = vmatpush1.msra.mxu0 0.0
      %5269 = vmatprep.subr.mxu0 0.0
      %5270 = vmatpush1.msra.mxu0 0.0
      %5271 = vmatprep.subr.mxu0 0.0
      %5272 = vmatpush1.msra.mxu0 0.0
      %5273 = vmatprep.subr.mxu0 0.0
      %5274 = vmatpush1.msra.mxu0 0.0
      %5275 = vmatprep.subr.mxu0 0.0
      %5276 = vmatpush1.msra.mxu0 0.0
      %5277 = vmatprep.subr.mxu0 0.0
      %5278 = vmatpush1.msra.mxu0 0.0
      %5279 = vmatprep.subr.mxu0 0.0
      %5280 = vmatpush1.msra.mxu0 0.0
      %5281 = vmatprep.subr.mxu0 0.0
      %5282 = vmatpush1.msra.mxu0 0.0
      %5283 = vmatprep.subr.mxu0 0.0
      %5284 = vmatpush1.msra.mxu0 0.0
      %5285 = vmatprep.subr.mxu0 0.0
      %5286 = vmatpush1.msra.mxu0 0.0
      %5287 = vmatprep.subr.mxu0 0.0
      %5288 = vmatpush1.msra.mxu0 0.0
      %5289 = vmatprep.subr.mxu0 0.0
      %5290 = vmatpush1.msra.mxu0 0.0
      %5291 = vmatprep.subr.mxu0 0.0
      %5292 = vmatpush1.msra.mxu0 0.0
      %5293 = vmatprep.subr.mxu0 0.0
      %5294 = vmatpush1.msra.mxu0 0.0
      %5295 = vmatprep.subr.mxu0 0.0
      %5296 = vmatpush1.msra.mxu0 0.0
      %5297 = vmatprep.subr.mxu0 0.0
      %5298 = vmatpush1.msra.mxu0 0.0
      %5299 = vmatprep.subr.mxu0 0.0
      %5300 = vmatpush1.msra.mxu0 0.0
      %5301 = vmatprep.subr.mxu0 0.0
      %5302 = vmatpush1.msra.mxu0 0.0
      %5303 = vmatprep.subr.mxu0 0.0
      %5304 = vmatpush1.msra.mxu0 0.0
      %5305 = vmatprep.subr.mxu0 0.0
      %5306 = vmatpush1.msra.mxu0 0.0
      %5307 = vmatprep.subr.mxu0 0.0
      %5308 = vmatpush1.msra.mxu0 0.0
      %5309 = vmatprep.subr.mxu0 0.0
      %5310 = vmatpush1.msra.mxu0 0.0
      %5311 = vmatprep.subr.mxu0 0.0
      %5312 = vmatpush1.msra.mxu0 0.0
      %5313 = vmatprep.subr.mxu0 0.0
      %5314 = vmatpush1.msra.mxu0 0.0
      %5315 = vmatprep.subr.mxu0 0.0
      %5316 = vmatpush1.msra.mxu0 0.0
      %5317 = vmatprep.subr.mxu0 0.0
      %5318 = vmatpush1.msra.mxu0 0.0
      %5319 = vmatprep.mubr.f32.mxu0 0.0
      %v5320 = vand.u32 %v4856, 4294901760
      %5321 = vmatmul.mubr.f32.gmra.mrb[0].mxu0 %v5320
      %v5322 = vpop.f32.mrb[0].mxu0
      %v5323 = vadd.f32 %v5249, %v5322
      %v5324 = vpop.f32.mrb[0].mxu0
      %v5325 = vadd.f32 %v5251, %v5324
      %5326 = vdwg.mxu0
      %v5328 = vsel %vm388, %v4844, 0
      %v5331 = vsel %vm392, %v4840, 0
      %v5334 = vsel %vm392, %v4841, 0
      %v5336 = vand.u32 %v5334, 4294901760
      %5337 = vmatprep.subr.mxu0 %v5336
      %v5338 = vand.u32 %v5331, 4294901760
      %5339 = vmatpush1.msra.mxu0 %v5338
      %5340 = vmatprep.subr.mxu0 0.0
      %5341 = vmatpush1.msra.mxu0 0.0
      %5342 = vmatprep.subr.mxu0 0.0
      %5343 = vmatpush1.msra.mxu0 0.0
      %5344 = vmatprep.subr.mxu0 0.0
      %5345 = vmatpush1.msra.mxu0 0.0
      %5346 = vmatprep.subr.mxu0 0.0
      %5347 = vmatpush1.msra.mxu0 0.0
      %5348 = vmatprep.subr.mxu0 0.0
      %5349 = vmatpush1.msra.mxu0 0.0
      %5350 = vmatprep.subr.mxu0 0.0
      %5351 = vmatpush1.msra.mxu0 0.0
      %5352 = vmatprep.subr.mxu0 0.0
      %5353 = vmatpush1.msra.mxu0 0.0
      %5354 = vmatprep.subr.mxu0 0.0
      %5355 = vmatpush1.msra.mxu0 0.0
      %5356 = vmatprep.subr.mxu0 0.0
      %5357 = vmatpush1.msra.mxu0 0.0
      %5358 = vmatprep.subr.mxu0 0.0
      %5359 = vmatpush1.msra.mxu0 0.0
      %5360 = vmatprep.subr.mxu0 0.0
      %5361 = vmatpush1.msra.mxu0 0.0
      %5362 = vmatprep.subr.mxu0 0.0
      %5363 = vmatpush1.msra.mxu0 0.0
      %5364 = vmatprep.subr.mxu0 0.0
      %5365 = vmatpush1.msra.mxu0 0.0
      %5366 = vmatprep.subr.mxu0 0.0
      %5367 = vmatpush1.msra.mxu0 0.0
      %5368 = vmatprep.subr.mxu0 0.0
      %5369 = vmatpush1.msra.mxu0 0.0
      %5370 = vmatprep.subr.mxu0 0.0
      %5371 = vmatpush1.msra.mxu0 0.0
      %5372 = vmatprep.subr.mxu0 0.0
      %5373 = vmatpush1.msra.mxu0 0.0
      %5374 = vmatprep.subr.mxu0 0.0
      %5375 = vmatpush1.msra.mxu0 0.0
      %5376 = vmatprep.subr.mxu0 0.0
      %5377 = vmatpush1.msra.mxu0 0.0
      %5378 = vmatprep.subr.mxu0 0.0
      %5379 = vmatpush1.msra.mxu0 0.0
      %5380 = vmatprep.subr.mxu0 0.0
      %5381 = vmatpush1.msra.mxu0 0.0
      %5382 = vmatprep.subr.mxu0 0.0
      %5383 = vmatpush1.msra.mxu0 0.0
      %5384 = vmatprep.subr.mxu0 0.0
      %5385 = vmatpush1.msra.mxu0 0.0
      %5386 = vmatprep.subr.mxu0 0.0
      %5387 = vmatpush1.msra.mxu0 0.0
      %5388 = vmatprep.subr.mxu0 0.0
      %5389 = vmatpush1.msra.mxu0 0.0
      %5390 = vmatprep.subr.mxu0 0.0
      %5391 = vmatpush1.msra.mxu0 0.0
      %5392 = vmatprep.subr.mxu0 0.0
      %5393 = vmatpush1.msra.mxu0 0.0
      %5394 = vmatprep.subr.mxu0 0.0
      %5395 = vmatpush1.msra.mxu0 0.0
      %5396 = vmatprep.subr.mxu0 0.0
      %5397 = vmatpush1.msra.mxu0 0.0
      %5398 = vmatprep.subr.mxu0 0.0
      %5399 = vmatpush1.msra.mxu0 0.0
      %5400 = vmatprep.subr.mxu0 0.0
      %5401 = vmatpush1.msra.mxu0 0.0
      %5402 = vmatprep.mubr.f32.mxu0 0.0
      %v5403 = vand.u32 %v5328, 4294901760
      %v5404 = vsub.f32 %v5328, %v5403
      %v5405 = vand.u32 %v5404, 4294901760
      %v5406 = vsub.f32 %v5404, %v5405
      %v5407 = vand.u32 %v5406, 4294901760
      %5408 = vmatmul.mubr.f32.gmra.mrb[0].mxu0 %v5407
      %v5409 = vpop.f32.mrb[0].mxu0
      %v5410 = vadd.f32 %v5323, %v5409
      %v5411 = vpop.f32.mrb[0].mxu0
      %v5412 = vadd.f32 %v5325, %v5411
      %5413 = vdwg.mxu0
      %v5414 = vand.u32 %v5334, 4294901760
      %v5415 = vsub.f32 %v5334, %v5414
      %v5416 = vand.u32 %v5415, 4294901760
      %v5417 = vsub.f32 %v5415, %v5416
      %v5418 = vand.u32 %v5417, 4294901760
      %5419 = vmatprep.subr.mxu0 %v5418
      %v5420 = vand.u32 %v5331, 4294901760
      %v5421 = vsub.f32 %v5331, %v5420
      %v5422 = vand.u32 %v5421, 4294901760
      %v5423 = vsub.f32 %v5421, %v5422
      %v5424 = vand.u32 %v5423, 4294901760
      %5425 = vmatpush1.msra.mxu0 %v5424
      %5426 = vmatprep.subr.mxu0 0.0
      %5427 = vmatpush1.msra.mxu0 0.0
      %5428 = vmatprep.subr.mxu0 0.0
      %5429 = vmatpush1.msra.mxu0 0.0
      %5430 = vmatprep.subr.mxu0 0.0
      %5431 = vmatpush1.msra.mxu0 0.0
      %5432 = vmatprep.subr.mxu0 0.0
      %5433 = vmatpush1.msra.mxu0 0.0
      %5434 = vmatprep.subr.mxu0 0.0
      %5435 = vmatpush1.msra.mxu0 0.0
      %5436 = vmatprep.subr.mxu0 0.0
      %5437 = vmatpush1.msra.mxu0 0.0
      %5438 = vmatprep.subr.mxu0 0.0
      %5439 = vmatpush1.msra.mxu0 0.0
      %5440 = vmatprep.subr.mxu0 0.0
      %5441 = vmatpush1.msra.mxu0 0.0
      %5442 = vmatprep.subr.mxu0 0.0
      %5443 = vmatpush1.msra.mxu0 0.0
      %5444 = vmatprep.subr.mxu0 0.0
      %5445 = vmatpush1.msra.mxu0 0.0
      %5446 = vmatprep.subr.mxu0 0.0
      %5447 = vmatpush1.msra.mxu0 0.0
      %5448 = vmatprep.subr.mxu0 0.0
      %5449 = vmatpush1.msra.mxu0 0.0
      %5450 = vmatprep.subr.mxu0 0.0
      %5451 = vmatpush1.msra.mxu0 0.0
      %5452 = vmatprep.subr.mxu0 0.0
      %5453 = vmatpush1.msra.mxu0 0.0
      %5454 = vmatprep.subr.mxu0 0.0
      %5455 = vmatpush1.msra.mxu0 0.0
      %5456 = vmatprep.subr.mxu0 0.0
      %5457 = vmatpush1.msra.mxu0 0.0
      %5458 = vmatprep.subr.mxu0 0.0
      %5459 = vmatpush1.msra.mxu0 0.0
      %5460 = vmatprep.subr.mxu0 0.0
      %5461 = vmatpush1.msra.mxu0 0.0
      %5462 = vmatprep.subr.mxu0 0.0
      %5463 = vmatpush1.msra.mxu0 0.0
      %5464 = vmatprep.subr.mxu0 0.0
      %5465 = vmatpush1.msra.mxu0 0.0
      %5466 = vmatprep.subr.mxu0 0.0
      %5467 = vmatpush1.msra.mxu0 0.0
      %5468 = vmatprep.subr.mxu0 0.0
      %5469 = vmatpush1.msra.mxu0 0.0
      %5470 = vmatprep.subr.mxu0 0.0
      %5471 = vmatpush1.msra.mxu0 0.0
      %5472 = vmatprep.subr.mxu0 0.0
      %5473 = vmatpush1.msra.mxu0 0.0
      %5474 = vmatprep.subr.mxu0 0.0
      %5475 = vmatpush1.msra.mxu0 0.0
      %5476 = vmatprep.subr.mxu0 0.0
      %5477 = vmatpush1.msra.mxu0 0.0
      %5478 = vmatprep.subr.mxu0 0.0
      %5479 = vmatpush1.msra.mxu0 0.0
      %5480 = vmatprep.subr.mxu0 0.0
      %5481 = vmatpush1.msra.mxu0 0.0
      %5482 = vmatprep.subr.mxu0 0.0
      %5483 = vmatpush1.msra.mxu0 0.0
      %5484 = vmatprep.subr.mxu0 0.0
      %5485 = vmatpush1.msra.mxu0 0.0
      %5486 = vmatprep.subr.mxu0 0.0
      %5487 = vmatpush1.msra.mxu0 0.0
      %5488 = vmatprep.mubr.f32.mxu0 0.0
      %v5489 = vand.u32 %v5328, 4294901760
      %5490 = vmatmul.mubr.f32.gmra.mrb[0].mxu0 %v5489
      %v5491 = vpop.f32.mrb[0].mxu0
      %v5492 = vadd.f32 %v5410, %v5491
      %v5493 = vpop.f32.mrb[0].mxu0
      %v5494 = vadd.f32 %v5412, %v5493
      %5495 = vdwg.mxu0
      %v5496 = vand.u32 %v5334, 4294901760
      %v5497 = vsub.f32 %v5334, %v5496
      %5498 = vmatprep.subr.mxu0 %v5497
      %v5499 = vand.u32 %v5331, 4294901760
      %v5500 = vsub.f32 %v5331, %v5499
      %5501 = vmatpush1.msra.mxu0 %v5500
      %5502 = vmatprep.subr.mxu0 0.0
      %5503 = vmatpush1.msra.mxu0 0.0
      %5504 = vmatprep.subr.mxu0 0.0
      %5505 = vmatpush1.msra.mxu0 0.0
      %5506 = vmatprep.subr.mxu0 0.0
      %5507 = vmatpush1.msra.mxu0 0.0
      %5508 = vmatprep.subr.mxu0 0.0
      %5509 = vmatpush1.msra.mxu0 0.0
      %5510 = vmatprep.subr.mxu0 0.0
      %5511 = vmatpush1.msra.mxu0 0.0
      %5512 = vmatprep.subr.mxu0 0.0
      %5513 = vmatpush1.msra.mxu0 0.0
      %5514 = vmatprep.subr.mxu0 0.0
      %5515 = vmatpush1.msra.mxu0 0.0
      %5516 = vmatprep.subr.mxu0 0.0
      %5517 = vmatpush1.msra.mxu0 0.0
      %5518 = vmatprep.subr.mxu0 0.0
      %5519 = vmatpush1.msra.mxu0 0.0
      %5520 = vmatprep.subr.mxu0 0.0
      %5521 = vmatpush1.msra.mxu0 0.0
      %5522 = vmatprep.subr.mxu0 0.0
      %5523 = vmatpush1.msra.mxu0 0.0
      %5524 = vmatprep.subr.mxu0 0.0
      %5525 = vmatpush1.msra.mxu0 0.0
      %5526 = vmatprep.subr.mxu0 0.0
      %5527 = vmatpush1.msra.mxu0 0.0
      %5528 = vmatprep.subr.mxu0 0.0
      %5529 = vmatpush1.msra.mxu0 0.0
      %5530 = vmatprep.subr.mxu0 0.0
      %5531 = vmatpush1.msra.mxu0 0.0
      %5532 = vmatprep.subr.mxu0 0.0
      %5533 = vmatpush1.msra.mxu0 0.0
      %5534 = vmatprep.subr.mxu0 0.0
      %5535 = vmatpush1.msra.mxu0 0.0
      %5536 = vmatprep.subr.mxu0 0.0
      %5537 = vmatpush1.msra.mxu0 0.0
      %5538 = vmatprep.subr.mxu0 0.0
      %5539 = vmatpush1.msra.mxu0 0.0
      %5540 = vmatprep.subr.mxu0 0.0
      %5541 = vmatpush1.msra.mxu0 0.0
      %5542 = vmatprep.subr.mxu0 0.0
      %5543 = vmatpush1.msra.mxu0 0.0
      %5544 = vmatprep.subr.mxu0 0.0
      %5545 = vmatpush1.msra.mxu0 0.0
      %5546 = vmatprep.subr.mxu0 0.0
      %5547 = vmatpush1.msra.mxu0 0.0
      %5548 = vmatprep.subr.mxu0 0.0
      %5549 = vmatpush1.msra.mxu0 0.0
      %5550 = vmatprep.subr.mxu0 0.0
      %5551 = vmatpush1.msra.mxu0 0.0
      %5552 = vmatprep.subr.mxu0 0.0
      %5553 = vmatpush1.msra.mxu0 0.0
      %5554 = vmatprep.subr.mxu0 0.0
      %5555 = vmatpush1.msra.mxu0 0.0
      %5556 = vmatprep.subr.mxu0 0.0
      %5557 = vmatpush1.msra.mxu0 0.0
      %5558 = vmatprep.subr.mxu0 0.0
      %5559 = vmatpush1.msra.mxu0 0.0
      %5560 = vmatprep.subr.mxu0 0.0
      %5561 = vmatpush1.msra.mxu0 0.0
      %5562 = vmatprep.subr.mxu0 0.0
      %5563 = vmatpush1.msra.mxu0 0.0
      %5564 = vmatprep.mubr.f32.mxu0 0.0
      %v5565 = vand.u32 %v5328, 4294901760
      %v5566 = vsub.f32 %v5328, %v5565
      %5567 = vmatmul.mubr.f32.gmra.mrb[0].mxu0 %v5566
      %v5568 = vpop.f32.mrb[0].mxu0
      %v5569 = vadd.f32 %v5492, %v5568
      %v5570 = vpop.f32.mrb[0].mxu0
      %v5571 = vadd.f32 %v5494, %v5570
      %5572 = vdwg.mxu0
      %v5573 = vand.u32 %v5334, 4294901760
      %5574 = vmatprep.subr.mxu0 %v5573
      %v5575 = vand.u32 %v5331, 4294901760
      %5576 = vmatpush1.msra.mxu0 %v5575
      %5577 = vmatprep.subr.mxu0 0.0
      %5578 = vmatpush1.msra.mxu0 0.0
      %5579 = vmatprep.subr.mxu0 0.0
      %5580 = vmatpush1.msra.mxu0 0.0
      %5581 = vmatprep.subr.mxu0 0.0
      %5582 = vmatpush1.msra.mxu0 0.0
      %5583 = vmatprep.subr.mxu0 0.0
      %5584 = vmatpush1.msra.mxu0 0.0
      %5585 = vmatprep.subr.mxu0 0.0
      %5586 = vmatpush1.msra.mxu0 0.0
      %5587 = vmatprep.subr.mxu0 0.0
      %5588 = vmatpush1.msra.mxu0 0.0
      %5589 = vmatprep.subr.mxu0 0.0
      %5590 = vmatpush1.msra.mxu0 0.0
      %5591 = vmatprep.subr.mxu0 0.0
      %5592 = vmatpush1.msra.mxu0 0.0
      %5593 = vmatprep.subr.mxu0 0.0
      %5594 = vmatpush1.msra.mxu0 0.0
      %5595 = vmatprep.subr.mxu0 0.0
      %5596 = vmatpush1.msra.mxu0 0.0
      %5597 = vmatprep.subr.mxu0 0.0
      %5598 = vmatpush1.msra.mxu0 0.0
      %5599 = vmatprep.subr.mxu0 0.0
      %5600 = vmatpush1.msra.mxu0 0.0
      %5601 = vmatprep.subr.mxu0 0.0
      %5602 = vmatpush1.msra.mxu0 0.0
      %5603 = vmatprep.subr.mxu0 0.0
      %5604 = vmatpush1.msra.mxu0 0.0
      %5605 = vmatprep.subr.mxu0 0.0
      %5606 = vmatpush1.msra.mxu0 0.0
      %5607 = vmatprep.subr.mxu0 0.0
      %5608 = vmatpush1.msra.mxu0 0.0
      %5609 = vmatprep.subr.mxu0 0.0
      %5610 = vmatpush1.msra.mxu0 0.0
      %5611 = vmatprep.subr.mxu0 0.0
      %5612 = vmatpush1.msra.mxu0 0.0
      %5613 = vmatprep.subr.mxu0 0.0
      %5614 = vmatpush1.msra.mxu0 0.0
      %5615 = vmatprep.subr.mxu0 0.0
      %5616 = vmatpush1.msra.mxu0 0.0
      %5617 = vmatprep.subr.mxu0 0.0
      %5618 = vmatpush1.msra.mxu0 0.0
      %5619 = vmatprep.subr.mxu0 0.0
      %5620 = vmatpush1.msra.mxu0 0.0
      %5621 = vmatprep.subr.mxu0 0.0
      %5622 = vmatpush1.msra.mxu0 0.0
      %5623 = vmatprep.subr.mxu0 0.0
      %5624 = vmatpush1.msra.mxu0 0.0
      %5625 = vmatprep.subr.mxu0 0.0
      %5626 = vmatpush1.msra.mxu0 0.0
      %5627 = vmatprep.subr.mxu0 0.0
      %5628 = vmatpush1.msra.mxu0 0.0
      %5629 = vmatprep.subr.mxu0 0.0
      %5630 = vmatpush1.msra.mxu0 0.0
      %5631 = vmatprep.subr.mxu0 0.0
      %5632 = vmatpush1.msra.mxu0 0.0
      %5633 = vmatprep.subr.mxu0 0.0
      %5634 = vmatpush1.msra.mxu0 0.0
      %5635 = vmatprep.subr.mxu0 0.0
      %5636 = vmatpush1.msra.mxu0 0.0
      %5637 = vmatprep.subr.mxu0 0.0
      %5638 = vmatpush1.msra.mxu0 0.0
      %5639 = vmatprep.mubr.f32.mxu0 0.0
      %v5640 = vand.u32 %v5328, 4294901760
      %v5641 = vsub.f32 %v5328, %v5640
      %v5642 = vand.u32 %v5641, 4294901760
      %5643 = vmatmul.mubr.f32.gmra.mrb[0].mxu0 %v5642
      %v5644 = vpop.f32.mrb[0].mxu0
      %v5645 = vadd.f32 %v5569, %v5644
      %v5646 = vpop.f32.mrb[0].mxu0
      %v5647 = vadd.f32 %v5571, %v5646
      %5648 = vdwg.mxu0
      %v5649 = vand.u32 %v5334, 4294901760
      %v5650 = vsub.f32 %v5334, %v5649
      %v5651 = vand.u32 %v5650, 4294901760
      %5652 = vmatprep.subr.mxu0 %v5651
      %v5653 = vand.u32 %v5331, 4294901760
      %v5654 = vsub.f32 %v5331, %v5653
      %v5655 = vand.u32 %v5654, 4294901760
      %5656 = vmatpush1.msra.mxu0 %v5655
      %5657 = vmatprep.subr.mxu0 0.0
      %5658 = vmatpush1.msra.mxu0 0.0
      %5659 = vmatprep.subr.mxu0 0.0
      %5660 = vmatpush1.msra.mxu0 0.0
      %5661 = vmatprep.subr.mxu0 0.0
      %5662 = vmatpush1.msra.mxu0 0.0
      %5663 = vmatprep.subr.mxu0 0.0
      %5664 = vmatpush1.msra.mxu0 0.0
      %5665 = vmatprep.subr.mxu0 0.0
      %5666 = vmatpush1.msra.mxu0 0.0
      %5667 = vmatprep.subr.mxu0 0.0
      %5668 = vmatpush1.msra.mxu0 0.0
      %5669 = vmatprep.subr.mxu0 0.0
      %5670 = vmatpush1.msra.mxu0 0.0
      %5671 = vmatprep.subr.mxu0 0.0
      %5672 = vmatpush1.msra.mxu0 0.0
      %5673 = vmatprep.subr.mxu0 0.0
      %5674 = vmatpush1.msra.mxu0 0.0
      %5675 = vmatprep.subr.mxu0 0.0
      %5676 = vmatpush1.msra.mxu0 0.0
      %5677 = vmatprep.subr.mxu0 0.0
      %5678 = vmatpush1.msra.mxu0 0.0
      %5679 = vmatprep.subr.mxu0 0.0
      %5680 = vmatpush1.msra.mxu0 0.0
      %5681 = vmatprep.subr.mxu0 0.0
      %5682 = vmatpush1.msra.mxu0 0.0
      %5683 = vmatprep.subr.mxu0 0.0
      %5684 = vmatpush1.msra.mxu0 0.0
      %5685 = vmatprep.subr.mxu0 0.0
      %5686 = vmatpush1.msra.mxu0 0.0
      %5687 = vmatprep.subr.mxu0 0.0
      %5688 = vmatpush1.msra.mxu0 0.0
      %5689 = vmatprep.subr.mxu0 0.0
      %5690 = vmatpush1.msra.mxu0 0.0
      %5691 = vmatprep.subr.mxu0 0.0
      %5692 = vmatpush1.msra.mxu0 0.0
      %5693 = vmatprep.subr.mxu0 0.0
      %5694 = vmatpush1.msra.mxu0 0.0
      %5695 = vmatprep.subr.mxu0 0.0
      %5696 = vmatpush1.msra.mxu0 0.0
      %5697 = vmatprep.subr.mxu0 0.0
      %5698 = vmatpush1.msra.mxu0 0.0
      %5699 = vmatprep.subr.mxu0 0.0
      %5700 = vmatpush1.msra.mxu0 0.0
      %5701 = vmatprep.subr.mxu0 0.0
      %5702 = vmatpush1.msra.mxu0 0.0
      %5703 = vmatprep.subr.mxu0 0.0
      %5704 = vmatpush1.msra.mxu0 0.0
      %5705 = vmatprep.subr.mxu0 0.0
      %5706 = vmatpush1.msra.mxu0 0.0
      %5707 = vmatprep.subr.mxu0 0.0
      %5708 = vmatpush1.msra.mxu0 0.0
      %5709 = vmatprep.subr.mxu0 0.0
      %5710 = vmatpush1.msra.mxu0 0.0
      %5711 = vmatprep.subr.mxu0 0.0
      %5712 = vmatpush1.msra.mxu0 0.0
      %5713 = vmatprep.subr.mxu0 0.0
      %5714 = vmatpush1.msra.mxu0 0.0
      %5715 = vmatprep.subr.mxu0 0.0
      %5716 = vmatpush1.msra.mxu0 0.0
      %5717 = vmatprep.subr.mxu0 0.0
      %5718 = vmatpush1.msra.mxu0 0.0
      %5719 = vmatprep.mubr.f32.mxu0 0.0
      %v5720 = vand.u32 %v5328, 4294901760
      %5721 = vmatmul.mubr.f32.gmra.mrb[0].mxu0 %v5720
      %v5722 = vpop.f32.mrb[0].mxu0
      %v5723 = vadd.f32 %v5645, %v5722
      %v5724 = vpop.f32.mrb[0].mxu0
      %v5725 = vadd.f32 %v5647, %v5724
      %5726 = vdwg.mxu0
      %v5727 = vand.u32 %v5334, 4294901760
      %5728 = vmatprep.subr.mxu0 %v5727
      %v5729 = vand.u32 %v5331, 4294901760
      %5730 = vmatpush1.msra.mxu0 %v5729
      %5731 = vmatprep.subr.mxu0 0.0
      %5732 = vmatpush1.msra.mxu0 0.0
      %5733 = vmatprep.subr.mxu0 0.0
      %5734 = vmatpush1.msra.mxu0 0.0
      %5735 = vmatprep.subr.mxu0 0.0
      %5736 = vmatpush1.msra.mxu0 0.0
      %5737 = vmatprep.subr.mxu0 0.0
      %5738 = vmatpush1.msra.mxu0 0.0
      %5739 = vmatprep.subr.mxu0 0.0
      %5740 = vmatpush1.msra.mxu0 0.0
      %5741 = vmatprep.subr.mxu0 0.0
      %5742 = vmatpush1.msra.mxu0 0.0
      %5743 = vmatprep.subr.mxu0 0.0
      %5744 = vmatpush1.msra.mxu0 0.0
      %5745 = vmatprep.subr.mxu0 0.0
      %5746 = vmatpush1.msra.mxu0 0.0
      %5747 = vmatprep.subr.mxu0 0.0
      %5748 = vmatpush1.msra.mxu0 0.0
      %5749 = vmatprep.subr.mxu0 0.0
      %5750 = vmatpush1.msra.mxu0 0.0
      %5751 = vmatprep.subr.mxu0 0.0
      %5752 = vmatpush1.msra.mxu0 0.0
      %5753 = vmatprep.subr.mxu0 0.0
      %5754 = vmatpush1.msra.mxu0 0.0
      %5755 = vmatprep.subr.mxu0 0.0
      %5756 = vmatpush1.msra.mxu0 0.0
      %5757 = vmatprep.subr.mxu0 0.0
      %5758 = vmatpush1.msra.mxu0 0.0
      %5759 = vmatprep.subr.mxu0 0.0
      %5760 = vmatpush1.msra.mxu0 0.0
      %5761 = vmatprep.subr.mxu0 0.0
      %5762 = vmatpush1.msra.mxu0 0.0
      %5763 = vmatprep.subr.mxu0 0.0
      %5764 = vmatpush1.msra.mxu0 0.0
      %5765 = vmatprep.subr.mxu0 0.0
      %5766 = vmatpush1.msra.mxu0 0.0
      %5767 = vmatprep.subr.mxu0 0.0
      %5768 = vmatpush1.msra.mxu0 0.0
      %5769 = vmatprep.subr.mxu0 0.0
      %5770 = vmatpush1.msra.mxu0 0.0
      %5771 = vmatprep.subr.mxu0 0.0
      %5772 = vmatpush1.msra.mxu0 0.0
      %5773 = vmatprep.subr.mxu0 0.0
      %5774 = vmatpush1.msra.mxu0 0.0
      %5775 = vmatprep.subr.mxu0 0.0
      %5776 = vmatpush1.msra.mxu0 0.0
      %5777 = vmatprep.subr.mxu0 0.0
      %5778 = vmatpush1.msra.mxu0 0.0
      %5779 = vmatprep.subr.mxu0 0.0
      %5780 = vmatpush1.msra.mxu0 0.0
      %5781 = vmatprep.subr.mxu0 0.0
      %5782 = vmatpush1.msra.mxu0 0.0
      %5783 = vmatprep.subr.mxu0 0.0
      %5784 = vmatpush1.msra.mxu0 0.0
      %5785 = vmatprep.subr.mxu0 0.0
      %5786 = vmatpush1.msra.mxu0 0.0
      %5787 = vmatprep.subr.mxu0 0.0
      %5788 = vmatpush1.msra.mxu0 0.0
      %5789 = vmatprep.subr.mxu0 0.0
      %5790 = vmatpush1.msra.mxu0 0.0
      %5791 = vmatprep.subr.mxu0 0.0
      %5792 = vmatpush1.msra.mxu0 0.0
      %5793 = vmatprep.mubr.f32.mxu0 0.0
      %v5794 = vand.u32 %v5328, 4294901760
      %5795 = vmatmul.mubr.f32.gmra.mrb[0].mxu0 %v5794
      %v5796 = vpop.f32.mrb[0].mxu0
      %v5797 = vadd.f32 %v5723, %v5796
      %v5798 = vpop.f32.mrb[0].mxu0
      %v5799 = vadd.f32 %v5725, %v5798
      %5800 = vdwg.mxu0
      %s5801 = scalar_lea.vmem %s4, 8
      %v5802 = vld [vmem:[%s5801] sm:$0xf]
      %v5804 = vsel %vm388, %v5802, 0
      %v5807 = vsel %vm392, %v4842, 0
      %v5810 = vsel %vm392, %v4843, 0
      %v5812 = vand.u32 %v5810, 4294901760
      %5813 = vmatprep.subr.mxu0 %v5812
      %v5814 = vand.u32 %v5807, 4294901760
      %5815 = vmatpush1.msra.mxu0 %v5814
      %5816 = vmatprep.subr.mxu0 0.0
      %5817 = vmatpush1.msra.mxu0 0.0
      %5818 = vmatprep.subr.mxu0 0.0
      %5819 = vmatpush1.msra.mxu0 0.0
      %5820 = vmatprep.subr.mxu0 0.0
      %5821 = vmatpush1.msra.mxu0 0.0
      %5822 = vmatprep.subr.mxu0 0.0
      %5823 = vmatpush1.msra.mxu0 0.0
      %5824 = vmatprep.subr.mxu0 0.0
      %5825 = vmatpush1.msra.mxu0 0.0
      %5826 = vmatprep.subr.mxu0 0.0
      %5827 = vmatpush1.msra.mxu0 0.0
      %5828 = vmatprep.subr.mxu0 0.0
      %5829 = vmatpush1.msra.mxu0 0.0
      %5830 = vmatprep.subr.mxu0 0.0
      %5831 = vmatpush1.msra.mxu0 0.0
      %5832 = vmatprep.subr.mxu0 0.0
      %5833 = vmatpush1.msra.mxu0 0.0
      %5834 = vmatprep.subr.mxu0 0.0
      %5835 = vmatpush1.msra.mxu0 0.0
      %5836 = vmatprep.subr.mxu0 0.0
      %5837 = vmatpush1.msra.mxu0 0.0
      %5838 = vmatprep.subr.mxu0 0.0
      %5839 = vmatpush1.msra.mxu0 0.0
      %5840 = vmatprep.subr.mxu0 0.0
      %5841 = vmatpush1.msra.mxu0 0.0
      %5842 = vmatprep.subr.mxu0 0.0
      %5843 = vmatpush1.msra.mxu0 0.0
      %5844 = vmatprep.subr.mxu0 0.0
      %5845 = vmatpush1.msra.mxu0 0.0
      %5846 = vmatprep.subr.mxu0 0.0
      %5847 = vmatpush1.msra.mxu0 0.0
      %5848 = vmatprep.subr.mxu0 0.0
      %5849 = vmatpush1.msra.mxu0 0.0
      %5850 = vmatprep.subr.mxu0 0.0
      %5851 = vmatpush1.msra.mxu0 0.0
      %5852 = vmatprep.subr.mxu0 0.0
      %5853 = vmatpush1.msra.mxu0 0.0
      %5854 = vmatprep.subr.mxu0 0.0
      %5855 = vmatpush1.msra.mxu0 0.0
      %5856 = vmatprep.subr.mxu0 0.0
      %5857 = vmatpush1.msra.mxu0 0.0
      %5858 = vmatprep.subr.mxu0 0.0
      %5859 = vmatpush1.msra.mxu0 0.0
      %5860 = vmatprep.subr.mxu0 0.0
      %5861 = vmatpush1.msra.mxu0 0.0
      %5862 = vmatprep.subr.mxu0 0.0
      %5863 = vmatpush1.msra.mxu0 0.0
      %5864 = vmatprep.subr.mxu0 0.0
      %5865 = vmatpush1.msra.mxu0 0.0
      %5866 = vmatprep.subr.mxu0 0.0
      %5867 = vmatpush1.msra.mxu0 0.0
      %5868 = vmatprep.subr.mxu0 0.0
      %5869 = vmatpush1.msra.mxu0 0.0
      %5870 = vmatprep.subr.mxu0 0.0
      %5871 = vmatpush1.msra.mxu0 0.0
      %5872 = vmatprep.subr.mxu0 0.0
      %5873 = vmatpush1.msra.mxu0 0.0
      %5874 = vmatprep.subr.mxu0 0.0
      %5875 = vmatpush1.msra.mxu0 0.0
      %5876 = vmatprep.subr.mxu0 0.0
      %5877 = vmatpush1.msra.mxu0 0.0
      %5878 = vmatprep.mubr.f32.mxu0 0.0
      %v5879 = vand.u32 %v5804, 4294901760
      %v5880 = vsub.f32 %v5804, %v5879
      %v5881 = vand.u32 %v5880, 4294901760
      %v5882 = vsub.f32 %v5880, %v5881
      %v5883 = vand.u32 %v5882, 4294901760
      %5884 = vmatmul.mubr.f32.gmra.mrb[0].mxu0 %v5883
      %v5885 = vpop.f32.mrb[0].mxu0
      %v5886 = vadd.f32 0.0, %v5885
      %v5887 = vpop.f32.mrb[0].mxu0
      %v5888 = vadd.f32 0.0, %v5887
      %5889 = vdwg.mxu0
      %v5890 = vand.u32 %v5810, 4294901760
      %v5891 = vsub.f32 %v5810, %v5890
      %v5892 = vand.u32 %v5891, 4294901760
      %v5893 = vsub.f32 %v5891, %v5892
      %v5894 = vand.u32 %v5893, 4294901760
      %5895 = vmatprep.subr.mxu0 %v5894
      %v5896 = vand.u32 %v5807, 4294901760
      %v5897 = vsub.f32 %v5807, %v5896
      %v5898 = vand.u32 %v5897, 4294901760
      %v5899 = vsub.f32 %v5897, %v5898
      %v5900 = vand.u32 %v5899, 4294901760
      %5901 = vmatpush1.msra.mxu0 %v5900
      %5902 = vmatprep.subr.mxu0 0.0
      %5903 = vmatpush1.msra.mxu0 0.0
      %5904 = vmatprep.subr.mxu0 0.0
      %5905 = vmatpush1.msra.mxu0 0.0
      %5906 = vmatprep.subr.mxu0 0.0
      %5907 = vmatpush1.msra.mxu0 0.0
      %5908 = vmatprep.subr.mxu0 0.0
      %5909 = vmatpush1.msra.mxu0 0.0
      %5910 = vmatprep.subr.mxu0 0.0
      %5911 = vmatpush1.msra.mxu0 0.0
      %5912 = vmatprep.subr.mxu0 0.0
      %5913 = vmatpush1.msra.mxu0 0.0
      %5914 = vmatprep.subr.mxu0 0.0
      %5915 = vmatpush1.msra.mxu0 0.0
      %5916 = vmatprep.subr.mxu0 0.0
      %5917 = vmatpush1.msra.mxu0 0.0
      %5918 = vmatprep.subr.mxu0 0.0
      %5919 = vmatpush1.msra.mxu0 0.0
      %5920 = vmatprep.subr.mxu0 0.0
      %5921 = vmatpush1.msra.mxu0 0.0
      %5922 = vmatprep.subr.mxu0 0.0
      %5923 = vmatpush1.msra.mxu0 0.0
      %5924 = vmatprep.subr.mxu0 0.0
      %5925 = vmatpush1.msra.mxu0 0.0
      %5926 = vmatprep.subr.mxu0 0.0
      %5927 = vmatpush1.msra.mxu0 0.0
      %5928 = vmatprep.subr.mxu0 0.0
      %5929 = vmatpush1.msra.mxu0 0.0
      %5930 = vmatprep.subr.mxu0 0.0
      %5931 = vmatpush1.msra.mxu0 0.0
      %5932 = vmatprep.subr.mxu0 0.0
      %5933 = vmatpush1.msra.mxu0 0.0
      %5934 = vmatprep.subr.mxu0 0.0
      %5935 = vmatpush1.msra.mxu0 0.0
      %5936 = vmatprep.subr.mxu0 0.0
      %5937 = vmatpush1.msra.mxu0 0.0
      %5938 = vmatprep.subr.mxu0 0.0
      %5939 = vmatpush1.msra.mxu0 0.0
      %5940 = vmatprep.subr.mxu0 0.0
      %5941 = vmatpush1.msra.mxu0 0.0
      %5942 = vmatprep.subr.mxu0 0.0
      %5943 = vmatpush1.msra.mxu0 0.0
      %5944 = vmatprep.subr.mxu0 0.0
      %5945 = vmatpush1.msra.mxu0 0.0
      %5946 = vmatprep.subr.mxu0 0.0
      %5947 = vmatpush1.msra.mxu0 0.0
      %5948 = vmatprep.subr.mxu0 0.0
      %5949 = vmatpush1.msra.mxu0 0.0
      %5950 = vmatprep.subr.mxu0 0.0
      %5951 = vmatpush1.msra.mxu0 0.0
      %5952 = vmatprep.subr.mxu0 0.0
      %5953 = vmatpush1.msra.mxu0 0.0
      %5954 = vmatprep.subr.mxu0 0.0
      %5955 = vmatpush1.msra.mxu0 0.0
      %5956 = vmatprep.subr.mxu0 0.0
      %5957 = vmatpush1.msra.mxu0 0.0
      %5958 = vmatprep.subr.mxu0 0.0
      %5959 = vmatpush1.msra.mxu0 0.0
      %5960 = vmatprep.subr.mxu0 0.0
      %5961 = vmatpush1.msra.mxu0 0.0
      %5962 = vmatprep.subr.mxu0 0.0
      %5963 = vmatpush1.msra.mxu0 0.0
      %5964 = vmatprep.mubr.f32.mxu0 0.0
      %v5965 = vand.u32 %v5804, 4294901760
      %5966 = vmatmul.mubr.f32.gmra.mrb[0].mxu0 %v5965
      %v5967 = vpop.f32.mrb[0].mxu0
      %v5968 = vadd.f32 %v5886, %v5967
      %v5969 = vpop.f32.mrb[0].mxu0
      %v5970 = vadd.f32 %v5888, %v5969
      %5971 = vdwg.mxu0
      %v5972 = vand.u32 %v5810, 4294901760
      %v5973 = vsub.f32 %v5810, %v5972
      %5974 = vmatprep.subr.mxu0 %v5973
      %v5975 = vand.u32 %v5807, 4294901760
      %v5976 = vsub.f32 %v5807, %v5975
      %5977 = vmatpush1.msra.mxu0 %v5976
      %5978 = vmatprep.subr.mxu0 0.0
      %5979 = vmatpush1.msra.mxu0 0.0
      %5980 = vmatprep.subr.mxu0 0.0
      %5981 = vmatpush1.msra.mxu0 0.0
      %5982 = vmatprep.subr.mxu0 0.0
      %5983 = vmatpush1.msra.mxu0 0.0
      %5984 = vmatprep.subr.mxu0 0.0
      %5985 = vmatpush1.msra.mxu0 0.0
      %5986 = vmatprep.subr.mxu0 0.0
      %5987 = vmatpush1.msra.mxu0 0.0
      %5988 = vmatprep.subr.mxu0 0.0
      %5989 = vmatpush1.msra.mxu0 0.0
      %5990 = vmatprep.subr.mxu0 0.0
      %5991 = vmatpush1.msra.mxu0 0.0
      %5992 = vmatprep.subr.mxu0 0.0
      %5993 = vmatpush1.msra.mxu0 0.0
      %5994 = vmatprep.subr.mxu0 0.0
      %5995 = vmatpush1.msra.mxu0 0.0
      %5996 = vmatprep.subr.mxu0 0.0
      %5997 = vmatpush1.msra.mxu0 0.0
      %5998 = vmatprep.subr.mxu0 0.0
      %5999 = vmatpush1.msra.mxu0 0.0
      %6000 = vmatprep.subr.mxu0 0.0
      %6001 = vmatpush1.msra.mxu0 0.0
      %6002 = vmatprep.subr.mxu0 0.0
      %6003 = vmatpush1.msra.mxu0 0.0
      %6004 = vmatprep.subr.mxu0 0.0
      %6005 = vmatpush1.msra.mxu0 0.0
      %6006 = vmatprep.subr.mxu0 0.0
      %6007 = vmatpush1.msra.mxu0 0.0
      %6008 = vmatprep.subr.mxu0 0.0
      %6009 = vmatpush1.msra.mxu0 0.0
      %6010 = vmatprep.subr.mxu0 0.0
      %6011 = vmatpush1.msra.mxu0 0.0
      %6012 = vmatprep.subr.mxu0 0.0
      %6013 = vmatpush1.msra.mxu0 0.0
      %6014 = vmatprep.subr.mxu0 0.0
      %6015 = vmatpush1.msra.mxu0 0.0
      %6016 = vmatprep.subr.mxu0 0.0
      %6017 = vmatpush1.msra.mxu0 0.0
      %6018 = vmatprep.subr.mxu0 0.0
      %6019 = vmatpush1.msra.mxu0 0.0
      %6020 = vmatprep.subr.mxu0 0.0
      %6021 = vmatpush1.msra.mxu0 0.0
      %6022 = vmatprep.subr.mxu0 0.0
      %6023 = vmatpush1.msra.mxu0 0.0
      %6024 = vmatprep.subr.mxu0 0.0
      %6025 = vmatpush1.msra.mxu0 0.0
      %6026 = vmatprep.subr.mxu0 0.0
      %6027 = vmatpush1.msra.mxu0 0.0
      %6028 = vmatprep.subr.mxu0 0.0
      %6029 = vmatpush1.msra.mxu0 0.0
      %6030 = vmatprep.subr.mxu0 0.0
      %6031 = vmatpush1.msra.mxu0 0.0
      %6032 = vmatprep.subr.mxu0 0.0
      %6033 = vmatpush1.msra.mxu0 0.0
      %6034 = vmatprep.subr.mxu0 0.0
      %6035 = vmatpush1.msra.mxu0 0.0
      %6036 = vmatprep.subr.mxu0 0.0
      %6037 = vmatpush1.msra.mxu0 0.0
      %6038 = vmatprep.subr.mxu0 0.0
      %6039 = vmatpush1.msra.mxu0 0.0
      %6040 = vmatprep.mubr.f32.mxu0 0.0
      %v6041 = vand.u32 %v5804, 4294901760
      %v6042 = vsub.f32 %v5804, %v6041
      %6043 = vmatmul.mubr.f32.gmra.mrb[0].mxu0 %v6042
      %v6044 = vpop.f32.mrb[0].mxu0
      %v6045 = vadd.f32 %v5968, %v6044
      %v6046 = vpop.f32.mrb[0].mxu0
      %v6047 = vadd.f32 %v5970, %v6046
      %6048 = vdwg.mxu0
      %v6049 = vand.u32 %v5810, 4294901760
      %6050 = vmatprep.subr.mxu0 %v6049
      %v6051 = vand.u32 %v5807, 4294901760
      %6052 = vmatpush1.msra.mxu0 %v6051
      %6053 = vmatprep.subr.mxu0 0.0
      %6054 = vmatpush1.msra.mxu0 0.0
      %6055 = vmatprep.subr.mxu0 0.0
      %6056 = vmatpush1.msra.mxu0 0.0
      %6057 = vmatprep.subr.mxu0 0.0
      %6058 = vmatpush1.msra.mxu0 0.0
      %6059 = vmatprep.subr.mxu0 0.0
      %6060 = vmatpush1.msra.mxu0 0.0
      %6061 = vmatprep.subr.mxu0 0.0
      %6062 = vmatpush1.msra.mxu0 0.0
      %6063 = vmatprep.subr.mxu0 0.0
      %6064 = vmatpush1.msra.mxu0 0.0
      %6065 = vmatprep.subr.mxu0 0.0
      %6066 = vmatpush1.msra.mxu0 0.0
      %6067 = vmatprep.subr.mxu0 0.0
      %6068 = vmatpush1.msra.mxu0 0.0
      %6069 = vmatprep.subr.mxu0 0.0
      %6070 = vmatpush1.msra.mxu0 0.0
      %6071 = vmatprep.subr.mxu0 0.0
      %6072 = vmatpush1.msra.mxu0 0.0
      %6073 = vmatprep.subr.mxu0 0.0
      %6074 = vmatpush1.msra.mxu0 0.0
      %6075 = vmatprep.subr.mxu0 0.0
      %6076 = vmatpush1.msra.mxu0 0.0
      %6077 = vmatprep.subr.mxu0 0.0
      %6078 = vmatpush1.msra.mxu0 0.0
      %6079 = vmatprep.subr.mxu0 0.0
      %6080 = vmatpush1.msra.mxu0 0.0
      %6081 = vmatprep.subr.mxu0 0.0
      %6082 = vmatpush1.msra.mxu0 0.0
      %6083 = vmatprep.subr.mxu0 0.0
      %6084 = vmatpush1.msra.mxu0 0.0
      %6085 = vmatprep.subr.mxu0 0.0
      %6086 = vmatpush1.msra.mxu0 0.0
      %6087 = vmatprep.subr.mxu0 0.0
      %6088 = vmatpush1.msra.mxu0 0.0
      %6089 = vmatprep.subr.mxu0 0.0
      %6090 = vmatpush1.msra.mxu0 0.0
      %6091 = vmatprep.subr.mxu0 0.0
      %6092 = vmatpush1.msra.mxu0 0.0
      %6093 = vmatprep.subr.mxu0 0.0
      %6094 = vmatpush1.msra.mxu0 0.0
      %6095 = vmatprep.subr.mxu0 0.0
      %6096 = vmatpush1.msra.mxu0 0.0
      %6097 = vmatprep.subr.mxu0 0.0
      %6098 = vmatpush1.msra.mxu0 0.0
      %6099 = vmatprep.subr.mxu0 0.0
      %6100 = vmatpush1.msra.mxu0 0.0
      %6101 = vmatprep.subr.mxu0 0.0
      %6102 = vmatpush1.msra.mxu0 0.0
      %6103 = vmatprep.subr.mxu0 0.0
      %6104 = vmatpush1.msra.mxu0 0.0
      %6105 = vmatprep.subr.mxu0 0.0
      %6106 = vmatpush1.msra.mxu0 0.0
      %6107 = vmatprep.subr.mxu0 0.0
      %6108 = vmatpush1.msra.mxu0 0.0
      %6109 = vmatprep.subr.mxu0 0.0
      %6110 = vmatpush1.msra.mxu0 0.0
      %6111 = vmatprep.subr.mxu0 0.0
      %6112 = vmatpush1.msra.mxu0 0.0
      %6113 = vmatprep.subr.mxu0 0.0
      %6114 = vmatpush1.msra.mxu0 0.0
      %6115 = vmatprep.mubr.f32.mxu0 0.0
      %v6116 = vand.u32 %v5804, 4294901760
      %v6117 = vsub.f32 %v5804, %v6116
      %v6118 = vand.u32 %v6117, 4294901760
      %6119 = vmatmul.mubr.f32.gmra.mrb[0].mxu0 %v6118
      %v6120 = vpop.f32.mrb[0].mxu0
      %v6121 = vadd.f32 %v6045, %v6120
      %v6122 = vpop.f32.mrb[0].mxu0
      %v6123 = vadd.f32 %v6047, %v6122
      %6124 = vdwg.mxu0
      %v6125 = vand.u32 %v5810, 4294901760
      %v6126 = vsub.f32 %v5810, %v6125
      %v6127 = vand.u32 %v6126, 4294901760
      %6128 = vmatprep.subr.mxu0 %v6127
      %v6129 = vand.u32 %v5807, 4294901760
      %v6130 = vsub.f32 %v5807, %v6129
      %v6131 = vand.u32 %v6130, 4294901760
      %6132 = vmatpush1.msra.mxu0 %v6131
      %6133 = vmatprep.subr.mxu0 0.0
      %6134 = vmatpush1.msra.mxu0 0.0
      %6135 = vmatprep.subr.mxu0 0.0
      %6136 = vmatpush1.msra.mxu0 0.0
      %6137 = vmatprep.subr.mxu0 0.0
      %6138 = vmatpush1.msra.mxu0 0.0
      %6139 = vmatprep.subr.mxu0 0.0
      %6140 = vmatpush1.msra.mxu0 0.0
      %6141 = vmatprep.subr.mxu0 0.0
      %6142 = vmatpush1.msra.mxu0 0.0
      %6143 = vmatprep.subr.mxu0 0.0
      %6144 = vmatpush1.msra.mxu0 0.0
      %6145 = vmatprep.subr.mxu0 0.0
      %6146 = vmatpush1.msra.mxu0 0.0
      %6147 = vmatprep.subr.mxu0 0.0
      %6148 = vmatpush1.msra.mxu0 0.0
      %6149 = vmatprep.subr.mxu0 0.0
      %6150 = vmatpush1.msra.mxu0 0.0
      %6151 = vmatprep.subr.mxu0 0.0
      %6152 = vmatpush1.msra.mxu0 0.0
      %6153 = vmatprep.subr.mxu0 0.0
      %6154 = vmatpush1.msra.mxu0 0.0
      %6155 = vmatprep.subr.mxu0 0.0
      %6156 = vmatpush1.msra.mxu0 0.0
      %6157 = vmatprep.subr.mxu0 0.0
      %6158 = vmatpush1.msra.mxu0 0.0
      %6159 = vmatprep.subr.mxu0 0.0
      %6160 = vmatpush1.msra.mxu0 0.0
      %6161 = vmatprep.subr.mxu0 0.0
      %6162 = vmatpush1.msra.mxu0 0.0
      %6163 = vmatprep.subr.mxu0 0.0
      %6164 = vmatpush1.msra.mxu0 0.0
      %6165 = vmatprep.subr.mxu0 0.0
      %6166 = vmatpush1.msra.mxu0 0.0
      %6167 = vmatprep.subr.mxu0 0.0
      %6168 = vmatpush1.msra.mxu0 0.0
      %6169 = vmatprep.subr.mxu0 0.0
      %6170 = vmatpush1.msra.mxu0 0.0
      %6171 = vmatprep.subr.mxu0 0.0
      %6172 = vmatpush1.msra.mxu0 0.0
      %6173 = vmatprep.subr.mxu0 0.0
      %6174 = vmatpush1.msra.mxu0 0.0
      %6175 = vmatprep.subr.mxu0 0.0
      %6176 = vmatpush1.msra.mxu0 0.0
      %6177 = vmatprep.subr.mxu0 0.0
      %6178 = vmatpush1.msra.mxu0 0.0
      %6179 = vmatprep.subr.mxu0 0.0
      %6180 = vmatpush1.msra.mxu0 0.0
      %6181 = vmatprep.subr.mxu0 0.0
      %6182 = vmatpush1.msra.mxu0 0.0
      %6183 = vmatprep.subr.mxu0 0.0
      %6184 = vmatpush1.msra.mxu0 0.0
      %6185 = vmatprep.subr.mxu0 0.0
      %6186 = vmatpush1.msra.mxu0 0.0
      %6187 = vmatprep.subr.mxu0 0.0
      %6188 = vmatpush1.msra.mxu0 0.0
      %6189 = vmatprep.subr.mxu0 0.0
      %6190 = vmatpush1.msra.mxu0 0.0
      %6191 = vmatprep.subr.mxu0 0.0
      %6192 = vmatpush1.msra.mxu0 0.0
      %6193 = vmatprep.subr.mxu0 0.0
      %6194 = vmatpush1.msra.mxu0 0.0
      %6195 = vmatprep.mubr.f32.mxu0 0.0
      %v6196 = vand.u32 %v5804, 4294901760
      %6197 = vmatmul.mubr.f32.gmra.mrb[0].mxu0 %v6196
      %v6198 = vpop.f32.mrb[0].mxu0
      %v6199 = vadd.f32 %v6121, %v6198
      %v6200 = vpop.f32.mrb[0].mxu0
      %v6201 = vadd.f32 %v6123, %v6200
      %6202 = vdwg.mxu0
      %v6203 = vand.u32 %v5810, 4294901760
      %6204 = vmatprep.subr.mxu0 %v6203
      %v6205 = vand.u32 %v5807, 4294901760
      %6206 = vmatpush1.msra.mxu0 %v6205
      %6207 = vmatprep.subr.mxu0 0.0
      %6208 = vmatpush1.msra.mxu0 0.0
      %6209 = vmatprep.subr.mxu0 0.0
      %6210 = vmatpush1.msra.mxu0 0.0
      %6211 = vmatprep.subr.mxu0 0.0
      %6212 = vmatpush1.msra.mxu0 0.0
      %6213 = vmatprep.subr.mxu0 0.0
      %6214 = vmatpush1.msra.mxu0 0.0
      %6215 = vmatprep.subr.mxu0 0.0
      %6216 = vmatpush1.msra.mxu0 0.0
      %6217 = vmatprep.subr.mxu0 0.0
      %6218 = vmatpush1.msra.mxu0 0.0
      %6219 = vmatprep.subr.mxu0 0.0
      %6220 = vmatpush1.msra.mxu0 0.0
      %6221 = vmatprep.subr.mxu0 0.0
      %6222 = vmatpush1.msra.mxu0 0.0
      %6223 = vmatprep.subr.mxu0 0.0
      %6224 = vmatpush1.msra.mxu0 0.0
      %6225 = vmatprep.subr.mxu0 0.0
      %6226 = vmatpush1.msra.mxu0 0.0
      %6227 = vmatprep.subr.mxu0 0.0
      %6228 = vmatpush1.msra.mxu0 0.0
      %6229 = vmatprep.subr.mxu0 0.0
      %6230 = vmatpush1.msra.mxu0 0.0
      %6231 = vmatprep.subr.mxu0 0.0
      %6232 = vmatpush1.msra.mxu0 0.0
      %6233 = vmatprep.subr.mxu0 0.0
      %6234 = vmatpush1.msra.mxu0 0.0
      %6235 = vmatprep.subr.mxu0 0.0
      %6236 = vmatpush1.msra.mxu0 0.0
      %6237 = vmatprep.subr.mxu0 0.0
      %6238 = vmatpush1.msra.mxu0 0.0
      %6239 = vmatprep.subr.mxu0 0.0
      %6240 = vmatpush1.msra.mxu0 0.0
      %6241 = vmatprep.subr.mxu0 0.0
      %6242 = vmatpush1.msra.mxu0 0.0
      %6243 = vmatprep.subr.mxu0 0.0
      %6244 = vmatpush1.msra.mxu0 0.0
      %6245 = vmatprep.subr.mxu0 0.0
      %6246 = vmatpush1.msra.mxu0 0.0
      %6247 = vmatprep.subr.mxu0 0.0
      %6248 = vmatpush1.msra.mxu0 0.0
      %6249 = vmatprep.subr.mxu0 0.0
      %6250 = vmatpush1.msra.mxu0 0.0
      %6251 = vmatprep.subr.mxu0 0.0
      %6252 = vmatpush1.msra.mxu0 0.0
      %6253 = vmatprep.subr.mxu0 0.0
      %6254 = vmatpush1.msra.mxu0 0.0
      %6255 = vmatprep.subr.mxu0 0.0
      %6256 = vmatpush1.msra.mxu0 0.0
      %6257 = vmatprep.subr.mxu0 0.0
      %6258 = vmatpush1.msra.mxu0 0.0
      %6259 = vmatprep.subr.mxu0 0.0
      %6260 = vmatpush1.msra.mxu0 0.0
      %6261 = vmatprep.subr.mxu0 0.0
      %6262 = vmatpush1.msra.mxu0 0.0
      %6263 = vmatprep.subr.mxu0 0.0
      %6264 = vmatpush1.msra.mxu0 0.0
      %6265 = vmatprep.subr.mxu0 0.0
      %6266 = vmatpush1.msra.mxu0 0.0
      %6267 = vmatprep.subr.mxu0 0.0
      %6268 = vmatpush1.msra.mxu0 0.0
      %6269 = vmatprep.mubr.f32.mxu0 0.0
      %v6270 = vand.u32 %v5804, 4294901760
      %6271 = vmatmul.mubr.f32.gmra.mrb[0].mxu0 %v6270
      %v6272 = vpop.f32.mrb[0].mxu0
      %v6273 = vadd.f32 %v6199, %v6272
      %v6274 = vpop.f32.mrb[0].mxu0
      %v6275 = vadd.f32 %v6201, %v6274
      %6276 = vdwg.mxu0
      %v6277 = vadd.f32 %v5797, %v6273
      %v6278 = vadd.f32 %v5799, %v6275
      %v6279 = vld [vmem:[#allocation2] sm:$0xff]
      %v6280 = vld [vmem:[#allocation2 + $0x8] sm:$0xf]
      %v6283 = vcombine.high %v6279, %v6279
      %6284 = vrot.lane.b32.xlu0 %v6279, 95
      %v6285 = vpop.permute.xlu0 %6284
      %6286 = vrot.lane.b32.xlu0 %v6283, 95
      %v6287 = vpop.permute.xlu0 %6286
      %6288 = vrot.lane.b32.xlu0 %v6280, 95
      %v6289 = vpop.permute.xlu0 %6288
      %v6290 = vsel %vm1825, %v6285, %v6287
      %v6291 = vsel %vm1825, %v6287, %v6289
      %6294 = vrot.lane.b32.xlu0 %v6279, 97
      %v6295 = vpop.permute.xlu0 %6294
      %6296 = vrot.lane.b32.xlu0 %v6283, 97
      %v6297 = vpop.permute.xlu0 %6296
      %6298 = vrot.lane.b32.xlu0 %v6280, 97
      %v6299 = vpop.permute.xlu0 %6298
      %v6300 = vsel %vm1836, %v6295, %v6297
      %v6301 = vsel %vm1836, %v6297, %v6299
      %v6304 = vsel %vm341, %v6290, %v6300
      %v6305 = vsel %vm342, %v6291, %v6301
      %v6306 = vsel %vm372, %v6300, %v6290
      %v6307 = vsel %vm373, %v6301, %v6291
      %s6308 = scalar_lea.vmem %s4, 12
      %v6309 = vld [vmem:[%s6308] sm:$0xf]
      %v6311 = vsel %vm388, %v6309, 0
      %v6314 = vsel %vm392, %v6304, 0
      %v6317 = vsel %vm392, %v6305, 0
      %v6319 = vand.u32 %v6317, 4294901760
      %6320 = vmatprep.subr.mxu0 %v6319
      %v6321 = vand.u32 %v6314, 4294901760
      %6322 = vmatpush1.msra.mxu0 %v6321
      %6323 = vmatprep.subr.mxu0 0.0
      %6324 = vmatpush1.msra.mxu0 0.0
      %6325 = vmatprep.subr.mxu0 0.0
      %6326 = vmatpush1.msra.mxu0 0.0
      %6327 = vmatprep.subr.mxu0 0.0
      %6328 = vmatpush1.msra.mxu0 0.0
      %6329 = vmatprep.subr.mxu0 0.0
      %6330 = vmatpush1.msra.mxu0 0.0
      %6331 = vmatprep.subr.mxu0 0.0
      %6332 = vmatpush1.msra.mxu0 0.0
      %6333 = vmatprep.subr.mxu0 0.0
      %6334 = vmatpush1.msra.mxu0 0.0
      %6335 = vmatprep.subr.mxu0 0.0
      %6336 = vmatpush1.msra.mxu0 0.0
      %6337 = vmatprep.subr.mxu0 0.0
      %6338 = vmatpush1.msra.mxu0 0.0
      %6339 = vmatprep.subr.mxu0 0.0
      %6340 = vmatpush1.msra.mxu0 0.0
      %6341 = vmatprep.subr.mxu0 0.0
      %6342 = vmatpush1.msra.mxu0 0.0
      %6343 = vmatprep.subr.mxu0 0.0
      %6344 = vmatpush1.msra.mxu0 0.0
      %6345 = vmatprep.subr.mxu0 0.0
      %6346 = vmatpush1.msra.mxu0 0.0
      %6347 = vmatprep.subr.mxu0 0.0
      %6348 = vmatpush1.msra.mxu0 0.0
      %6349 = vmatprep.subr.mxu0 0.0
      %6350 = vmatpush1.msra.mxu0 0.0
      %6351 = vmatprep.subr.mxu0 0.0
      %6352 = vmatpush1.msra.mxu0 0.0
      %6353 = vmatprep.subr.mxu0 0.0
      %6354 = vmatpush1.msra.mxu0 0.0
      %6355 = vmatprep.subr.mxu0 0.0
      %6356 = vmatpush1.msra.mxu0 0.0
      %6357 = vmatprep.subr.mxu0 0.0
      %6358 = vmatpush1.msra.mxu0 0.0
      %6359 = vmatprep.subr.mxu0 0.0
      %6360 = vmatpush1.msra.mxu0 0.0
      %6361 = vmatprep.subr.mxu0 0.0
      %6362 = vmatpush1.msra.mxu0 0.0
      %6363 = vmatprep.subr.mxu0 0.0
      %6364 = vmatpush1.msra.mxu0 0.0
      %6365 = vmatprep.subr.mxu0 0.0
      %6366 = vmatpush1.msra.mxu0 0.0
      %6367 = vmatprep.subr.mxu0 0.0
      %6368 = vmatpush1.msra.mxu0 0.0
      %6369 = vmatprep.subr.mxu0 0.0
      %6370 = vmatpush1.msra.mxu0 0.0
      %6371 = vmatprep.subr.mxu0 0.0
      %6372 = vmatpush1.msra.mxu0 0.0
      %6373 = vmatprep.subr.mxu0 0.0
      %6374 = vmatpush1.msra.mxu0 0.0
      %6375 = vmatprep.subr.mxu0 0.0
      %6376 = vmatpush1.msra.mxu0 0.0
      %6377 = vmatprep.subr.mxu0 0.0
      %6378 = vmatpush1.msra.mxu0 0.0
      %6379 = vmatprep.subr.mxu0 0.0
      %6380 = vmatpush1.msra.mxu0 0.0
      %6381 = vmatprep.subr.mxu0 0.0
      %6382 = vmatpush1.msra.mxu0 0.0
      %6383 = vmatprep.subr.mxu0 0.0
      %6384 = vmatpush1.msra.mxu0 0.0
      %6385 = vmatprep.mubr.f32.mxu0 0.0
      %v6386 = vand.u32 %v6311, 4294901760
      %v6387 = vsub.f32 %v6311, %v6386
      %v6388 = vand.u32 %v6387, 4294901760
      %v6389 = vsub.f32 %v6387, %v6388
      %v6390 = vand.u32 %v6389, 4294901760
      %6391 = vmatmul.mubr.f32.gmra.mrb[0].mxu0 %v6390
      %v6392 = vpop.f32.mrb[0].mxu0
      %v6393 = vadd.f32 0.0, %v6392
      %v6394 = vpop.f32.mrb[0].mxu0
      %v6395 = vadd.f32 0.0, %v6394
      %6396 = vdwg.mxu0
      %v6397 = vand.u32 %v6317, 4294901760
      %v6398 = vsub.f32 %v6317, %v6397
      %v6399 = vand.u32 %v6398, 4294901760
      %v6400 = vsub.f32 %v6398, %v6399
      %v6401 = vand.u32 %v6400, 4294901760
      %6402 = vmatprep.subr.mxu0 %v6401
      %v6403 = vand.u32 %v6314, 4294901760
      %v6404 = vsub.f32 %v6314, %v6403
      %v6405 = vand.u32 %v6404, 4294901760
      %v6406 = vsub.f32 %v6404, %v6405
      %v6407 = vand.u32 %v6406, 4294901760
      %6408 = vmatpush1.msra.mxu0 %v6407
      %6409 = vmatprep.subr.mxu0 0.0
      %6410 = vmatpush1.msra.mxu0 0.0
      %6411 = vmatprep.subr.mxu0 0.0
      %6412 = vmatpush1.msra.mxu0 0.0
      %6413 = vmatprep.subr.mxu0 0.0
      %6414 = vmatpush1.msra.mxu0 0.0
      %6415 = vmatprep.subr.mxu0 0.0
      %6416 = vmatpush1.msra.mxu0 0.0
      %6417 = vmatprep.subr.mxu0 0.0
      %6418 = vmatpush1.msra.mxu0 0.0
      %6419 = vmatprep.subr.mxu0 0.0
      %6420 = vmatpush1.msra.mxu0 0.0
      %6421 = vmatprep.subr.mxu0 0.0
      %6422 = vmatpush1.msra.mxu0 0.0
      %6423 = vmatprep.subr.mxu0 0.0
      %6424 = vmatpush1.msra.mxu0 0.0
      %6425 = vmatprep.subr.mxu0 0.0
      %6426 = vmatpush1.msra.mxu0 0.0
      %6427 = vmatprep.subr.mxu0 0.0
      %6428 = vmatpush1.msra.mxu0 0.0
      %6429 = vmatprep.subr.mxu0 0.0
      %6430 = vmatpush1.msra.mxu0 0.0
      %6431 = vmatprep.subr.mxu0 0.0
      %6432 = vmatpush1.msra.mxu0 0.0
      %6433 = vmatprep.subr.mxu0 0.0
      %6434 = vmatpush1.msra.mxu0 0.0
      %6435 = vmatprep.subr.mxu0 0.0
      %6436 = vmatpush1.msra.mxu0 0.0
      %6437 = vmatprep.subr.mxu0 0.0
      %6438 = vmatpush1.msra.mxu0 0.0
      %6439 = vmatprep.subr.mxu0 0.0
      %6440 = vmatpush1.msra.mxu0 0.0
      %6441 = vmatprep.subr.mxu0 0.0
      %6442 = vmatpush1.msra.mxu0 0.0
      %6443 = vmatprep.subr.mxu0 0.0
      %6444 = vmatpush1.msra.mxu0 0.0
      %6445 = vmatprep.subr.mxu0 0.0
      %6446 = vmatpush1.msra.mxu0 0.0
      %6447 = vmatprep.subr.mxu0 0.0
      %6448 = vmatpush1.msra.mxu0 0.0
      %6449 = vmatprep.subr.mxu0 0.0
      %6450 = vmatpush1.msra.mxu0 0.0
      %6451 = vmatprep.subr.mxu0 0.0
      %6452 = vmatpush1.msra.mxu0 0.0
      %6453 = vmatprep.subr.mxu0 0.0
      %6454 = vmatpush1.msra.mxu0 0.0
      %6455 = vmatprep.subr.mxu0 0.0
      %6456 = vmatpush1.msra.mxu0 0.0
      %6457 = vmatprep.subr.mxu0 0.0
      %6458 = vmatpush1.msra.mxu0 0.0
      %6459 = vmatprep.subr.mxu0 0.0
      %6460 = vmatpush1.msra.mxu0 0.0
      %6461 = vmatprep.subr.mxu0 0.0
      %6462 = vmatpush1.msra.mxu0 0.0
      %6463 = vmatprep.subr.mxu0 0.0
      %6464 = vmatpush1.msra.mxu0 0.0
      %6465 = vmatprep.subr.mxu0 0.0
      %6466 = vmatpush1.msra.mxu0 0.0
      %6467 = vmatprep.subr.mxu0 0.0
      %6468 = vmatpush1.msra.mxu0 0.0
      %6469 = vmatprep.subr.mxu0 0.0
      %6470 = vmatpush1.msra.mxu0 0.0
      %6471 = vmatprep.mubr.f32.mxu0 0.0
      %v6472 = vand.u32 %v6311, 4294901760
      %6473 = vmatmul.mubr.f32.gmra.mrb[0].mxu0 %v6472
      %v6474 = vpop.f32.mrb[0].mxu0
      %v6475 = vadd.f32 %v6393, %v6474
      %v6476 = vpop.f32.mrb[0].mxu0
      %v6477 = vadd.f32 %v6395, %v6476
      %6478 = vdwg.mxu0
      %v6479 = vand.u32 %v6317, 4294901760
      %v6480 = vsub.f32 %v6317, %v6479
      %6481 = vmatprep.subr.mxu0 %v6480
      %v6482 = vand.u32 %v6314, 4294901760
      %v6483 = vsub.f32 %v6314, %v6482
      %6484 = vmatpush1.msra.mxu0 %v6483
      %6485 = vmatprep.subr.mxu0 0.0
      %6486 = vmatpush1.msra.mxu0 0.0
      %6487 = vmatprep.subr.mxu0 0.0
      %6488 = vmatpush1.msra.mxu0 0.0
      %6489 = vmatprep.subr.mxu0 0.0
      %6490 = vmatpush1.msra.mxu0 0.0
      %6491 = vmatprep.subr.mxu0 0.0
      %6492 = vmatpush1.msra.mxu0 0.0
      %6493 = vmatprep.subr.mxu0 0.0
      %6494 = vmatpush1.msra.mxu0 0.0
      %6495 = vmatprep.subr.mxu0 0.0
      %6496 = vmatpush1.msra.mxu0 0.0
      %6497 = vmatprep.subr.mxu0 0.0
      %6498 = vmatpush1.msra.mxu0 0.0
      %6499 = vmatprep.subr.mxu0 0.0
      %6500 = vmatpush1.msra.mxu0 0.0
      %6501 = vmatprep.subr.mxu0 0.0
      %6502 = vmatpush1.msra.mxu0 0.0
      %6503 = vmatprep.subr.mxu0 0.0
      %6504 = vmatpush1.msra.mxu0 0.0
      %6505 = vmatprep.subr.mxu0 0.0
      %6506 = vmatpush1.msra.mxu0 0.0
      %6507 = vmatprep.subr.mxu0 0.0
      %6508 = vmatpush1.msra.mxu0 0.0
      %6509 = vmatprep.subr.mxu0 0.0
      %6510 = vmatpush1.msra.mxu0 0.0
      %6511 = vmatprep.subr.mxu0 0.0
      %6512 = vmatpush1.msra.mxu0 0.0
      %6513 = vmatprep.subr.mxu0 0.0
      %6514 = vmatpush1.msra.mxu0 0.0
      %6515 = vmatprep.subr.mxu0 0.0
      %6516 = vmatpush1.msra.mxu0 0.0
      %6517 = vmatprep.subr.mxu0 0.0
      %6518 = vmatpush1.msra.mxu0 0.0
      %6519 = vmatprep.subr.mxu0 0.0
      %6520 = vmatpush1.msra.mxu0 0.0
      %6521 = vmatprep.subr.mxu0 0.0
      %6522 = vmatpush1.msra.mxu0 0.0
      %6523 = vmatprep.subr.mxu0 0.0
      %6524 = vmatpush1.msra.mxu0 0.0
      %6525 = vmatprep.subr.mxu0 0.0
      %6526 = vmatpush1.msra.mxu0 0.0
      %6527 = vmatprep.subr.mxu0 0.0
      %6528 = vmatpush1.msra.mxu0 0.0
      %6529 = vmatprep.subr.mxu0 0.0
      %6530 = vmatpush1.msra.mxu0 0.0
      %6531 = vmatprep.subr.mxu0 0.0
      %6532 = vmatpush1.msra.mxu0 0.0
      %6533 = vmatprep.subr.mxu0 0.0
      %6534 = vmatpush1.msra.mxu0 0.0
      %6535 = vmatprep.subr.mxu0 0.0
      %6536 = vmatpush1.msra.mxu0 0.0
      %6537 = vmatprep.subr.mxu0 0.0
      %6538 = vmatpush1.msra.mxu0 0.0
      %6539 = vmatprep.subr.mxu0 0.0
      %6540 = vmatpush1.msra.mxu0 0.0
      %6541 = vmatprep.subr.mxu0 0.0
      %6542 = vmatpush1.msra.mxu0 0.0
      %6543 = vmatprep.subr.mxu0 0.0
      %6544 = vmatpush1.msra.mxu0 0.0
      %6545 = vmatprep.subr.mxu0 0.0
      %6546 = vmatpush1.msra.mxu0 0.0
      %6547 = vmatprep.mubr.f32.mxu0 0.0
      %v6548 = vand.u32 %v6311, 4294901760
      %v6549 = vsub.f32 %v6311, %v6548
      %6550 = vmatmul.mubr.f32.gmra.mrb[0].mxu0 %v6549
      %v6551 = vpop.f32.mrb[0].mxu0
      %v6552 = vadd.f32 %v6475, %v6551
      %v6553 = vpop.f32.mrb[0].mxu0
      %v6554 = vadd.f32 %v6477, %v6553
      %6555 = vdwg.mxu0
      %v6556 = vand.u32 %v6317, 4294901760
      %6557 = vmatprep.subr.mxu0 %v6556
      %v6558 = vand.u32 %v6314, 4294901760
      %6559 = vmatpush1.msra.mxu0 %v6558
      %6560 = vmatprep.subr.mxu0 0.0
      %6561 = vmatpush1.msra.mxu0 0.0
      %6562 = vmatprep.subr.mxu0 0.0
      %6563 = vmatpush1.msra.mxu0 0.0
      %6564 = vmatprep.subr.mxu0 0.0
      %6565 = vmatpush1.msra.mxu0 0.0
      %6566 = vmatprep.subr.mxu0 0.0
      %6567 = vmatpush1.msra.mxu0 0.0
      %6568 = vmatprep.subr.mxu0 0.0
      %6569 = vmatpush1.msra.mxu0 0.0
      %6570 = vmatprep.subr.mxu0 0.0
      %6571 = vmatpush1.msra.mxu0 0.0
      %6572 = vmatprep.subr.mxu0 0.0
      %6573 = vmatpush1.msra.mxu0 0.0
      %6574 = vmatprep.subr.mxu0 0.0
      %6575 = vmatpush1.msra.mxu0 0.0
      %6576 = vmatprep.subr.mxu0 0.0
      %6577 = vmatpush1.msra.mxu0 0.0
      %6578 = vmatprep.subr.mxu0 0.0
      %6579 = vmatpush1.msra.mxu0 0.0
      %6580 = vmatprep.subr.mxu0 0.0
      %6581 = vmatpush1.msra.mxu0 0.0
      %6582 = vmatprep.subr.mxu0 0.0
      %6583 = vmatpush1.msra.mxu0 0.0
      %6584 = vmatprep.subr.mxu0 0.0
      %6585 = vmatpush1.msra.mxu0 0.0
      %6586 = vmatprep.subr.mxu0 0.0
      %6587 = vmatpush1.msra.mxu0 0.0
      %6588 = vmatprep.subr.mxu0 0.0
      %6589 = vmatpush1.msra.mxu0 0.0
      %6590 = vmatprep.subr.mxu0 0.0
      %6591 = vmatpush1.msra.mxu0 0.0
      %6592 = vmatprep.subr.mxu0 0.0
      %6593 = vmatpush1.msra.mxu0 0.0
      %6594 = vmatprep.subr.mxu0 0.0
      %6595 = vmatpush1.msra.mxu0 0.0
      %6596 = vmatprep.subr.mxu0 0.0
      %6597 = vmatpush1.msra.mxu0 0.0
      %6598 = vmatprep.subr.mxu0 0.0
      %6599 = vmatpush1.msra.mxu0 0.0
      %6600 = vmatprep.subr.mxu0 0.0
      %6601 = vmatpush1.msra.mxu0 0.0
      %6602 = vmatprep.subr.mxu0 0.0
      %6603 = vmatpush1.msra.mxu0 0.0
      %6604 = vmatprep.subr.mxu0 0.0
      %6605 = vmatpush1.msra.mxu0 0.0
      %6606 = vmatprep.subr.mxu0 0.0
      %6607 = vmatpush1.msra.mxu0 0.0
      %6608 = vmatprep.subr.mxu0 0.0
      %6609 = vmatpush1.msra.mxu0 0.0
      %6610 = vmatprep.subr.mxu0 0.0
      %6611 = vmatpush1.msra.mxu0 0.0
      %6612 = vmatprep.subr.mxu0 0.0
      %6613 = vmatpush1.msra.mxu0 0.0
      %6614 = vmatprep.subr.mxu0 0.0
      %6615 = vmatpush1.msra.mxu0 0.0
      %6616 = vmatprep.subr.mxu0 0.0
      %6617 = vmatpush1.msra.mxu0 0.0
      %6618 = vmatprep.subr.mxu0 0.0
      %6619 = vmatpush1.msra.mxu0 0.0
      %6620 = vmatprep.subr.mxu0 0.0
      %6621 = vmatpush1.msra.mxu0 0.0
      %6622 = vmatprep.mubr.f32.mxu0 0.0
      %v6623 = vand.u32 %v6311, 4294901760
      %v6624 = vsub.f32 %v6311, %v6623
      %v6625 = vand.u32 %v6624, 4294901760
      %6626 = vmatmul.mubr.f32.gmra.mrb[0].mxu0 %v6625
      %v6627 = vpop.f32.mrb[0].mxu0
      %v6628 = vadd.f32 %v6552, %v6627
      %v6629 = vpop.f32.mrb[0].mxu0
      %v6630 = vadd.f32 %v6554, %v6629
      %6631 = vdwg.mxu0
      %v6632 = vand.u32 %v6317, 4294901760
      %v6633 = vsub.f32 %v6317, %v6632
      %v6634 = vand.u32 %v6633, 4294901760
      %6635 = vmatprep.subr.mxu0 %v6634
      %v6636 = vand.u32 %v6314, 4294901760
      %v6637 = vsub.f32 %v6314, %v6636
      %v6638 = vand.u32 %v6637, 4294901760
      %6639 = vmatpush1.msra.mxu0 %v6638
      %6640 = vmatprep.subr.mxu0 0.0
      %6641 = vmatpush1.msra.mxu0 0.0
      %6642 = vmatprep.subr.mxu0 0.0
      %6643 = vmatpush1.msra.mxu0 0.0
      %6644 = vmatprep.subr.mxu0 0.0
      %6645 = vmatpush1.msra.mxu0 0.0
      %6646 = vmatprep.subr.mxu0 0.0
      %6647 = vmatpush1.msra.mxu0 0.0
      %6648 = vmatprep.subr.mxu0 0.0
      %6649 = vmatpush1.msra.mxu0 0.0
      %6650 = vmatprep.subr.mxu0 0.0
      %6651 = vmatpush1.msra.mxu0 0.0
      %6652 = vmatprep.subr.mxu0 0.0
      %6653 = vmatpush1.msra.mxu0 0.0
      %6654 = vmatprep.subr.mxu0 0.0
      %6655 = vmatpush1.msra.mxu0 0.0
      %6656 = vmatprep.subr.mxu0 0.0
      %6657 = vmatpush1.msra.mxu0 0.0
      %6658 = vmatprep.subr.mxu0 0.0
      %6659 = vmatpush1.msra.mxu0 0.0
      %6660 = vmatprep.subr.mxu0 0.0
      %6661 = vmatpush1.msra.mxu0 0.0
      %6662 = vmatprep.subr.mxu0 0.0
      %6663 = vmatpush1.msra.mxu0 0.0
      %6664 = vmatprep.subr.mxu0 0.0
      %6665 = vmatpush1.msra.mxu0 0.0
      %6666 = vmatprep.subr.mxu0 0.0
      %6667 = vmatpush1.msra.mxu0 0.0
      %6668 = vmatprep.subr.mxu0 0.0
      %6669 = vmatpush1.msra.mxu0 0.0
      %6670 = vmatprep.subr.mxu0 0.0
      %6671 = vmatpush1.msra.mxu0 0.0
      %6672 = vmatprep.subr.mxu0 0.0
      %6673 = vmatpush1.msra.mxu0 0.0
      %6674 = vmatprep.subr.mxu0 0.0
      %6675 = vmatpush1.msra.mxu0 0.0
      %6676 = vmatprep.subr.mxu0 0.0
      %6677 = vmatpush1.msra.mxu0 0.0
      %6678 = vmatprep.subr.mxu0 0.0
      %6679 = vmatpush1.msra.mxu0 0.0
      %6680 = vmatprep.subr.mxu0 0.0
      %6681 = vmatpush1.msra.mxu0 0.0
      %6682 = vmatprep.subr.mxu0 0.0
      %6683 = vmatpush1.msra.mxu0 0.0
      %6684 = vmatprep.subr.mxu0 0.0
      %6685 = vmatpush1.msra.mxu0 0.0
      %6686 = vmatprep.subr.mxu0 0.0
      %6687 = vmatpush1.msra.mxu0 0.0
      %6688 = vmatprep.subr.mxu0 0.0
      %6689 = vmatpush1.msra.mxu0 0.0
      %6690 = vmatprep.subr.mxu0 0.0
      %6691 = vmatpush1.msra.mxu0 0.0
      %6692 = vmatprep.subr.mxu0 0.0
      %6693 = vmatpush1.msra.mxu0 0.0
      %6694 = vmatprep.subr.mxu0 0.0
      %6695 = vmatpush1.msra.mxu0 0.0
      %6696 = vmatprep.subr.mxu0 0.0
      %6697 = vmatpush1.msra.mxu0 0.0
      %6698 = vmatprep.subr.mxu0 0.0
      %6699 = vmatpush1.msra.mxu0 0.0
      %6700 = vmatprep.subr.mxu0 0.0
      %6701 = vmatpush1.msra.mxu0 0.0
      %6702 = vmatprep.mubr.f32.mxu0 0.0
      %v6703 = vand.u32 %v6311, 4294901760
      %6704 = vmatmul.mubr.f32.gmra.mrb[0].mxu0 %v6703
      %v6705 = vpop.f32.mrb[0].mxu0
      %v6706 = vadd.f32 %v6628, %v6705
      %v6707 = vpop.f32.mrb[0].mxu0
      %v6708 = vadd.f32 %v6630, %v6707
      %6709 = vdwg.mxu0
      %v6710 = vand.u32 %v6317, 4294901760
      %6711 = vmatprep.subr.mxu0 %v6710
      %v6712 = vand.u32 %v6314, 4294901760
      %6713 = vmatpush1.msra.mxu0 %v6712
      %6714 = vmatprep.subr.mxu0 0.0
      %6715 = vmatpush1.msra.mxu0 0.0
      %6716 = vmatprep.subr.mxu0 0.0
      %6717 = vmatpush1.msra.mxu0 0.0
      %6718 = vmatprep.subr.mxu0 0.0
      %6719 = vmatpush1.msra.mxu0 0.0
      %6720 = vmatprep.subr.mxu0 0.0
      %6721 = vmatpush1.msra.mxu0 0.0
      %6722 = vmatprep.subr.mxu0 0.0
      %6723 = vmatpush1.msra.mxu0 0.0
      %6724 = vmatprep.subr.mxu0 0.0
      %6725 = vmatpush1.msra.mxu0 0.0
      %6726 = vmatprep.subr.mxu0 0.0
      %6727 = vmatpush1.msra.mxu0 0.0
      %6728 = vmatprep.subr.mxu0 0.0
      %6729 = vmatpush1.msra.mxu0 0.0
      %6730 = vmatprep.subr.mxu0 0.0
      %6731 = vmatpush1.msra.mxu0 0.0
      %6732 = vmatprep.subr.mxu0 0.0
      %6733 = vmatpush1.msra.mxu0 0.0
      %6734 = vmatprep.subr.mxu0 0.0
      %6735 = vmatpush1.msra.mxu0 0.0
      %6736 = vmatprep.subr.mxu0 0.0
      %6737 = vmatpush1.msra.mxu0 0.0
      %6738 = vmatprep.subr.mxu0 0.0
      %6739 = vmatpush1.msra.mxu0 0.0
      %6740 = vmatprep.subr.mxu0 0.0
      %6741 = vmatpush1.msra.mxu0 0.0
      %6742 = vmatprep.subr.mxu0 0.0
      %6743 = vmatpush1.msra.mxu0 0.0
      %6744 = vmatprep.subr.mxu0 0.0
      %6745 = vmatpush1.msra.mxu0 0.0
      %6746 = vmatprep.subr.mxu0 0.0
      %6747 = vmatpush1.msra.mxu0 0.0
      %6748 = vmatprep.subr.mxu0 0.0
      %6749 = vmatpush1.msra.mxu0 0.0
      %6750 = vmatprep.subr.mxu0 0.0
      %6751 = vmatpush1.msra.mxu0 0.0
      %6752 = vmatprep.subr.mxu0 0.0
      %6753 = vmatpush1.msra.mxu0 0.0
      %6754 = vmatprep.subr.mxu0 0.0
      %6755 = vmatpush1.msra.mxu0 0.0
      %6756 = vmatprep.subr.mxu0 0.0
      %6757 = vmatpush1.msra.mxu0 0.0
      %6758 = vmatprep.subr.mxu0 0.0
      %6759 = vmatpush1.msra.mxu0 0.0
      %6760 = vmatprep.subr.mxu0 0.0
      %6761 = vmatpush1.msra.mxu0 0.0
      %6762 = vmatprep.subr.mxu0 0.0
      %6763 = vmatpush1.msra.mxu0 0.0
      %6764 = vmatprep.subr.mxu0 0.0
      %6765 = vmatpush1.msra.mxu0 0.0
      %6766 = vmatprep.subr.mxu0 0.0
      %6767 = vmatpush1.msra.mxu0 0.0
      %6768 = vmatprep.subr.mxu0 0.0
      %6769 = vmatpush1.msra.mxu0 0.0
      %6770 = vmatprep.subr.mxu0 0.0
      %6771 = vmatpush1.msra.mxu0 0.0
      %6772 = vmatprep.subr.mxu0 0.0
      %6773 = vmatpush1.msra.mxu0 0.0
      %6774 = vmatprep.subr.mxu0 0.0
      %6775 = vmatpush1.msra.mxu0 0.0
      %6776 = vmatprep.mubr.f32.mxu0 0.0
      %v6777 = vand.u32 %v6311, 4294901760
      %6778 = vmatmul.mubr.f32.gmra.mrb[0].mxu0 %v6777
      %v6779 = vpop.f32.mrb[0].mxu0
      %v6780 = vadd.f32 %v6706, %v6779
      %v6781 = vpop.f32.mrb[0].mxu0
      %v6782 = vadd.f32 %v6708, %v6781
      %6783 = vdwg.mxu0
      %v6784 = vadd.f32 %v6277, %v6780
      %v6785 = vadd.f32 %v6278, %v6782
      %s6786 = scalar_lea.vmem %s4, 16
      %v6787 = vld [vmem:[%s6786] sm:$0xf]
      %6788 = vrot.lane.b32.xlu0 %v6279, 96
      %v6789 = vpop.permute.xlu0 %6788
      %6790 = vrot.lane.b32.xlu0 %v6283, 96
      %v6791 = vpop.permute.xlu0 %6790
      %6792 = vrot.lane.b32.xlu0 %v6280, 96
      %v6793 = vpop.permute.xlu0 %6792
      %v6794 = vsel %vm2331, %v6789, %v6791
      %v6795 = vsel %vm2331, %v6791, %v6793
      %v6797 = vsel %vm388, %v6787, 0
      %v6799 = vsel %vm392, %v6794, 0
      %v6801 = vsel %vm392, %v6795, 0
      %v6803 = vand.u32 %v6801, 4294901760
      %6804 = vmatprep.subr.mxu0 %v6803
      %v6805 = vand.u32 %v6799, 4294901760
      %6806 = vmatpush1.msra.mxu0 %v6805
      %6807 = vmatprep.subr.mxu0 0.0
      %6808 = vmatpush1.msra.mxu0 0.0
      %6809 = vmatprep.subr.mxu0 0.0
      %6810 = vmatpush1.msra.mxu0 0.0
      %6811 = vmatprep.subr.mxu0 0.0
      %6812 = vmatpush1.msra.mxu0 0.0
      %6813 = vmatprep.subr.mxu0 0.0
      %6814 = vmatpush1.msra.mxu0 0.0
      %6815 = vmatprep.subr.mxu0 0.0
      %6816 = vmatpush1.msra.mxu0 0.0
      %6817 = vmatprep.subr.mxu0 0.0
      %6818 = vmatpush1.msra.mxu0 0.0
      %6819 = vmatprep.subr.mxu0 0.0
      %6820 = vmatpush1.msra.mxu0 0.0
      %6821 = vmatprep.subr.mxu0 0.0
      %6822 = vmatpush1.msra.mxu0 0.0
      %6823 = vmatprep.subr.mxu0 0.0
      %6824 = vmatpush1.msra.mxu0 0.0
      %6825 = vmatprep.subr.mxu0 0.0
      %6826 = vmatpush1.msra.mxu0 0.0
      %6827 = vmatprep.subr.mxu0 0.0
      %6828 = vmatpush1.msra.mxu0 0.0
      %6829 = vmatprep.subr.mxu0 0.0
      %6830 = vmatpush1.msra.mxu0 0.0
      %6831 = vmatprep.subr.mxu0 0.0
      %6832 = vmatpush1.msra.mxu0 0.0
      %6833 = vmatprep.subr.mxu0 0.0
      %6834 = vmatpush1.msra.mxu0 0.0
      %6835 = vmatprep.subr.mxu0 0.0
      %6836 = vmatpush1.msra.mxu0 0.0
      %6837 = vmatprep.subr.mxu0 0.0
      %6838 = vmatpush1.msra.mxu0 0.0
      %6839 = vmatprep.subr.mxu0 0.0
      %6840 = vmatpush1.msra.mxu0 0.0
      %6841 = vmatprep.subr.mxu0 0.0
      %6842 = vmatpush1.msra.mxu0 0.0
      %6843 = vmatprep.subr.mxu0 0.0
      %6844 = vmatpush1.msra.mxu0 0.0
      %6845 = vmatprep.subr.mxu0 0.0
      %6846 = vmatpush1.msra.mxu0 0.0
      %6847 = vmatprep.subr.mxu0 0.0
      %6848 = vmatpush1.msra.mxu0 0.0
      %6849 = vmatprep.subr.mxu0 0.0
      %6850 = vmatpush1.msra.mxu0 0.0
      %6851 = vmatprep.subr.mxu0 0.0
      %6852 = vmatpush1.msra.mxu0 0.0
      %6853 = vmatprep.subr.mxu0 0.0
      %6854 = vmatpush1.msra.mxu0 0.0
      %6855 = vmatprep.subr.mxu0 0.0
      %6856 = vmatpush1.msra.mxu0 0.0
      %6857 = vmatprep.subr.mxu0 0.0
      %6858 = vmatpush1.msra.mxu0 0.0
      %6859 = vmatprep.subr.mxu0 0.0
      %6860 = vmatpush1.msra.mxu0 0.0
      %6861 = vmatprep.subr.mxu0 0.0
      %6862 = vmatpush1.msra.mxu0 0.0
      %6863 = vmatprep.subr.mxu0 0.0
      %6864 = vmatpush1.msra.mxu0 0.0
      %6865 = vmatprep.subr.mxu0 0.0
      %6866 = vmatpush1.msra.mxu0 0.0
      %6867 = vmatprep.subr.mxu0 0.0
      %6868 = vmatpush1.msra.mxu0 0.0
      %6869 = vmatprep.mubr.f32.mxu0 0.0
      %v6870 = vand.u32 %v6797, 4294901760
      %v6871 = vsub.f32 %v6797, %v6870
      %v6872 = vand.u32 %v6871, 4294901760
      %v6873 = vsub.f32 %v6871, %v6872
      %v6874 = vand.u32 %v6873, 4294901760
      %6875 = vmatmul.mubr.f32.gmra.mrb[0].mxu0 %v6874
      %v6876 = vpop.f32.mrb[0].mxu0
      %v6877 = vadd.f32 0.0, %v6876
      %v6878 = vpop.f32.mrb[0].mxu0
      %v6879 = vadd.f32 0.0, %v6878
      %6880 = vdwg.mxu0
      %v6881 = vand.u32 %v6801, 4294901760
      %v6882 = vsub.f32 %v6801, %v6881
      %v6883 = vand.u32 %v6882, 4294901760
      %v6884 = vsub.f32 %v6882, %v6883
      %v6885 = vand.u32 %v6884, 4294901760
      %6886 = vmatprep.subr.mxu0 %v6885
      %v6887 = vand.u32 %v6799, 4294901760
      %v6888 = vsub.f32 %v6799, %v6887
      %v6889 = vand.u32 %v6888, 4294901760
      %v6890 = vsub.f32 %v6888, %v6889
      %v6891 = vand.u32 %v6890, 4294901760
      %6892 = vmatpush1.msra.mxu0 %v6891
      %6893 = vmatprep.subr.mxu0 0.0
      %6894 = vmatpush1.msra.mxu0 0.0
      %6895 = vmatprep.subr.mxu0 0.0
      %6896 = vmatpush1.msra.mxu0 0.0
      %6897 = vmatprep.subr.mxu0 0.0
      %6898 = vmatpush1.msra.mxu0 0.0
      %6899 = vmatprep.subr.mxu0 0.0
      %6900 = vmatpush1.msra.mxu0 0.0
      %6901 = vmatprep.subr.mxu0 0.0
      %6902 = vmatpush1.msra.mxu0 0.0
      %6903 = vmatprep.subr.mxu0 0.0
      %6904 = vmatpush1.msra.mxu0 0.0
      %6905 = vmatprep.subr.mxu0 0.0
      %6906 = vmatpush1.msra.mxu0 0.0
      %6907 = vmatprep.subr.mxu0 0.0
      %6908 = vmatpush1.msra.mxu0 0.0
      %6909 = vmatprep.subr.mxu0 0.0
      %6910 = vmatpush1.msra.mxu0 0.0
      %6911 = vmatprep.subr.mxu0 0.0
      %6912 = vmatpush1.msra.mxu0 0.0
      %6913 = vmatprep.subr.mxu0 0.0
      %6914 = vmatpush1.msra.mxu0 0.0
      %6915 = vmatprep.subr.mxu0 0.0
      %6916 = vmatpush1.msra.mxu0 0.0
      %6917 = vmatprep.subr.mxu0 0.0
      %6918 = vmatpush1.msra.mxu0 0.0
      %6919 = vmatprep.subr.mxu0 0.0
      %6920 = vmatpush1.msra.mxu0 0.0
      %6921 = vmatprep.subr.mxu0 0.0
      %6922 = vmatpush1.msra.mxu0 0.0
      %6923 = vmatprep.subr.mxu0 0.0
      %6924 = vmatpush1.msra.mxu0 0.0
      %6925 = vmatprep.subr.mxu0 0.0
      %6926 = vmatpush1.msra.mxu0 0.0
      %6927 = vmatprep.subr.mxu0 0.0
      %6928 = vmatpush1.msra.mxu0 0.0
      %6929 = vmatprep.subr.mxu0 0.0
      %6930 = vmatpush1.msra.mxu0 0.0
      %6931 = vmatprep.subr.mxu0 0.0
      %6932 = vmatpush1.msra.mxu0 0.0
      %6933 = vmatprep.subr.mxu0 0.0
      %6934 = vmatpush1.msra.mxu0 0.0
      %6935 = vmatprep.subr.mxu0 0.0
      %6936 = vmatpush1.msra.mxu0 0.0
      %6937 = vmatprep.subr.mxu0 0.0
      %6938 = vmatpush1.msra.mxu0 0.0
      %6939 = vmatprep.subr.mxu0 0.0
      %6940 = vmatpush1.msra.mxu0 0.0
      %6941 = vmatprep.subr.mxu0 0.0
      %6942 = vmatpush1.msra.mxu0 0.0
      %6943 = vmatprep.subr.mxu0 0.0
      %6944 = vmatpush1.msra.mxu0 0.0
      %6945 = vmatprep.subr.mxu0 0.0
      %6946 = vmatpush1.msra.mxu0 0.0
      %6947 = vmatprep.subr.mxu0 0.0
      %6948 = vmatpush1.msra.mxu0 0.0
      %6949 = vmatprep.subr.mxu0 0.0
      %6950 = vmatpush1.msra.mxu0 0.0
      %6951 = vmatprep.subr.mxu0 0.0
      %6952 = vmatpush1.msra.mxu0 0.0
      %6953 = vmatprep.subr.mxu0 0.0
      %6954 = vmatpush1.msra.mxu0 0.0
      %6955 = vmatprep.mubr.f32.mxu0 0.0
      %v6956 = vand.u32 %v6797, 4294901760
      %6957 = vmatmul.mubr.f32.gmra.mrb[0].mxu0 %v6956
      %v6958 = vpop.f32.mrb[0].mxu0
      %v6959 = vadd.f32 %v6877, %v6958
      %v6960 = vpop.f32.mrb[0].mxu0
      %v6961 = vadd.f32 %v6879, %v6960
      %6962 = vdwg.mxu0
      %v6963 = vand.u32 %v6801, 4294901760
      %v6964 = vsub.f32 %v6801, %v6963
      %6965 = vmatprep.subr.mxu0 %v6964
      %v6966 = vand.u32 %v6799, 4294901760
      %v6967 = vsub.f32 %v6799, %v6966
      %6968 = vmatpush1.msra.mxu0 %v6967
      %6969 = vmatprep.subr.mxu0 0.0
      %6970 = vmatpush1.msra.mxu0 0.0
      %6971 = vmatprep.subr.mxu0 0.0
      %6972 = vmatpush1.msra.mxu0 0.0
      %6973 = vmatprep.subr.mxu0 0.0
      %6974 = vmatpush1.msra.mxu0 0.0
      %6975 = vmatprep.subr.mxu0 0.0
      %6976 = vmatpush1.msra.mxu0 0.0
      %6977 = vmatprep.subr.mxu0 0.0
      %6978 = vmatpush1.msra.mxu0 0.0
      %6979 = vmatprep.subr.mxu0 0.0
      %6980 = vmatpush1.msra.mxu0 0.0
      %6981 = vmatprep.subr.mxu0 0.0
      %6982 = vmatpush1.msra.mxu0 0.0
      %6983 = vmatprep.subr.mxu0 0.0
      %6984 = vmatpush1.msra.mxu0 0.0
      %6985 = vmatprep.subr.mxu0 0.0
      %6986 = vmatpush1.msra.mxu0 0.0
      %6987 = vmatprep.subr.mxu0 0.0
      %6988 = vmatpush1.msra.mxu0 0.0
      %6989 = vmatprep.subr.mxu0 0.0
      %6990 = vmatpush1.msra.mxu0 0.0
      %6991 = vmatprep.subr.mxu0 0.0
      %6992 = vmatpush1.msra.mxu0 0.0
      %6993 = vmatprep.subr.mxu0 0.0
      %6994 = vmatpush1.msra.mxu0 0.0
      %6995 = vmatprep.subr.mxu0 0.0
      %6996 = vmatpush1.msra.mxu0 0.0
      %6997 = vmatprep.subr.mxu0 0.0
      %6998 = vmatpush1.msra.mxu0 0.0
      %6999 = vmatprep.subr.mxu0 0.0
      %7000 = vmatpush1.msra.mxu0 0.0
      %7001 = vmatprep.subr.mxu0 0.0
      %7002 = vmatpush1.msra.mxu0 0.0
      %7003 = vmatprep.subr.mxu0 0.0
      %7004 = vmatpush1.msra.mxu0 0.0
      %7005 = vmatprep.subr.mxu0 0.0
      %7006 = vmatpush1.msra.mxu0 0.0
      %7007 = vmatprep.subr.mxu0 0.0
      %7008 = vmatpush1.msra.mxu0 0.0
      %7009 = vmatprep.subr.mxu0 0.0
      %7010 = vmatpush1.msra.mxu0 0.0
      %7011 = vmatprep.subr.mxu0 0.0
      %7012 = vmatpush1.msra.mxu0 0.0
      %7013 = vmatprep.subr.mxu0 0.0
      %7014 = vmatpush1.msra.mxu0 0.0
      %7015 = vmatprep.subr.mxu0 0.0
      %7016 = vmatpush1.msra.mxu0 0.0
      %7017 = vmatprep.subr.mxu0 0.0
      %7018 = vmatpush1.msra.mxu0 0.0
      %7019 = vmatprep.subr.mxu0 0.0
      %7020 = vmatpush1.msra.mxu0 0.0
      %7021 = vmatprep.subr.mxu0 0.0
      %7022 = vmatpush1.msra.mxu0 0.0
      %7023 = vmatprep.subr.mxu0 0.0
      %7024 = vmatpush1.msra.mxu0 0.0
      %7025 = vmatprep.subr.mxu0 0.0
      %7026 = vmatpush1.msra.mxu0 0.0
      %7027 = vmatprep.subr.mxu0 0.0
      %7028 = vmatpush1.msra.mxu0 0.0
      %7029 = vmatprep.subr.mxu0 0.0
      %7030 = vmatpush1.msra.mxu0 0.0
      %7031 = vmatprep.mubr.f32.mxu0 0.0
      %v7032 = vand.u32 %v6797, 4294901760
      %v7033 = vsub.f32 %v6797, %v7032
      %7034 = vmatmul.mubr.f32.gmra.mrb[0].mxu0 %v7033
      %v7035 = vpop.f32.mrb[0].mxu0
      %v7036 = vadd.f32 %v6959, %v7035
      %v7037 = vpop.f32.mrb[0].mxu0
      %v7038 = vadd.f32 %v6961, %v7037
      %7039 = vdwg.mxu0
      %v7040 = vand.u32 %v6801, 4294901760
      %7041 = vmatprep.subr.mxu0 %v7040
      %v7042 = vand.u32 %v6799, 4294901760
      %7043 = vmatpush1.msra.mxu0 %v7042
      %7044 = vmatprep.subr.mxu0 0.0
      %7045 = vmatpush1.msra.mxu0 0.0
      %7046 = vmatprep.subr.mxu0 0.0
      %7047 = vmatpush1.msra.mxu0 0.0
      %7048 = vmatprep.subr.mxu0 0.0
      %7049 = vmatpush1.msra.mxu0 0.0
      %7050 = vmatprep.subr.mxu0 0.0
      %7051 = vmatpush1.msra.mxu0 0.0
      %7052 = vmatprep.subr.mxu0 0.0
      %7053 = vmatpush1.msra.mxu0 0.0
      %7054 = vmatprep.subr.mxu0 0.0
      %7055 = vmatpush1.msra.mxu0 0.0
      %7056 = vmatprep.subr.mxu0 0.0
      %7057 = vmatpush1.msra.mxu0 0.0
      %7058 = vmatprep.subr.mxu0 0.0
      %7059 = vmatpush1.msra.mxu0 0.0
      %7060 = vmatprep.subr.mxu0 0.0
      %7061 = vmatpush1.msra.mxu0 0.0
      %7062 = vmatprep.subr.mxu0 0.0
      %7063 = vmatpush1.msra.mxu0 0.0
      %7064 = vmatprep.subr.mxu0 0.0
      %7065 = vmatpush1.msra.mxu0 0.0
      %7066 = vmatprep.subr.mxu0 0.0
      %7067 = vmatpush1.msra.mxu0 0.0
      %7068 = vmatprep.subr.mxu0 0.0
      %7069 = vmatpush1.msra.mxu0 0.0
      %7070 = vmatprep.subr.mxu0 0.0
      %7071 = vmatpush1.msra.mxu0 0.0
      %7072 = vmatprep.subr.mxu0 0.0
      %7073 = vmatpush1.msra.mxu0 0.0
      %7074 = vmatprep.subr.mxu0 0.0
      %7075 = vmatpush1.msra.mxu0 0.0
      %7076 = vmatprep.subr.mxu0 0.0
      %7077 = vmatpush1.msra.mxu0 0.0
      %7078 = vmatprep.subr.mxu0 0.0
      %7079 = vmatpush1.msra.mxu0 0.0
      %7080 = vmatprep.subr.mxu0 0.0
      %7081 = vmatpush1.msra.mxu0 0.0
      %7082 = vmatprep.subr.mxu0 0.0
      %7083 = vmatpush1.msra.mxu0 0.0
      %7084 = vmatprep.subr.mxu0 0.0
      %7085 = vmatpush1.msra.mxu0 0.0
      %7086 = vmatprep.subr.mxu0 0.0
      %7087 = vmatpush1.msra.mxu0 0.0
      %7088 = vmatprep.subr.mxu0 0.0
      %7089 = vmatpush1.msra.mxu0 0.0
      %7090 = vmatprep.subr.mxu0 0.0
      %7091 = vmatpush1.msra.mxu0 0.0
      %7092 = vmatprep.subr.mxu0 0.0
      %7093 = vmatpush1.msra.mxu0 0.0
      %7094 = vmatprep.subr.mxu0 0.0
      %7095 = vmatpush1.msra.mxu0 0.0
      %7096 = vmatprep.subr.mxu0 0.0
      %7097 = vmatpush1.msra.mxu0 0.0
      %7098 = vmatprep.subr.mxu0 0.0
      %7099 = vmatpush1.msra.mxu0 0.0
      %7100 = vmatprep.subr.mxu0 0.0
      %7101 = vmatpush1.msra.mxu0 0.0
      %7102 = vmatprep.subr.mxu0 0.0
      %7103 = vmatpush1.msra.mxu0 0.0
      %7104 = vmatprep.subr.mxu0 0.0
      %7105 = vmatpush1.msra.mxu0 0.0
      %7106 = vmatprep.mubr.f32.mxu0 0.0
      %v7107 = vand.u32 %v6797, 4294901760
      %v7108 = vsub.f32 %v6797, %v7107
      %v7109 = vand.u32 %v7108, 4294901760
      %7110 = vmatmul.mubr.f32.gmra.mrb[0].mxu0 %v7109
      %v7111 = vpop.f32.mrb[0].mxu0
      %v7112 = vadd.f32 %v7036, %v7111
      %v7113 = vpop.f32.mrb[0].mxu0
      %v7114 = vadd.f32 %v7038, %v7113
      %7115 = vdwg.mxu0
      %v7116 = vand.u32 %v6801, 4294901760
      %v7117 = vsub.f32 %v6801, %v7116
      %v7118 = vand.u32 %v7117, 4294901760
      %7119 = vmatprep.subr.mxu0 %v7118
      %v7120 = vand.u32 %v6799, 4294901760
      %v7121 = vsub.f32 %v6799, %v7120
      %v7122 = vand.u32 %v7121, 4294901760
      %7123 = vmatpush1.msra.mxu0 %v7122
      %7124 = vmatprep.subr.mxu0 0.0
      %7125 = vmatpush1.msra.mxu0 0.0
      %7126 = vmatprep.subr.mxu0 0.0
      %7127 = vmatpush1.msra.mxu0 0.0
      %7128 = vmatprep.subr.mxu0 0.0
      %7129 = vmatpush1.msra.mxu0 0.0
      %7130 = vmatprep.subr.mxu0 0.0
      %7131 = vmatpush1.msra.mxu0 0.0
      %7132 = vmatprep.subr.mxu0 0.0
      %7133 = vmatpush1.msra.mxu0 0.0
      %7134 = vmatprep.subr.mxu0 0.0
      %7135 = vmatpush1.msra.mxu0 0.0
      %7136 = vmatprep.subr.mxu0 0.0
      %7137 = vmatpush1.msra.mxu0 0.0
      %7138 = vmatprep.subr.mxu0 0.0
      %7139 = vmatpush1.msra.mxu0 0.0
      %7140 = vmatprep.subr.mxu0 0.0
      %7141 = vmatpush1.msra.mxu0 0.0
      %7142 = vmatprep.subr.mxu0 0.0
      %7143 = vmatpush1.msra.mxu0 0.0
      %7144 = vmatprep.subr.mxu0 0.0
      %7145 = vmatpush1.msra.mxu0 0.0
      %7146 = vmatprep.subr.mxu0 0.0
      %7147 = vmatpush1.msra.mxu0 0.0
      %7148 = vmatprep.subr.mxu0 0.0
      %7149 = vmatpush1.msra.mxu0 0.0
      %7150 = vmatprep.subr.mxu0 0.0
      %7151 = vmatpush1.msra.mxu0 0.0
      %7152 = vmatprep.subr.mxu0 0.0
      %7153 = vmatpush1.msra.mxu0 0.0
      %7154 = vmatprep.subr.mxu0 0.0
      %7155 = vmatpush1.msra.mxu0 0.0
      %7156 = vmatprep.subr.mxu0 0.0
      %7157 = vmatpush1.msra.mxu0 0.0
      %7158 = vmatprep.subr.mxu0 0.0
      %7159 = vmatpush1.msra.mxu0 0.0
      %7160 = vmatprep.subr.mxu0 0.0
      %7161 = vmatpush1.msra.mxu0 0.0
      %7162 = vmatprep.subr.mxu0 0.0
      %7163 = vmatpush1.msra.mxu0 0.0
      %7164 = vmatprep.subr.mxu0 0.0
      %7165 = vmatpush1.msra.mxu0 0.0
      %7166 = vmatprep.subr.mxu0 0.0
      %7167 = vmatpush1.msra.mxu0 0.0
      %7168 = vmatprep.subr.mxu0 0.0
      %7169 = vmatpush1.msra.mxu0 0.0
      %7170 = vmatprep.subr.mxu0 0.0
      %7171 = vmatpush1.msra.mxu0 0.0
      %7172 = vmatprep.subr.mxu0 0.0
      %7173 = vmatpush1.msra.mxu0 0.0
      %7174 = vmatprep.subr.mxu0 0.0
      %7175 = vmatpush1.msra.mxu0 0.0
      %7176 = vmatprep.subr.mxu0 0.0
      %7177 = vmatpush1.msra.mxu0 0.0
      %7178 = vmatprep.subr.mxu0 0.0
      %7179 = vmatpush1.msra.mxu0 0.0
      %7180 = vmatprep.subr.mxu0 0.0
      %7181 = vmatpush1.msra.mxu0 0.0
      %7182 = vmatprep.subr.mxu0 0.0
      %7183 = vmatpush1.msra.mxu0 0.0
      %7184 = vmatprep.subr.mxu0 0.0
      %7185 = vmatpush1.msra.mxu0 0.0
      %7186 = vmatprep.mubr.f32.mxu0 0.0
      %v7187 = vand.u32 %v6797, 4294901760
      %7188 = vmatmul.mubr.f32.gmra.mrb[0].mxu0 %v7187
      %v7189 = vpop.f32.mrb[0].mxu0
      %v7190 = vadd.f32 %v7112, %v7189
      %v7191 = vpop.f32.mrb[0].mxu0
      %v7192 = vadd.f32 %v7114, %v7191
      %7193 = vdwg.mxu0
      %v7194 = vand.u32 %v6801, 4294901760
      %7195 = vmatprep.subr.mxu0 %v7194
      %v7196 = vand.u32 %v6799, 4294901760
      %7197 = vmatpush1.msra.mxu0 %v7196
      %7198 = vmatprep.subr.mxu0 0.0
      %7199 = vmatpush1.msra.mxu0 0.0
      %7200 = vmatprep.subr.mxu0 0.0
      %7201 = vmatpush1.msra.mxu0 0.0
      %7202 = vmatprep.subr.mxu0 0.0
      %7203 = vmatpush1.msra.mxu0 0.0
      %7204 = vmatprep.subr.mxu0 0.0
      %7205 = vmatpush1.msra.mxu0 0.0
      %7206 = vmatprep.subr.mxu0 0.0
      %7207 = vmatpush1.msra.mxu0 0.0
      %7208 = vmatprep.subr.mxu0 0.0
      %7209 = vmatpush1.msra.mxu0 0.0
      %7210 = vmatprep.subr.mxu0 0.0
      %7211 = vmatpush1.msra.mxu0 0.0
      %7212 = vmatprep.subr.mxu0 0.0
      %7213 = vmatpush1.msra.mxu0 0.0
      %7214 = vmatprep.subr.mxu0 0.0
      %7215 = vmatpush1.msra.mxu0 0.0
      %7216 = vmatprep.subr.mxu0 0.0
      %7217 = vmatpush1.msra.mxu0 0.0
      %7218 = vmatprep.subr.mxu0 0.0
      %7219 = vmatpush1.msra.mxu0 0.0
      %7220 = vmatprep.subr.mxu0 0.0
      %7221 = vmatpush1.msra.mxu0 0.0
      %7222 = vmatprep.subr.mxu0 0.0
      %7223 = vmatpush1.msra.mxu0 0.0
      %7224 = vmatprep.subr.mxu0 0.0
      %7225 = vmatpush1.msra.mxu0 0.0
      %7226 = vmatprep.subr.mxu0 0.0
      %7227 = vmatpush1.msra.mxu0 0.0
      %7228 = vmatprep.subr.mxu0 0.0
      %7229 = vmatpush1.msra.mxu0 0.0
      %7230 = vmatprep.subr.mxu0 0.0
      %7231 = vmatpush1.msra.mxu0 0.0
      %7232 = vmatprep.subr.mxu0 0.0
      %7233 = vmatpush1.msra.mxu0 0.0
      %7234 = vmatprep.subr.mxu0 0.0
      %7235 = vmatpush1.msra.mxu0 0.0
      %7236 = vmatprep.subr.mxu0 0.0
      %7237 = vmatpush1.msra.mxu0 0.0
      %7238 = vmatprep.subr.mxu0 0.0
      %7239 = vmatpush1.msra.mxu0 0.0
      %7240 = vmatprep.subr.mxu0 0.0
      %7241 = vmatpush1.msra.mxu0 0.0
      %7242 = vmatprep.subr.mxu0 0.0
      %7243 = vmatpush1.msra.mxu0 0.0
      %7244 = vmatprep.subr.mxu0 0.0
      %7245 = vmatpush1.msra.mxu0 0.0
      %7246 = vmatprep.subr.mxu0 0.0
      %7247 = vmatpush1.msra.mxu0 0.0
      %7248 = vmatprep.subr.mxu0 0.0
      %7249 = vmatpush1.msra.mxu0 0.0
      %7250 = vmatprep.subr.mxu0 0.0
      %7251 = vmatpush1.msra.mxu0 0.0
      %7252 = vmatprep.subr.mxu0 0.0
      %7253 = vmatpush1.msra.mxu0 0.0
      %7254 = vmatprep.subr.mxu0 0.0
      %7255 = vmatpush1.msra.mxu0 0.0
      %7256 = vmatprep.subr.mxu0 0.0
      %7257 = vmatpush1.msra.mxu0 0.0
      %7258 = vmatprep.subr.mxu0 0.0
      %7259 = vmatpush1.msra.mxu0 0.0
      %7260 = vmatprep.mubr.f32.mxu0 0.0
      %v7261 = vand.u32 %v6797, 4294901760
      %7262 = vmatmul.mubr.f32.gmra.mrb[0].mxu0 %v7261
      %v7263 = vpop.f32.mrb[0].mxu0
      %v7264 = vadd.f32 %v7190, %v7263
      %v7265 = vpop.f32.mrb[0].mxu0
      %v7266 = vadd.f32 %v7192, %v7265
      %7267 = vdwg.mxu0
      %v7268 = vadd.f32 %v6784, %v7264
      %v7269 = vadd.f32 %v6785, %v7266
      %s7270 = scalar_lea.vmem %s4, 20
      %v7271 = vld [vmem:[%s7270] sm:$0xf]
      %v7273 = vsel %vm388, %v7271, 0
      %v7276 = vsel %vm392, %v6306, 0
      %v7279 = vsel %vm392, %v6307, 0
      %v7281 = vand.u32 %v7279, 4294901760
      %7282 = vmatprep.subr.mxu0 %v7281
      %v7283 = vand.u32 %v7276, 4294901760
      %7284 = vmatpush1.msra.mxu0 %v7283
      %7285 = vmatprep.subr.mxu0 0.0
      %7286 = vmatpush1.msra.mxu0 0.0
      %7287 = vmatprep.subr.mxu0 0.0
      %7288 = vmatpush1.msra.mxu0 0.0
      %7289 = vmatprep.subr.mxu0 0.0
      %7290 = vmatpush1.msra.mxu0 0.0
      %7291 = vmatprep.subr.mxu0 0.0
      %7292 = vmatpush1.msra.mxu0 0.0
      %7293 = vmatprep.subr.mxu0 0.0
      %7294 = vmatpush1.msra.mxu0 0.0
      %7295 = vmatprep.subr.mxu0 0.0
      %7296 = vmatpush1.msra.mxu0 0.0
      %7297 = vmatprep.subr.mxu0 0.0
      %7298 = vmatpush1.msra.mxu0 0.0
      %7299 = vmatprep.subr.mxu0 0.0
      %7300 = vmatpush1.msra.mxu0 0.0
      %7301 = vmatprep.subr.mxu0 0.0
      %7302 = vmatpush1.msra.mxu0 0.0
      %7303 = vmatprep.subr.mxu0 0.0
      %7304 = vmatpush1.msra.mxu0 0.0
      %7305 = vmatprep.subr.mxu0 0.0
      %7306 = vmatpush1.msra.mxu0 0.0
      %7307 = vmatprep.subr.mxu0 0.0
      %7308 = vmatpush1.msra.mxu0 0.0
      %7309 = vmatprep.subr.mxu0 0.0
      %7310 = vmatpush1.msra.mxu0 0.0
      %7311 = vmatprep.subr.mxu0 0.0
      %7312 = vmatpush1.msra.mxu0 0.0
      %7313 = vmatprep.subr.mxu0 0.0
      %7314 = vmatpush1.msra.mxu0 0.0
      %7315 = vmatprep.subr.mxu0 0.0
      %7316 = vmatpush1.msra.mxu0 0.0
      %7317 = vmatprep.subr.mxu0 0.0
      %7318 = vmatpush1.msra.mxu0 0.0
      %7319 = vmatprep.subr.mxu0 0.0
      %7320 = vmatpush1.msra.mxu0 0.0
      %7321 = vmatprep.subr.mxu0 0.0
      %7322 = vmatpush1.msra.mxu0 0.0
      %7323 = vmatprep.subr.mxu0 0.0
      %7324 = vmatpush1.msra.mxu0 0.0
      %7325 = vmatprep.subr.mxu0 0.0
      %7326 = vmatpush1.msra.mxu0 0.0
      %7327 = vmatprep.subr.mxu0 0.0
      %7328 = vmatpush1.msra.mxu0 0.0
      %7329 = vmatprep.subr.mxu0 0.0
      %7330 = vmatpush1.msra.mxu0 0.0
      %7331 = vmatprep.subr.mxu0 0.0
      %7332 = vmatpush1.msra.mxu0 0.0
      %7333 = vmatprep.subr.mxu0 0.0
      %7334 = vmatpush1.msra.mxu0 0.0
      %7335 = vmatprep.subr.mxu0 0.0
      %7336 = vmatpush1.msra.mxu0 0.0
      %7337 = vmatprep.subr.mxu0 0.0
      %7338 = vmatpush1.msra.mxu0 0.0
      %7339 = vmatprep.subr.mxu0 0.0
      %7340 = vmatpush1.msra.mxu0 0.0
      %7341 = vmatprep.subr.mxu0 0.0
      %7342 = vmatpush1.msra.mxu0 0.0
      %7343 = vmatprep.subr.mxu0 0.0
      %7344 = vmatpush1.msra.mxu0 0.0
      %7345 = vmatprep.subr.mxu0 0.0
      %7346 = vmatpush1.msra.mxu0 0.0
      %7347 = vmatprep.mubr.f32.mxu0 0.0
      %v7348 = vand.u32 %v7273, 4294901760
      %v7349 = vsub.f32 %v7273, %v7348
      %v7350 = vand.u32 %v7349, 4294901760
      %v7351 = vsub.f32 %v7349, %v7350
      %v7352 = vand.u32 %v7351, 4294901760
      %7353 = vmatmul.mubr.f32.gmra.mrb[0].mxu0 %v7352
      %v7354 = vpop.f32.mrb[0].mxu0
      %v7355 = vadd.f32 0.0, %v7354
      %v7356 = vpop.f32.mrb[0].mxu0
      %v7357 = vadd.f32 0.0, %v7356
      %7358 = vdwg.mxu0
      %v7359 = vand.u32 %v7279, 4294901760
      %v7360 = vsub.f32 %v7279, %v7359
      %v7361 = vand.u32 %v7360, 4294901760
      %v7362 = vsub.f32 %v7360, %v7361
      %v7363 = vand.u32 %v7362, 4294901760
      %7364 = vmatprep.subr.mxu0 %v7363
      %v7365 = vand.u32 %v7276, 4294901760
      %v7366 = vsub.f32 %v7276, %v7365
      %v7367 = vand.u32 %v7366, 4294901760
      %v7368 = vsub.f32 %v7366, %v7367
      %v7369 = vand.u32 %v7368, 4294901760
      %7370 = vmatpush1.msra.mxu0 %v7369
      %7371 = vmatprep.subr.mxu0 0.0
      %7372 = vmatpush1.msra.mxu0 0.0
      %7373 = vmatprep.subr.mxu0 0.0
      %7374 = vmatpush1.msra.mxu0 0.0
      %7375 = vmatprep.subr.mxu0 0.0
      %7376 = vmatpush1.msra.mxu0 0.0
      %7377 = vmatprep.subr.mxu0 0.0
      %7378 = vmatpush1.msra.mxu0 0.0
      %7379 = vmatprep.subr.mxu0 0.0
      %7380 = vmatpush1.msra.mxu0 0.0
      %7381 = vmatprep.subr.mxu0 0.0
      %7382 = vmatpush1.msra.mxu0 0.0
      %7383 = vmatprep.subr.mxu0 0.0
      %7384 = vmatpush1.msra.mxu0 0.0
      %7385 = vmatprep.subr.mxu0 0.0
      %7386 = vmatpush1.msra.mxu0 0.0
      %7387 = vmatprep.subr.mxu0 0.0
      %7388 = vmatpush1.msra.mxu0 0.0
      %7389 = vmatprep.subr.mxu0 0.0
      %7390 = vmatpush1.msra.mxu0 0.0
      %7391 = vmatprep.subr.mxu0 0.0
      %7392 = vmatpush1.msra.mxu0 0.0
      %7393 = vmatprep.subr.mxu0 0.0
      %7394 = vmatpush1.msra.mxu0 0.0
      %7395 = vmatprep.subr.mxu0 0.0
      %7396 = vmatpush1.msra.mxu0 0.0
      %7397 = vmatprep.subr.mxu0 0.0
      %7398 = vmatpush1.msra.mxu0 0.0
      %7399 = vmatprep.subr.mxu0 0.0
      %7400 = vmatpush1.msra.mxu0 0.0
      %7401 = vmatprep.subr.mxu0 0.0
      %7402 = vmatpush1.msra.mxu0 0.0
      %7403 = vmatprep.subr.mxu0 0.0
      %7404 = vmatpush1.msra.mxu0 0.0
      %7405 = vmatprep.subr.mxu0 0.0
      %7406 = vmatpush1.msra.mxu0 0.0
      %7407 = vmatprep.subr.mxu0 0.0
      %7408 = vmatpush1.msra.mxu0 0.0
      %7409 = vmatprep.subr.mxu0 0.0
      %7410 = vmatpush1.msra.mxu0 0.0
      %7411 = vmatprep.subr.mxu0 0.0
      %7412 = vmatpush1.msra.mxu0 0.0
      %7413 = vmatprep.subr.mxu0 0.0
      %7414 = vmatpush1.msra.mxu0 0.0
      %7415 = vmatprep.subr.mxu0 0.0
      %7416 = vmatpush1.msra.mxu0 0.0
      %7417 = vmatprep.subr.mxu0 0.0
      %7418 = vmatpush1.msra.mxu0 0.0
      %7419 = vmatprep.subr.mxu0 0.0
      %7420 = vmatpush1.msra.mxu0 0.0
      %7421 = vmatprep.subr.mxu0 0.0
      %7422 = vmatpush1.msra.mxu0 0.0
      %7423 = vmatprep.subr.mxu0 0.0
      %7424 = vmatpush1.msra.mxu0 0.0
      %7425 = vmatprep.subr.mxu0 0.0
      %7426 = vmatpush1.msra.mxu0 0.0
      %7427 = vmatprep.subr.mxu0 0.0
      %7428 = vmatpush1.msra.mxu0 0.0
      %7429 = vmatprep.subr.mxu0 0.0
      %7430 = vmatpush1.msra.mxu0 0.0
      %7431 = vmatprep.subr.mxu0 0.0
      %7432 = vmatpush1.msra.mxu0 0.0
      %7433 = vmatprep.mubr.f32.mxu0 0.0
      %v7434 = vand.u32 %v7273, 4294901760
      %7435 = vmatmul.mubr.f32.gmra.mrb[0].mxu0 %v7434
      %v7436 = vpop.f32.mrb[0].mxu0
      %v7437 = vadd.f32 %v7355, %v7436
      %v7438 = vpop.f32.mrb[0].mxu0
      %v7439 = vadd.f32 %v7357, %v7438
      %7440 = vdwg.mxu0
      %v7441 = vand.u32 %v7279, 4294901760
      %v7442 = vsub.f32 %v7279, %v7441
      %7443 = vmatprep.subr.mxu0 %v7442
      %v7444 = vand.u32 %v7276, 4294901760
      %v7445 = vsub.f32 %v7276, %v7444
      %7446 = vmatpush1.msra.mxu0 %v7445
      %7447 = vmatprep.subr.mxu0 0.0
      %7448 = vmatpush1.msra.mxu0 0.0
      %7449 = vmatprep.subr.mxu0 0.0
      %7450 = vmatpush1.msra.mxu0 0.0
      %7451 = vmatprep.subr.mxu0 0.0
      %7452 = vmatpush1.msra.mxu0 0.0
      %7453 = vmatprep.subr.mxu0 0.0
      %7454 = vmatpush1.msra.mxu0 0.0
      %7455 = vmatprep.subr.mxu0 0.0
      %7456 = vmatpush1.msra.mxu0 0.0
      %7457 = vmatprep.subr.mxu0 0.0
      %7458 = vmatpush1.msra.mxu0 0.0
      %7459 = vmatprep.subr.mxu0 0.0
      %7460 = vmatpush1.msra.mxu0 0.0
      %7461 = vmatprep.subr.mxu0 0.0
      %7462 = vmatpush1.msra.mxu0 0.0
      %7463 = vmatprep.subr.mxu0 0.0
      %7464 = vmatpush1.msra.mxu0 0.0
      %7465 = vmatprep.subr.mxu0 0.0
      %7466 = vmatpush1.msra.mxu0 0.0
      %7467 = vmatprep.subr.mxu0 0.0
      %7468 = vmatpush1.msra.mxu0 0.0
      %7469 = vmatprep.subr.mxu0 0.0
      %7470 = vmatpush1.msra.mxu0 0.0
      %7471 = vmatprep.subr.mxu0 0.0
      %7472 = vmatpush1.msra.mxu0 0.0
      %7473 = vmatprep.subr.mxu0 0.0
      %7474 = vmatpush1.msra.mxu0 0.0
      %7475 = vmatprep.subr.mxu0 0.0
      %7476 = vmatpush1.msra.mxu0 0.0
      %7477 = vmatprep.subr.mxu0 0.0
      %7478 = vmatpush1.msra.mxu0 0.0
      %7479 = vmatprep.subr.mxu0 0.0
      %7480 = vmatpush1.msra.mxu0 0.0
      %7481 = vmatprep.subr.mxu0 0.0
      %7482 = vmatpush1.msra.mxu0 0.0
      %7483 = vmatprep.subr.mxu0 0.0
      %7484 = vmatpush1.msra.mxu0 0.0
      %7485 = vmatprep.subr.mxu0 0.0
      %7486 = vmatpush1.msra.mxu0 0.0
      %7487 = vmatprep.subr.mxu0 0.0
      %7488 = vmatpush1.msra.mxu0 0.0
      %7489 = vmatprep.subr.mxu0 0.0
      %7490 = vmatpush1.msra.mxu0 0.0
      %7491 = vmatprep.subr.mxu0 0.0
      %7492 = vmatpush1.msra.mxu0 0.0
      %7493 = vmatprep.subr.mxu0 0.0
      %7494 = vmatpush1.msra.mxu0 0.0
      %7495 = vmatprep.subr.mxu0 0.0
      %7496 = vmatpush1.msra.mxu0 0.0
      %7497 = vmatprep.subr.mxu0 0.0
      %7498 = vmatpush1.msra.mxu0 0.0
      %7499 = vmatprep.subr.mxu0 0.0
      %7500 = vmatpush1.msra.mxu0 0.0
      %7501 = vmatprep.subr.mxu0 0.0
      %7502 = vmatpush1.msra.mxu0 0.0
      %7503 = vmatprep.subr.mxu0 0.0
      %7504 = vmatpush1.msra.mxu0 0.0
      %7505 = vmatprep.subr.mxu0 0.0
      %7506 = vmatpush1.msra.mxu0 0.0
      %7507 = vmatprep.subr.mxu0 0.0
      %7508 = vmatpush1.msra.mxu0 0.0
      %7509 = vmatprep.mubr.f32.mxu0 0.0
      %v7510 = vand.u32 %v7273, 4294901760
      %v7511 = vsub.f32 %v7273, %v7510
      %7512 = vmatmul.mubr.f32.gmra.mrb[0].mxu0 %v7511
      %v7513 = vpop.f32.mrb[0].mxu0
      %v7514 = vadd.f32 %v7437, %v7513
      %v7515 = vpop.f32.mrb[0].mxu0
      %v7516 = vadd.f32 %v7439, %v7515
      %7517 = vdwg.mxu0
      %v7518 = vand.u32 %v7279, 4294901760
      %7519 = vmatprep.subr.mxu0 %v7518
      %v7520 = vand.u32 %v7276, 4294901760
      %7521 = vmatpush1.msra.mxu0 %v7520
      %7522 = vmatprep.subr.mxu0 0.0
      %7523 = vmatpush1.msra.mxu0 0.0
      %7524 = vmatprep.subr.mxu0 0.0
      %7525 = vmatpush1.msra.mxu0 0.0
      %7526 = vmatprep.subr.mxu0 0.0
      %7527 = vmatpush1.msra.mxu0 0.0
      %7528 = vmatprep.subr.mxu0 0.0
      %7529 = vmatpush1.msra.mxu0 0.0
      %7530 = vmatprep.subr.mxu0 0.0
      %7531 = vmatpush1.msra.mxu0 0.0
      %7532 = vmatprep.subr.mxu0 0.0
      %7533 = vmatpush1.msra.mxu0 0.0
      %7534 = vmatprep.subr.mxu0 0.0
      %7535 = vmatpush1.msra.mxu0 0.0
      %7536 = vmatprep.subr.mxu0 0.0
      %7537 = vmatpush1.msra.mxu0 0.0
      %7538 = vmatprep.subr.mxu0 0.0
      %7539 = vmatpush1.msra.mxu0 0.0
      %7540 = vmatprep.subr.mxu0 0.0
      %7541 = vmatpush1.msra.mxu0 0.0
      %7542 = vmatprep.subr.mxu0 0.0
      %7543 = vmatpush1.msra.mxu0 0.0
      %7544 = vmatprep.subr.mxu0 0.0
      %7545 = vmatpush1.msra.mxu0 0.0
      %7546 = vmatprep.subr.mxu0 0.0
      %7547 = vmatpush1.msra.mxu0 0.0
      %7548 = vmatprep.subr.mxu0 0.0
      %7549 = vmatpush1.msra.mxu0 0.0
      %7550 = vmatprep.subr.mxu0 0.0
      %7551 = vmatpush1.msra.mxu0 0.0
      %7552 = vmatprep.subr.mxu0 0.0
      %7553 = vmatpush1.msra.mxu0 0.0
      %7554 = vmatprep.subr.mxu0 0.0
      %7555 = vmatpush1.msra.mxu0 0.0
      %7556 = vmatprep.subr.mxu0 0.0
      %7557 = vmatpush1.msra.mxu0 0.0
      %7558 = vmatprep.subr.mxu0 0.0
      %7559 = vmatpush1.msra.mxu0 0.0
      %7560 = vmatprep.subr.mxu0 0.0
      %7561 = vmatpush1.msra.mxu0 0.0
      %7562 = vmatprep.subr.mxu0 0.0
      %7563 = vmatpush1.msra.mxu0 0.0
      %7564 = vmatprep.subr.mxu0 0.0
      %7565 = vmatpush1.msra.mxu0 0.0
      %7566 = vmatprep.subr.mxu0 0.0
      %7567 = vmatpush1.msra.mxu0 0.0
      %7568 = vmatprep.subr.mxu0 0.0
      %7569 = vmatpush1.msra.mxu0 0.0
      %7570 = vmatprep.subr.mxu0 0.0
      %7571 = vmatpush1.msra.mxu0 0.0
      %7572 = vmatprep.subr.mxu0 0.0
      %7573 = vmatpush1.msra.mxu0 0.0
      %7574 = vmatprep.subr.mxu0 0.0
      %7575 = vmatpush1.msra.mxu0 0.0
      %7576 = vmatprep.subr.mxu0 0.0
      %7577 = vmatpush1.msra.mxu0 0.0
      %7578 = vmatprep.subr.mxu0 0.0
      %7579 = vmatpush1.msra.mxu0 0.0
      %7580 = vmatprep.subr.mxu0 0.0
      %7581 = vmatpush1.msra.mxu0 0.0
      %7582 = vmatprep.subr.mxu0 0.0
      %7583 = vmatpush1.msra.mxu0 0.0
      %7584 = vmatprep.mubr.f32.mxu0 0.0
      %v7585 = vand.u32 %v7273, 4294901760
      %v7586 = vsub.f32 %v7273, %v7585
      %v7587 = vand.u32 %v7586, 4294901760
      %7588 = vmatmul.mubr.f32.gmra.mrb[0].mxu0 %v7587
      %v7589 = vpop.f32.mrb[0].mxu0
      %v7590 = vadd.f32 %v7514, %v7589
      %v7591 = vpop.f32.mrb[0].mxu0
      %v7592 = vadd.f32 %v7516, %v7591
      %7593 = vdwg.mxu0
      %v7594 = vand.u32 %v7279, 4294901760
      %v7595 = vsub.f32 %v7279, %v7594
      %v7596 = vand.u32 %v7595, 4294901760
      %7597 = vmatprep.subr.mxu0 %v7596
      %v7598 = vand.u32 %v7276, 4294901760
      %v7599 = vsub.f32 %v7276, %v7598
      %v7600 = vand.u32 %v7599, 4294901760
      %7601 = vmatpush1.msra.mxu0 %v7600
      %7602 = vmatprep.subr.mxu0 0.0
      %7603 = vmatpush1.msra.mxu0 0.0
      %7604 = vmatprep.subr.mxu0 0.0
      %7605 = vmatpush1.msra.mxu0 0.0
      %7606 = vmatprep.subr.mxu0 0.0
      %7607 = vmatpush1.msra.mxu0 0.0
      %7608 = vmatprep.subr.mxu0 0.0
      %7609 = vmatpush1.msra.mxu0 0.0
      %7610 = vmatprep.subr.mxu0 0.0
      %7611 = vmatpush1.msra.mxu0 0.0
      %7612 = vmatprep.subr.mxu0 0.0
      %7613 = vmatpush1.msra.mxu0 0.0
      %7614 = vmatprep.subr.mxu0 0.0
      %7615 = vmatpush1.msra.mxu0 0.0
      %7616 = vmatprep.subr.mxu0 0.0
      %7617 = vmatpush1.msra.mxu0 0.0
      %7618 = vmatprep.subr.mxu0 0.0
      %7619 = vmatpush1.msra.mxu0 0.0
      %7620 = vmatprep.subr.mxu0 0.0
      %7621 = vmatpush1.msra.mxu0 0.0
      %7622 = vmatprep.subr.mxu0 0.0
      %7623 = vmatpush1.msra.mxu0 0.0
      %7624 = vmatprep.subr.mxu0 0.0
      %7625 = vmatpush1.msra.mxu0 0.0
      %7626 = vmatprep.subr.mxu0 0.0
      %7627 = vmatpush1.msra.mxu0 0.0
      %7628 = vmatprep.subr.mxu0 0.0
      %7629 = vmatpush1.msra.mxu0 0.0
      %7630 = vmatprep.subr.mxu0 0.0
      %7631 = vmatpush1.msra.mxu0 0.0
      %7632 = vmatprep.subr.mxu0 0.0
      %7633 = vmatpush1.msra.mxu0 0.0
      %7634 = vmatprep.subr.mxu0 0.0
      %7635 = vmatpush1.msra.mxu0 0.0
      %7636 = vmatprep.subr.mxu0 0.0
      %7637 = vmatpush1.msra.mxu0 0.0
      %7638 = vmatprep.subr.mxu0 0.0
      %7639 = vmatpush1.msra.mxu0 0.0
      %7640 = vmatprep.subr.mxu0 0.0
      %7641 = vmatpush1.msra.mxu0 0.0
      %7642 = vmatprep.subr.mxu0 0.0
      %7643 = vmatpush1.msra.mxu0 0.0
      %7644 = vmatprep.subr.mxu0 0.0
      %7645 = vmatpush1.msra.mxu0 0.0
      %7646 = vmatprep.subr.mxu0 0.0
      %7647 = vmatpush1.msra.mxu0 0.0
      %7648 = vmatprep.subr.mxu0 0.0
      %7649 = vmatpush1.msra.mxu0 0.0
      %7650 = vmatprep.subr.mxu0 0.0
      %7651 = vmatpush1.msra.mxu0 0.0
      %7652 = vmatprep.subr.mxu0 0.0
      %7653 = vmatpush1.msra.mxu0 0.0
      %7654 = vmatprep.subr.mxu0 0.0
      %7655 = vmatpush1.msra.mxu0 0.0
      %7656 = vmatprep.subr.mxu0 0.0
      %7657 = vmatpush1.msra.mxu0 0.0
      %7658 = vmatprep.subr.mxu0 0.0
      %7659 = vmatpush1.msra.mxu0 0.0
      %7660 = vmatprep.subr.mxu0 0.0
      %7661 = vmatpush1.msra.mxu0 0.0
      %7662 = vmatprep.subr.mxu0 0.0
      %7663 = vmatpush1.msra.mxu0 0.0
      %7664 = vmatprep.mubr.f32.mxu0 0.0
      %v7665 = vand.u32 %v7273, 4294901760
      %7666 = vmatmul.mubr.f32.gmra.mrb[0].mxu0 %v7665
      %v7667 = vpop.f32.mrb[0].mxu0
      %v7668 = vadd.f32 %v7590, %v7667
      %v7669 = vpop.f32.mrb[0].mxu0
      %v7670 = vadd.f32 %v7592, %v7669
      %7671 = vdwg.mxu0
      %v7672 = vand.u32 %v7279, 4294901760
      %7673 = vmatprep.subr.mxu0 %v7672
      %v7674 = vand.u32 %v7276, 4294901760
      %7675 = vmatpush1.msra.mxu0 %v7674
      %7676 = vmatprep.subr.mxu0 0.0
      %7677 = vmatpush1.msra.mxu0 0.0
      %7678 = vmatprep.subr.mxu0 0.0
      %7679 = vmatpush1.msra.mxu0 0.0
      %7680 = vmatprep.subr.mxu0 0.0
      %7681 = vmatpush1.msra.mxu0 0.0
      %7682 = vmatprep.subr.mxu0 0.0
      %7683 = vmatpush1.msra.mxu0 0.0
      %7684 = vmatprep.subr.mxu0 0.0
      %7685 = vmatpush1.msra.mxu0 0.0
      %7686 = vmatprep.subr.mxu0 0.0
      %7687 = vmatpush1.msra.mxu0 0.0
      %7688 = vmatprep.subr.mxu0 0.0
      %7689 = vmatpush1.msra.mxu0 0.0
      %7690 = vmatprep.subr.mxu0 0.0
      %7691 = vmatpush1.msra.mxu0 0.0
      %7692 = vmatprep.subr.mxu0 0.0
      %7693 = vmatpush1.msra.mxu0 0.0
      %7694 = vmatprep.subr.mxu0 0.0
      %7695 = vmatpush1.msra.mxu0 0.0
      %7696 = vmatprep.subr.mxu0 0.0
      %7697 = vmatpush1.msra.mxu0 0.0
      %7698 = vmatprep.subr.mxu0 0.0
      %7699 = vmatpush1.msra.mxu0 0.0
      %7700 = vmatprep.subr.mxu0 0.0
      %7701 = vmatpush1.msra.mxu0 0.0
      %7702 = vmatprep.subr.mxu0 0.0
      %7703 = vmatpush1.msra.mxu0 0.0
      %7704 = vmatprep.subr.mxu0 0.0
      %7705 = vmatpush1.msra.mxu0 0.0
      %7706 = vmatprep.subr.mxu0 0.0
      %7707 = vmatpush1.msra.mxu0 0.0
      %7708 = vmatprep.subr.mxu0 0.0
      %7709 = vmatpush1.msra.mxu0 0.0
      %7710 = vmatprep.subr.mxu0 0.0
      %7711 = vmatpush1.msra.mxu0 0.0
      %7712 = vmatprep.subr.mxu0 0.0
      %7713 = vmatpush1.msra.mxu0 0.0
      %7714 = vmatprep.subr.mxu0 0.0
      %7715 = vmatpush1.msra.mxu0 0.0
      %7716 = vmatprep.subr.mxu0 0.0
      %7717 = vmatpush1.msra.mxu0 0.0
      %7718 = vmatprep.subr.mxu0 0.0
      %7719 = vmatpush1.msra.mxu0 0.0
      %7720 = vmatprep.subr.mxu0 0.0
      %7721 = vmatpush1.msra.mxu0 0.0
      %7722 = vmatprep.subr.mxu0 0.0
      %7723 = vmatpush1.msra.mxu0 0.0
      %7724 = vmatprep.subr.mxu0 0.0
      %7725 = vmatpush1.msra.mxu0 0.0
      %7726 = vmatprep.subr.mxu0 0.0
      %7727 = vmatpush1.msra.mxu0 0.0
      %7728 = vmatprep.subr.mxu0 0.0
      %7729 = vmatpush1.msra.mxu0 0.0
      %7730 = vmatprep.subr.mxu0 0.0
      %7731 = vmatpush1.msra.mxu0 0.0
      %7732 = vmatprep.subr.mxu0 0.0
      %7733 = vmatpush1.msra.mxu0 0.0
      %7734 = vmatprep.subr.mxu0 0.0
      %7735 = vmatpush1.msra.mxu0 0.0
      %7736 = vmatprep.subr.mxu0 0.0
      %7737 = vmatpush1.msra.mxu0 0.0
      %7738 = vmatprep.mubr.f32.mxu0 0.0
      %v7739 = vand.u32 %v7273, 4294901760
      %7740 = vmatmul.mubr.f32.gmra.mrb[0].mxu0 %v7739
      %v7741 = vpop.f32.mrb[0].mxu0
      %v7742 = vadd.f32 %v7668, %v7741
      %v7743 = vpop.f32.mrb[0].mxu0
      %v7744 = vadd.f32 %v7670, %v7743
      %7745 = vdwg.mxu0
      %v7746 = vadd.f32 %v7268, %v7742
      %v7747 = vadd.f32 %v7269, %v7744
      %v7748 = vld [vmem:[#allocation2] sm:$0xff]
      %v7749 = vld [vmem:[#allocation2 + $0x8] sm:$0xf]
      %v7752 = vcombine.high %v7748, %v7748
      %7753 = vrot.lane.b32.xlu0 %v7748, 79
      %v7754 = vpop.permute.xlu0 %7753
      %7755 = vrot.lane.b32.xlu0 %v7752, 79
      %v7756 = vpop.permute.xlu0 %7755
      %7757 = vrot.lane.b32.xlu0 %v7749, 79
      %v7758 = vpop.permute.xlu0 %7757
      %v7759 = vsel %vm3297, %v7754, %v7756
      %v7760 = vsel %vm3297, %v7756, %v7758
      %7763 = vrot.lane.b32.xlu0 %v7748, 81
      %v7764 = vpop.permute.xlu0 %7763
      %7765 = vrot.lane.b32.xlu0 %v7752, 81
      %v7766 = vpop.permute.xlu0 %7765
      %7767 = vrot.lane.b32.xlu0 %v7749, 81
      %v7768 = vpop.permute.xlu0 %7767
      %v7769 = vsel %vm3308, %v7764, %v7766
      %v7770 = vsel %vm3308, %v7766, %v7768
      %v7773 = vsel %vm341, %v7759, %v7769
      %v7774 = vsel %vm342, %v7760, %v7770
      %v7775 = vsel %vm372, %v7769, %v7759
      %v7776 = vsel %vm373, %v7770, %v7760
      %s7777 = scalar_lea.vmem %s4, 24
      %v7778 = vld [vmem:[%s7777] sm:$0xf]
      %v7780 = vsel %vm388, %v7778, 0
      %v7783 = vsel %vm392, %v7773, 0
      %v7786 = vsel %vm392, %v7774, 0
      %v7788 = vand.u32 %v7786, 4294901760
      %7789 = vmatprep.subr.mxu0 %v7788
      %v7790 = vand.u32 %v7783, 4294901760
      %7791 = vmatpush1.msra.mxu0 %v7790
      %7792 = vmatprep.subr.mxu0 0.0
      %7793 = vmatpush1.msra.mxu0 0.0
      %7794 = vmatprep.subr.mxu0 0.0
      %7795 = vmatpush1.msra.mxu0 0.0
      %7796 = vmatprep.subr.mxu0 0.0
      %7797 = vmatpush1.msra.mxu0 0.0
      %7798 = vmatprep.subr.mxu0 0.0
      %7799 = vmatpush1.msra.mxu0 0.0
      %7800 = vmatprep.subr.mxu0 0.0
      %7801 = vmatpush1.msra.mxu0 0.0
      %7802 = vmatprep.subr.mxu0 0.0
      %7803 = vmatpush1.msra.mxu0 0.0
      %7804 = vmatprep.subr.mxu0 0.0
      %7805 = vmatpush1.msra.mxu0 0.0
      %7806 = vmatprep.subr.mxu0 0.0
      %7807 = vmatpush1.msra.mxu0 0.0
      %7808 = vmatprep.subr.mxu0 0.0
      %7809 = vmatpush1.msra.mxu0 0.0
      %7810 = vmatprep.subr.mxu0 0.0
      %7811 = vmatpush1.msra.mxu0 0.0
      %7812 = vmatprep.subr.mxu0 0.0
      %7813 = vmatpush1.msra.mxu0 0.0
      %7814 = vmatprep.subr.mxu0 0.0
      %7815 = vmatpush1.msra.mxu0 0.0
      %7816 = vmatprep.subr.mxu0 0.0
      %7817 = vmatpush1.msra.mxu0 0.0
      %7818 = vmatprep.subr.mxu0 0.0
      %7819 = vmatpush1.msra.mxu0 0.0
      %7820 = vmatprep.subr.mxu0 0.0
      %7821 = vmatpush1.msra.mxu0 0.0
      %7822 = vmatprep.subr.mxu0 0.0
      %7823 = vmatpush1.msra.mxu0 0.0
      %7824 = vmatprep.subr.mxu0 0.0
      %7825 = vmatpush1.msra.mxu0 0.0
      %7826 = vmatprep.subr.mxu0 0.0
      %7827 = vmatpush1.msra.mxu0 0.0
      %7828 = vmatprep.subr.mxu0 0.0
      %7829 = vmatpush1.msra.mxu0 0.0
      %7830 = vmatprep.subr.mxu0 0.0
      %7831 = vmatpush1.msra.mxu0 0.0
      %7832 = vmatprep.subr.mxu0 0.0
      %7833 = vmatpush1.msra.mxu0 0.0
      %7834 = vmatprep.subr.mxu0 0.0
      %7835 = vmatpush1.msra.mxu0 0.0
      %7836 = vmatprep.subr.mxu0 0.0
      %7837 = vmatpush1.msra.mxu0 0.0
      %7838 = vmatprep.subr.mxu0 0.0
      %7839 = vmatpush1.msra.mxu0 0.0
      %7840 = vmatprep.subr.mxu0 0.0
      %7841 = vmatpush1.msra.mxu0 0.0
      %7842 = vmatprep.subr.mxu0 0.0
      %7843 = vmatpush1.msra.mxu0 0.0
      %7844 = vmatprep.subr.mxu0 0.0
      %7845 = vmatpush1.msra.mxu0 0.0
      %7846 = vmatprep.subr.mxu0 0.0
      %7847 = vmatpush1.msra.mxu0 0.0
      %7848 = vmatprep.subr.mxu0 0.0
      %7849 = vmatpush1.msra.mxu0 0.0
      %7850 = vmatprep.subr.mxu0 0.0
      %7851 = vmatpush1.msra.mxu0 0.0
      %7852 = vmatprep.subr.mxu0 0.0
      %7853 = vmatpush1.msra.mxu0 0.0
      %7854 = vmatprep.mubr.f32.mxu0 0.0
      %v7855 = vand.u32 %v7780, 4294901760
      %v7856 = vsub.f32 %v7780, %v7855
      %v7857 = vand.u32 %v7856, 4294901760
      %v7858 = vsub.f32 %v7856, %v7857
      %v7859 = vand.u32 %v7858, 4294901760
      %7860 = vmatmul.mubr.f32.gmra.mrb[0].mxu0 %v7859
      %v7861 = vpop.f32.mrb[0].mxu0
      %v7862 = vadd.f32 0.0, %v7861
      %v7863 = vpop.f32.mrb[0].mxu0
      %v7864 = vadd.f32 0.0, %v7863
      %7865 = vdwg.mxu0
      %v7866 = vand.u32 %v7786, 4294901760
      %v7867 = vsub.f32 %v7786, %v7866
      %v7868 = vand.u32 %v7867, 4294901760
      %v7869 = vsub.f32 %v7867, %v7868
      %v7870 = vand.u32 %v7869, 4294901760
      %7871 = vmatprep.subr.mxu0 %v7870
      %v7872 = vand.u32 %v7783, 4294901760
      %v7873 = vsub.f32 %v7783, %v7872
      %v7874 = vand.u32 %v7873, 4294901760
      %v7875 = vsub.f32 %v7873, %v7874
      %v7876 = vand.u32 %v7875, 4294901760
      %7877 = vmatpush1.msra.mxu0 %v7876
      %7878 = vmatprep.subr.mxu0 0.0
      %7879 = vmatpush1.msra.mxu0 0.0
      %7880 = vmatprep.subr.mxu0 0.0
      %7881 = vmatpush1.msra.mxu0 0.0
      %7882 = vmatprep.subr.mxu0 0.0
      %7883 = vmatpush1.msra.mxu0 0.0
      %7884 = vmatprep.subr.mxu0 0.0
      %7885 = vmatpush1.msra.mxu0 0.0
      %7886 = vmatprep.subr.mxu0 0.0
      %7887 = vmatpush1.msra.mxu0 0.0
      %7888 = vmatprep.subr.mxu0 0.0
      %7889 = vmatpush1.msra.mxu0 0.0
      %7890 = vmatprep.subr.mxu0 0.0
      %7891 = vmatpush1.msra.mxu0 0.0
      %7892 = vmatprep.subr.mxu0 0.0
      %7893 = vmatpush1.msra.mxu0 0.0
      %7894 = vmatprep.subr.mxu0 0.0
      %7895 = vmatpush1.msra.mxu0 0.0
      %7896 = vmatprep.subr.mxu0 0.0
      %7897 = vmatpush1.msra.mxu0 0.0
      %7898 = vmatprep.subr.mxu0 0.0
      %7899 = vmatpush1.msra.mxu0 0.0
      %7900 = vmatprep.subr.mxu0 0.0
      %7901 = vmatpush1.msra.mxu0 0.0
      %7902 = vmatprep.subr.mxu0 0.0
      %7903 = vmatpush1.msra.mxu0 0.0
      %7904 = vmatprep.subr.mxu0 0.0
      %7905 = vmatpush1.msra.mxu0 0.0
      %7906 = vmatprep.subr.mxu0 0.0
      %7907 = vmatpush1.msra.mxu0 0.0
      %7908 = vmatprep.subr.mxu0 0.0
      %7909 = vmatpush1.msra.mxu0 0.0
      %7910 = vmatprep.subr.mxu0 0.0
      %7911 = vmatpush1.msra.mxu0 0.0
      %7912 = vmatprep.subr.mxu0 0.0
      %7913 = vmatpush1.msra.mxu0 0.0
      %7914 = vmatprep.subr.mxu0 0.0
      %7915 = vmatpush1.msra.mxu0 0.0
      %7916 = vmatprep.subr.mxu0 0.0
      %7917 = vmatpush1.msra.mxu0 0.0
      %7918 = vmatprep.subr.mxu0 0.0
      %7919 = vmatpush1.msra.mxu0 0.0
      %7920 = vmatprep.subr.mxu0 0.0
      %7921 = vmatpush1.msra.mxu0 0.0
      %7922 = vmatprep.subr.mxu0 0.0
      %7923 = vmatpush1.msra.mxu0 0.0
      %7924 = vmatprep.subr.mxu0 0.0
      %7925 = vmatpush1.msra.mxu0 0.0
      %7926 = vmatprep.subr.mxu0 0.0
      %7927 = vmatpush1.msra.mxu0 0.0
      %7928 = vmatprep.subr.mxu0 0.0
      %7929 = vmatpush1.msra.mxu0 0.0
      %7930 = vmatprep.subr.mxu0 0.0
      %7931 = vmatpush1.msra.mxu0 0.0
      %7932 = vmatprep.subr.mxu0 0.0
      %7933 = vmatpush1.msra.mxu0 0.0
      %7934 = vmatprep.subr.mxu0 0.0
      %7935 = vmatpush1.msra.mxu0 0.0
      %7936 = vmatprep.subr.mxu0 0.0
      %7937 = vmatpush1.msra.mxu0 0.0
      %7938 = vmatprep.subr.mxu0 0.0
      %7939 = vmatpush1.msra.mxu0 0.0
      %7940 = vmatprep.mubr.f32.mxu0 0.0
      %v7941 = vand.u32 %v7780, 4294901760
      %7942 = vmatmul.mubr.f32.gmra.mrb[0].mxu0 %v7941
      %v7943 = vpop.f32.mrb[0].mxu0
      %v7944 = vadd.f32 %v7862, %v7943
      %v7945 = vpop.f32.mrb[0].mxu0
      %v7946 = vadd.f32 %v7864, %v7945
      %7947 = vdwg.mxu0
      %v7948 = vand.u32 %v7786, 4294901760
      %v7949 = vsub.f32 %v7786, %v7948
      %7950 = vmatprep.subr.mxu0 %v7949
      %v7951 = vand.u32 %v7783, 4294901760
      %v7952 = vsub.f32 %v7783, %v7951
      %7953 = vmatpush1.msra.mxu0 %v7952
      %7954 = vmatprep.subr.mxu0 0.0
      %7955 = vmatpush1.msra.mxu0 0.0
      %7956 = vmatprep.subr.mxu0 0.0
      %7957 = vmatpush1.msra.mxu0 0.0
      %7958 = vmatprep.subr.mxu0 0.0
      %7959 = vmatpush1.msra.mxu0 0.0
      %7960 = vmatprep.subr.mxu0 0.0
      %7961 = vmatpush1.msra.mxu0 0.0
      %7962 = vmatprep.subr.mxu0 0.0
      %7963 = vmatpush1.msra.mxu0 0.0
      %7964 = vmatprep.subr.mxu0 0.0
      %7965 = vmatpush1.msra.mxu0 0.0
      %7966 = vmatprep.subr.mxu0 0.0
      %7967 = vmatpush1.msra.mxu0 0.0
      %7968 = vmatprep.subr.mxu0 0.0
      %7969 = vmatpush1.msra.mxu0 0.0
      %7970 = vmatprep.subr.mxu0 0.0
      %7971 = vmatpush1.msra.mxu0 0.0
      %7972 = vmatprep.subr.mxu0 0.0
      %7973 = vmatpush1.msra.mxu0 0.0
      %7974 = vmatprep.subr.mxu0 0.0
      %7975 = vmatpush1.msra.mxu0 0.0
      %7976 = vmatprep.subr.mxu0 0.0
      %7977 = vmatpush1.msra.mxu0 0.0
      %7978 = vmatprep.subr.mxu0 0.0
      %7979 = vmatpush1.msra.mxu0 0.0
      %7980 = vmatprep.subr.mxu0 0.0
      %7981 = vmatpush1.msra.mxu0 0.0
      %7982 = vmatprep.subr.mxu0 0.0
      %7983 = vmatpush1.msra.mxu0 0.0
      %7984 = vmatprep.subr.mxu0 0.0
      %7985 = vmatpush1.msra.mxu0 0.0
      %7986 = vmatprep.subr.mxu0 0.0
      %7987 = vmatpush1.msra.mxu0 0.0
      %7988 = vmatprep.subr.mxu0 0.0
      %7989 = vmatpush1.msra.mxu0 0.0
      %7990 = vmatprep.subr.mxu0 0.0
      %7991 = vmatpush1.msra.mxu0 0.0
      %7992 = vmatprep.subr.mxu0 0.0
      %7993 = vmatpush1.msra.mxu0 0.0
      %7994 = vmatprep.subr.mxu0 0.0
      %7995 = vmatpush1.msra.mxu0 0.0
      %7996 = vmatprep.subr.mxu0 0.0
      %7997 = vmatpush1.msra.mxu0 0.0
      %7998 = vmatprep.subr.mxu0 0.0
      %7999 = vmatpush1.msra.mxu0 0.0
      %8000 = vmatprep.subr.mxu0 0.0
      %8001 = vmatpush1.msra.mxu0 0.0
      %8002 = vmatprep.subr.mxu0 0.0
      %8003 = vmatpush1.msra.mxu0 0.0
      %8004 = vmatprep.subr.mxu0 0.0
      %8005 = vmatpush1.msra.mxu0 0.0
      %8006 = vmatprep.subr.mxu0 0.0
      %8007 = vmatpush1.msra.mxu0 0.0
      %8008 = vmatprep.subr.mxu0 0.0
      %8009 = vmatpush1.msra.mxu0 0.0
      %8010 = vmatprep.subr.mxu0 0.0
      %8011 = vmatpush1.msra.mxu0 0.0
      %8012 = vmatprep.subr.mxu0 0.0
      %8013 = vmatpush1.msra.mxu0 0.0
      %8014 = vmatprep.subr.mxu0 0.0
      %8015 = vmatpush1.msra.mxu0 0.0
      %8016 = vmatprep.mubr.f32.mxu0 0.0
      %v8017 = vand.u32 %v7780, 4294901760
      %v8018 = vsub.f32 %v7780, %v8017
      %8019 = vmatmul.mubr.f32.gmra.mrb[0].mxu0 %v8018
      %v8020 = vpop.f32.mrb[0].mxu0
      %v8021 = vadd.f32 %v7944, %v8020
      %v8022 = vpop.f32.mrb[0].mxu0
      %v8023 = vadd.f32 %v7946, %v8022
      %8024 = vdwg.mxu0
      %v8025 = vand.u32 %v7786, 4294901760
      %8026 = vmatprep.subr.mxu0 %v8025
      %v8027 = vand.u32 %v7783, 4294901760
      %8028 = vmatpush1.msra.mxu0 %v8027
      %8029 = vmatprep.subr.mxu0 0.0
      %8030 = vmatpush1.msra.mxu0 0.0
      %8031 = vmatprep.subr.mxu0 0.0
      %8032 = vmatpush1.msra.mxu0 0.0
      %8033 = vmatprep.subr.mxu0 0.0
      %8034 = vmatpush1.msra.mxu0 0.0
      %8035 = vmatprep.subr.mxu0 0.0
      %8036 = vmatpush1.msra.mxu0 0.0
      %8037 = vmatprep.subr.mxu0 0.0
      %8038 = vmatpush1.msra.mxu0 0.0
      %8039 = vmatprep.subr.mxu0 0.0
      %8040 = vmatpush1.msra.mxu0 0.0
      %8041 = vmatprep.subr.mxu0 0.0
      %8042 = vmatpush1.msra.mxu0 0.0
      %8043 = vmatprep.subr.mxu0 0.0
      %8044 = vmatpush1.msra.mxu0 0.0
      %8045 = vmatprep.subr.mxu0 0.0
      %8046 = vmatpush1.msra.mxu0 0.0
      %8047 = vmatprep.subr.mxu0 0.0
      %8048 = vmatpush1.msra.mxu0 0.0
      %8049 = vmatprep.subr.mxu0 0.0
      %8050 = vmatpush1.msra.mxu0 0.0
      %8051 = vmatprep.subr.mxu0 0.0
      %8052 = vmatpush1.msra.mxu0 0.0
      %8053 = vmatprep.subr.mxu0 0.0
      %8054 = vmatpush1.msra.mxu0 0.0
      %8055 = vmatprep.subr.mxu0 0.0
      %8056 = vmatpush1.msra.mxu0 0.0
      %8057 = vmatprep.subr.mxu0 0.0
      %8058 = vmatpush1.msra.mxu0 0.0
      %8059 = vmatprep.subr.mxu0 0.0
      %8060 = vmatpush1.msra.mxu0 0.0
      %8061 = vmatprep.subr.mxu0 0.0
      %8062 = vmatpush1.msra.mxu0 0.0
      %8063 = vmatprep.subr.mxu0 0.0
      %8064 = vmatpush1.msra.mxu0 0.0
      %8065 = vmatprep.subr.mxu0 0.0
      %8066 = vmatpush1.msra.mxu0 0.0
      %8067 = vmatprep.subr.mxu0 0.0
      %8068 = vmatpush1.msra.mxu0 0.0
      %8069 = vmatprep.subr.mxu0 0.0
      %8070 = vmatpush1.msra.mxu0 0.0
      %8071 = vmatprep.subr.mxu0 0.0
      %8072 = vmatpush1.msra.mxu0 0.0
      %8073 = vmatprep.subr.mxu0 0.0
      %8074 = vmatpush1.msra.mxu0 0.0
      %8075 = vmatprep.subr.mxu0 0.0
      %8076 = vmatpush1.msra.mxu0 0.0
      %8077 = vmatprep.subr.mxu0 0.0
      %8078 = vmatpush1.msra.mxu0 0.0
      %8079 = vmatprep.subr.mxu0 0.0
      %8080 = vmatpush1.msra.mxu0 0.0
      %8081 = vmatprep.subr.mxu0 0.0
      %8082 = vmatpush1.msra.mxu0 0.0
      %8083 = vmatprep.subr.mxu0 0.0
      %8084 = vmatpush1.msra.mxu0 0.0
      %8085 = vmatprep.subr.mxu0 0.0
      %8086 = vmatpush1.msra.mxu0 0.0
      %8087 = vmatprep.subr.mxu0 0.0
      %8088 = vmatpush1.msra.mxu0 0.0
      %8089 = vmatprep.subr.mxu0 0.0
      %8090 = vmatpush1.msra.mxu0 0.0
      %8091 = vmatprep.mubr.f32.mxu0 0.0
      %v8092 = vand.u32 %v7780, 4294901760
      %v8093 = vsub.f32 %v7780, %v8092
      %v8094 = vand.u32 %v8093, 4294901760
      %8095 = vmatmul.mubr.f32.gmra.mrb[0].mxu0 %v8094
      %v8096 = vpop.f32.mrb[0].mxu0
      %v8097 = vadd.f32 %v8021, %v8096
      %v8098 = vpop.f32.mrb[0].mxu0
      %v8099 = vadd.f32 %v8023, %v8098
      %8100 = vdwg.mxu0
      %v8101 = vand.u32 %v7786, 4294901760
      %v8102 = vsub.f32 %v7786, %v8101
      %v8103 = vand.u32 %v8102, 4294901760
      %8104 = vmatprep.subr.mxu0 %v8103
      %v8105 = vand.u32 %v7783, 4294901760
      %v8106 = vsub.f32 %v7783, %v8105
      %v8107 = vand.u32 %v8106, 4294901760
      %8108 = vmatpush1.msra.mxu0 %v8107
      %8109 = vmatprep.subr.mxu0 0.0
      %8110 = vmatpush1.msra.mxu0 0.0
      %8111 = vmatprep.subr.mxu0 0.0
      %8112 = vmatpush1.msra.mxu0 0.0
      %8113 = vmatprep.subr.mxu0 0.0
      %8114 = vmatpush1.msra.mxu0 0.0
      %8115 = vmatprep.subr.mxu0 0.0
      %8116 = vmatpush1.msra.mxu0 0.0
      %8117 = vmatprep.subr.mxu0 0.0
      %8118 = vmatpush1.msra.mxu0 0.0
      %8119 = vmatprep.subr.mxu0 0.0
      %8120 = vmatpush1.msra.mxu0 0.0
      %8121 = vmatprep.subr.mxu0 0.0
      %8122 = vmatpush1.msra.mxu0 0.0
      %8123 = vmatprep.subr.mxu0 0.0
      %8124 = vmatpush1.msra.mxu0 0.0
      %8125 = vmatprep.subr.mxu0 0.0
      %8126 = vmatpush1.msra.mxu0 0.0
      %8127 = vmatprep.subr.mxu0 0.0
      %8128 = vmatpush1.msra.mxu0 0.0
      %8129 = vmatprep.subr.mxu0 0.0
      %8130 = vmatpush1.msra.mxu0 0.0
      %8131 = vmatprep.subr.mxu0 0.0
      %8132 = vmatpush1.msra.mxu0 0.0
      %8133 = vmatprep.subr.mxu0 0.0
      %8134 = vmatpush1.msra.mxu0 0.0
      %8135 = vmatprep.subr.mxu0 0.0
      %8136 = vmatpush1.msra.mxu0 0.0
      %8137 = vmatprep.subr.mxu0 0.0
      %8138 = vmatpush1.msra.mxu0 0.0
      %8139 = vmatprep.subr.mxu0 0.0
      %8140 = vmatpush1.msra.mxu0 0.0
      %8141 = vmatprep.subr.mxu0 0.0
      %8142 = vmatpush1.msra.mxu0 0.0
      %8143 = vmatprep.subr.mxu0 0.0
      %8144 = vmatpush1.msra.mxu0 0.0
      %8145 = vmatprep.subr.mxu0 0.0
      %8146 = vmatpush1.msra.mxu0 0.0
      %8147 = vmatprep.subr.mxu0 0.0
      %8148 = vmatpush1.msra.mxu0 0.0
      %8149 = vmatprep.subr.mxu0 0.0
      %8150 = vmatpush1.msra.mxu0 0.0
      %8151 = vmatprep.subr.mxu0 0.0
      %8152 = vmatpush1.msra.mxu0 0.0
      %8153 = vmatprep.subr.mxu0 0.0
      %8154 = vmatpush1.msra.mxu0 0.0
      %8155 = vmatprep.subr.mxu0 0.0
      %8156 = vmatpush1.msra.mxu0 0.0
      %8157 = vmatprep.subr.mxu0 0.0
      %8158 = vmatpush1.msra.mxu0 0.0
      %8159 = vmatprep.subr.mxu0 0.0
      %8160 = vmatpush1.msra.mxu0 0.0
      %8161 = vmatprep.subr.mxu0 0.0
      %8162 = vmatpush1.msra.mxu0 0.0
      %8163 = vmatprep.subr.mxu0 0.0
      %8164 = vmatpush1.msra.mxu0 0.0
      %8165 = vmatprep.subr.mxu0 0.0
      %8166 = vmatpush1.msra.mxu0 0.0
      %8167 = vmatprep.subr.mxu0 0.0
      %8168 = vmatpush1.msra.mxu0 0.0
      %8169 = vmatprep.subr.mxu0 0.0
      %8170 = vmatpush1.msra.mxu0 0.0
      %8171 = vmatprep.mubr.f32.mxu0 0.0
      %v8172 = vand.u32 %v7780, 4294901760
      %8173 = vmatmul.mubr.f32.gmra.mrb[0].mxu0 %v8172
      %v8174 = vpop.f32.mrb[0].mxu0
      %v8175 = vadd.f32 %v8097, %v8174
      %v8176 = vpop.f32.mrb[0].mxu0
      %v8177 = vadd.f32 %v8099, %v8176
      %8178 = vdwg.mxu0
      %v8179 = vand.u32 %v7786, 4294901760
      %8180 = vmatprep.subr.mxu0 %v8179
      %v8181 = vand.u32 %v7783, 4294901760
      %8182 = vmatpush1.msra.mxu0 %v8181
      %8183 = vmatprep.subr.mxu0 0.0
      %8184 = vmatpush1.msra.mxu0 0.0
      %8185 = vmatprep.subr.mxu0 0.0
      %8186 = vmatpush1.msra.mxu0 0.0
      %8187 = vmatprep.subr.mxu0 0.0
      %8188 = vmatpush1.msra.mxu0 0.0
      %8189 = vmatprep.subr.mxu0 0.0
      %8190 = vmatpush1.msra.mxu0 0.0
      %8191 = vmatprep.subr.mxu0 0.0
      %8192 = vmatpush1.msra.mxu0 0.0
      %8193 = vmatprep.subr.mxu0 0.0
      %8194 = vmatpush1.msra.mxu0 0.0
      %8195 = vmatprep.subr.mxu0 0.0
      %8196 = vmatpush1.msra.mxu0 0.0
      %8197 = vmatprep.subr.mxu0 0.0
      %8198 = vmatpush1.msra.mxu0 0.0
      %8199 = vmatprep.subr.mxu0 0.0
      %8200 = vmatpush1.msra.mxu0 0.0
      %8201 = vmatprep.subr.mxu0 0.0
      %8202 = vmatpush1.msra.mxu0 0.0
      %8203 = vmatprep.subr.mxu0 0.0
      %8204 = vmatpush1.msra.mxu0 0.0
      %8205 = vmatprep.subr.mxu0 0.0
      %8206 = vmatpush1.msra.mxu0 0.0
      %8207 = vmatprep.subr.mxu0 0.0
      %8208 = vmatpush1.msra.mxu0 0.0
      %8209 = vmatprep.subr.mxu0 0.0
      %8210 = vmatpush1.msra.mxu0 0.0
      %8211 = vmatprep.subr.mxu0 0.0
      %8212 = vmatpush1.msra.mxu0 0.0
      %8213 = vmatprep.subr.mxu0 0.0
      %8214 = vmatpush1.msra.mxu0 0.0
      %8215 = vmatprep.subr.mxu0 0.0
      %8216 = vmatpush1.msra.mxu0 0.0
      %8217 = vmatprep.subr.mxu0 0.0
      %8218 = vmatpush1.msra.mxu0 0.0
      %8219 = vmatprep.subr.mxu0 0.0
      %8220 = vmatpush1.msra.mxu0 0.0
      %8221 = vmatprep.subr.mxu0 0.0
      %8222 = vmatpush1.msra.mxu0 0.0
      %8223 = vmatprep.subr.mxu0 0.0
      %8224 = vmatpush1.msra.mxu0 0.0
      %8225 = vmatprep.subr.mxu0 0.0
      %8226 = vmatpush1.msra.mxu0 0.0
      %8227 = vmatprep.subr.mxu0 0.0
      %8228 = vmatpush1.msra.mxu0 0.0
      %8229 = vmatprep.subr.mxu0 0.0
      %8230 = vmatpush1.msra.mxu0 0.0
      %8231 = vmatprep.subr.mxu0 0.0
      %8232 = vmatpush1.msra.mxu0 0.0
      %8233 = vmatprep.subr.mxu0 0.0
      %8234 = vmatpush1.msra.mxu0 0.0
      %8235 = vmatprep.subr.mxu0 0.0
      %8236 = vmatpush1.msra.mxu0 0.0
      %8237 = vmatprep.subr.mxu0 0.0
      %8238 = vmatpush1.msra.mxu0 0.0
      %8239 = vmatprep.subr.mxu0 0.0
      %8240 = vmatpush1.msra.mxu0 0.0
      %8241 = vmatprep.subr.mxu0 0.0
      %8242 = vmatpush1.msra.mxu0 0.0
      %8243 = vmatprep.subr.mxu0 0.0
      %8244 = vmatpush1.msra.mxu0 0.0
      %8245 = vmatprep.mubr.f32.mxu0 0.0
      %v8246 = vand.u32 %v7780, 4294901760
      %8247 = vmatmul.mubr.f32.gmra.mrb[0].mxu0 %v8246
      %v8248 = vpop.f32.mrb[0].mxu0
      %v8249 = vadd.f32 %v8175, %v8248
      %v8250 = vpop.f32.mrb[0].mxu0
      %v8251 = vadd.f32 %v8177, %v8250
      %8252 = vdwg.mxu0
      %v8253 = vadd.f32 %v7746, %v8249
      %v8254 = vadd.f32 %v7747, %v8251
      %s8255 = scalar_lea.vmem %s4, 28
      %v8256 = vld [vmem:[%s8255] sm:$0xf]
      %8257 = vrot.lane.b32.xlu0 %v7748, 80
      %v8258 = vpop.permute.xlu0 %8257
      %8259 = vrot.lane.b32.xlu0 %v7752, 80
      %v8260 = vpop.permute.xlu0 %8259
      %8261 = vrot.lane.b32.xlu0 %v7749, 80
      %v8262 = vpop.permute.xlu0 %8261
      %v8263 = vsel %vm3803, %v8258, %v8260
      %v8264 = vsel %vm3803, %v8260, %v8262
      %v8266 = vsel %vm388, %v8256, 0
      %v8268 = vsel %vm392, %v8263, 0
      %v8270 = vsel %vm392, %v8264, 0
      %v8272 = vand.u32 %v8270, 4294901760
      %8273 = vmatprep.subr.mxu0 %v8272
      %v8274 = vand.u32 %v8268, 4294901760
      %8275 = vmatpush1.msra.mxu0 %v8274
      %8276 = vmatprep.subr.mxu0 0.0
      %8277 = vmatpush1.msra.mxu0 0.0
      %8278 = vmatprep.subr.mxu0 0.0
      %8279 = vmatpush1.msra.mxu0 0.0
      %8280 = vmatprep.subr.mxu0 0.0
      %8281 = vmatpush1.msra.mxu0 0.0
      %8282 = vmatprep.subr.mxu0 0.0
      %8283 = vmatpush1.msra.mxu0 0.0
      %8284 = vmatprep.subr.mxu0 0.0
      %8285 = vmatpush1.msra.mxu0 0.0
      %8286 = vmatprep.subr.mxu0 0.0
      %8287 = vmatpush1.msra.mxu0 0.0
      %8288 = vmatprep.subr.mxu0 0.0
      %8289 = vmatpush1.msra.mxu0 0.0
      %8290 = vmatprep.subr.mxu0 0.0
      %8291 = vmatpush1.msra.mxu0 0.0
      %8292 = vmatprep.subr.mxu0 0.0
      %8293 = vmatpush1.msra.mxu0 0.0
      %8294 = vmatprep.subr.mxu0 0.0
      %8295 = vmatpush1.msra.mxu0 0.0
      %8296 = vmatprep.subr.mxu0 0.0
      %8297 = vmatpush1.msra.mxu0 0.0
      %8298 = vmatprep.subr.mxu0 0.0
      %8299 = vmatpush1.msra.mxu0 0.0
      %8300 = vmatprep.subr.mxu0 0.0
      %8301 = vmatpush1.msra.mxu0 0.0
      %8302 = vmatprep.subr.mxu0 0.0
      %8303 = vmatpush1.msra.mxu0 0.0
      %8304 = vmatprep.subr.mxu0 0.0
      %8305 = vmatpush1.msra.mxu0 0.0
      %8306 = vmatprep.subr.mxu0 0.0
      %8307 = vmatpush1.msra.mxu0 0.0
      %8308 = vmatprep.subr.mxu0 0.0
      %8309 = vmatpush1.msra.mxu0 0.0
      %8310 = vmatprep.subr.mxu0 0.0
      %8311 = vmatpush1.msra.mxu0 0.0
      %8312 = vmatprep.subr.mxu0 0.0
      %8313 = vmatpush1.msra.mxu0 0.0
      %8314 = vmatprep.subr.mxu0 0.0
      %8315 = vmatpush1.msra.mxu0 0.0
      %8316 = vmatprep.subr.mxu0 0.0
      %8317 = vmatpush1.msra.mxu0 0.0
      %8318 = vmatprep.subr.mxu0 0.0
      %8319 = vmatpush1.msra.mxu0 0.0
      %8320 = vmatprep.subr.mxu0 0.0
      %8321 = vmatpush1.msra.mxu0 0.0
      %8322 = vmatprep.subr.mxu0 0.0
      %8323 = vmatpush1.msra.mxu0 0.0
      %8324 = vmatprep.subr.mxu0 0.0
      %8325 = vmatpush1.msra.mxu0 0.0
      %8326 = vmatprep.subr.mxu0 0.0
      %8327 = vmatpush1.msra.mxu0 0.0
      %8328 = vmatprep.subr.mxu0 0.0
      %8329 = vmatpush1.msra.mxu0 0.0
      %8330 = vmatprep.subr.mxu0 0.0
      %8331 = vmatpush1.msra.mxu0 0.0
      %8332 = vmatprep.subr.mxu0 0.0
      %8333 = vmatpush1.msra.mxu0 0.0
      %8334 = vmatprep.subr.mxu0 0.0
      %8335 = vmatpush1.msra.mxu0 0.0
      %8336 = vmatprep.subr.mxu0 0.0
      %8337 = vmatpush1.msra.mxu0 0.0
      %8338 = vmatprep.mubr.f32.mxu0 0.0
      %v8339 = vand.u32 %v8266, 4294901760
      %v8340 = vsub.f32 %v8266, %v8339
      %v8341 = vand.u32 %v8340, 4294901760
      %v8342 = vsub.f32 %v8340, %v8341
      %v8343 = vand.u32 %v8342, 4294901760
      %8344 = vmatmul.mubr.f32.gmra.mrb[0].mxu0 %v8343
      %v8345 = vpop.f32.mrb[0].mxu0
      %v8346 = vadd.f32 0.0, %v8345
      %v8347 = vpop.f32.mrb[0].mxu0
      %v8348 = vadd.f32 0.0, %v8347
      %8349 = vdwg.mxu0
      %v8350 = vand.u32 %v8270, 4294901760
      %v8351 = vsub.f32 %v8270, %v8350
      %v8352 = vand.u32 %v8351, 4294901760
      %v8353 = vsub.f32 %v8351, %v8352
      %v8354 = vand.u32 %v8353, 4294901760
      %8355 = vmatprep.subr.mxu0 %v8354
      %v8356 = vand.u32 %v8268, 4294901760
      %v8357 = vsub.f32 %v8268, %v8356
      %v8358 = vand.u32 %v8357, 4294901760
      %v8359 = vsub.f32 %v8357, %v8358
      %v8360 = vand.u32 %v8359, 4294901760
      %8361 = vmatpush1.msra.mxu0 %v8360
      %8362 = vmatprep.subr.mxu0 0.0
      %8363 = vmatpush1.msra.mxu0 0.0
      %8364 = vmatprep.subr.mxu0 0.0
      %8365 = vmatpush1.msra.mxu0 0.0
      %8366 = vmatprep.subr.mxu0 0.0
      %8367 = vmatpush1.msra.mxu0 0.0
      %8368 = vmatprep.subr.mxu0 0.0
      %8369 = vmatpush1.msra.mxu0 0.0
      %8370 = vmatprep.subr.mxu0 0.0
      %8371 = vmatpush1.msra.mxu0 0.0
      %8372 = vmatprep.subr.mxu0 0.0
      %8373 = vmatpush1.msra.mxu0 0.0
      %8374 = vmatprep.subr.mxu0 0.0
      %8375 = vmatpush1.msra.mxu0 0.0
      %8376 = vmatprep.subr.mxu0 0.0
      %8377 = vmatpush1.msra.mxu0 0.0
      %8378 = vmatprep.subr.mxu0 0.0
      %8379 = vmatpush1.msra.mxu0 0.0
      %8380 = vmatprep.subr.mxu0 0.0
      %8381 = vmatpush1.msra.mxu0 0.0
      %8382 = vmatprep.subr.mxu0 0.0
      %8383 = vmatpush1.msra.mxu0 0.0
      %8384 = vmatprep.subr.mxu0 0.0
      %8385 = vmatpush1.msra.mxu0 0.0
      %8386 = vmatprep.subr.mxu0 0.0
      %8387 = vmatpush1.msra.mxu0 0.0
      %8388 = vmatprep.subr.mxu0 0.0
      %8389 = vmatpush1.msra.mxu0 0.0
      %8390 = vmatprep.subr.mxu0 0.0
      %8391 = vmatpush1.msra.mxu0 0.0
      %8392 = vmatprep.subr.mxu0 0.0
      %8393 = vmatpush1.msra.mxu0 0.0
      %8394 = vmatprep.subr.mxu0 0.0
      %8395 = vmatpush1.msra.mxu0 0.0
      %8396 = vmatprep.subr.mxu0 0.0
      %8397 = vmatpush1.msra.mxu0 0.0
      %8398 = vmatprep.subr.mxu0 0.0
      %8399 = vmatpush1.msra.mxu0 0.0
      %8400 = vmatprep.subr.mxu0 0.0
      %8401 = vmatpush1.msra.mxu0 0.0
      %8402 = vmatprep.subr.mxu0 0.0
      %8403 = vmatpush1.msra.mxu0 0.0
      %8404 = vmatprep.subr.mxu0 0.0
      %8405 = vmatpush1.msra.mxu0 0.0
      %8406 = vmatprep.subr.mxu0 0.0
      %8407 = vmatpush1.msra.mxu0 0.0
      %8408 = vmatprep.subr.mxu0 0.0
      %8409 = vmatpush1.msra.mxu0 0.0
      %8410 = vmatprep.subr.mxu0 0.0
      %8411 = vmatpush1.msra.mxu0 0.0
      %8412 = vmatprep.subr.mxu0 0.0
      %8413 = vmatpush1.msra.mxu0 0.0
      %8414 = vmatprep.subr.mxu0 0.0
      %8415 = vmatpush1.msra.mxu0 0.0
      %8416 = vmatprep.subr.mxu0 0.0
      %8417 = vmatpush1.msra.mxu0 0.0
      %8418 = vmatprep.subr.mxu0 0.0
      %8419 = vmatpush1.msra.mxu0 0.0
      %8420 = vmatprep.subr.mxu0 0.0
      %8421 = vmatpush1.msra.mxu0 0.0
      %8422 = vmatprep.subr.mxu0 0.0
      %8423 = vmatpush1.msra.mxu0 0.0
      %8424 = vmatprep.mubr.f32.mxu0 0.0
      %v8425 = vand.u32 %v8266, 4294901760
      %8426 = vmatmul.mubr.f32.gmra.mrb[0].mxu0 %v8425
      %v8427 = vpop.f32.mrb[0].mxu0
      %v8428 = vadd.f32 %v8346, %v8427
      %v8429 = vpop.f32.mrb[0].mxu0
      %v8430 = vadd.f32 %v8348, %v8429
      %8431 = vdwg.mxu0
      %v8432 = vand.u32 %v8270, 4294901760
      %v8433 = vsub.f32 %v8270, %v8432
      %8434 = vmatprep.subr.mxu0 %v8433
      %v8435 = vand.u32 %v8268, 4294901760
      %v8436 = vsub.f32 %v8268, %v8435
      %8437 = vmatpush1.msra.mxu0 %v8436
      %8438 = vmatprep.subr.mxu0 0.0
      %8439 = vmatpush1.msra.mxu0 0.0
      %8440 = vmatprep.subr.mxu0 0.0
      %8441 = vmatpush1.msra.mxu0 0.0
      %8442 = vmatprep.subr.mxu0 0.0
      %8443 = vmatpush1.msra.mxu0 0.0
      %8444 = vmatprep.subr.mxu0 0.0
      %8445 = vmatpush1.msra.mxu0 0.0
      %8446 = vmatprep.subr.mxu0 0.0
      %8447 = vmatpush1.msra.mxu0 0.0
      %8448 = vmatprep.subr.mxu0 0.0
      %8449 = vmatpush1.msra.mxu0 0.0
      %8450 = vmatprep.subr.mxu0 0.0
      %8451 = vmatpush1.msra.mxu0 0.0
      %8452 = vmatprep.subr.mxu0 0.0
      %8453 = vmatpush1.msra.mxu0 0.0
      %8454 = vmatprep.subr.mxu0 0.0
      %8455 = vmatpush1.msra.mxu0 0.0
      %8456 = vmatprep.subr.mxu0 0.0
      %8457 = vmatpush1.msra.mxu0 0.0
      %8458 = vmatprep.subr.mxu0 0.0
      %8459 = vmatpush1.msra.mxu0 0.0
      %8460 = vmatprep.subr.mxu0 0.0
      %8461 = vmatpush1.msra.mxu0 0.0
      %8462 = vmatprep.subr.mxu0 0.0
      %8463 = vmatpush1.msra.mxu0 0.0
      %8464 = vmatprep.subr.mxu0 0.0
      %8465 = vmatpush1.msra.mxu0 0.0
      %8466 = vmatprep.subr.mxu0 0.0
      %8467 = vmatpush1.msra.mxu0 0.0
      %8468 = vmatprep.subr.mxu0 0.0
      %8469 = vmatpush1.msra.mxu0 0.0
      %8470 = vmatprep.subr.mxu0 0.0
      %8471 = vmatpush1.msra.mxu0 0.0
      %8472 = vmatprep.subr.mxu0 0.0
      %8473 = vmatpush1.msra.mxu0 0.0
      %8474 = vmatprep.subr.mxu0 0.0
      %8475 = vmatpush1.msra.mxu0 0.0
      %8476 = vmatprep.subr.mxu0 0.0
      %8477 = vmatpush1.msra.mxu0 0.0
      %8478 = vmatprep.subr.mxu0 0.0
      %8479 = vmatpush1.msra.mxu0 0.0
      %8480 = vmatprep.subr.mxu0 0.0
      %8481 = vmatpush1.msra.mxu0 0.0
      %8482 = vmatprep.subr.mxu0 0.0
      %8483 = vmatpush1.msra.mxu0 0.0
      %8484 = vmatprep.subr.mxu0 0.0
      %8485 = vmatpush1.msra.mxu0 0.0
      %8486 = vmatprep.subr.mxu0 0.0
      %8487 = vmatpush1.msra.mxu0 0.0
      %8488 = vmatprep.subr.mxu0 0.0
      %8489 = vmatpush1.msra.mxu0 0.0
      %8490 = vmatprep.subr.mxu0 0.0
      %8491 = vmatpush1.msra.mxu0 0.0
      %8492 = vmatprep.subr.mxu0 0.0
      %8493 = vmatpush1.msra.mxu0 0.0
      %8494 = vmatprep.subr.mxu0 0.0
      %8495 = vmatpush1.msra.mxu0 0.0
      %8496 = vmatprep.subr.mxu0 0.0
      %8497 = vmatpush1.msra.mxu0 0.0
      %8498 = vmatprep.subr.mxu0 0.0
      %8499 = vmatpush1.msra.mxu0 0.0
      %8500 = vmatprep.mubr.f32.mxu0 0.0
      %v8501 = vand.u32 %v8266, 4294901760
      %v8502 = vsub.f32 %v8266, %v8501
      %8503 = vmatmul.mubr.f32.gmra.mrb[0].mxu0 %v8502
      %v8504 = vpop.f32.mrb[0].mxu0
      %v8505 = vadd.f32 %v8428, %v8504
      %v8506 = vpop.f32.mrb[0].mxu0
      %v8507 = vadd.f32 %v8430, %v8506
      %8508 = vdwg.mxu0
      %v8509 = vand.u32 %v8270, 4294901760
      %8510 = vmatprep.subr.mxu0 %v8509
      %v8511 = vand.u32 %v8268, 4294901760
      %8512 = vmatpush1.msra.mxu0 %v8511
      %8513 = vmatprep.subr.mxu0 0.0
      %8514 = vmatpush1.msra.mxu0 0.0
      %8515 = vmatprep.subr.mxu0 0.0
      %8516 = vmatpush1.msra.mxu0 0.0
      %8517 = vmatprep.subr.mxu0 0.0
      %8518 = vmatpush1.msra.mxu0 0.0
      %8519 = vmatprep.subr.mxu0 0.0
      %8520 = vmatpush1.msra.mxu0 0.0
      %8521 = vmatprep.subr.mxu0 0.0
      %8522 = vmatpush1.msra.mxu0 0.0
      %8523 = vmatprep.subr.mxu0 0.0
      %8524 = vmatpush1.msra.mxu0 0.0
      %8525 = vmatprep.subr.mxu0 0.0
      %8526 = vmatpush1.msra.mxu0 0.0
      %8527 = vmatprep.subr.mxu0 0.0
      %8528 = vmatpush1.msra.mxu0 0.0
      %8529 = vmatprep.subr.mxu0 0.0
      %8530 = vmatpush1.msra.mxu0 0.0
      %8531 = vmatprep.subr.mxu0 0.0
      %8532 = vmatpush1.msra.mxu0 0.0
      %8533 = vmatprep.subr.mxu0 0.0
      %8534 = vmatpush1.msra.mxu0 0.0
      %8535 = vmatprep.subr.mxu0 0.0
      %8536 = vmatpush1.msra.mxu0 0.0
      %8537 = vmatprep.subr.mxu0 0.0
      %8538 = vmatpush1.msra.mxu0 0.0
      %8539 = vmatprep.subr.mxu0 0.0
      %8540 = vmatpush1.msra.mxu0 0.0
      %8541 = vmatprep.subr.mxu0 0.0
      %8542 = vmatpush1.msra.mxu0 0.0
      %8543 = vmatprep.subr.mxu0 0.0
      %8544 = vmatpush1.msra.mxu0 0.0
      %8545 = vmatprep.subr.mxu0 0.0
      %8546 = vmatpush1.msra.mxu0 0.0
      %8547 = vmatprep.subr.mxu0 0.0
      %8548 = vmatpush1.msra.mxu0 0.0
      %8549 = vmatprep.subr.mxu0 0.0
      %8550 = vmatpush1.msra.mxu0 0.0
      %8551 = vmatprep.subr.mxu0 0.0
      %8552 = vmatpush1.msra.mxu0 0.0
      %8553 = vmatprep.subr.mxu0 0.0
      %8554 = vmatpush1.msra.mxu0 0.0
      %8555 = vmatprep.subr.mxu0 0.0
      %8556 = vmatpush1.msra.mxu0 0.0
      %8557 = vmatprep.subr.mxu0 0.0
      %8558 = vmatpush1.msra.mxu0 0.0
      %8559 = vmatprep.subr.mxu0 0.0
      %8560 = vmatpush1.msra.mxu0 0.0
      %8561 = vmatprep.subr.mxu0 0.0
      %8562 = vmatpush1.msra.mxu0 0.0
      %8563 = vmatprep.subr.mxu0 0.0
      %8564 = vmatpush1.msra.mxu0 0.0
      %8565 = vmatprep.subr.mxu0 0.0
      %8566 = vmatpush1.msra.mxu0 0.0
      %8567 = vmatprep.subr.mxu0 0.0
      %8568 = vmatpush1.msra.mxu0 0.0
      %8569 = vmatprep.subr.mxu0 0.0
      %8570 = vmatpush1.msra.mxu0 0.0
      %8571 = vmatprep.subr.mxu0 0.0
      %8572 = vmatpush1.msra.mxu0 0.0
      %8573 = vmatprep.subr.mxu0 0.0
      %8574 = vmatpush1.msra.mxu0 0.0
      %8575 = vmatprep.mubr.f32.mxu0 0.0
      %v8576 = vand.u32 %v8266, 4294901760
      %v8577 = vsub.f32 %v8266, %v8576
      %v8578 = vand.u32 %v8577, 4294901760
      %8579 = vmatmul.mubr.f32.gmra.mrb[0].mxu0 %v8578
      %v8580 = vpop.f32.mrb[0].mxu0
      %v8581 = vadd.f32 %v8505, %v8580
      %v8582 = vpop.f32.mrb[0].mxu0
      %v8583 = vadd.f32 %v8507, %v8582
      %8584 = vdwg.mxu0
      %v8585 = vand.u32 %v8270, 4294901760
      %v8586 = vsub.f32 %v8270, %v8585
      %v8587 = vand.u32 %v8586, 4294901760
      %8588 = vmatprep.subr.mxu0 %v8587
      %v8589 = vand.u32 %v8268, 4294901760
      %v8590 = vsub.f32 %v8268, %v8589
      %v8591 = vand.u32 %v8590, 4294901760
      %8592 = vmatpush1.msra.mxu0 %v8591
      %8593 = vmatprep.subr.mxu0 0.0
      %8594 = vmatpush1.msra.mxu0 0.0
      %8595 = vmatprep.subr.mxu0 0.0
      %8596 = vmatpush1.msra.mxu0 0.0
      %8597 = vmatprep.subr.mxu0 0.0
      %8598 = vmatpush1.msra.mxu0 0.0
      %8599 = vmatprep.subr.mxu0 0.0
      %8600 = vmatpush1.msra.mxu0 0.0
      %8601 = vmatprep.subr.mxu0 0.0
      %8602 = vmatpush1.msra.mxu0 0.0
      %8603 = vmatprep.subr.mxu0 0.0
      %8604 = vmatpush1.msra.mxu0 0.0
      %8605 = vmatprep.subr.mxu0 0.0
      %8606 = vmatpush1.msra.mxu0 0.0
      %8607 = vmatprep.subr.mxu0 0.0
      %8608 = vmatpush1.msra.mxu0 0.0
      %8609 = vmatprep.subr.mxu0 0.0
      %8610 = vmatpush1.msra.mxu0 0.0
      %8611 = vmatprep.subr.mxu0 0.0
      %8612 = vmatpush1.msra.mxu0 0.0
      %8613 = vmatprep.subr.mxu0 0.0
      %8614 = vmatpush1.msra.mxu0 0.0
      %8615 = vmatprep.subr.mxu0 0.0
      %8616 = vmatpush1.msra.mxu0 0.0
      %8617 = vmatprep.subr.mxu0 0.0
      %8618 = vmatpush1.msra.mxu0 0.0
      %8619 = vmatprep.subr.mxu0 0.0
      %8620 = vmatpush1.msra.mxu0 0.0
      %8621 = vmatprep.subr.mxu0 0.0
      %8622 = vmatpush1.msra.mxu0 0.0
      %8623 = vmatprep.subr.mxu0 0.0
      %8624 = vmatpush1.msra.mxu0 0.0
      %8625 = vmatprep.subr.mxu0 0.0
      %8626 = vmatpush1.msra.mxu0 0.0
      %8627 = vmatprep.subr.mxu0 0.0
      %8628 = vmatpush1.msra.mxu0 0.0
      %8629 = vmatprep.subr.mxu0 0.0
      %8630 = vmatpush1.msra.mxu0 0.0
      %8631 = vmatprep.subr.mxu0 0.0
      %8632 = vmatpush1.msra.mxu0 0.0
      %8633 = vmatprep.subr.mxu0 0.0
      %8634 = vmatpush1.msra.mxu0 0.0
      %8635 = vmatprep.subr.mxu0 0.0
      %8636 = vmatpush1.msra.mxu0 0.0
      %8637 = vmatprep.subr.mxu0 0.0
      %8638 = vmatpush1.msra.mxu0 0.0
      %8639 = vmatprep.subr.mxu0 0.0
      %8640 = vmatpush1.msra.mxu0 0.0
      %8641 = vmatprep.subr.mxu0 0.0
      %8642 = vmatpush1.msra.mxu0 0.0
      %8643 = vmatprep.subr.mxu0 0.0
      %8644 = vmatpush1.msra.mxu0 0.0
      %8645 = vmatprep.subr.mxu0 0.0
      %8646 = vmatpush1.msra.mxu0 0.0
      %8647 = vmatprep.subr.mxu0 0.0
      %8648 = vmatpush1.msra.mxu0 0.0
      %8649 = vmatprep.subr.mxu0 0.0
      %8650 = vmatpush1.msra.mxu0 0.0
      %8651 = vmatprep.subr.mxu0 0.0
      %8652 = vmatpush1.msra.mxu0 0.0
      %8653 = vmatprep.subr.mxu0 0.0
      %8654 = vmatpush1.msra.mxu0 0.0
      %8655 = vmatprep.mubr.f32.mxu0 0.0
      %v8656 = vand.u32 %v8266, 4294901760
      %8657 = vmatmul.mubr.f32.gmra.mrb[0].mxu0 %v8656
      %v8658 = vpop.f32.mrb[0].mxu0
      %v8659 = vadd.f32 %v8581, %v8658
      %v8660 = vpop.f32.mrb[0].mxu0
      %v8661 = vadd.f32 %v8583, %v8660
      %8662 = vdwg.mxu0
      %v8663 = vand.u32 %v8270, 4294901760
      %8664 = vmatprep.subr.mxu0 %v8663
      %v8665 = vand.u32 %v8268, 4294901760
      %8666 = vmatpush1.msra.mxu0 %v8665
      %8667 = vmatprep.subr.mxu0 0.0
      %8668 = vmatpush1.msra.mxu0 0.0
      %8669 = vmatprep.subr.mxu0 0.0
      %8670 = vmatpush1.msra.mxu0 0.0
      %8671 = vmatprep.subr.mxu0 0.0
      %8672 = vmatpush1.msra.mxu0 0.0
      %8673 = vmatprep.subr.mxu0 0.0
      %8674 = vmatpush1.msra.mxu0 0.0
      %8675 = vmatprep.subr.mxu0 0.0
      %8676 = vmatpush1.msra.mxu0 0.0
      %8677 = vmatprep.subr.mxu0 0.0
      %8678 = vmatpush1.msra.mxu0 0.0
      %8679 = vmatprep.subr.mxu0 0.0
      %8680 = vmatpush1.msra.mxu0 0.0
      %8681 = vmatprep.subr.mxu0 0.0
      %8682 = vmatpush1.msra.mxu0 0.0
      %8683 = vmatprep.subr.mxu0 0.0
      %8684 = vmatpush1.msra.mxu0 0.0
      %8685 = vmatprep.subr.mxu0 0.0
      %8686 = vmatpush1.msra.mxu0 0.0
      %8687 = vmatprep.subr.mxu0 0.0
      %8688 = vmatpush1.msra.mxu0 0.0
      %8689 = vmatprep.subr.mxu0 0.0
      %8690 = vmatpush1.msra.mxu0 0.0
      %8691 = vmatprep.subr.mxu0 0.0
      %8692 = vmatpush1.msra.mxu0 0.0
      %8693 = vmatprep.subr.mxu0 0.0
      %8694 = vmatpush1.msra.mxu0 0.0
      %8695 = vmatprep.subr.mxu0 0.0
      %8696 = vmatpush1.msra.mxu0 0.0
      %8697 = vmatprep.subr.mxu0 0.0
      %8698 = vmatpush1.msra.mxu0 0.0
      %8699 = vmatprep.subr.mxu0 0.0
      %8700 = vmatpush1.msra.mxu0 0.0
      %8701 = vmatprep.subr.mxu0 0.0
      %8702 = vmatpush1.msra.mxu0 0.0
      %8703 = vmatprep.subr.mxu0 0.0
      %8704 = vmatpush1.msra.mxu0 0.0
      %8705 = vmatprep.subr.mxu0 0.0
      %8706 = vmatpush1.msra.mxu0 0.0
      %8707 = vmatprep.subr.mxu0 0.0
      %8708 = vmatpush1.msra.mxu0 0.0
      %8709 = vmatprep.subr.mxu0 0.0
      %8710 = vmatpush1.msra.mxu0 0.0
      %8711 = vmatprep.subr.mxu0 0.0
      %8712 = vmatpush1.msra.mxu0 0.0
      %8713 = vmatprep.subr.mxu0 0.0
      %8714 = vmatpush1.msra.mxu0 0.0
      %8715 = vmatprep.subr.mxu0 0.0
      %8716 = vmatpush1.msra.mxu0 0.0
      %8717 = vmatprep.subr.mxu0 0.0
      %8718 = vmatpush1.msra.mxu0 0.0
      %8719 = vmatprep.subr.mxu0 0.0
      %8720 = vmatpush1.msra.mxu0 0.0
      %8721 = vmatprep.subr.mxu0 0.0
      %8722 = vmatpush1.msra.mxu0 0.0
      %8723 = vmatprep.subr.mxu0 0.0
      %8724 = vmatpush1.msra.mxu0 0.0
      %8725 = vmatprep.subr.mxu0 0.0
      %8726 = vmatpush1.msra.mxu0 0.0
      %8727 = vmatprep.subr.mxu0 0.0
      %8728 = vmatpush1.msra.mxu0 0.0
      %8729 = vmatprep.mubr.f32.mxu0 0.0
      %v8730 = vand.u32 %v8266, 4294901760
      %8731 = vmatmul.mubr.f32.gmra.mrb[0].mxu0 %v8730
      %v8732 = vpop.f32.mrb[0].mxu0
      %v8733 = vadd.f32 %v8659, %v8732
      %v8734 = vpop.f32.mrb[0].mxu0
      %v8735 = vadd.f32 %v8661, %v8734
      %8736 = vdwg.mxu0
      %v8737 = vadd.f32 %v8253, %v8733
      %v8738 = vadd.f32 %v8254, %v8735
      %s8739 = scalar_lea.vmem %s4, 32
      %v8740 = vld [vmem:[%s8739] sm:$0xf]
      %v8742 = vsel %vm388, %v8740, 0
      %v8745 = vsel %vm392, %v7775, 0
      %v8748 = vsel %vm392, %v7776, 0
      %v8750 = vand.u32 %v8748, 4294901760
      %8751 = vmatprep.subr.mxu0 %v8750
      %v8752 = vand.u32 %v8745, 4294901760
      %8753 = vmatpush1.msra.mxu0 %v8752
      %8754 = vmatprep.subr.mxu0 0.0
      %8755 = vmatpush1.msra.mxu0 0.0
      %8756 = vmatprep.subr.mxu0 0.0
      %8757 = vmatpush1.msra.mxu0 0.0
      %8758 = vmatprep.subr.mxu0 0.0
      %8759 = vmatpush1.msra.mxu0 0.0
      %8760 = vmatprep.subr.mxu0 0.0
      %8761 = vmatpush1.msra.mxu0 0.0
      %8762 = vmatprep.subr.mxu0 0.0
      %8763 = vmatpush1.msra.mxu0 0.0
      %8764 = vmatprep.subr.mxu0 0.0
      %8765 = vmatpush1.msra.mxu0 0.0
      %8766 = vmatprep.subr.mxu0 0.0
      %8767 = vmatpush1.msra.mxu0 0.0
      %8768 = vmatprep.subr.mxu0 0.0
      %8769 = vmatpush1.msra.mxu0 0.0
      %8770 = vmatprep.subr.mxu0 0.0
      %8771 = vmatpush1.msra.mxu0 0.0
      %8772 = vmatprep.subr.mxu0 0.0
      %8773 = vmatpush1.msra.mxu0 0.0
      %8774 = vmatprep.subr.mxu0 0.0
      %8775 = vmatpush1.msra.mxu0 0.0
      %8776 = vmatprep.subr.mxu0 0.0
      %8777 = vmatpush1.msra.mxu0 0.0
      %8778 = vmatprep.subr.mxu0 0.0
      %8779 = vmatpush1.msra.mxu0 0.0
      %8780 = vmatprep.subr.mxu0 0.0
      %8781 = vmatpush1.msra.mxu0 0.0
      %8782 = vmatprep.subr.mxu0 0.0
      %8783 = vmatpush1.msra.mxu0 0.0
      %8784 = vmatprep.subr.mxu0 0.0
      %8785 = vmatpush1.msra.mxu0 0.0
      %8786 = vmatprep.subr.mxu0 0.0
      %8787 = vmatpush1.msra.mxu0 0.0
      %8788 = vmatprep.subr.mxu0 0.0
      %8789 = vmatpush1.msra.mxu0 0.0
      %8790 = vmatprep.subr.mxu0 0.0
      %8791 = vmatpush1.msra.mxu0 0.0
      %8792 = vmatprep.subr.mxu0 0.0
      %8793 = vmatpush1.msra.mxu0 0.0
      %8794 = vmatprep.subr.mxu0 0.0
      %8795 = vmatpush1.msra.mxu0 0.0
      %8796 = vmatprep.subr.mxu0 0.0
      %8797 = vmatpush1.msra.mxu0 0.0
      %8798 = vmatprep.subr.mxu0 0.0
      %8799 = vmatpush1.msra.mxu0 0.0
      %8800 = vmatprep.subr.mxu0 0.0
      %8801 = vmatpush1.msra.mxu0 0.0
      %8802 = vmatprep.subr.mxu0 0.0
      %8803 = vmatpush1.msra.mxu0 0.0
      %8804 = vmatprep.subr.mxu0 0.0
      %8805 = vmatpush1.msra.mxu0 0.0
      %8806 = vmatprep.subr.mxu0 0.0
      %8807 = vmatpush1.msra.mxu0 0.0
      %8808 = vmatprep.subr.mxu0 0.0
      %8809 = vmatpush1.msra.mxu0 0.0
      %8810 = vmatprep.subr.mxu0 0.0
      %8811 = vmatpush1.msra.mxu0 0.0
      %8812 = vmatprep.subr.mxu0 0.0
      %8813 = vmatpush1.msra.mxu0 0.0
      %8814 = vmatprep.subr.mxu0 0.0
      %8815 = vmatpush1.msra.mxu0 0.0
      %8816 = vmatprep.mubr.f32.mxu0 0.0
      %v8817 = vand.u32 %v8742, 4294901760
      %v8818 = vsub.f32 %v8742, %v8817
      %v8819 = vand.u32 %v8818, 4294901760
      %v8820 = vsub.f32 %v8818, %v8819
      %v8821 = vand.u32 %v8820, 4294901760
      %8822 = vmatmul.mubr.f32.gmra.mrb[0].mxu0 %v8821
      %v8823 = vpop.f32.mrb[0].mxu0
      %v8824 = vadd.f32 0.0, %v8823
      %v8825 = vpop.f32.mrb[0].mxu0
      %v8826 = vadd.f32 0.0, %v8825
      %8827 = vdwg.mxu0
      %v8828 = vand.u32 %v8748, 4294901760
      %v8829 = vsub.f32 %v8748, %v8828
      %v8830 = vand.u32 %v8829, 4294901760
      %v8831 = vsub.f32 %v8829, %v8830
      %v8832 = vand.u32 %v8831, 4294901760
      %8833 = vmatprep.subr.mxu0 %v8832
      %v8834 = vand.u32 %v8745, 4294901760
      %v8835 = vsub.f32 %v8745, %v8834
      %v8836 = vand.u32 %v8835, 4294901760
      %v8837 = vsub.f32 %v8835, %v8836
      %v8838 = vand.u32 %v8837, 4294901760
      %8839 = vmatpush1.msra.mxu0 %v8838
      %8840 = vmatprep.subr.mxu0 0.0
      %8841 = vmatpush1.msra.mxu0 0.0
      %8842 = vmatprep.subr.mxu0 0.0
      %8843 = vmatpush1.msra.mxu0 0.0
      %8844 = vmatprep.subr.mxu0 0.0
      %8845 = vmatpush1.msra.mxu0 0.0
      %8846 = vmatprep.subr.mxu0 0.0
      %8847 = vmatpush1.msra.mxu0 0.0
      %8848 = vmatprep.subr.mxu0 0.0
      %8849 = vmatpush1.msra.mxu0 0.0
      %8850 = vmatprep.subr.mxu0 0.0
      %8851 = vmatpush1.msra.mxu0 0.0
      %8852 = vmatprep.subr.mxu0 0.0
      %8853 = vmatpush1.msra.mxu0 0.0
      %8854 = vmatprep.subr.mxu0 0.0
      %8855 = vmatpush1.msra.mxu0 0.0
      %8856 = vmatprep.subr.mxu0 0.0
      %8857 = vmatpush1.msra.mxu0 0.0
      %8858 = vmatprep.subr.mxu0 0.0
      %8859 = vmatpush1.msra.mxu0 0.0
      %8860 = vmatprep.subr.mxu0 0.0
      %8861 = vmatpush1.msra.mxu0 0.0
      %8862 = vmatprep.subr.mxu0 0.0
      %8863 = vmatpush1.msra.mxu0 0.0
      %8864 = vmatprep.subr.mxu0 0.0
      %8865 = vmatpush1.msra.mxu0 0.0
      %8866 = vmatprep.subr.mxu0 0.0
      %8867 = vmatpush1.msra.mxu0 0.0
      %8868 = vmatprep.subr.mxu0 0.0
      %8869 = vmatpush1.msra.mxu0 0.0
      %8870 = vmatprep.subr.mxu0 0.0
      %8871 = vmatpush1.msra.mxu0 0.0
      %8872 = vmatprep.subr.mxu0 0.0
      %8873 = vmatpush1.msra.mxu0 0.0
      %8874 = vmatprep.subr.mxu0 0.0
      %8875 = vmatpush1.msra.mxu0 0.0
      %8876 = vmatprep.subr.mxu0 0.0
      %8877 = vmatpush1.msra.mxu0 0.0
      %8878 = vmatprep.subr.mxu0 0.0
      %8879 = vmatpush1.msra.mxu0 0.0
      %8880 = vmatprep.subr.mxu0 0.0
      %8881 = vmatpush1.msra.mxu0 0.0
      %8882 = vmatprep.subr.mxu0 0.0
      %8883 = vmatpush1.msra.mxu0 0.0
      %8884 = vmatprep.subr.mxu0 0.0
      %8885 = vmatpush1.msra.mxu0 0.0
      %8886 = vmatprep.subr.mxu0 0.0
      %8887 = vmatpush1.msra.mxu0 0.0
      %8888 = vmatprep.subr.mxu0 0.0
      %8889 = vmatpush1.msra.mxu0 0.0
      %8890 = vmatprep.subr.mxu0 0.0
      %8891 = vmatpush1.msra.mxu0 0.0
      %8892 = vmatprep.subr.mxu0 0.0
      %8893 = vmatpush1.msra.mxu0 0.0
      %8894 = vmatprep.subr.mxu0 0.0
      %8895 = vmatpush1.msra.mxu0 0.0
      %8896 = vmatprep.subr.mxu0 0.0
      %8897 = vmatpush1.msra.mxu0 0.0
      %8898 = vmatprep.subr.mxu0 0.0
      %8899 = vmatpush1.msra.mxu0 0.0
      %8900 = vmatprep.subr.mxu0 0.0
      %8901 = vmatpush1.msra.mxu0 0.0
      %8902 = vmatprep.mubr.f32.mxu0 0.0
      %v8903 = vand.u32 %v8742, 4294901760
      %8904 = vmatmul.mubr.f32.gmra.mrb[0].mxu0 %v8903
      %v8905 = vpop.f32.mrb[0].mxu0
      %v8906 = vadd.f32 %v8824, %v8905
      %v8907 = vpop.f32.mrb[0].mxu0
      %v8908 = vadd.f32 %v8826, %v8907
      %8909 = vdwg.mxu0
      %v8910 = vand.u32 %v8748, 4294901760
      %v8911 = vsub.f32 %v8748, %v8910
      %8912 = vmatprep.subr.mxu0 %v8911
      %v8913 = vand.u32 %v8745, 4294901760
      %v8914 = vsub.f32 %v8745, %v8913
      %8915 = vmatpush1.msra.mxu0 %v8914
      %8916 = vmatprep.subr.mxu0 0.0
      %8917 = vmatpush1.msra.mxu0 0.0
      %8918 = vmatprep.subr.mxu0 0.0
      %8919 = vmatpush1.msra.mxu0 0.0
      %8920 = vmatprep.subr.mxu0 0.0
      %8921 = vmatpush1.msra.mxu0 0.0
      %8922 = vmatprep.subr.mxu0 0.0
      %8923 = vmatpush1.msra.mxu0 0.0
      %8924 = vmatprep.subr.mxu0 0.0
      %8925 = vmatpush1.msra.mxu0 0.0
      %8926 = vmatprep.subr.mxu0 0.0
      %8927 = vmatpush1.msra.mxu0 0.0
      %8928 = vmatprep.subr.mxu0 0.0
      %8929 = vmatpush1.msra.mxu0 0.0
      %8930 = vmatprep.subr.mxu0 0.0
      %8931 = vmatpush1.msra.mxu0 0.0
      %8932 = vmatprep.subr.mxu0 0.0
      %8933 = vmatpush1.msra.mxu0 0.0
      %8934 = vmatprep.subr.mxu0 0.0
      %8935 = vmatpush1.msra.mxu0 0.0
      %8936 = vmatprep.subr.mxu0 0.0
      %8937 = vmatpush1.msra.mxu0 0.0
      %8938 = vmatprep.subr.mxu0 0.0
      %8939 = vmatpush1.msra.mxu0 0.0
      %8940 = vmatprep.subr.mxu0 0.0
      %8941 = vmatpush1.msra.mxu0 0.0
      %8942 = vmatprep.subr.mxu0 0.0
      %8943 = vmatpush1.msra.mxu0 0.0
      %8944 = vmatprep.subr.mxu0 0.0
      %8945 = vmatpush1.msra.mxu0 0.0
      %8946 = vmatprep.subr.mxu0 0.0
      %8947 = vmatpush1.msra.mxu0 0.0
      %8948 = vmatprep.subr.mxu0 0.0
      %8949 = vmatpush1.msra.mxu0 0.0
      %8950 = vmatprep.subr.mxu0 0.0
      %8951 = vmatpush1.msra.mxu0 0.0
      %8952 = vmatprep.subr.mxu0 0.0
      %8953 = vmatpush1.msra.mxu0 0.0
      %8954 = vmatprep.subr.mxu0 0.0
      %8955 = vmatpush1.msra.mxu0 0.0
      %8956 = vmatprep.subr.mxu0 0.0
      %8957 = vmatpush1.msra.mxu0 0.0
      %8958 = vmatprep.subr.mxu0 0.0
      %8959 = vmatpush1.msra.mxu0 0.0
      %8960 = vmatprep.subr.mxu0 0.0
      %8961 = vmatpush1.msra.mxu0 0.0
      %8962 = vmatprep.subr.mxu0 0.0
      %8963 = vmatpush1.msra.mxu0 0.0
      %8964 = vmatprep.subr.mxu0 0.0
      %8965 = vmatpush1.msra.mxu0 0.0
      %8966 = vmatprep.subr.mxu0 0.0
      %8967 = vmatpush1.msra.mxu0 0.0
      %8968 = vmatprep.subr.mxu0 0.0
      %8969 = vmatpush1.msra.mxu0 0.0
      %8970 = vmatprep.subr.mxu0 0.0
      %8971 = vmatpush1.msra.mxu0 0.0
      %8972 = vmatprep.subr.mxu0 0.0
      %8973 = vmatpush1.msra.mxu0 0.0
      %8974 = vmatprep.subr.mxu0 0.0
      %8975 = vmatpush1.msra.mxu0 0.0
      %8976 = vmatprep.subr.mxu0 0.0
      %8977 = vmatpush1.msra.mxu0 0.0
      %8978 = vmatprep.mubr.f32.mxu0 0.0
      %v8979 = vand.u32 %v8742, 4294901760
      %v8980 = vsub.f32 %v8742, %v8979
      %8981 = vmatmul.mubr.f32.gmra.mrb[0].mxu0 %v8980
      %v8982 = vpop.f32.mrb[0].mxu0
      %v8983 = vadd.f32 %v8906, %v8982
      %v8984 = vpop.f32.mrb[0].mxu0
      %v8985 = vadd.f32 %v8908, %v8984
      %8986 = vdwg.mxu0
      %v8987 = vand.u32 %v8748, 4294901760
      %8988 = vmatprep.subr.mxu0 %v8987
      %v8989 = vand.u32 %v8745, 4294901760
      %8990 = vmatpush1.msra.mxu0 %v8989
      %8991 = vmatprep.subr.mxu0 0.0
      %8992 = vmatpush1.msra.mxu0 0.0
      %8993 = vmatprep.subr.mxu0 0.0
      %8994 = vmatpush1.msra.mxu0 0.0
      %8995 = vmatprep.subr.mxu0 0.0
      %8996 = vmatpush1.msra.mxu0 0.0
      %8997 = vmatprep.subr.mxu0 0.0
      %8998 = vmatpush1.msra.mxu0 0.0
      %8999 = vmatprep.subr.mxu0 0.0
      %9000 = vmatpush1.msra.mxu0 0.0
      %9001 = vmatprep.subr.mxu0 0.0
      %9002 = vmatpush1.msra.mxu0 0.0
      %9003 = vmatprep.subr.mxu0 0.0
      %9004 = vmatpush1.msra.mxu0 0.0
      %9005 = vmatprep.subr.mxu0 0.0
      %9006 = vmatpush1.msra.mxu0 0.0
      %9007 = vmatprep.subr.mxu0 0.0
      %9008 = vmatpush1.msra.mxu0 0.0
      %9009 = vmatprep.subr.mxu0 0.0
      %9010 = vmatpush1.msra.mxu0 0.0
      %9011 = vmatprep.subr.mxu0 0.0
      %9012 = vmatpush1.msra.mxu0 0.0
      %9013 = vmatprep.subr.mxu0 0.0
      %9014 = vmatpush1.msra.mxu0 0.0
      %9015 = vmatprep.subr.mxu0 0.0
      %9016 = vmatpush1.msra.mxu0 0.0
      %9017 = vmatprep.subr.mxu0 0.0
      %9018 = vmatpush1.msra.mxu0 0.0
      %9019 = vmatprep.subr.mxu0 0.0
      %9020 = vmatpush1.msra.mxu0 0.0
      %9021 = vmatprep.subr.mxu0 0.0
      %9022 = vmatpush1.msra.mxu0 0.0
      %9023 = vmatprep.subr.mxu0 0.0
      %9024 = vmatpush1.msra.mxu0 0.0
      %9025 = vmatprep.subr.mxu0 0.0
      %9026 = vmatpush1.msra.mxu0 0.0
      %9027 = vmatprep.subr.mxu0 0.0
      %9028 = vmatpush1.msra.mxu0 0.0
      %9029 = vmatprep.subr.mxu0 0.0
      %9030 = vmatpush1.msra.mxu0 0.0
      %9031 = vmatprep.subr.mxu0 0.0
      %9032 = vmatpush1.msra.mxu0 0.0
      %9033 = vmatprep.subr.mxu0 0.0
      %9034 = vmatpush1.msra.mxu0 0.0
      %9035 = vmatprep.subr.mxu0 0.0
      %9036 = vmatpush1.msra.mxu0 0.0
      %9037 = vmatprep.subr.mxu0 0.0
      %9038 = vmatpush1.msra.mxu0 0.0
      %9039 = vmatprep.subr.mxu0 0.0
      %9040 = vmatpush1.msra.mxu0 0.0
      %9041 = vmatprep.subr.mxu0 0.0
      %9042 = vmatpush1.msra.mxu0 0.0
      %9043 = vmatprep.subr.mxu0 0.0
      %9044 = vmatpush1.msra.mxu0 0.0
      %9045 = vmatprep.subr.mxu0 0.0
      %9046 = vmatpush1.msra.mxu0 0.0
      %9047 = vmatprep.subr.mxu0 0.0
      %9048 = vmatpush1.msra.mxu0 0.0
      %9049 = vmatprep.subr.mxu0 0.0
      %9050 = vmatpush1.msra.mxu0 0.0
      %9051 = vmatprep.subr.mxu0 0.0
      %9052 = vmatpush1.msra.mxu0 0.0
      %9053 = vmatprep.mubr.f32.mxu0 0.0
      %v9054 = vand.u32 %v8742, 4294901760
      %v9055 = vsub.f32 %v8742, %v9054
      %v9056 = vand.u32 %v9055, 4294901760
      %9057 = vmatmul.mubr.f32.gmra.mrb[0].mxu0 %v9056
      %v9058 = vpop.f32.mrb[0].mxu0
      %v9059 = vadd.f32 %v8983, %v9058
      %v9060 = vpop.f32.mrb[0].mxu0
      %v9061 = vadd.f32 %v8985, %v9060
      %9062 = vdwg.mxu0
      %v9063 = vand.u32 %v8748, 4294901760
      %v9064 = vsub.f32 %v8748, %v9063
      %v9065 = vand.u32 %v9064, 4294901760
      %9066 = vmatprep.subr.mxu0 %v9065
      %v9067 = vand.u32 %v8745, 4294901760
      %v9068 = vsub.f32 %v8745, %v9067
      %v9069 = vand.u32 %v9068, 4294901760
      %9070 = vmatpush1.msra.mxu0 %v9069
      %9071 = vmatprep.subr.mxu0 0.0
      %9072 = vmatpush1.msra.mxu0 0.0
      %9073 = vmatprep.subr.mxu0 0.0
      %9074 = vmatpush1.msra.mxu0 0.0
      %9075 = vmatprep.subr.mxu0 0.0
      %9076 = vmatpush1.msra.mxu0 0.0
      %9077 = vmatprep.subr.mxu0 0.0
      %9078 = vmatpush1.msra.mxu0 0.0
      %9079 = vmatprep.subr.mxu0 0.0
      %9080 = vmatpush1.msra.mxu0 0.0
      %9081 = vmatprep.subr.mxu0 0.0
      %9082 = vmatpush1.msra.mxu0 0.0
      %9083 = vmatprep.subr.mxu0 0.0
      %9084 = vmatpush1.msra.mxu0 0.0
      %9085 = vmatprep.subr.mxu0 0.0
      %9086 = vmatpush1.msra.mxu0 0.0
      %9087 = vmatprep.subr.mxu0 0.0
      %9088 = vmatpush1.msra.mxu0 0.0
      %9089 = vmatprep.subr.mxu0 0.0
      %9090 = vmatpush1.msra.mxu0 0.0
      %9091 = vmatprep.subr.mxu0 0.0
      %9092 = vmatpush1.msra.mxu0 0.0
      %9093 = vmatprep.subr.mxu0 0.0
      %9094 = vmatpush1.msra.mxu0 0.0
      %9095 = vmatprep.subr.mxu0 0.0
      %9096 = vmatpush1.msra.mxu0 0.0
      %9097 = vmatprep.subr.mxu0 0.0
      %9098 = vmatpush1.msra.mxu0 0.0
      %9099 = vmatprep.subr.mxu0 0.0
      %9100 = vmatpush1.msra.mxu0 0.0
      %9101 = vmatprep.subr.mxu0 0.0
      %9102 = vmatpush1.msra.mxu0 0.0
      %9103 = vmatprep.subr.mxu0 0.0
      %9104 = vmatpush1.msra.mxu0 0.0
      %9105 = vmatprep.subr.mxu0 0.0
      %9106 = vmatpush1.msra.mxu0 0.0
      %9107 = vmatprep.subr.mxu0 0.0
      %9108 = vmatpush1.msra.mxu0 0.0
      %9109 = vmatprep.subr.mxu0 0.0
      %9110 = vmatpush1.msra.mxu0 0.0
      %9111 = vmatprep.subr.mxu0 0.0
      %9112 = vmatpush1.msra.mxu0 0.0
      %9113 = vmatprep.subr.mxu0 0.0
      %9114 = vmatpush1.msra.mxu0 0.0
      %9115 = vmatprep.subr.mxu0 0.0
      %9116 = vmatpush1.msra.mxu0 0.0
      %9117 = vmatprep.subr.mxu0 0.0
      %9118 = vmatpush1.msra.mxu0 0.0
      %9119 = vmatprep.subr.mxu0 0.0
      %9120 = vmatpush1.msra.mxu0 0.0
      %9121 = vmatprep.subr.mxu0 0.0
      %9122 = vmatpush1.msra.mxu0 0.0
      %9123 = vmatprep.subr.mxu0 0.0
      %9124 = vmatpush1.msra.mxu0 0.0
      %9125 = vmatprep.subr.mxu0 0.0
      %9126 = vmatpush1.msra.mxu0 0.0
      %9127 = vmatprep.subr.mxu0 0.0
      %9128 = vmatpush1.msra.mxu0 0.0
      %9129 = vmatprep.subr.mxu0 0.0
      %9130 = vmatpush1.msra.mxu0 0.0
      %9131 = vmatprep.subr.mxu0 0.0
      %9132 = vmatpush1.msra.mxu0 0.0
      %9133 = vmatprep.mubr.f32.mxu0 0.0
      %v9134 = vand.u32 %v8742, 4294901760
      %9135 = vmatmul.mubr.f32.gmra.mrb[0].mxu0 %v9134
      %v9136 = vpop.f32.mrb[0].mxu0
      %v9137 = vadd.f32 %v9059, %v9136
      %v9138 = vpop.f32.mrb[0].mxu0
      %v9139 = vadd.f32 %v9061, %v9138
      %9140 = vdwg.mxu0
      %v9141 = vand.u32 %v8748, 4294901760
      %9142 = vmatprep.subr.mxu0 %v9141
      %v9143 = vand.u32 %v8745, 4294901760
      %9144 = vmatpush1.msra.mxu0 %v9143
      %9145 = vmatprep.subr.mxu0 0.0
      %9146 = vmatpush1.msra.mxu0 0.0
      %9147 = vmatprep.subr.mxu0 0.0
      %9148 = vmatpush1.msra.mxu0 0.0
      %9149 = vmatprep.subr.mxu0 0.0
      %9150 = vmatpush1.msra.mxu0 0.0
      %9151 = vmatprep.subr.mxu0 0.0
      %9152 = vmatpush1.msra.mxu0 0.0
      %9153 = vmatprep.subr.mxu0 0.0
      %9154 = vmatpush1.msra.mxu0 0.0
      %9155 = vmatprep.subr.mxu0 0.0
      %9156 = vmatpush1.msra.mxu0 0.0
      %9157 = vmatprep.subr.mxu0 0.0
      %9158 = vmatpush1.msra.mxu0 0.0
      %9159 = vmatprep.subr.mxu0 0.0
      %9160 = vmatpush1.msra.mxu0 0.0
      %9161 = vmatprep.subr.mxu0 0.0
      %9162 = vmatpush1.msra.mxu0 0.0
      %9163 = vmatprep.subr.mxu0 0.0
      %9164 = vmatpush1.msra.mxu0 0.0
      %9165 = vmatprep.subr.mxu0 0.0
      %9166 = vmatpush1.msra.mxu0 0.0
      %9167 = vmatprep.subr.mxu0 0.0
      %9168 = vmatpush1.msra.mxu0 0.0
      %9169 = vmatprep.subr.mxu0 0.0
      %9170 = vmatpush1.msra.mxu0 0.0
      %9171 = vmatprep.subr.mxu0 0.0
      %9172 = vmatpush1.msra.mxu0 0.0
      %9173 = vmatprep.subr.mxu0 0.0
      %9174 = vmatpush1.msra.mxu0 0.0
      %9175 = vmatprep.subr.mxu0 0.0
      %9176 = vmatpush1.msra.mxu0 0.0
      %9177 = vmatprep.subr.mxu0 0.0
      %9178 = vmatpush1.msra.mxu0 0.0
      %9179 = vmatprep.subr.mxu0 0.0
      %9180 = vmatpush1.msra.mxu0 0.0
      %9181 = vmatprep.subr.mxu0 0.0
      %9182 = vmatpush1.msra.mxu0 0.0
      %9183 = vmatprep.subr.mxu0 0.0
      %9184 = vmatpush1.msra.mxu0 0.0
      %9185 = vmatprep.subr.mxu0 0.0
      %9186 = vmatpush1.msra.mxu0 0.0
      %9187 = vmatprep.subr.mxu0 0.0
      %9188 = vmatpush1.msra.mxu0 0.0
      %9189 = vmatprep.subr.mxu0 0.0
      %9190 = vmatpush1.msra.mxu0 0.0
      %9191 = vmatprep.subr.mxu0 0.0
      %9192 = vmatpush1.msra.mxu0 0.0
      %9193 = vmatprep.subr.mxu0 0.0
      %9194 = vmatpush1.msra.mxu0 0.0
      %9195 = vmatprep.subr.mxu0 0.0
      %9196 = vmatpush1.msra.mxu0 0.0
      %9197 = vmatprep.subr.mxu0 0.0
      %9198 = vmatpush1.msra.mxu0 0.0
      %9199 = vmatprep.subr.mxu0 0.0
      %9200 = vmatpush1.msra.mxu0 0.0
      %9201 = vmatprep.subr.mxu0 0.0
      %9202 = vmatpush1.msra.mxu0 0.0
      %9203 = vmatprep.subr.mxu0 0.0
      %9204 = vmatpush1.msra.mxu0 0.0
      %9205 = vmatprep.subr.mxu0 0.0
      %9206 = vmatpush1.msra.mxu0 0.0
      %9207 = vmatprep.mubr.f32.mxu0 0.0
      %v9208 = vand.u32 %v8742, 4294901760
      %9209 = vmatmul.mubr.f32.gmra.mrb[0].mxu0 %v9208
      %v9210 = vpop.f32.mrb[0].mxu0
      %v9211 = vadd.f32 %v9137, %v9210
      %v9212 = vpop.f32.mrb[0].mxu0
      %v9213 = vadd.f32 %v9139, %v9212
      %9214 = vdwg.mxu0
      %v9215 = vadd.f32 %v8737, %v9211
      %v9216 = vadd.f32 %v8738, %v9213
      %v9217 = vsel %vm392, %v9215, 0.0
      %v9218 = vsel %vm392, %v9216, 0.0
      %v9219 = vadd.f32 %v9217, %v9218
      %9220 = vadd.xlane.f32.xlu0 %v9219
      %v9221 = vpop.xlane.xlu0 %9220
      %v9222 = vmul.f32 %v9221, %v4763
      %v9223 = vsub.f32 %v9215, %v9222
      %v9224 = vsub.f32 %v9216, %v9222
      %v9225 = vmul.f32 %v9223, %v9223
      %v9226 = vmul.f32 %v9224, %v9224
      %v9227 = vsel %vm392, %v9225, 0.0
      %v9228 = vsel %vm392, %v9226, 0.0
      %v9229 = vadd.f32 %v9227, %v9228
      %9230 = vadd.xlane.f32.xlu0 %v9229
      %v9231 = vpop.xlane.xlu0 %9230
      %v9232 = vmul.f32 %v9231, %v4763
      %v9233 = vadd.f32 %v9232, 1e-05
      %v9234 = vrsqrt.pop %v9233
      %v9235 = vmul.f32 %v9223, %v9234
      %v9236 = vmul.f32 %v9224, %v9234
      %v9237 = vld [vmem:[%s5] sm:$0xf]
      %9239 = vset.pattern.permute.xlu0 0
      %9240 = vperm.xlu0 %9239, %v9237
      %v9241 = vpop.permute.xlu0 %9240
      %v9243 = vmul.f32 %v9235, %v9241
      %v9244 = vmul.f32 %v9236, %v9241
      %v9245 = vld [vmem:[%s6] sm:$0xf]
      %9247 = vset.pattern.permute.xlu0 0
      %9248 = vperm.xlu0 %9247, %v9245
      %v9249 = vpop.permute.xlu0 %9248
      %v9251 = vadd.f32 %v9243, %v9249
      %v9252 = vadd.f32 %v9244, %v9249
      %v9253 = vld [vmem:[%s273] sm:$0xff]
      %v9255 = vcombine.high %v9253, %v9253
      %v9257 = vadd.f32 %v9251, %v9253
      %v9258 = vadd.f32 %v9252, %v9255
      %v9261 = vcombine.low %v9257, %v9258
      %9263 = vst [vmem:[%s278] sm:$0xff] %v9261
      %p9264 = scmp.lt.s32.totalorder %s18, 1
      %s9265 = scalar_select %p9264, %s18, 1
      %s9266 = smul.addr %s9265, 2
      %s9267 = smul.addr %s9266, 4
      %s9268 = scalar_lea.vmem %s7, %s9267
      // Predicated region
      $region49: #{residual_block.1} parent=47 // pred_check
        %p9269 = pneg %p188
      $region50: #{residual_block.1} parent=47 // pred_check_branch
        %9271 = sbr.rel (%p9269) target = $region52
      $region51: #{residual_block.1} parent=47 // pred_region
        _
      $region52: #{residual_block.1} parent=47 // pred_fallthru
        _
    $region48: #{residual_block.1} parent=5 // pred_fallthru
      _
    %p9272 = scmp.le.s32.totalorder 2, %s13
    // Predicated region
    $region53: #{residual_block.1} parent=5 // pred_check
      %p9273 = pneg %p9272
    $region54: #{residual_block.1} parent=5 // pred_check_branch
      %9275 = sbr.rel (%p9273) target = $region56
    $region55: #{residual_block.1} parent=5 // pred_region
      %s9276 = ssub.s32 %s13, 2
      // Predicated region
      $region57: #{residual_block.1} parent=55 // pred_check
        %p9277 = pneg %p194
      $region58: #{residual_block.1} parent=55 // pred_check_branch
        %9279 = sbr.rel (%p9277) target = $region60
      $region59: #{residual_block.1} parent=55 // pred_region
        %p9280 = scmp.lt.s32.totalorder %s19, 1
        %s9281 = scalar_select %p9280, %s19, 1
        %s9282 = smul.addr %s9281, 2
        %s9283 = smul.addr %s9282, 4
        %s9284 = scalar_lea.vmem %s7, %s9283
      $region60: #{residual_block.1} parent=55 // pred_fallthru
        _
    $region56: #{residual_block.1} parent=5 // pred_fallthru
      _
  $region6: #{residual_block.1} parent=0 // loop_footer
    %s17 = sadd.s32 1, %s13
  $region7: #{residual_block.1} parent=0 // loop_footer_branch
    %12 = sbr.rel target = $region3
  $region8: #{residual_block.1} parent=0 // loop_exit
    _

</llo_original>
